<compile_context>
chip_gen: v6e
topology: v6e:2x2x1
jax: 0.10.0
libtpu: 0.0.40
codegen_flags: <defaults>
</compile_context>

<pallas_src>
import math
import functools

import numpy as np
import jax
import jax.numpy as jnp
from jax.experimental import pallas as pl
from jax.experimental.pallas import tpu as pltpu


# ----------------------------------------------------------------------------
# Kernel 1: strided Conv2d stand-in as im2col matmul (bias fused).
# (Negligible at these shapes; if B/H/W grow, tile M=B*OH*OW over a "parallel"
#  grid axis instead of grid=(1,).)
# ----------------------------------------------------------------------------
def _matmul_bias_kernel(x_ref, w_ref, b_ref, o_ref):
    o_ref[...] = (jnp.dot(x_ref[...], w_ref[...],
                          preferred_element_type=jnp.float32) + b_ref[...])


def pallas_matmul_bias(x, w, b):
    M, K = x.shape
    _, N = w.shape
    return pl.pallas_call(
        _matmul_bias_kernel,
        out_shape=jax.ShapeDtypeStruct((M, N), jnp.float32),
        grid=(1,),
        in_specs=[
            pl.BlockSpec((M, K), lambda i: (0, 0)),
            pl.BlockSpec((K, N), lambda i: (0, 0)),
            pl.BlockSpec((1, N), lambda i: (0, 0)),
        ],
        out_specs=pl.BlockSpec((M, N), lambda i: (0, 0)),
    )(x, w, b.reshape(1, N))


# ----------------------------------------------------------------------------
# Kernel 2: fused  PosEnc + TransformerEncoder stack + mean-pool MLP head.
# Single grid step; all B*N tokens processed together; everything stays in VMEM.
# ----------------------------------------------------------------------------
def _fused_kernel(*refs, layer_cfgs, batch, seq):
    x_ref, pe_ref = refs[0], refs[1]
    n_lw = 11 * len(layer_cfgs)
    lrefs = refs[2:2 + n_lw]
    w1, b1h, w2, b2h, w3, b3h = refs[2 + n_lw:2 + n_lw + 6]
    o_ref = refs[-1]
    eps = 1e-6
    B, N = batch, seq

    # PositionalEncoding: lane-splat of the (B*N, 1) PE column on first read.
    t = x_ref[...] + pe_ref[...]                                  # (B*N, C) f32

    for li, (heads, dh) in enumerate(layer_cfgs):
        (wq, wk, wv, woh, bo, g1, b1, wf1, wf2, g2, b2) = \
            lrefs[11 * li: 11 * (li + 1)]
        C = heads * dh

        t_bf = t.astype(jnp.bfloat16)
        o_acc = jnp.zeros((B * N, C), jnp.float32)

        # Heads: per-head weight blocks (no lane slices of activations),
        # batch dimension handled with 3-D einsums, output proj accumulated.
        for h in range(heads):
            qh = jnp.dot(t_bf, wq[h], preferred_element_type=jnp.float32)
            kh = jnp.dot(t_bf, wk[h], preferred_element_type=jnp.float32)
            vh = jnp.dot(t_bf, wv[h], preferred_element_type=jnp.float32)
            q3 = qh.reshape(B, N, dh).astype(jnp.bfloat16)   # scale pre-folded
            k3 = kh.reshape(B, N, dh).astype(jnp.bfloat16)
            v3 = vh.reshape(B, N, dh).astype(jnp.bfloat16)

            s = jnp.einsum('bnd,bmd->bnm', q3, k3,
                           preferred_element_type=jnp.float32)    # (B, N, N)
            s = s - jnp.max(s, axis=-1, keepdims=True)
            e = jnp.exp(s)
            inv = pl.reciprocal(jnp.sum(e, axis=-1, keepdims=True), approx=True)
            attn = (e * inv).astype(jnp.bfloat16)
            oh = jnp.einsum('bnm,bmd->bnd', attn, v3,
                            preferred_element_type=jnp.float32)   # (B, N, dh)

            o_acc = o_acc + jnp.dot(
                oh.reshape(B * N, dh).astype(jnp.bfloat16), woh[h],
                preferred_element_type=jnp.float32)               # (B*N, C)

        proj = o_acc + bo[...]

        # residual + LayerNorm 1 (eps=1e-6), rsqrt on EUP.
        h1 = t + proj
        mu1 = jnp.mean(h1, axis=-1, keepdims=True)
        var1 = jnp.mean(jnp.square(h1 - mu1), axis=-1, keepdims=True)
        ln1 = (h1 - mu1) * jax.lax.rsqrt(var1 + eps) * g1[...] + b1[...]

        # FFN (two bias-free linears, no activation — matches the module) + LN2.
        ff = jnp.dot(ln1.astype(jnp.bfloat16), wf1[...],
                     preferred_element_type=jnp.float32)
        ff = jnp.dot(ff.astype(jnp.bfloat16), wf2[...],
                     preferred_element_type=jnp.float32)
        h2 = ln1 + ff
        mu2 = jnp.mean(h2, axis=-1, keepdims=True)
        var2 = jnp.mean(jnp.square(h2 - mu2), axis=-1, keepdims=True)
        t = (h2 - mu2) * jax.lax.rsqrt(var2 + eps) * g2[...] + b2[...]

    # mean over tokens (per batch row) -> (B, C)
    pooled_rows = [jnp.mean(t[b * N:(b + 1) * N, :], axis=0, keepdims=True)
                   for b in range(B)]
    pooled = jnp.concatenate(pooled_rows, axis=0)                 # (B, C) f32

    # Linear/ReLU6/Linear/ReLU6/Linear/Sigmoid — bf16 weights, f32 accumulate,
    # batched over B, weights read exactly once, 128-lane-padded output.
    z = jnp.dot(pooled.astype(jnp.bfloat16), w1[...],
                preferred_element_type=jnp.float32) + b1h[...]
    z = jnp.clip(z, 0.0, 6.0)
    z = jnp.dot(z.astype(jnp.bfloat16), w2[...],
                preferred_element_type=jnp.float32) + b2h[...]
    z = jnp.clip(z, 0.0, 6.0)
    z = jnp.dot(z.astype(jnp.bfloat16), w3[...],
                preferred_element_type=jnp.float32) + b3h[...]
    o_ref[...] = jax.nn.sigmoid(z)


def _full_spec(shape):
    rank = len(shape)
    return pl.BlockSpec(shape, lambda i, _r=rank: (0,) * _r)


def _prep_layer_weights(layer_weights, layer_cfgs):
    """Split wqkv/wo into per-head bf16 blocks; fold attention scale into q."""
    flat = []
    for (heads, dh), w in zip(layer_cfgs, layer_weights):
        wqkv, wo, bo, g1, b1, wf1, wf2, g2, b2 = w
        C = heads * dh
        scale = dh ** (-0.5)
        wq = (wqkv[:, :C] * scale).reshape(C, heads, dh).transpose(1, 0, 2)
        wk = wqkv[:, C:2 * C].reshape(C, heads, dh).transpose(1, 0, 2)
        wv = wqkv[:, 2 * C:].reshape(C, heads, dh).transpose(1, 0, 2)
        woh = wo.reshape(heads, dh, C)
        flat += [wq.astype(jnp.bfloat16), wk.astype(jnp.bfloat16),
                 wv.astype(jnp.bfloat16), woh.astype(jnp.bfloat16),
                 bo, g1, b1,
                 wf1.astype(jnp.bfloat16), wf2.astype(jnp.bfloat16),
                 g2, b2]
    return flat


def _prep_head_weights(head_weights, out_pad):
    """bf16 weights, f32 biases; pad final layer to 128 lanes (unmasked vst)."""
    w1, b1h, w2, b2h, w3, b3h = head_weights
    nc = w3.shape[1]
    pad = out_pad - nc
    w3p = jnp.pad(w3, ((0, 0), (0, pad)))
    b3p = jnp.pad(b3h, ((0, 0), (0, pad)))
    return [w1.astype(jnp.bfloat16), b1h,
            w2.astype(jnp.bfloat16), b2h,
            w3p.astype(jnp.bfloat16), b3p]


def pallas_posenc_transformer_head(tokens, pe_col, layer_weights, layer_cfgs,
                                   head_weights):
    B, N, C = tokens.shape
    num_class = head_weights[-1].shape[1]
    OUT_PAD = 128
    x2 = tokens.reshape(B * N, C)
    flat_w = (_prep_layer_weights(layer_weights, layer_cfgs)
              + _prep_head_weights(head_weights, OUT_PAD))
    in_arrays = [x2, pe_col] + flat_w
    out = pl.pallas_call(
        functools.partial(_fused_kernel, layer_cfgs=layer_cfgs,
                          batch=B, seq=N),
        out_shape=jax.ShapeDtypeStruct((B, OUT_PAD), jnp.float32),
        grid=(1,),
        in_specs=[_full_spec(a.shape) for a in in_arrays],
        out_specs=_full_spec((B, OUT_PAD)),
        compiler_params=pltpu.CompilerParams(
            dimension_semantics=("arbitrary",)),
    )(*in_arrays)
    return out[:, :num_class]


# ----------------------------------------------------------------------------
# Glue (im2col conv wrapper, composed token permutation, params)
# ----------------------------------------------------------------------------
def conv2d_stride_pallas(x, w, b, stride, padding):
    """PyTorch-style Conv2d (NCHW, OIHW) via im2col + Pallas matmul, NHWC out."""
    B, Cin, H, W = x.shape
    Cout, _, KH, KW = w.shape
    OH = (H + 2 * padding - KH) // stride + 1
    OW = (W + 2 * padding - KW) // stride + 1
    xp = jnp.pad(x, ((0, 0), (0, 0), (padding, padding), (padding, padding)))
    cols = []
    for kh in range(KH):
        for kw in range(KW):
            cols.append(xp[:, :, kh:kh + OH * stride:stride,
                              kw:kw + OW * stride:stride])          # (B,Cin,OH,OW)
    patches = jnp.stack(cols, axis=2).reshape(B, Cin * KH * KW, OH, OW)
    x2d = patches.transpose(0, 2, 3, 1).reshape(B * OH * OW, Cin * KH * KW)
    w2d = w.reshape(Cout, Cin * KH * KW).T
    K = Cin * KH * KW
    kpad = (-K) % 8                          # pad contraction dim to sublane mult.
    if kpad:
        x2d = jnp.pad(x2d, ((0, 0), (0, kpad)))
        w2d = jnp.pad(w2d, ((0, kpad), (0, 0)))
    y2d = pallas_matmul_bias(x2d, w2d, b)
    return y2d.reshape(B, OH, OW, Cout)      # NHWC; Cout laid out as (Co, r, r)


def feat_nhwc_to_tokens(y_bhwc, r):
    """conv(NHWC) -> PixelShuffle(r) -> 'b c h w -> b (h w) c' as ONE permutation."""
    B, OH, OW, Cout = y_bhwc.shape
    Co = Cout // (r * r)
    y6 = y_bhwc.reshape(B, OH, OW, Co, r, r)
    y6 = y6.transpose(0, 1, 4, 2, 5, 3)      # (B, OH, r, OW, r, Co)
    return y6.reshape(B, OH * r * OW * r, Co)


def pixel_shuffle(x, r):                     # NCHW, used by the reference only
    B, C, H, W = x.shape
    Co = C // (r * r)
    x = x.reshape(B, Co, r, r, H, W)
    x = x.transpose(0, 1, 4, 2, 5, 3)
    return x.reshape(B, Co, H * r, W * r)


def make_pe(max_len, d_model):
    position = np.arange(max_len)[:, None].astype(np.float32)
    div_term = np.exp(np.arange(0, d_model, 2).astype(np.float32)
                      * (-math.log(10000.0) / d_model))
    pe = np.zeros((max_len, d_model), np.float32)
    pe[:, 0::2] = np.sin(position * div_term)
    pe[:, 1::2] = np.cos(position * div_term)
    return jnp.asarray(pe)


def init_params(key, *, in_ch, feat_ch, attn_dim_list, num_head_list, num_class):
    inner = attn_dim_list[0] * num_head_list[0]
    ks = iter(jax.random.split(key, 64))
    n = lambda shape, s=0.05: s * jax.random.normal(next(ks), shape, jnp.float32)
    params = {
        # TODO(synk): feature_model is an injected backbone in the PyTorch module;
        # stand-in = a single strided Conv2d producing the "last" feature map.
        "conv_w": n((feat_ch, in_ch, 3, 3), 0.1),
        "conv_b": n((feat_ch,), 0.1),
        "pe": make_pe(5000, inner),
        "layers": [],
        "head": None,
    }
    layer_cfgs = []
    dim = inner
    for attn_dim, num_head in zip(attn_dim_list, num_head_list):
        d = attn_dim * num_head
        assert d == dim
        params["layers"].append((
            n((d, 3 * d)),                                        # to_qkv (no bias)
            n((d, d)),                                            # to_out weight
            n((1, d), 0.02),                                      # to_out bias
            jnp.ones((1, d), jnp.float32) + n((1, d), 0.02),      # attn_norm gamma
            n((1, d), 0.02),                                      # attn_norm beta
            n((d, 4 * d)),                                        # ffpn_dense_1 (no bias)
            n((4 * d, d)),                                        # ffpn_dense_2 (no bias)
            jnp.ones((1, d), jnp.float32) + n((1, d), 0.02),      # ffpn_norm gamma
            n((1, d), 0.02),                                      # ffpn_norm beta
        ))
        layer_cfgs.append((num_head, attn_dim))                   # (heads, dim_head)
        dim = d
    params["head"] = (
        n((dim, 512)), n((1, 512), 0.02),
        n((512, 256)), n((1, 256), 0.02),
        n((256, num_class)), n((1, num_class), 0.02),
    )
    return params, tuple(layer_cfgs)


def cnn_feature_transformer_2d(x, params, *, layer_cfgs):
    # feature_model(x)[-1]
    feat = conv2d_stride_pallas(x, params["conv_w"], params["conv_b"],
                                stride=4, padding=1)
    # PixelShuffle(2) + 'b c h w -> b (h w) c' (single composed permutation)
    tokens = feat_nhwc_to_tokens(feat, 2)
    B, N, C = tokens.shape
    # PositionalEncoding quirk of the module: pe[:B] is (B, d_model, 1) which
    # broadcasts against (B, N, C) only when N == d_model (and B <= max_len).
    assert N == params["pe"].shape[1] and B <= params["pe"].shape[0]
    pe_col = params["pe"][:B].reshape(B * N, 1)   # lane-splat column, no (B,N,C) bcast
    # Fused PosEnc + Transformer stack + mean-pool MLP head (one pallas_call).
    return pallas_posenc_transformer_head(tokens, pe_col, params["layers"],
                                          layer_cfgs, params["head"])


# ----------------------------------------------------------------------------
# Pure-JAX f32 reference (for correctness check)
# ----------------------------------------------------------------------------
def _layer_norm(x, g, b, eps=1e-6):
    mu = jnp.mean(x, axis=-1, keepdims=True)
    var = jnp.mean(jnp.square(x - mu), axis=-1, keepdims=True)
    return (x - mu) / jnp.sqrt(var + eps) * g + b


def reference_forward(x, params, layer_cfgs):
    feat = jax.lax.conv_general_dilated(
        x, params["conv_w"], (4, 4), ((1, 1), (1, 1)),
        dimension_numbers=("NCHW", "OIHW", "NCHW"))
    feat = feat + params["conv_b"][None, :, None, None]
    feat = pixel_shuffle(feat, 2)
    B, C, H2, W2 = feat.shape
    t = feat.transpose(0, 2, 3, 1).reshape(B, H2 * W2, C)
    t = t + params["pe"][:B][:, :, None]
    for (heads, dh), w in zip(layer_cfgs, params["layers"]):
        wqkv, wo, bo, g1, b1, wf1, wf2, g2, b2 = w
        Cd = heads * dh
        qkv = t @ wqkv
        split = lambda z: z.reshape(B, -1, heads, dh).transpose(0, 2, 1, 3)
        q, k, v = (split(qkv[..., :Cd]), split(qkv[..., Cd:2 * Cd]),
                   split(qkv[..., 2 * Cd:]))
        dots = jnp.einsum("bhnd,bhmd->bhnm", q, k) * (dh ** (-0.5))
        attn = jax.nn.softmax(dots, axis=-1)
        o = jnp.einsum("bhnm,bhmd->bhnd", attn, v)
        o = o.transpose(0, 2, 1, 3).reshape(B, -1, Cd)
        o = o @ wo + bo
        ln1 = _layer_norm(t + o, g1, b1)
        ff = (ln1 @ wf1) @ wf2
        t = _layer_norm(ln1 + ff, g2, b2)
    w1, b1h, w2, b2h, w3, b3h = params["head"]
    pooled = t.mean(axis=1)
    h = jnp.clip(pooled @ w1 + b1h, 0.0, 6.0)
    h = jnp.clip(h @ w2 + b2h, 0.0, 6.0)
    return jax.nn.sigmoid(h @ w3 + b3h)


# ----------------------------------------------------------------------------
if __name__ == "__main__":
    B, Cin, H, W = 2, 4, 16, 16
    attn_dim_list = [16]
    num_head_list = [4]
    num_class = 8
    inner_dim = attn_dim_list[0] * num_head_list[0]            # 64
    feat_ch = 4 * inner_dim                                    # PixelShuffle(2) -> inner_dim channels

    key = jax.random.PRNGKey(0)
    k_x, k_p = jax.random.split(key)
    x = jax.random.normal(k_x, (B, Cin, H, W), jnp.float32)
    params, layer_cfgs = init_params(k_p, in_ch=Cin, feat_ch=feat_ch,
                                     attn_dim_list=attn_dim_list,
                                     num_head_list=num_head_list,
                                     num_class=num_class)

    fwd = jax.jit(functools.partial(cnn_feature_transformer_2d,
                                    layer_cfgs=layer_cfgs))
    out = fwd(x, params)
    out = jax.block_until_ready(out)
    assert out.shape == (B, num_class) and out.dtype == jnp.float32

    ref = reference_forward(x, params, layer_cfgs)
    # Tolerance covers bf16 matmul inputs (f32 accumulation) + approx reciprocal.
    np.testing.assert_allclose(np.asarray(out), np.asarray(ref),
                               rtol=2e-2, atol=5e-3)
    print("KERNEL_OK")
</pallas_src>

<mosaic_0001>
module attributes {stable_mosaic.version = 11 : i64} {
  func.func @_matmul_bias_kernel(%arg0: i32, %arg1: memref<32x40xf32, #tpu.memory_space<vmem>>, %arg2: memref<40x256xf32, #tpu.memory_space<vmem>>, %arg3: memref<1x256xf32, #tpu.memory_space<vmem>>, %arg4: memref<32x256xf32, #tpu.memory_space<vmem>>) attributes {dimension_semantics = [#tpu.dimension_semantics<arbitrary>], iteration_bounds = array<i64: 1>, scalar_prefetch = 0 : i64, scratch_operands = 0 : i64, tpu.core_type = #tpu.core_type<tc>, window_params = [{pipeline_mode = #tpu.pipeline_mode<synchronous>, transform_indices = @transform_0, window_bounds = array<i64: 32, 40>}, {pipeline_mode = #tpu.pipeline_mode<synchronous>, transform_indices = @transform_1, window_bounds = array<i64: 40, 256>}, {pipeline_mode = #tpu.pipeline_mode<synchronous>, transform_indices = @transform_2, window_bounds = array<i64: 1, 256>}, {pipeline_mode = #tpu.pipeline_mode<synchronous>, transform_indices = @transform_3, window_bounds = array<i64: 32, 256>}]} {
    %c0 = arith.constant 0 : index
    %c0_0 = arith.constant 0 : index
    %0 = vector.load %arg1[%c0, %c0_0] : memref<32x40xf32, #tpu.memory_space<vmem>>, vector<32x40xf32>
    %c0_1 = arith.constant 0 : index
    %c0_2 = arith.constant 0 : index
    %1 = vector.load %arg2[%c0_1, %c0_2] : memref<40x256xf32, #tpu.memory_space<vmem>>, vector<40x256xf32>
    %cst = arith.constant dense<0.000000e+00> : vector<32x256xf32>
    %2 = tpu.matmul %0, %1, %cst {dimension_numbers = #tpu.dot_dimension_numbers<[1], [0], [0], [1], [0, 0, 1, 1], [], []>} : vector<32x40xf32>, vector<40x256xf32>, vector<32x256xf32> -> vector<32x256xf32>
    %c0_3 = arith.constant 0 : index
    %c0_4 = arith.constant 0 : index
    %3 = vector.load %arg3[%c0_3, %c0_4] : memref<1x256xf32, #tpu.memory_space<vmem>>, vector<1x256xf32>
    %4 = vector.broadcast %3 : vector<1x256xf32> to vector<32x256xf32>
    %5 = arith.addf %2, %4 : vector<32x256xf32>
    %c0_5 = arith.constant 0 : index
    %c0_6 = arith.constant 0 : index
    %6 = vector.load %arg4[%c0_5, %c0_6] : memref<32x256xf32, #tpu.memory_space<vmem>>, vector<32x256xf32>
    tpu.vector_store %arg4[%c0_5, %c0_6], %5 {strides = array<i32>} : memref<32x256xf32, #tpu.memory_space<vmem>>, vector<32x256xf32>,
    return
  }
  func.func @transform_0(%arg0: i32) -> (i32, i32) {
    %c0_i32 = arith.constant 0 : i32
    %c0_i32_0 = arith.constant 0 : i32
    %c0_i32_1 = arith.constant 0 : i32
    return %c0_i32, %c0_i32_0 : i32, i32
  }
  func.func @transform_1(%arg0: i32) -> (i32, i32) {
    %c0_i32 = arith.constant 0 : i32
    %c0_i32_0 = arith.constant 0 : i32
    %c0_i32_1 = arith.constant 0 : i32
    return %c0_i32, %c0_i32_0 : i32, i32
  }
  func.func @transform_2(%arg0: i32) -> (i32, i32) {
    %c0_i32 = arith.constant 0 : i32
    %c0_i32_0 = arith.constant 0 : i32
    %c0_i32_1 = arith.constant 0 : i32
    return %c0_i32, %c0_i32_0 : i32, i32
  }
  func.func @transform_3(%arg0: i32) -> (i32, i32) {
    %c0_i32 = arith.constant 0 : i32
    %c0_i32_0 = arith.constant 0 : i32
    %c0_i32_1 = arith.constant 0 : i32
    return %c0_i32, %c0_i32_0 : i32, i32
  }
}

module attributes {stable_mosaic.version = 11 : i64} {
  func.func @_fused_kernel(%arg0: i32, %arg1: memref<128x64xf32, #tpu.memory_space<vmem>>, %arg2: memref<128x1xf32, #tpu.memory_space<vmem>>, %arg3: memref<4x64x16xbf16, #tpu.memory_space<vmem>>, %arg4: memref<4x64x16xbf16, #tpu.memory_space<vmem>>, %arg5: memref<4x64x16xbf16, #tpu.memory_space<vmem>>, %arg6: memref<4x16x64xbf16, #tpu.memory_space<vmem>>, %arg7: memref<1x64xf32, #tpu.memory_space<vmem>>, %arg8: memref<1x64xf32, #tpu.memory_space<vmem>>, %arg9: memref<1x64xf32, #tpu.memory_space<vmem>>, %arg10: memref<64x256xbf16, #tpu.memory_space<vmem>>, %arg11: memref<256x64xbf16, #tpu.memory_space<vmem>>, %arg12: memref<1x64xf32, #tpu.memory_space<vmem>>, %arg13: memref<1x64xf32, #tpu.memory_space<vmem>>, %arg14: memref<64x512xbf16, #tpu.memory_space<vmem>>, %arg15: memref<1x512xf32, #tpu.memory_space<vmem>>, %arg16: memref<512x256xbf16, #tpu.memory_space<vmem>>, %arg17: memref<1x256xf32, #tpu.memory_space<vmem>>, %arg18: memref<256x128xbf16, #tpu.memory_space<vmem>>, %arg19: memref<1x128xf32, #tpu.memory_space<vmem>>, %arg20: memref<2x128xf32, #tpu.memory_space<vmem>>) attributes {dimension_semantics = [#tpu.dimension_semantics<arbitrary>], iteration_bounds = array<i64: 1>, scalar_prefetch = 0 : i64, scratch_operands = 0 : i64, tpu.core_type = #tpu.core_type<tc>, window_params = [{pipeline_mode = #tpu.pipeline_mode<synchronous>, transform_indices = @transform_0, window_bounds = array<i64: 128, 64>}, {pipeline_mode = #tpu.pipeline_mode<synchronous>, transform_indices = @transform_1, window_bounds = array<i64: 128, 1>}, {pipeline_mode = #tpu.pipeline_mode<synchronous>, transform_indices = @transform_2, window_bounds = array<i64: 4, 64, 16>}, {pipeline_mode = #tpu.pipeline_mode<synchronous>, transform_indices = @transform_3, window_bounds = array<i64: 4, 64, 16>}, {pipeline_mode = #tpu.pipeline_mode<synchronous>, transform_indices = @transform_4, window_bounds = array<i64: 4, 64, 16>}, {pipeline_mode = #tpu.pipeline_mode<synchronous>, transform_indices = @transform_5, window_bounds = array<i64: 4, 16, 64>}, {pipeline_mode = #tpu.pipeline_mode<synchronous>, transform_indices = @transform_6, window_bounds = array<i64: 1, 64>}, {pipeline_mode = #tpu.pipeline_mode<synchronous>, transform_indices = @transform_7, window_bounds = array<i64: 1, 64>}, {pipeline_mode = #tpu.pipeline_mode<synchronous>, transform_indices = @transform_8, window_bounds = array<i64: 1, 64>}, {pipeline_mode = #tpu.pipeline_mode<synchronous>, transform_indices = @transform_9, window_bounds = array<i64: 64, 256>}, {pipeline_mode = #tpu.pipeline_mode<synchronous>, transform_indices = @transform_10, window_bounds = array<i64: 256, 64>}, {pipeline_mode = #tpu.pipeline_mode<synchronous>, transform_indices = @transform_11, window_bounds = array<i64: 1, 64>}, {pipeline_mode = #tpu.pipeline_mode<synchronous>, transform_indices = @transform_12, window_bounds = array<i64: 1, 64>}, {pipeline_mode = #tpu.pipeline_mode<synchronous>, transform_indices = @transform_13, window_bounds = array<i64: 64, 512>}, {pipeline_mode = #tpu.pipeline_mode<synchronous>, transform_indices = @transform_14, window_bounds = array<i64: 1, 512>}, {pipeline_mode = #tpu.pipeline_mode<synchronous>, transform_indices = @transform_15, window_bounds = array<i64: 512, 256>}, {pipeline_mode = #tpu.pipeline_mode<synchronous>, transform_indices = @transform_16, window_bounds = array<i64: 1, 256>}, {pipeline_mode = #tpu.pipeline_mode<synchronous>, transform_indices = @transform_17, window_bounds = array<i64: 256, 128>}, {pipeline_mode = #tpu.pipeline_mode<synchronous>, transform_indices = @transform_18, window_bounds = array<i64: 1, 128>}, {pipeline_mode = #tpu.pipeline_mode<synchronous>, transform_indices = @transform_19, window_bounds = array<i64: 2, 128>}]} {
    %c0 = arith.constant 0 : index
    %c0_0 = arith.constant 0 : index
    %0 = vector.load %arg1[%c0, %c0_0] : memref<128x64xf32, #tpu.memory_space<vmem>>, vector<128x64xf32>
    %c0_1 = arith.constant 0 : index
    %c0_2 = arith.constant 0 : index
    %1 = vector.load %arg2[%c0_1, %c0_2] : memref<128x1xf32, #tpu.memory_space<vmem>>, vector<128x1xf32>
    %2 = vector.broadcast %1 : vector<128x1xf32> to vector<128x64xf32>
    %3 = arith.addf %0, %2 : vector<128x64xf32>
    %4 = arith.truncf %3 : vector<128x64xf32> to vector<128x64xbf16>
    %cst = arith.constant 0.000000e+00 : f32
    %5 = vector.broadcast %cst : f32 to vector<128x64xf32>
    %c0_3 = arith.constant 0 : index
    %c0_4 = arith.constant 0 : index
    %c0_5 = arith.constant 0 : index
    %6 = vector.load %arg3[%c0_3, %c0_4, %c0_5] : memref<4x64x16xbf16, #tpu.memory_space<vmem>>, vector<1x64x16xbf16>
    %7 = vector.shape_cast %6 : vector<1x64x16xbf16> to vector<64x16xbf16>
    %cst_6 = arith.constant dense<0.000000e+00> : vector<128x16xf32>
    %8 = tpu.matmul %4, %7, %cst_6 {dimension_numbers = #tpu.dot_dimension_numbers<[1], [0], [0], [1], [0, 0, 1, 1], [], []>} : vector<128x64xbf16>, vector<64x16xbf16>, vector<128x16xf32> -> vector<128x16xf32>
    %c0_7 = arith.constant 0 : index
    %c0_8 = arith.constant 0 : index
    %c0_9 = arith.constant 0 : index
    %9 = vector.load %arg4[%c0_7, %c0_8, %c0_9] : memref<4x64x16xbf16, #tpu.memory_space<vmem>>, vector<1x64x16xbf16>
    %10 = vector.shape_cast %9 : vector<1x64x16xbf16> to vector<64x16xbf16>
    %cst_10 = arith.constant dense<0.000000e+00> : vector<128x16xf32>
    %11 = tpu.matmul %4, %10, %cst_10 {dimension_numbers = #tpu.dot_dimension_numbers<[1], [0], [0], [1], [0, 0, 1, 1], [], []>} : vector<128x64xbf16>, vector<64x16xbf16>, vector<128x16xf32> -> vector<128x16xf32>
    %c0_11 = arith.constant 0 : index
    %c0_12 = arith.constant 0 : index
    %c0_13 = arith.constant 0 : index
    %12 = vector.load %arg5[%c0_11, %c0_12, %c0_13] : memref<4x64x16xbf16, #tpu.memory_space<vmem>>, vector<1x64x16xbf16>
    %13 = vector.shape_cast %12 : vector<1x64x16xbf16> to vector<64x16xbf16>
    %cst_14 = arith.constant dense<0.000000e+00> : vector<128x16xf32>
    %14 = tpu.matmul %4, %13, %cst_14 {dimension_numbers = #tpu.dot_dimension_numbers<[1], [0], [0], [1], [0, 0, 1, 1], [], []>} : vector<128x64xbf16>, vector<64x16xbf16>, vector<128x16xf32> -> vector<128x16xf32>
    %15 = vector.shape_cast %8 : vector<128x16xf32> to vector<2x64x16xf32>
    %16 = arith.truncf %15 : vector<2x64x16xf32> to vector<2x64x16xbf16>
    %17 = vector.shape_cast %11 : vector<128x16xf32> to vector<2x64x16xf32>
    %18 = arith.truncf %17 : vector<2x64x16xf32> to vector<2x64x16xbf16>
    %19 = vector.shape_cast %14 : vector<128x16xf32> to vector<2x64x16xf32>
    %20 = arith.truncf %19 : vector<2x64x16xf32> to vector<2x64x16xbf16>
    "tpu.trace_start"() <{level = 10 : i32, message = "bnd,bmd->bnm"}> : () -> ()
    %cst_15 = arith.constant dense<0.000000e+00> : vector<2x64x64xf32>
    %21 = tpu.matmul %16, %18, %cst_15 {dimension_numbers = #tpu.dot_dimension_numbers<[2], [2], [1], [1], [0, 0, 0, 1, 1, 1], [0], [0]>} : vector<2x64x16xbf16>, vector<2x64x16xbf16>, vector<2x64x64xf32> -> vector<2x64x64xf32>
    "tpu.trace_stop"() : () -> ()
    %cst_16 = arith.constant dense<0xFF800000> : vector<2x64xf32>
    %22 = vector.multi_reduction <maximumf>, %21, %cst_16 [2] : vector<2x64x64xf32> to vector<2x64xf32>
    %23 = vector.shape_cast %22 : vector<2x64xf32> to vector<2x64x1xf32>
    %24 = vector.broadcast %23 : vector<2x64x1xf32> to vector<2x64x64xf32>
    %25 = arith.subf %21, %24 : vector<2x64x64xf32>
    %26 = math.exp %25 : vector<2x64x64xf32>
    %cst_17 = arith.constant dense<0.000000e+00> : vector<2x64xf32>
    %27 = vector.multi_reduction <add>, %26, %cst_17 [2] : vector<2x64x64xf32> to vector<2x64xf32>
    %28 = vector.shape_cast %27 : vector<2x64xf32> to vector<2x64x1xf32>
    %29 = tpu.reciprocal %28 {approx = true} : vector<2x64x1xf32> -> vector<2x64x1xf32>
    %30 = vector.broadcast %29 : vector<2x64x1xf32> to vector<2x64x64xf32>
    %31 = arith.mulf %26, %30 : vector<2x64x64xf32>
    %32 = arith.truncf %31 : vector<2x64x64xf32> to vector<2x64x64xbf16>
    "tpu.trace_start"() <{level = 10 : i32, message = "bnm,bmd->bnd"}> : () -> ()
    %cst_18 = arith.constant dense<0.000000e+00> : vector<2x64x16xf32>
    %33 = tpu.matmul %32, %20, %cst_18 {dimension_numbers = #tpu.dot_dimension_numbers<[2], [1], [1], [2], [0, 0, 0, 1, 1, 2], [0], [0]>} : vector<2x64x64xbf16>, vector<2x64x16xbf16>, vector<2x64x16xf32> -> vector<2x64x16xf32>
    "tpu.trace_stop"() : () -> ()
    %34 = vector.shape_cast %33 : vector<2x64x16xf32> to vector<128x16xf32>
    %35 = arith.truncf %34 : vector<128x16xf32> to vector<128x16xbf16>
    %c0_19 = arith.constant 0 : index
    %c0_20 = arith.constant 0 : index
    %c0_21 = arith.constant 0 : index
    %36 = vector.load %arg6[%c0_19, %c0_20, %c0_21] : memref<4x16x64xbf16, #tpu.memory_space<vmem>>, vector<1x16x64xbf16>
    %37 = vector.shape_cast %36 : vector<1x16x64xbf16> to vector<16x64xbf16>
    %cst_22 = arith.constant dense<0.000000e+00> : vector<128x64xf32>
    %38 = tpu.matmul %35, %37, %cst_22 {dimension_numbers = #tpu.dot_dimension_numbers<[1], [0], [0], [1], [0, 0, 1, 1], [], []>} : vector<128x16xbf16>, vector<16x64xbf16>, vector<128x64xf32> -> vector<128x64xf32>
    %39 = arith.addf %5, %38 : vector<128x64xf32>
    %c1 = arith.constant 1 : index
    %c0_23 = arith.constant 0 : index
    %c0_24 = arith.constant 0 : index
    %40 = vector.load %arg3[%c1, %c0_23, %c0_24] : memref<4x64x16xbf16, #tpu.memory_space<vmem>>, vector<1x64x16xbf16>
    %41 = vector.shape_cast %40 : vector<1x64x16xbf16> to vector<64x16xbf16>
    %cst_25 = arith.constant dense<0.000000e+00> : vector<128x16xf32>
    %42 = tpu.matmul %4, %41, %cst_25 {dimension_numbers = #tpu.dot_dimension_numbers<[1], [0], [0], [1], [0, 0, 1, 1], [], []>} : vector<128x64xbf16>, vector<64x16xbf16>, vector<128x16xf32> -> vector<128x16xf32>
    %c1_26 = arith.constant 1 : index
    %c0_27 = arith.constant 0 : index
    %c0_28 = arith.constant 0 : index
    %43 = vector.load %arg4[%c1_26, %c0_27, %c0_28] : memref<4x64x16xbf16, #tpu.memory_space<vmem>>, vector<1x64x16xbf16>
    %44 = vector.shape_cast %43 : vector<1x64x16xbf16> to vector<64x16xbf16>
    %cst_29 = arith.constant dense<0.000000e+00> : vector<128x16xf32>
    %45 = tpu.matmul %4, %44, %cst_29 {dimension_numbers = #tpu.dot_dimension_numbers<[1], [0], [0], [1], [0, 0, 1, 1], [], []>} : vector<128x64xbf16>, vector<64x16xbf16>, vector<128x16xf32> -> vector<128x16xf32>
    %c1_30 = arith.constant 1 : index
    %c0_31 = arith.constant 0 : index
    %c0_32 = arith.constant 0 : index
    %46 = vector.load %arg5[%c1_30, %c0_31, %c0_32] : memref<4x64x16xbf16, #tpu.memory_space<vmem>>, vector<1x64x16xbf16>
    %47 = vector.shape_cast %46 : vector<1x64x16xbf16> to vector<64x16xbf16>
    %cst_33 = arith.constant dense<0.000000e+00> : vector<128x16xf32>
    %48 = tpu.matmul %4, %47, %cst_33 {dimension_numbers = #tpu.dot_dimension_numbers<[1], [0], [0], [1], [0, 0, 1, 1], [], []>} : vector<128x64xbf16>, vector<64x16xbf16>, vector<128x16xf32> -> vector<128x16xf32>
    %49 = vector.shape_cast %42 : vector<128x16xf32> to vector<2x64x16xf32>
    %50 = arith.truncf %49 : vector<2x64x16xf32> to vector<2x64x16xbf16>
    %51 = vector.shape_cast %45 : vector<128x16xf32> to vector<2x64x16xf32>
    %52 = arith.truncf %51 : vector<2x64x16xf32> to vector<2x64x16xbf16>
    %53 = vector.shape_cast %48 : vector<128x16xf32> to vector<2x64x16xf32>
    %54 = arith.truncf %53 : vector<2x64x16xf32> to vector<2x64x16xbf16>
    "tpu.trace_start"() <{level = 10 : i32, message = "bnd,bmd->bnm"}> : () -> ()
    %cst_34 = arith.constant dense<0.000000e+00> : vector<2x64x64xf32>
    %55 = tpu.matmul %50, %52, %cst_34 {dimension_numbers = #tpu.dot_dimension_numbers<[2], [2], [1], [1], [0, 0, 0, 1, 1, 1], [0], [0]>} : vector<2x64x16xbf16>, vector<2x64x16xbf16>, vector<2x64x64xf32> -> vector<2x64x64xf32>
    "tpu.trace_stop"() : () -> ()
    %cst_35 = arith.constant dense<0xFF800000> : vector<2x64xf32>
    %56 = vector.multi_reduction <maximumf>, %55, %cst_35 [2] : vector<2x64x64xf32> to vector<2x64xf32>
    %57 = vector.shape_cast %56 : vector<2x64xf32> to vector<2x64x1xf32>
    %58 = vector.broadcast %57 : vector<2x64x1xf32> to vector<2x64x64xf32>
    %59 = arith.subf %55, %58 : vector<2x64x64xf32>
    %60 = math.exp %59 : vector<2x64x64xf32>
    %cst_36 = arith.constant dense<0.000000e+00> : vector<2x64xf32>
    %61 = vector.multi_reduction <add>, %60, %cst_36 [2] : vector<2x64x64xf32> to vector<2x64xf32>
    %62 = vector.shape_cast %61 : vector<2x64xf32> to vector<2x64x1xf32>
    %63 = tpu.reciprocal %62 {approx = true} : vector<2x64x1xf32> -> vector<2x64x1xf32>
    %64 = vector.broadcast %63 : vector<2x64x1xf32> to vector<2x64x64xf32>
    %65 = arith.mulf %60, %64 : vector<2x64x64xf32>
    %66 = arith.truncf %65 : vector<2x64x64xf32> to vector<2x64x64xbf16>
    "tpu.trace_start"() <{level = 10 : i32, message = "bnm,bmd->bnd"}> : () -> ()
    %cst_37 = arith.constant dense<0.000000e+00> : vector<2x64x16xf32>
    %67 = tpu.matmul %66, %54, %cst_37 {dimension_numbers = #tpu.dot_dimension_numbers<[2], [1], [1], [2], [0, 0, 0, 1, 1, 2], [0], [0]>} : vector<2x64x64xbf16>, vector<2x64x16xbf16>, vector<2x64x16xf32> -> vector<2x64x16xf32>
    "tpu.trace_stop"() : () -> ()
    %68 = vector.shape_cast %67 : vector<2x64x16xf32> to vector<128x16xf32>
    %69 = arith.truncf %68 : vector<128x16xf32> to vector<128x16xbf16>
    %c1_38 = arith.constant 1 : index
    %c0_39 = arith.constant 0 : index
    %c0_40 = arith.constant 0 : index
    %70 = vector.load %arg6[%c1_38, %c0_39, %c0_40] : memref<4x16x64xbf16, #tpu.memory_space<vmem>>, vector<1x16x64xbf16>
    %71 = vector.shape_cast %70 : vector<1x16x64xbf16> to vector<16x64xbf16>
    %cst_41 = arith.constant dense<0.000000e+00> : vector<128x64xf32>
    %72 = tpu.matmul %69, %71, %cst_41 {dimension_numbers = #tpu.dot_dimension_numbers<[1], [0], [0], [1], [0, 0, 1, 1], [], []>} : vector<128x16xbf16>, vector<16x64xbf16>, vector<128x64xf32> -> vector<128x64xf32>
    %73 = arith.addf %39, %72 : vector<128x64xf32>
    %c2 = arith.constant 2 : index
    %c0_42 = arith.constant 0 : index
    %c0_43 = arith.constant 0 : index
    %74 = vector.load %arg3[%c2, %c0_42, %c0_43] : memref<4x64x16xbf16, #tpu.memory_space<vmem>>, vector<1x64x16xbf16>
    %75 = vector.shape_cast %74 : vector<1x64x16xbf16> to vector<64x16xbf16>
    %cst_44 = arith.constant dense<0.000000e+00> : vector<128x16xf32>
    %76 = tpu.matmul %4, %75, %cst_44 {dimension_numbers = #tpu.dot_dimension_numbers<[1], [0], [0], [1], [0, 0, 1, 1], [], []>} : vector<128x64xbf16>, vector<64x16xbf16>, vector<128x16xf32> -> vector<128x16xf32>
    %c2_45 = arith.constant 2 : index
    %c0_46 = arith.constant 0 : index
    %c0_47 = arith.constant 0 : index
    %77 = vector.load %arg4[%c2_45, %c0_46, %c0_47] : memref<4x64x16xbf16, #tpu.memory_space<vmem>>, vector<1x64x16xbf16>
    %78 = vector.shape_cast %77 : vector<1x64x16xbf16> to vector<64x16xbf16>
    %cst_48 = arith.constant dense<0.000000e+00> : vector<128x16xf32>
    %79 = tpu.matmul %4, %78, %cst_48 {dimension_numbers = #tpu.dot_dimension_numbers<[1], [0], [0], [1], [0, 0, 1, 1], [], []>} : vector<128x64xbf16>, vector<64x16xbf16>, vector<128x16xf32> -> vector<128x16xf32>
    %c2_49 = arith.constant 2 : index
    %c0_50 = arith.constant 0 : index
    %c0_51 = arith.constant 0 : index
    %80 = vector.load %arg5[%c2_49, %c0_50, %c0_51] : memref<4x64x16xbf16, #tpu.memory_space<vmem>>, vector<1x64x16xbf16>
    %81 = vector.shape_cast %80 : vector<1x64x16xbf16> to vector<64x16xbf16>
    %cst_52 = arith.constant dense<0.000000e+00> : vector<128x16xf32>
    %82 = tpu.matmul %4, %81, %cst_52 {dimension_numbers = #tpu.dot_dimension_numbers<[1], [0], [0], [1], [0, 0, 1, 1], [], []>} : vector<128x64xbf16>, vector<64x16xbf16>, vector<128x16xf32> -> vector<128x16xf32>
    %83 = vector.shape_cast %76 : vector<128x16xf32> to vector<2x64x16xf32>
    %84 = arith.truncf %83 : vector<2x64x16xf32> to vector<2x64x16xbf16>
    %85 = vector.shape_cast %79 : vector<128x16xf32> to vector<2x64x16xf32>
    %86 = arith.truncf %85 : vector<2x64x16xf32> to vector<2x64x16xbf16>
    %87 = vector.shape_cast %82 : vector<128x16xf32> to vector<2x64x16xf32>
    %88 = arith.truncf %87 : vector<2x64x16xf32> to vector<2x64x16xbf16>
    "tpu.trace_start"() <{level = 10 : i32, message = "bnd,bmd->bnm"}> : () -> ()
    %cst_53 = arith.constant dense<0.000000e+00> : vector<2x64x64xf32>
    %89 = tpu.matmul %84, %86, %cst_53 {dimension_numbers = #tpu.dot_dimension_numbers<[2], [2], [1], [1], [0, 0, 0, 1, 1, 1], [0], [0]>} : vector<2x64x16xbf16>, vector<2x64x16xbf16>, vector<2x64x64xf32> -> vector<2x64x64xf32>
    "tpu.trace_stop"() : () -> ()
    %cst_54 = arith.constant dense<0xFF800000> : vector<2x64xf32>
    %90 = vector.multi_reduction <maximumf>, %89, %cst_54 [2] : vector<2x64x64xf32> to vector<2x64xf32>
    %91 = vector.shape_cast %90 : vector<2x64xf32> to vector<2x64x1xf32>
    %92 = vector.broadcast %91 : vector<2x64x1xf32> to vector<2x64x64xf32>
    %93 = arith.subf %89, %92 : vector<2x64x64xf32>
    %94 = math.exp %93 : vector<2x64x64xf32>
    %cst_55 = arith.constant dense<0.000000e+00> : vector<2x64xf32>
    %95 = vector.multi_reduction <add>, %94, %cst_55 [2] : vector<2x64x64xf32> to vector<2x64xf32>
    %96 = vector.shape_cast %95 : vector<2x64xf32> to vector<2x64x1xf32>
    %97 = tpu.reciprocal %96 {approx = true} : vector<2x64x1xf32> -> vector<2x64x1xf32>
    %98 = vector.broadcast %97 : vector<2x64x1xf32> to vector<2x64x64xf32>
    %99 = arith.mulf %94, %98 : vector<2x64x64xf32>
    %100 = arith.truncf %99 : vector<2x64x64xf32> to vector<2x64x64xbf16>
    "tpu.trace_start"() <{level = 10 : i32, message = "bnm,bmd->bnd"}> : () -> ()
    %cst_56 = arith.constant dense<0.000000e+00> : vector<2x64x16xf32>
    %101 = tpu.matmul %100, %88, %cst_56 {dimension_numbers = #tpu.dot_dimension_numbers<[2], [1], [1], [2], [0, 0, 0, 1, 1, 2], [0], [0]>} : vector<2x64x64xbf16>, vector<2x64x16xbf16>, vector<2x64x16xf32> -> vector<2x64x16xf32>
    "tpu.trace_stop"() : () -> ()
    %102 = vector.shape_cast %101 : vector<2x64x16xf32> to vector<128x16xf32>
    %103 = arith.truncf %102 : vector<128x16xf32> to vector<128x16xbf16>
    %c2_57 = arith.constant 2 : index
    %c0_58 = arith.constant 0 : index
    %c0_59 = arith.constant 0 : index
    %104 = vector.load %arg6[%c2_57, %c0_58, %c0_59] : memref<4x16x64xbf16, #tpu.memory_space<vmem>>, vector<1x16x64xbf16>
    %105 = vector.shape_cast %104 : vector<1x16x64xbf16> to vector<16x64xbf16>
    %cst_60 = arith.constant dense<0.000000e+00> : vector<128x64xf32>
    %106 = tpu.matmul %103, %105, %cst_60 {dimension_numbers = #tpu.dot_dimension_numbers<[1], [0], [0], [1], [0, 0, 1, 1], [], []>} : vector<128x16xbf16>, vector<16x64xbf16>, vector<128x64xf32> -> vector<128x64xf32>
    %107 = arith.addf %73, %106 : vector<128x64xf32>
    %c3 = arith.constant 3 : index
    %c0_61 = arith.constant 0 : index
    %c0_62 = arith.constant 0 : index
    %108 = vector.load %arg3[%c3, %c0_61, %c0_62] : memref<4x64x16xbf16, #tpu.memory_space<vmem>>, vector<1x64x16xbf16>
    %109 = vector.shape_cast %108 : vector<1x64x16xbf16> to vector<64x16xbf16>
    %cst_63 = arith.constant dense<0.000000e+00> : vector<128x16xf32>
    %110 = tpu.matmul %4, %109, %cst_63 {dimension_numbers = #tpu.dot_dimension_numbers<[1], [0], [0], [1], [0, 0, 1, 1], [], []>} : vector<128x64xbf16>, vector<64x16xbf16>, vector<128x16xf32> -> vector<128x16xf32>
    %c3_64 = arith.constant 3 : index
    %c0_65 = arith.constant 0 : index
    %c0_66 = arith.constant 0 : index
    %111 = vector.load %arg4[%c3_64, %c0_65, %c0_66] : memref<4x64x16xbf16, #tpu.memory_space<vmem>>, vector<1x64x16xbf16>
    %112 = vector.shape_cast %111 : vector<1x64x16xbf16> to vector<64x16xbf16>
    %cst_67 = arith.constant dense<0.000000e+00> : vector<128x16xf32>
    %113 = tpu.matmul %4, %112, %cst_67 {dimension_numbers = #tpu.dot_dimension_numbers<[1], [0], [0], [1], [0, 0, 1, 1], [], []>} : vector<128x64xbf16>, vector<64x16xbf16>, vector<128x16xf32> -> vector<128x16xf32>
    %c3_68 = arith.constant 3 : index
    %c0_69 = arith.constant 0 : index
    %c0_70 = arith.constant 0 : index
    %114 = vector.load %arg5[%c3_68, %c0_69, %c0_70] : memref<4x64x16xbf16, #tpu.memory_space<vmem>>, vector<1x64x16xbf16>
    %115 = vector.shape_cast %114 : vector<1x64x16xbf16> to vector<64x16xbf16>
    %cst_71 = arith.constant dense<0.000000e+00> : vector<128x16xf32>
    %116 = tpu.matmul %4, %115, %cst_71 {dimension_numbers = #tpu.dot_dimension_numbers<[1], [0], [0], [1], [0, 0, 1, 1], [], []>} : vector<128x64xbf16>, vector<64x16xbf16>, vector<128x16xf32> -> vector<128x16xf32>
    %117 = vector.shape_cast %110 : vector<128x16xf32> to vector<2x64x16xf32>
    %118 = arith.truncf %117 : vector<2x64x16xf32> to vector<2x64x16xbf16>
    %119 = vector.shape_cast %113 : vector<128x16xf32> to vector<2x64x16xf32>
    %120 = arith.truncf %119 : vector<2x64x16xf32> to vector<2x64x16xbf16>
    %121 = vector.shape_cast %116 : vector<128x16xf32> to vector<2x64x16xf32>
    %122 = arith.truncf %121 : vector<2x64x16xf32> to vector<2x64x16xbf16>
    "tpu.trace_start"() <{level = 10 : i32, message = "bnd,bmd->bnm"}> : () -> ()
    %cst_72 = arith.constant dense<0.000000e+00> : vector<2x64x64xf32>
    %123 = tpu.matmul %118, %120, %cst_72 {dimension_numbers = #tpu.dot_dimension_numbers<[2], [2], [1], [1], [0, 0, 0, 1, 1, 1], [0], [0]>} : vector<2x64x16xbf16>, vector<2x64x16xbf16>, vector<2x64x64xf32> -> vector<2x64x64xf32>
    "tpu.trace_stop"() : () -> ()
    %cst_73 = arith.constant dense<0xFF800000> : vector<2x64xf32>
    %124 = vector.multi_reduction <maximumf>, %123, %cst_73 [2] : vector<2x64x64xf32> to vector<2x64xf32>
    %125 = vector.shape_cast %124 : vector<2x64xf32> to vector<2x64x1xf32>
    %126 = vector.broadcast %125 : vector<2x64x1xf32> to vector<2x64x64xf32>
    %127 = arith.subf %123, %126 : vector<2x64x64xf32>
    %128 = math.exp %127 : vector<2x64x64xf32>
    %cst_74 = arith.constant dense<0.000000e+00> : vector<2x64xf32>
    %129 = vector.multi_reduction <add>, %128, %cst_74 [2] : vector<2x64x64xf32> to vector<2x64xf32>
    %130 = vector.shape_cast %129 : vector<2x64xf32> to vector<2x64x1xf32>
    %131 = tpu.reciprocal %130 {approx = true} : vector<2x64x1xf32> -> vector<2x64x1xf32>
    %132 = vector.broadcast %131 : vector<2x64x1xf32> to vector<2x64x64xf32>
    %133 = arith.mulf %128, %132 : vector<2x64x64xf32>
    %134 = arith.truncf %133 : vector<2x64x64xf32> to vector<2x64x64xbf16>
    "tpu.trace_start"() <{level = 10 : i32, message = "bnm,bmd->bnd"}> : () -> ()
    %cst_75 = arith.constant dense<0.000000e+00> : vector<2x64x16xf32>
    %135 = tpu.matmul %134, %122, %cst_75 {dimension_numbers = #tpu.dot_dimension_numbers<[2], [1], [1], [2], [0, 0, 0, 1, 1, 2], [0], [0]>} : vector<2x64x64xbf16>, vector<2x64x16xbf16>, vector<2x64x16xf32> -> vector<2x64x16xf32>
    "tpu.trace_stop"() : () -> ()
    %136 = vector.shape_cast %135 : vector<2x64x16xf32> to vector<128x16xf32>
    %137 = arith.truncf %136 : vector<128x16xf32> to vector<128x16xbf16>
    %c3_76 = arith.constant 3 : index
    %c0_77 = arith.constant 0 : index
    %c0_78 = arith.constant 0 : index
    %138 = vector.load %arg6[%c3_76, %c0_77, %c0_78] : memref<4x16x64xbf16, #tpu.memory_space<vmem>>, vector<1x16x64xbf16>
    %139 = vector.shape_cast %138 : vector<1x16x64xbf16> to vector<16x64xbf16>
    %cst_79 = arith.constant dense<0.000000e+00> : vector<128x64xf32>
    %140 = tpu.matmul %137, %139, %cst_79 {dimension_numbers = #tpu.dot_dimension_numbers<[1], [0], [0], [1], [0, 0, 1, 1], [], []>} : vector<128x16xbf16>, vector<16x64xbf16>, vector<128x64xf32> -> vector<128x64xf32>
    %141 = arith.addf %107, %140 : vector<128x64xf32>
    %c0_80 = arith.constant 0 : index
    %c0_81 = arith.constant 0 : index
    %142 = vector.load %arg7[%c0_80, %c0_81] : memref<1x64xf32, #tpu.memory_space<vmem>>, vector<1x64xf32>
    %143 = vector.broadcast %142 : vector<1x64xf32> to vector<128x64xf32>
    %144 = arith.addf %141, %143 : vector<128x64xf32>
    %145 = arith.addf %3, %144 : vector<128x64xf32>
    %cst_82 = arith.constant dense<0.000000e+00> : vector<128xf32>
    %146 = vector.multi_reduction <add>, %145, %cst_82 [1] : vector<128x64xf32> to vector<128xf32>
    %147 = vector.shape_cast %146 : vector<128xf32> to vector<128x1xf32>
    %cst_83 = arith.constant 6.400000e+01 : f32
    %148 = vector.broadcast %cst_83 : f32 to vector<128x1xf32>
    %149 = arith.divf %147, %148 : vector<128x1xf32>
    %150 = vector.broadcast %149 : vector<128x1xf32> to vector<128x64xf32>
    %151 = arith.subf %145, %150 : vector<128x64xf32>
    %152 = arith.mulf %151, %151 : vector<128x64xf32>
    %cst_84 = arith.constant dense<0.000000e+00> : vector<128xf32>
    %153 = vector.multi_reduction <add>, %152, %cst_84 [1] : vector<128x64xf32> to vector<128xf32>
    %154 = vector.shape_cast %153 : vector<128xf32> to vector<128x1xf32>
    %cst_85 = arith.constant 6.400000e+01 : f32
    %155 = vector.broadcast %cst_85 : f32 to vector<128x1xf32>
    %156 = arith.divf %154, %155 : vector<128x1xf32>
    %157 = vector.broadcast %149 : vector<128x1xf32> to vector<128x64xf32>
    %158 = arith.subf %145, %157 : vector<128x64xf32>
    %cst_86 = arith.constant 9.99999997E-7 : f32
    %159 = vector.broadcast %cst_86 : f32 to vector<128x1xf32>
    %160 = arith.addf %156, %159 : vector<128x1xf32>
    %161 = math.rsqrt %160 : vector<128x1xf32>
    %162 = vector.broadcast %161 : vector<128x1xf32> to vector<128x64xf32>
    %163 = arith.mulf %158, %162 : vector<128x64xf32>
    %c0_87 = arith.constant 0 : index
    %c0_88 = arith.constant 0 : index
    %164 = vector.load %arg8[%c0_87, %c0_88] : memref<1x64xf32, #tpu.memory_space<vmem>>, vector<1x64xf32>
    %165 = vector.broadcast %164 : vector<1x64xf32> to vector<128x64xf32>
    %166 = arith.mulf %163, %165 : vector<128x64xf32>
    %c0_89 = arith.constant 0 : index
    %c0_90 = arith.constant 0 : index
    %167 = vector.load %arg9[%c0_89, %c0_90] : memref<1x64xf32, #tpu.memory_space<vmem>>, vector<1x64xf32>
    %168 = vector.broadcast %167 : vector<1x64xf32> to vector<128x64xf32>
    %169 = arith.addf %166, %168 : vector<128x64xf32>
    %170 = arith.truncf %169 : vector<128x64xf32> to vector<128x64xbf16>
    %c0_91 = arith.constant 0 : index
    %c0_92 = arith.constant 0 : index
    %171 = vector.load %arg10[%c0_91, %c0_92] : memref<64x256xbf16, #tpu.memory_space<vmem>>, vector<64x256xbf16>
    %cst_93 = arith.constant dense<0.000000e+00> : vector<128x256xf32>
    %172 = tpu.matmul %170, %171, %cst_93 {dimension_numbers = #tpu.dot_dimension_numbers<[1], [0], [0], [1], [0, 0, 1, 1], [], []>} : vector<128x64xbf16>, vector<64x256xbf16>, vector<128x256xf32> -> vector<128x256xf32>
    %173 = arith.truncf %172 : vector<128x256xf32> to vector<128x256xbf16>
    %c0_94 = arith.constant 0 : index
    %c0_95 = arith.constant 0 : index
    %174 = vector.load %arg11[%c0_94, %c0_95] : memref<256x64xbf16, #tpu.memory_space<vmem>>, vector<256x64xbf16>
    %cst_96 = arith.constant dense<0.000000e+00> : vector<128x64xf32>
    %175 = tpu.matmul %173, %174, %cst_96 {dimension_numbers = #tpu.dot_dimension_numbers<[1], [0], [0], [1], [0, 0, 1, 1], [], []>} : vector<128x256xbf16>, vector<256x64xbf16>, vector<128x64xf32> -> vector<128x64xf32>
    %176 = arith.addf %169, %175 : vector<128x64xf32>
    %cst_97 = arith.constant dense<0.000000e+00> : vector<128xf32>
    %177 = vector.multi_reduction <add>, %176, %cst_97 [1] : vector<128x64xf32> to vector<128xf32>
    %178 = vector.shape_cast %177 : vector<128xf32> to vector<128x1xf32>
    %cst_98 = arith.constant 6.400000e+01 : f32
    %179 = vector.broadcast %cst_98 : f32 to vector<128x1xf32>
    %180 = arith.divf %178, %179 : vector<128x1xf32>
    %181 = vector.broadcast %180 : vector<128x1xf32> to vector<128x64xf32>
    %182 = arith.subf %176, %181 : vector<128x64xf32>
    %183 = arith.mulf %182, %182 : vector<128x64xf32>
    %cst_99 = arith.constant dense<0.000000e+00> : vector<128xf32>
    %184 = vector.multi_reduction <add>, %183, %cst_99 [1] : vector<128x64xf32> to vector<128xf32>
    %185 = vector.shape_cast %184 : vector<128xf32> to vector<128x1xf32>
    %cst_100 = arith.constant 6.400000e+01 : f32
    %186 = vector.broadcast %cst_100 : f32 to vector<128x1xf32>
    %187 = arith.divf %185, %186 : vector<128x1xf32>
    %188 = vector.broadcast %180 : vector<128x1xf32> to vector<128x64xf32>
    %189 = arith.subf %176, %188 : vector<128x64xf32>
    %cst_101 = arith.constant 9.99999997E-7 : f32
    %190 = vector.broadcast %cst_101 : f32 to vector<128x1xf32>
    %191 = arith.addf %187, %190 : vector<128x1xf32>
    %192 = math.rsqrt %191 : vector<128x1xf32>
    %193 = vector.broadcast %192 : vector<128x1xf32> to vector<128x64xf32>
    %194 = arith.mulf %189, %193 : vector<128x64xf32>
    %c0_102 = arith.constant 0 : index
    %c0_103 = arith.constant 0 : index
    %195 = vector.load %arg12[%c0_102, %c0_103] : memref<1x64xf32, #tpu.memory_space<vmem>>, vector<1x64xf32>
    %196 = vector.broadcast %195 : vector<1x64xf32> to vector<128x64xf32>
    %197 = arith.mulf %194, %196 : vector<128x64xf32>
    %c0_104 = arith.constant 0 : index
    %c0_105 = arith.constant 0 : index
    %198 = vector.load %arg13[%c0_104, %c0_105] : memref<1x64xf32, #tpu.memory_space<vmem>>, vector<1x64xf32>
    %199 = vector.broadcast %198 : vector<1x64xf32> to vector<128x64xf32>
    %200 = arith.addf %197, %199 : vector<128x64xf32>
    %201 = vector.extract_strided_slice %200 {offsets = [0, 0], sizes = [64, 64], strides = [1, 1]} : vector<128x64xf32> to vector<64x64xf32>
    %cst_106 = arith.constant dense<0.000000e+00> : vector<64xf32>
    %202 = vector.multi_reduction <add>, %201, %cst_106 [0] : vector<64x64xf32> to vector<64xf32>
    %203 = vector.shape_cast %202 : vector<64xf32> to vector<1x64xf32>
    %cst_107 = arith.constant 6.400000e+01 : f32
    %204 = vector.broadcast %cst_107 : f32 to vector<1x64xf32>
    %205 = arith.divf %203, %204 : vector<1x64xf32>
    %206 = vector.extract_strided_slice %200 {offsets = [64, 0], sizes = [64, 64], strides = [1, 1]} : vector<128x64xf32> to vector<64x64xf32>
    %cst_108 = arith.constant dense<0.000000e+00> : vector<64xf32>
    %207 = vector.multi_reduction <add>, %206, %cst_108 [0] : vector<64x64xf32> to vector<64xf32>
    %208 = vector.shape_cast %207 : vector<64xf32> to vector<1x64xf32>
    %cst_109 = arith.constant 6.400000e+01 : f32
    %209 = vector.broadcast %cst_109 : f32 to vector<1x64xf32>
    %210 = arith.divf %208, %209 : vector<1x64xf32>
    %211 = tpu.concatenate %205, %210 in 0 : vector<1x64xf32>, vector<1x64xf32> -> vector<2x64xf32>
    %212 = arith.truncf %211 : vector<2x64xf32> to vector<2x64xbf16>
    %c0_110 = arith.constant 0 : index
    %c0_111 = arith.constant 0 : index
    %213 = vector.load %arg14[%c0_110, %c0_111] : memref<64x512xbf16, #tpu.memory_space<vmem>>, vector<64x512xbf16>
    %cst_112 = arith.constant dense<0.000000e+00> : vector<2x512xf32>
    %214 = tpu.matmul %212, %213, %cst_112 {dimension_numbers = #tpu.dot_dimension_numbers<[1], [0], [0], [1], [0, 0, 1, 1], [], []>} : vector<2x64xbf16>, vector<64x512xbf16>, vector<2x512xf32> -> vector<2x512xf32>
    %c0_113 = arith.constant 0 : index
    %c0_114 = arith.constant 0 : index
    %215 = vector.load %arg15[%c0_113, %c0_114] : memref<1x512xf32, #tpu.memory_space<vmem>>, vector<1x512xf32>
    %216 = vector.broadcast %215 : vector<1x512xf32> to vector<2x512xf32>
    %217 = arith.addf %214, %216 : vector<2x512xf32>
    %cst_115 = arith.constant 0.000000e+00 : f32
    %cst_116 = arith.constant 6.000000e+00 : f32
    %218 = vector.broadcast %cst_115 : f32 to vector<2x512xf32>
    %219 = arith.maximumf %218, %217 : vector<2x512xf32>
    %220 = vector.broadcast %cst_116 : f32 to vector<2x512xf32>
    %221 = arith.minimumf %220, %219 : vector<2x512xf32>
    %222 = arith.truncf %221 : vector<2x512xf32> to vector<2x512xbf16>
    %c0_117 = arith.constant 0 : index
    %c0_118 = arith.constant 0 : index
    %223 = vector.load %arg16[%c0_117, %c0_118] : memref<512x256xbf16, #tpu.memory_space<vmem>>, vector<512x256xbf16>
    %cst_119 = arith.constant dense<0.000000e+00> : vector<2x256xf32>
    %224 = tpu.matmul %222, %223, %cst_119 {dimension_numbers = #tpu.dot_dimension_numbers<[1], [0], [0], [1], [0, 0, 1, 1], [], []>} : vector<2x512xbf16>, vector<512x256xbf16>, vector<2x256xf32> -> vector<2x256xf32>
    %c0_120 = arith.constant 0 : index
    %c0_121 = arith.constant 0 : index
    %225 = vector.load %arg17[%c0_120, %c0_121] : memref<1x256xf32, #tpu.memory_space<vmem>>, vector<1x256xf32>
    %226 = vector.broadcast %225 : vector<1x256xf32> to vector<2x256xf32>
    %227 = arith.addf %224, %226 : vector<2x256xf32>
    %cst_122 = arith.constant 0.000000e+00 : f32
    %cst_123 = arith.constant 6.000000e+00 : f32
    %228 = vector.broadcast %cst_122 : f32 to vector<2x256xf32>
    %229 = arith.maximumf %228, %227 : vector<2x256xf32>
    %230 = vector.broadcast %cst_123 : f32 to vector<2x256xf32>
    %231 = arith.minimumf %230, %229 : vector<2x256xf32>
    %232 = arith.truncf %231 : vector<2x256xf32> to vector<2x256xbf16>
    %c0_124 = arith.constant 0 : index
    %c0_125 = arith.constant 0 : index
    %233 = vector.load %arg18[%c0_124, %c0_125] : memref<256x128xbf16, #tpu.memory_space<vmem>>, vector<256x128xbf16>
    %cst_126 = arith.constant dense<0.000000e+00> : vector<2x128xf32>
    %234 = tpu.matmul %232, %233, %cst_126 {dimension_numbers = #tpu.dot_dimension_numbers<[1], [0], [0], [1], [0, 0, 1, 1], [], []>} : vector<2x256xbf16>, vector<256x128xbf16>, vector<2x128xf32> -> vector<2x128xf32>
    %c0_127 = arith.constant 0 : index
    %c0_128 = arith.constant 0 : index
    %235 = vector.load %arg19[%c0_127, %c0_128] : memref<1x128xf32, #tpu.memory_space<vmem>>, vector<1x128xf32>
    %236 = vector.broadcast %235 : vector<1x128xf32> to vector<2x128xf32>
    %237 = arith.addf %234, %236 : vector<2x128xf32>
    %238 = arith.negf %237 : vector<2x128xf32>
    %239 = math.exp %238 : vector<2x128xf32>
    %cst_129 = arith.constant 1.000000e+00 : f32
    %240 = vector.broadcast %cst_129 : f32 to vector<2x128xf32>
    %241 = arith.addf %240, %239 : vector<2x128xf32>
    %242 = arith.divf %240, %241 : vector<2x128xf32>
    %c0_130 = arith.constant 0 : index
    %c0_131 = arith.constant 0 : index
    %243 = vector.load %arg20[%c0_130, %c0_131] : memref<2x128xf32, #tpu.memory_space<vmem>>, vector<2x128xf32>
    tpu.vector_store %arg20[%c0_130, %c0_131], %242 {strides = array<i32>} : memref<2x128xf32, #tpu.memory_space<vmem>>, vector<2x128xf32>,
    return
  }
  func.func @transform_0(%arg0: i32) -> (i32, i32) {
    %c0_i32 = arith.constant 0 : i32
    %c0_i32_0 = arith.constant 0 : i32
    %c0_i32_1 = arith.constant 0 : i32
    return %c0_i32, %c0_i32_0 : i32, i32
  }
  func.func @transform_1(%arg0: i32) -> (i32, i32) {
    %c0_i32 = arith.constant 0 : i32
    %c0_i32_0 = arith.constant 0 : i32
    %c0_i32_1 = arith.constant 0 : i32
    return %c0_i32, %c0_i32_0 : i32, i32
  }
  func.func @transform_2(%arg0: i32) -> (i32, i32, i32) {
    %c0_i32 = arith.constant 0 : i32
    %c0_i32_0 = arith.constant 0 : i32
    %c0_i32_1 = arith.constant 0 : i32
    %c0_i32_2 = arith.constant 0 : i32
    return %c0_i32, %c0_i32_0, %c0_i32_1 : i32, i32, i32
  }
  func.func @transform_3(%arg0: i32) -> (i32, i32, i32) {
    %c0_i32 = arith.constant 0 : i32
    %c0_i32_0 = arith.constant 0 : i32
    %c0_i32_1 = arith.constant 0 : i32
    %c0_i32_2 = arith.constant 0 : i32
    return %c0_i32, %c0_i32_0, %c0_i32_1 : i32, i32, i32
  }
  func.func @transform_4(%arg0: i32) -> (i32, i32, i32) {
    %c0_i32 = arith.constant 0 : i32
    %c0_i32_0 = arith.constant 0 : i32
    %c0_i32_1 = arith.constant 0 : i32
    %c0_i32_2 = arith.constant 0 : i32
    return %c0_i32, %c0_i32_0, %c0_i32_1 : i32, i32, i32
  }
  func.func @transform_5(%arg0: i32) -> (i32, i32, i32) {
    %c0_i32 = arith.constant 0 : i32
    %c0_i32_0 = arith.constant 0 : i32
    %c0_i32_1 = arith.constant 0 : i32
    %c0_i32_2 = arith.constant 0 : i32
    return %c0_i32, %c0_i32_0, %c0_i32_1 : i32, i32, i32
  }
  func.func @transform_6(%arg0: i32) -> (i32, i32) {
    %c0_i32 = arith.constant 0 : i32
    %c0_i32_0 = arith.constant 0 : i32
    %c0_i32_1 = arith.constant 0 : i32
    return %c0_i32, %c0_i32_0 : i32, i32
  }
  func.func @transform_7(%arg0: i32) -> (i32, i32) {
    %c0_i32 = arith.constant 0 : i32
    %c0_i32_0 = arith.constant 0 : i32
    %c0_i32_1 = arith.constant 0 : i32
    return %c0_i32, %c0_i32_0 : i32, i32
  }
  func.func @transform_8(%arg0: i32) -> (i32, i32) {
    %c0_i32 = arith.constant 0 : i32
    %c0_i32_0 = arith.constant 0 : i32
    %c0_i32_1 = arith.constant 0 : i32
    return %c0_i32, %c0_i32_0 : i32, i32
  }
  func.func @transform_9(%arg0: i32) -> (i32, i32) {
    %c0_i32 = arith.constant 0 : i32
    %c0_i32_0 = arith.constant 0 : i32
    %c0_i32_1 = arith.constant 0 : i32
    return %c0_i32, %c0_i32_0 : i32, i32
  }
  func.func @transform_10(%arg0: i32) -> (i32, i32) {
    %c0_i32 = arith.constant 0 : i32
    %c0_i32_0 = arith.constant 0 : i32
    %c0_i32_1 = arith.constant 0 : i32
    return %c0_i32, %c0_i32_0 : i32, i32
  }
  func.func @transform_11(%arg0: i32) -> (i32, i32) {
    %c0_i32 = arith.constant 0 : i32
    %c0_i32_0 = arith.constant 0 : i32
    %c0_i32_1 = arith.constant 0 : i32
    return %c0_i32, %c0_i32_0 : i32, i32
  }
  func.func @transform_12(%arg0: i32) -> (i32, i32) {
    %c0_i32 = arith.constant 0 : i32
    %c0_i32_0 = arith.constant 0 : i32
    %c0_i32_1 = arith.constant 0 : i32
    return %c0_i32, %c0_i32_0 : i32, i32
  }
  func.func @transform_13(%arg0: i32) -> (i32, i32) {
    %c0_i32 = arith.constant 0 : i32
    %c0_i32_0 = arith.constant 0 : i32
    %c0_i32_1 = arith.constant 0 : i32
    return %c0_i32, %c0_i32_0 : i32, i32
  }
  func.func @transform_14(%arg0: i32) -> (i32, i32) {
    %c0_i32 = arith.constant 0 : i32
    %c0_i32_0 = arith.constant 0 : i32
    %c0_i32_1 = arith.constant 0 : i32
    return %c0_i32, %c0_i32_0 : i32, i32
  }
  func.func @transform_15(%arg0: i32) -> (i32, i32) {
    %c0_i32 = arith.constant 0 : i32
    %c0_i32_0 = arith.constant 0 : i32
    %c0_i32_1 = arith.constant 0 : i32
    return %c0_i32, %c0_i32_0 : i32, i32
  }
  func.func @transform_16(%arg0: i32) -> (i32, i32) {
    %c0_i32 = arith.constant 0 : i32
    %c0_i32_0 = arith.constant 0 : i32
    %c0_i32_1 = arith.constant 0 : i32
    return %c0_i32, %c0_i32_0 : i32, i32
  }
  func.func @transform_17(%arg0: i32) -> (i32, i32) {
    %c0_i32 = arith.constant 0 : i32
    %c0_i32_0 = arith.constant 0 : i32
    %c0_i32_1 = arith.constant 0 : i32
    return %c0_i32, %c0_i32_0 : i32, i32
  }
  func.func @transform_18(%arg0: i32) -> (i32, i32) {
    %c0_i32 = arith.constant 0 : i32
    %c0_i32_0 = arith.constant 0 : i32
    %c0_i32_1 = arith.constant 0 : i32
    return %c0_i32, %c0_i32_0 : i32, i32
  }
  func.func @transform_19(%arg0: i32) -> (i32, i32) {
    %c0_i32 = arith.constant 0 : i32
    %c0_i32_0 = arith.constant 0 : i32
    %c0_i32_1 = arith.constant 0 : i32
    return %c0_i32, %c0_i32_0 : i32, i32
  }
}

</mosaic_0001>

<llo_original>
// kernel: cnn_feature_transformer_2d.2
$region0: #{cnn_feature_transformer_2d.2}
  #allocation0 [shape = 'u32[]', space=smem, size = 0x4, offset = 0x4, fixed_abs, tag = 'smem constant byte address 0x4 - core index']
  #allocation1 [shape = 'u32[144,128]{1,0:T(1,128)}', space=vmem, size = 0x12000, scoped, tag = 'internal scratch']
  %s0 = inlined_call_operand.vmem [shape: f32[32,40], index: 0, kind: input, shape index: {}]
  %s1 = inlined_call_operand.vmem [shape: f32[40,256], index: 1, kind: input, shape index: {}]
  %s2 = inlined_call_operand.vmem [shape: f32[1,256], index: 2, kind: input, shape index: {}]
  %s3 = inlined_call_operand.vmem [shape: f32[32,256], index: 3, kind: output, shape index: {}]
  %s4 = sld [smem:[#allocation0]]
  $region22: #{cnn_feature_transformer_2d.2} parent=0
    _
  %s6 = ssub.s32 1, %s4
  %s7 = scalar_select 0, %s6, %s4
  // Predicated region
  $region2: #{cnn_feature_transformer_2d.2} parent=0 // pred_check
    _
  $region3: #{cnn_feature_transformer_2d.2} parent=0 // pred_check_branch
    %9 = sbr.rel (0) target = $region5
  $region4: #{cnn_feature_transformer_2d.2} parent=0 // pred_region
    _
  $region5: #{cnn_feature_transformer_2d.2} parent=0 // pred_fallthru
    _
  // Predicated region
  $region6: #{cnn_feature_transformer_2d.2} parent=0 // pred_check
    _
  $region7: #{cnn_feature_transformer_2d.2} parent=0 // pred_check_branch
    %11 = sbr.rel (0) target = $region9
  $region8: #{cnn_feature_transformer_2d.2} parent=0 // pred_region
    _
  $region9: #{cnn_feature_transformer_2d.2} parent=0 // pred_fallthru
    _
  // Predicated region
  $region10: #{cnn_feature_transformer_2d.2} parent=0 // pred_check
    _
  $region11: #{cnn_feature_transformer_2d.2} parent=0 // pred_check_branch
    %13 = sbr.rel (0) target = $region13
  $region12: #{cnn_feature_transformer_2d.2} parent=0 // pred_region
    _
  $region13: #{cnn_feature_transformer_2d.2} parent=0 // pred_fallthru
    _
  %v14 = vld [vmem:[%s0] sm:$0xff]
  %v15 = vld [vmem:[%s0 + $0x8] sm:$0xff]
  %v16 = vld [vmem:[%s0 + $0x10] sm:$0xff]
  %v17 = vld [vmem:[%s0 + $0x18] sm:$0xff]
  %v18 = vld [vmem:[%s1] sm:$0xff]
  %v19 = vld [vmem:[%s1 + $0x8] sm:$0xff]
  %v20 = vld [vmem:[%s1 + $0x10] sm:$0xff]
  %v21 = vld [vmem:[%s1 + $0x18] sm:$0xff]
  %v22 = vld [vmem:[%s1 + $0x20] sm:$0xff]
  %v23 = vld [vmem:[%s1 + $0x28] sm:$0xff]
  %v24 = vld [vmem:[%s1 + $0x30] sm:$0xff]
  %v25 = vld [vmem:[%s1 + $0x38] sm:$0xff]
  %v26 = vld [vmem:[%s1 + $0x40] sm:$0xff]
  %v27 = vld [vmem:[%s1 + $0x48] sm:$0xff]
  %v28 = vld [vmem:[%s2] sm:$0x3]
  %v30 = vlaneseq
  %v31 = vshrl.u32 %v30, 7
  %v32 = vsub.s32 0, %v31
  %v33 = vrot.slane %v28, %v32
  %v34 = vlaneseq
  %v35 = vshrl.u32 %v34, 7
  %v36 = vsub.s32 1, %v35
  %v37 = vrot.slane %v28, %v36
  %vm40 = vcmask 326656
  %v42 = vsel %vm40, %v14, 0
  %v45 = vsel %vm40, %v15, 0
  %v48 = vsel %vm40, %v16, 0
  %v51 = vsel %vm40, %v17, 0
  %53 = vmatprep.subr.mxu0 0.0
  %54 = vmatpush1.msra.mxu0 0.0
  %55 = vmatprep.subr.mxu0 0.0
  %56 = vmatpush1.msra.mxu0 0.0
  %57 = vmatprep.subr.mxu0 0.0
  %58 = vmatpush1.msra.mxu0 0.0
  %59 = vmatprep.subr.mxu0 0.0
  %60 = vmatpush1.msra.mxu0 0.0
  %61 = vmatprep.subr.mxu0 0.0
  %62 = vmatpush1.msra.mxu0 0.0
  %63 = vmatprep.subr.mxu0 0.0
  %64 = vmatpush1.msra.mxu0 0.0
  %65 = vmatprep.subr.mxu0 0.0
  %66 = vmatpush1.msra.mxu0 0.0
  %67 = vmatprep.subr.mxu0 0.0
  %68 = vmatpush1.msra.mxu0 0.0
  %69 = vmatprep.subr.mxu0 0.0
  %70 = vmatpush1.msra.mxu0 0.0
  %71 = vmatprep.subr.mxu0 0.0
  %72 = vmatpush1.msra.mxu0 0.0
  %73 = vmatprep.subr.mxu0 0.0
  %74 = vmatpush1.msra.mxu0 0.0
  %75 = vmatprep.subr.mxu0 %v27
  %76 = vmatpush1.msra.mxu0 %v26
  %77 = vmatprep.subr.mxu0 %v25
  %78 = vmatpush1.msra.mxu0 %v24
  %79 = vmatprep.subr.mxu0 %v23
  %80 = vmatpush1.msra.mxu0 %v22
  %81 = vmatprep.subr.mxu0 %v21
  %82 = vmatpush1.msra.mxu0 %v20
  %83 = vmatprep.subr.mxu0 %v19
  %84 = vmatpush1.msra.mxu0 %v18
  %85 = vmatprep.subr.mxu0 0.0
  %86 = vmatpush2.msra.mxu0 0.0
  %87 = vmatprep.subr.mxu0 0.0
  %88 = vmatpush2.msra.mxu0 0.0
  %89 = vmatprep.subr.mxu0 0.0
  %90 = vmatpush2.msra.mxu0 0.0
  %91 = vmatprep.subr.mxu0 0.0
  %92 = vmatpush2.msra.mxu0 0.0
  %93 = vmatprep.subr.mxu0 0.0
  %94 = vmatpush2.msra.mxu0 0.0
  %95 = vmatprep.subr.mxu0 0.0
  %96 = vmatpush2.msra.mxu0 0.0
  %97 = vmatprep.subr.mxu0 0.0
  %98 = vmatpush2.msra.mxu0 0.0
  %99 = vmatprep.subr.mxu0 0.0
  %100 = vmatpush2.msra.mxu0 0.0
  %101 = vmatprep.subr.mxu0 0.0
  %102 = vmatpush2.msra.mxu0 0.0
  %103 = vmatprep.subr.mxu0 0.0
  %104 = vmatpush2.msra.mxu0 0.0
  %105 = vmatprep.subr.mxu0 0.0
  %106 = vmatpush2.msra.mxu0 0.0
  %107 = vmatprep.subr.mxu0 0.0
  %108 = vmatpush2.msra.mxu0 0.0
  %109 = vmatprep.subr.mxu0 0.0
  %110 = vmatpush2.msra.mxu0 0.0
  %111 = vmatprep.subr.mxu0 0.0
  %112 = vmatpush2.msra.mxu0 0.0
  %113 = vmatprep.subr.mxu0 0.0
  %114 = vmatpush2.msra.mxu0 0.0
  %115 = vmatprep.subr.mxu0 0.0
  %116 = vmatpush2.msra.mxu0 0.0
  %117 = vmatprep.mubr.f32.mxu0 0.0
  %118 = vmatmul.mubr.f32.gmra.mxu0 %v42
  %v119 = vpop.f32.mrf.mxu0
  %v120 = vadd.f32 %v33, %v119
  %v121 = vpop.f32.mrf.mxu0
  %v122 = vadd.f32 %v37, %v121
  %123 = vmatprep.mubr.f32.mxu0 0.0
  %124 = vmatmul.mubr.f32.gmra.mxu0 %v45
  %v125 = vpop.f32.mrf.mxu0
  %v126 = vadd.f32 %v33, %v125
  %v127 = vpop.f32.mrf.mxu0
  %v128 = vadd.f32 %v37, %v127
  %129 = vmatprep.mubr.f32.mxu0 0.0
  %130 = vmatmul.mubr.f32.gmra.mxu0 %v48
  %v131 = vpop.f32.mrf.mxu0
  %v132 = vadd.f32 %v33, %v131
  %v133 = vpop.f32.mrf.mxu0
  %v134 = vadd.f32 %v37, %v133
  %135 = vmatprep.mubr.f32.mxu0 0.0
  %136 = vmatmul.mubr.f32.gmra.mxu0 %v51
  %v137 = vpop.f32.mrf.mxu0
  %v138 = vadd.f32 %v33, %v137
  %v139 = vpop.f32.mrf.mxu0
  %v140 = vadd.f32 %v37, %v139
  %141 = vdwg.mxu0
  %142 = vst [vmem:[%s3] sm:$0xff] %v120
  %143 = vst [vmem:[%s3 + $0x8] sm:$0xff] %v122
  %144 = vst [vmem:[%s3 + $0x10] sm:$0xff] %v126
  %145 = vst [vmem:[%s3 + $0x18] sm:$0xff] %v128
  %146 = vst [vmem:[%s3 + $0x20] sm:$0xff] %v132
  %147 = vst [vmem:[%s3 + $0x28] sm:$0xff] %v134
  %148 = vst [vmem:[%s3 + $0x30] sm:$0xff] %v138
  %149 = vst [vmem:[%s3 + $0x38] sm:$0xff] %v140
  // Predicated region
  $region14: #{cnn_feature_transformer_2d.2} parent=0 // pred_check
    _
  $region15: #{cnn_feature_transformer_2d.2} parent=0 // pred_check_branch
    %151 = sbr.rel (0) target = $region17
  $region16: #{cnn_feature_transformer_2d.2} parent=0 // pred_region
    _
  $region17: #{cnn_feature_transformer_2d.2} parent=0 // pred_fallthru
    _
  // Predicated region
  $region18: #{cnn_feature_transformer_2d.2} parent=0 // pred_check
    _
  $region19: #{cnn_feature_transformer_2d.2} parent=0 // pred_check_branch
    %153 = sbr.rel (0) target = $region21
  $region20: #{cnn_feature_transformer_2d.2} parent=0 // pred_region
    _
  $region21: #{cnn_feature_transformer_2d.2} parent=0 // pred_fallthru
    _

// kernel: cnn_feature_transformer_2d.3
$region0: #{cnn_feature_transformer_2d.3}
  #allocation0 [shape = 'u32[]', space=smem, size = 0x4, offset = 0x4, fixed_abs, tag = 'smem constant byte address 0x4 - core index']
  #allocation1 [shape = 'u32[144,128]{1,0:T(1,128)}', space=vmem, size = 0x12000, scoped, tag = 'internal scratch']
  %s0 = inlined_call_operand.vmem [shape: f32[128,64], index: 0, kind: input, shape index: {}]
  %s1 = inlined_call_operand.vmem [shape: f32[128,1], index: 1, kind: input, shape index: {}]
  %s2 = inlined_call_operand.vmem [shape: bf16[4,64,16], index: 2, kind: input, shape index: {}]
  %s3 = inlined_call_operand.vmem [shape: bf16[4,64,16], index: 3, kind: input, shape index: {}]
  %s4 = inlined_call_operand.vmem [shape: bf16[4,64,16], index: 4, kind: input, shape index: {}]
  %s5 = inlined_call_operand.vmem [shape: bf16[4,16,64], index: 5, kind: input, shape index: {}]
  %s6 = inlined_call_operand.vmem [shape: f32[1,64], index: 6, kind: input, shape index: {}]
  %s7 = inlined_call_operand.vmem [shape: f32[1,64], index: 7, kind: input, shape index: {}]
  %s8 = inlined_call_operand.vmem [shape: f32[1,64], index: 8, kind: input, shape index: {}]
  %s9 = inlined_call_operand.vmem [shape: bf16[64,256], index: 9, kind: input, shape index: {}]
  %s10 = inlined_call_operand.vmem [shape: bf16[256,64], index: 10, kind: input, shape index: {}]
  %s11 = inlined_call_operand.vmem [shape: f32[1,64], index: 11, kind: input, shape index: {}]
  %s12 = inlined_call_operand.vmem [shape: f32[1,64], index: 12, kind: input, shape index: {}]
  %s13 = inlined_call_operand.vmem [shape: bf16[64,512], index: 13, kind: input, shape index: {}]
  %s14 = inlined_call_operand.vmem [shape: f32[1,512], index: 14, kind: input, shape index: {}]
  %s15 = inlined_call_operand.vmem [shape: bf16[512,256], index: 15, kind: input, shape index: {}]
  %s16 = inlined_call_operand.vmem [shape: f32[1,256], index: 16, kind: input, shape index: {}]
  %s17 = inlined_call_operand.vmem [shape: bf16[256,128], index: 17, kind: input, shape index: {}]
  %s18 = inlined_call_operand.vmem [shape: f32[1,128], index: 18, kind: input, shape index: {}]
  %s19 = inlined_call_operand.hbm [shape: f32[2,128], index: 19, kind: output, shape index: {}]
  %s20 = sld [smem:[#allocation0]]
  $region86: #{cnn_feature_transformer_2d.3} parent=0
    _
  %s22 = ssub.s32 1, %s20
  %s23 = scalar_select 0, %s22, %s20
  $region1: #{cnn_feature_transformer_2d.3} parent=0
    #allocation2 [shape = 'u8[1024]{0}', space=vmem, size = 0x400, scoped, tag = 'output window, operand 0, single buffered']
    #allocation3 [shape = 's32[1]{0}', space=sflag, size = 0x4, scoped, tag = 'scoped memory for cnn_feature_transformer_2d.3']
    %24 = vsyncpa [#allocation3], 0
    // Predicated region
    $region2: #{cnn_feature_transformer_2d.3} parent=1 // pred_check
      _
    $region3: #{cnn_feature_transformer_2d.3} parent=1 // pred_check_branch
      %26 = sbr.rel (0) target = $region5
    $region4: #{cnn_feature_transformer_2d.3} parent=1 // pred_region
      _
    $region5: #{cnn_feature_transformer_2d.3} parent=1 // pred_fallthru
      _
    // Predicated region
    $region6: #{cnn_feature_transformer_2d.3} parent=1 // pred_check
      _
    $region7: #{cnn_feature_transformer_2d.3} parent=1 // pred_check_branch
      %28 = sbr.rel (0) target = $region9
    $region8: #{cnn_feature_transformer_2d.3} parent=1 // pred_region
      _
    $region9: #{cnn_feature_transformer_2d.3} parent=1 // pred_fallthru
      _
    // Predicated region
    $region10: #{cnn_feature_transformer_2d.3} parent=1 // pred_check
      _
    $region11: #{cnn_feature_transformer_2d.3} parent=1 // pred_check_branch
      %30 = sbr.rel (0) target = $region13
    $region12: #{cnn_feature_transformer_2d.3} parent=1 // pred_region
      _
    $region13: #{cnn_feature_transformer_2d.3} parent=1 // pred_fallthru
      _
    // Predicated region
    $region14: #{cnn_feature_transformer_2d.3} parent=1 // pred_check
      _
    $region15: #{cnn_feature_transformer_2d.3} parent=1 // pred_check_branch
      %32 = sbr.rel (0) target = $region17
    $region16: #{cnn_feature_transformer_2d.3} parent=1 // pred_region
      _
    $region17: #{cnn_feature_transformer_2d.3} parent=1 // pred_fallthru
      _
    // Predicated region
    $region18: #{cnn_feature_transformer_2d.3} parent=1 // pred_check
      _
    $region19: #{cnn_feature_transformer_2d.3} parent=1 // pred_check_branch
      %34 = sbr.rel (0) target = $region21
    $region20: #{cnn_feature_transformer_2d.3} parent=1 // pred_region
      _
    $region21: #{cnn_feature_transformer_2d.3} parent=1 // pred_fallthru
      _
    // Predicated region
    $region22: #{cnn_feature_transformer_2d.3} parent=1 // pred_check
      _
    $region23: #{cnn_feature_transformer_2d.3} parent=1 // pred_check_branch
      %36 = sbr.rel (0) target = $region25
    $region24: #{cnn_feature_transformer_2d.3} parent=1 // pred_region
      _
    $region25: #{cnn_feature_transformer_2d.3} parent=1 // pred_fallthru
      _
    // Predicated region
    $region26: #{cnn_feature_transformer_2d.3} parent=1 // pred_check
      _
    $region27: #{cnn_feature_transformer_2d.3} parent=1 // pred_check_branch
      %38 = sbr.rel (0) target = $region29
    $region28: #{cnn_feature_transformer_2d.3} parent=1 // pred_region
      _
    $region29: #{cnn_feature_transformer_2d.3} parent=1 // pred_fallthru
      _
    // Predicated region
    $region30: #{cnn_feature_transformer_2d.3} parent=1 // pred_check
      _
    $region31: #{cnn_feature_transformer_2d.3} parent=1 // pred_check_branch
      %40 = sbr.rel (0) target = $region33
    $region32: #{cnn_feature_transformer_2d.3} parent=1 // pred_region
      _
    $region33: #{cnn_feature_transformer_2d.3} parent=1 // pred_fallthru
      _
    // Predicated region
    $region34: #{cnn_feature_transformer_2d.3} parent=1 // pred_check
      _
    $region35: #{cnn_feature_transformer_2d.3} parent=1 // pred_check_branch
      %42 = sbr.rel (0) target = $region37
    $region36: #{cnn_feature_transformer_2d.3} parent=1 // pred_region
      _
    $region37: #{cnn_feature_transformer_2d.3} parent=1 // pred_fallthru
      _
    // Predicated region
    $region38: #{cnn_feature_transformer_2d.3} parent=1 // pred_check
      _
    $region39: #{cnn_feature_transformer_2d.3} parent=1 // pred_check_branch
      %44 = sbr.rel (0) target = $region41
    $region40: #{cnn_feature_transformer_2d.3} parent=1 // pred_region
      _
    $region41: #{cnn_feature_transformer_2d.3} parent=1 // pred_fallthru
      _
    // Predicated region
    $region42: #{cnn_feature_transformer_2d.3} parent=1 // pred_check
      _
    $region43: #{cnn_feature_transformer_2d.3} parent=1 // pred_check_branch
      %46 = sbr.rel (0) target = $region45
    $region44: #{cnn_feature_transformer_2d.3} parent=1 // pred_region
      _
    $region45: #{cnn_feature_transformer_2d.3} parent=1 // pred_fallthru
      _
    // Predicated region
    $region46: #{cnn_feature_transformer_2d.3} parent=1 // pred_check
      _
    $region47: #{cnn_feature_transformer_2d.3} parent=1 // pred_check_branch
      %48 = sbr.rel (0) target = $region49
    $region48: #{cnn_feature_transformer_2d.3} parent=1 // pred_region
      _
    $region49: #{cnn_feature_transformer_2d.3} parent=1 // pred_fallthru
      _
    // Predicated region
    $region50: #{cnn_feature_transformer_2d.3} parent=1 // pred_check
      _
    $region51: #{cnn_feature_transformer_2d.3} parent=1 // pred_check_branch
      %50 = sbr.rel (0) target = $region53
    $region52: #{cnn_feature_transformer_2d.3} parent=1 // pred_region
      _
    $region53: #{cnn_feature_transformer_2d.3} parent=1 // pred_fallthru
      _
    // Predicated region
    $region54: #{cnn_feature_transformer_2d.3} parent=1 // pred_check
      _
    $region55: #{cnn_feature_transformer_2d.3} parent=1 // pred_check_branch
      %52 = sbr.rel (0) target = $region57
    $region56: #{cnn_feature_transformer_2d.3} parent=1 // pred_region
      _
    $region57: #{cnn_feature_transformer_2d.3} parent=1 // pred_fallthru
      _
    // Predicated region
    $region58: #{cnn_feature_transformer_2d.3} parent=1 // pred_check
      _
    $region59: #{cnn_feature_transformer_2d.3} parent=1 // pred_check_branch
      %54 = sbr.rel (0) target = $region61
    $region60: #{cnn_feature_transformer_2d.3} parent=1 // pred_region
      _
    $region61: #{cnn_feature_transformer_2d.3} parent=1 // pred_fallthru
      _
    // Predicated region
    $region62: #{cnn_feature_transformer_2d.3} parent=1 // pred_check
      _
    $region63: #{cnn_feature_transformer_2d.3} parent=1 // pred_check_branch
      %56 = sbr.rel (0) target = $region65
    $region64: #{cnn_feature_transformer_2d.3} parent=1 // pred_region
      _
    $region65: #{cnn_feature_transformer_2d.3} parent=1 // pred_fallthru
      _
    // Predicated region
    $region66: #{cnn_feature_transformer_2d.3} parent=1 // pred_check
      _
    $region67: #{cnn_feature_transformer_2d.3} parent=1 // pred_check_branch
      %58 = sbr.rel (0) target = $region69
    $region68: #{cnn_feature_transformer_2d.3} parent=1 // pred_region
      _
    $region69: #{cnn_feature_transformer_2d.3} parent=1 // pred_fallthru
      _
    // Predicated region
    $region70: #{cnn_feature_transformer_2d.3} parent=1 // pred_check
      _
    $region71: #{cnn_feature_transformer_2d.3} parent=1 // pred_check_branch
      %60 = sbr.rel (0) target = $region73
    $region72: #{cnn_feature_transformer_2d.3} parent=1 // pred_region
      _
    $region73: #{cnn_feature_transformer_2d.3} parent=1 // pred_fallthru
      _
    // Predicated region
    $region74: #{cnn_feature_transformer_2d.3} parent=1 // pred_check
      _
    $region75: #{cnn_feature_transformer_2d.3} parent=1 // pred_check_branch
      %62 = sbr.rel (0) target = $region77
    $region76: #{cnn_feature_transformer_2d.3} parent=1 // pred_region
      _
    $region77: #{cnn_feature_transformer_2d.3} parent=1 // pred_fallthru
      _
    %v64 = vld [vmem:[%s0] sm:$0xff]
    %v65 = vld [vmem:[%s0 + $0x8] sm:$0xff]
    %v66 = vld [vmem:[%s0 + $0x10] sm:$0xff]
    %v67 = vld [vmem:[%s0 + $0x18] sm:$0xff]
    %v68 = vld [vmem:[%s0 + $0x20] sm:$0xff]
    %v69 = vld [vmem:[%s0 + $0x28] sm:$0xff]
    %v70 = vld [vmem:[%s0 + $0x30] sm:$0xff]
    %v71 = vld [vmem:[%s0 + $0x38] sm:$0xff]
    %v72 = vld [vmem:[%s0 + $0x40] sm:$0xff]
    %v73 = vld [vmem:[%s0 + $0x48] sm:$0xff]
    %v74 = vld [vmem:[%s0 + $0x50] sm:$0xff]
    %v75 = vld [vmem:[%s0 + $0x58] sm:$0xff]
    %v76 = vld [vmem:[%s0 + $0x60] sm:$0xff]
    %v77 = vld [vmem:[%s0 + $0x68] sm:$0xff]
    %v78 = vld [vmem:[%s0 + $0x70] sm:$0xff]
    %v79 = vld [vmem:[%s0 + $0x78] sm:$0xff]
    %v80 = vld [vmem:[%s1] sm:$0xff]
    %v81 = vld [vmem:[%s1 + $0x8] sm:$0xff]
    %v82 = vld [vmem:[%s1 + $0x10] sm:$0xff]
    %v83 = vld [vmem:[%s1 + $0x18] sm:$0xff]
    %v84 = vld [vmem:[%s1 + $0x20] sm:$0xff]
    %v85 = vld [vmem:[%s1 + $0x28] sm:$0xff]
    %v86 = vld [vmem:[%s1 + $0x30] sm:$0xff]
    %v87 = vld [vmem:[%s1 + $0x38] sm:$0xff]
    %v88 = vld [vmem:[%s1 + $0x40] sm:$0xff]
    %v89 = vld [vmem:[%s1 + $0x48] sm:$0xff]
    %v90 = vld [vmem:[%s1 + $0x50] sm:$0xff]
    %v91 = vld [vmem:[%s1 + $0x58] sm:$0xff]
    %v92 = vld [vmem:[%s1 + $0x60] sm:$0xff]
    %v93 = vld [vmem:[%s1 + $0x68] sm:$0xff]
    %v94 = vld [vmem:[%s1 + $0x70] sm:$0xff]
    %v95 = vld [vmem:[%s1 + $0x78] sm:$0xff]
    %97 = vset.pattern.permute.xlu0 0
    %98 = vperm.xlu0 %97, %v80
    %v99 = vpop.permute.xlu0 %98
    %102 = vset.pattern.permute.xlu0 0
    %103 = vperm.xlu0 %102, %v81
    %v104 = vpop.permute.xlu0 %103
    %107 = vset.pattern.permute.xlu0 0
    %108 = vperm.xlu0 %107, %v82
    %v109 = vpop.permute.xlu0 %108
    %112 = vset.pattern.permute.xlu0 0
    %113 = vperm.xlu0 %112, %v83
    %v114 = vpop.permute.xlu0 %113
    %117 = vset.pattern.permute.xlu0 0
    %118 = vperm.xlu0 %117, %v84
    %v119 = vpop.permute.xlu0 %118
    %122 = vset.pattern.permute.xlu0 0
    %123 = vperm.xlu0 %122, %v85
    %v124 = vpop.permute.xlu0 %123
    %127 = vset.pattern.permute.xlu0 0
    %128 = vperm.xlu0 %127, %v86
    %v129 = vpop.permute.xlu0 %128
    %132 = vset.pattern.permute.xlu0 0
    %133 = vperm.xlu0 %132, %v87
    %v134 = vpop.permute.xlu0 %133
    %137 = vset.pattern.permute.xlu0 0
    %138 = vperm.xlu0 %137, %v88
    %v139 = vpop.permute.xlu0 %138
    %142 = vset.pattern.permute.xlu0 0
    %143 = vperm.xlu0 %142, %v89
    %v144 = vpop.permute.xlu0 %143
    %147 = vset.pattern.permute.xlu0 0
    %148 = vperm.xlu0 %147, %v90
    %v149 = vpop.permute.xlu0 %148
    %152 = vset.pattern.permute.xlu0 0
    %153 = vperm.xlu0 %152, %v91
    %v154 = vpop.permute.xlu0 %153
    %157 = vset.pattern.permute.xlu0 0
    %158 = vperm.xlu0 %157, %v92
    %v159 = vpop.permute.xlu0 %158
    %162 = vset.pattern.permute.xlu0 0
    %163 = vperm.xlu0 %162, %v93
    %v164 = vpop.permute.xlu0 %163
    %167 = vset.pattern.permute.xlu0 0
    %168 = vperm.xlu0 %167, %v94
    %v169 = vpop.permute.xlu0 %168
    %172 = vset.pattern.permute.xlu0 0
    %173 = vperm.xlu0 %172, %v95
    %v174 = vpop.permute.xlu0 %173
    %v176 = vadd.f32 %v64, %v99
    %v177 = vadd.f32 %v65, %v104
    %v178 = vadd.f32 %v66, %v109
    %v179 = vadd.f32 %v67, %v114
    %v180 = vadd.f32 %v68, %v119
    %v181 = vadd.f32 %v69, %v124
    %v182 = vadd.f32 %v70, %v129
    %v183 = vadd.f32 %v71, %v134
    %v184 = vadd.f32 %v72, %v139
    %v185 = vadd.f32 %v73, %v144
    %v186 = vadd.f32 %v74, %v149
    %v187 = vadd.f32 %v75, %v154
    %v188 = vadd.f32 %v76, %v159
    %v189 = vadd.f32 %v77, %v164
    %v190 = vadd.f32 %v78, %v169
    %v191 = vadd.f32 %v79, %v174
    %v192 = vpack.c.bf16 %v177, %v176
    %v193 = vpack.c.bf16 %v179, %v178
    %v194 = vpack.c.bf16 %v181, %v180
    %v195 = vpack.c.bf16 %v183, %v182
    %v196 = vpack.c.bf16 %v185, %v184
    %v197 = vpack.c.bf16 %v187, %v186
    %v198 = vpack.c.bf16 %v189, %v188
    %v199 = vpack.c.bf16 %v191, %v190
    %v200 = vld [vmem:[%s2] sm:$0xf]
    %v201 = vld [vmem:[%s2 + $0x4] sm:$0xf]
    %v202 = vld [vmem:[%s2 + $0x8] sm:$0xf]
    %v203 = vld [vmem:[%s2 + $0xc] sm:$0xf]
    %v204 = vld [vmem:[%s2 + $0x10] sm:$0xf]
    %v205 = vld [vmem:[%s2 + $0x14] sm:$0xf]
    %v206 = vld [vmem:[%s2 + $0x18] sm:$0xf]
    %v207 = vld [vmem:[%s2 + $0x1c] sm:$0xf]
    %v216 = vunpack.c.l.b16 %v200
    %v217 = vunpack.c.l.b16 %v201
    %v218 = vunpack.c.l.b16 %v202
    %v219 = vunpack.c.l.b16 %v203
    %v220 = vunpack.c.l.b16 %v204
    %v221 = vunpack.c.l.b16 %v205
    %v222 = vunpack.c.l.b16 %v206
    %v223 = vunpack.c.l.b16 %v207
    %v224 = vpack.c.b16 %v217, %v216
    %v225 = vpack.c.b16 %v219, %v218
    %v226 = vpack.c.b16 %v221, %v220
    %v227 = vpack.c.b16 %v223, %v222
    %vm232 = vcmask 523264
    %v234 = vsel %vm232, %v192, 0
    %v237 = vsel %vm232, %v193, 0
    %v240 = vsel %vm232, %v194, 0
    %v243 = vsel %vm232, %v195, 0
    %v246 = vsel %vm232, %v196, 0
    %v249 = vsel %vm232, %v197, 0
    %v252 = vsel %vm232, %v198, 0
    %v255 = vsel %vm232, %v199, 0
    %257 = vmatprep.subr.bf16.mxu0 0
    %258 = vmatpush1.bf16.msra.mxu0 0
    %259 = vmatprep.subr.bf16.mxu0 0
    %260 = vmatpush1.bf16.msra.mxu0 0
    %261 = vmatprep.subr.bf16.mxu0 0
    %262 = vmatpush1.bf16.msra.mxu0 0
    %263 = vmatprep.subr.bf16.mxu0 0
    %264 = vmatpush1.bf16.msra.mxu0 0
    %265 = vmatprep.subr.bf16.mxu0 0
    %266 = vmatpush1.bf16.msra.mxu0 %v227
    %267 = vmatprep.subr.bf16.mxu0 0
    %268 = vmatpush1.bf16.msra.mxu0 %v226
    %269 = vmatprep.subr.bf16.mxu0 0
    %270 = vmatpush1.bf16.msra.mxu0 %v225
    %271 = vmatprep.subr.bf16.mxu0 0
    %272 = vmatpush1.bf16.msra.mxu0 %v224
    %273 = vmatprep.subr.bf16.mxu0 0
    %274 = vmatpush2.bf16.msra.mxu0 0
    %275 = vmatprep.subr.bf16.mxu0 0
    %276 = vmatpush2.bf16.msra.mxu0 0
    %277 = vmatprep.subr.bf16.mxu0 0
    %278 = vmatpush2.bf16.msra.mxu0 0
    %279 = vmatprep.subr.bf16.mxu0 0
    %280 = vmatpush2.bf16.msra.mxu0 0
    %281 = vmatprep.subr.bf16.mxu0 0
    %282 = vmatpush2.bf16.msra.mxu0 0
    %283 = vmatprep.subr.bf16.mxu0 0
    %284 = vmatpush2.bf16.msra.mxu0 0
    %285 = vmatprep.subr.bf16.mxu0 0
    %286 = vmatpush2.bf16.msra.mxu0 0
    %287 = vmatprep.subr.bf16.mxu0 0
    %288 = vmatpush2.bf16.msra.mxu0 0
    %289 = vmatprep.mubr.bf16.mxu0 0
    %290 = vmatmul.mubr.bf16.gmra.mxu0 %v234
    %v291 = vpop.f32.mrf.mxu0
    %v292 = vadd.f32 0.0, %v291
    %v293 = vpop.f32.mrf.mxu0
    %v294 = vpop.f32.mrf.mxu0
    %v295 = vadd.f32 0.0, %v294
    %v296 = vpop.f32.mrf.mxu0
    %297 = vmatprep.mubr.bf16.mxu0 0
    %298 = vmatmul.mubr.bf16.gmra.mxu0 %v237
    %v299 = vpop.f32.mrf.mxu0
    %v300 = vadd.f32 0.0, %v299
    %v301 = vpop.f32.mrf.mxu0
    %v302 = vpop.f32.mrf.mxu0
    %v303 = vadd.f32 0.0, %v302
    %v304 = vpop.f32.mrf.mxu0
    %305 = vmatprep.mubr.bf16.mxu0 0
    %306 = vmatmul.mubr.bf16.gmra.mxu0 %v240
    %v307 = vpop.f32.mrf.mxu0
    %v308 = vadd.f32 0.0, %v307
    %v309 = vpop.f32.mrf.mxu0
    %v310 = vpop.f32.mrf.mxu0
    %v311 = vadd.f32 0.0, %v310
    %v312 = vpop.f32.mrf.mxu0
    %313 = vmatprep.mubr.bf16.mxu0 0
    %314 = vmatmul.mubr.bf16.gmra.mxu0 %v243
    %v315 = vpop.f32.mrf.mxu0
    %v316 = vadd.f32 0.0, %v315
    %v317 = vpop.f32.mrf.mxu0
    %v318 = vpop.f32.mrf.mxu0
    %v319 = vadd.f32 0.0, %v318
    %v320 = vpop.f32.mrf.mxu0
    %321 = vmatprep.mubr.bf16.mxu0 0
    %322 = vmatmul.mubr.bf16.gmra.mxu0 %v246
    %v323 = vpop.f32.mrf.mxu0
    %v324 = vadd.f32 0.0, %v323
    %v325 = vpop.f32.mrf.mxu0
    %v326 = vpop.f32.mrf.mxu0
    %v327 = vadd.f32 0.0, %v326
    %v328 = vpop.f32.mrf.mxu0
    %329 = vmatprep.mubr.bf16.mxu0 0
    %330 = vmatmul.mubr.bf16.gmra.mxu0 %v249
    %v331 = vpop.f32.mrf.mxu0
    %v332 = vadd.f32 0.0, %v331
    %v333 = vpop.f32.mrf.mxu0
    %v334 = vpop.f32.mrf.mxu0
    %v335 = vadd.f32 0.0, %v334
    %v336 = vpop.f32.mrf.mxu0
    %337 = vmatprep.mubr.bf16.mxu0 0
    %338 = vmatmul.mubr.bf16.gmra.mxu0 %v252
    %v339 = vpop.f32.mrf.mxu0
    %v340 = vadd.f32 0.0, %v339
    %v341 = vpop.f32.mrf.mxu0
    %v342 = vpop.f32.mrf.mxu0
    %v343 = vadd.f32 0.0, %v342
    %v344 = vpop.f32.mrf.mxu0
    %345 = vmatprep.mubr.bf16.mxu0 0
    %346 = vmatmul.mubr.bf16.gmra.mxu0 %v255
    %v347 = vpop.f32.mrf.mxu0
    %v348 = vadd.f32 0.0, %v347
    %v349 = vpop.f32.mrf.mxu0
    %v350 = vpop.f32.mrf.mxu0
    %v351 = vadd.f32 0.0, %v350
    %v352 = vpop.f32.mrf.mxu0
    %353 = vdwg.mxu0
    %v354 = vld [vmem:[%s3] sm:$0xf]
    %v355 = vld [vmem:[%s3 + $0x4] sm:$0xf]
    %v356 = vld [vmem:[%s3 + $0x8] sm:$0xf]
    %v357 = vld [vmem:[%s3 + $0xc] sm:$0xf]
    %v358 = vld [vmem:[%s3 + $0x10] sm:$0xf]
    %v359 = vld [vmem:[%s3 + $0x14] sm:$0xf]
    %v360 = vld [vmem:[%s3 + $0x18] sm:$0xf]
    %v361 = vld [vmem:[%s3 + $0x1c] sm:$0xf]
    %v370 = vunpack.c.l.b16 %v354
    %v371 = vunpack.c.l.b16 %v355
    %v372 = vunpack.c.l.b16 %v356
    %v373 = vunpack.c.l.b16 %v357
    %v374 = vunpack.c.l.b16 %v358
    %v375 = vunpack.c.l.b16 %v359
    %v376 = vunpack.c.l.b16 %v360
    %v377 = vunpack.c.l.b16 %v361
    %v378 = vpack.c.b16 %v371, %v370
    %v379 = vpack.c.b16 %v373, %v372
    %v380 = vpack.c.b16 %v375, %v374
    %v381 = vpack.c.b16 %v377, %v376
    %386 = vmatprep.subr.bf16.mxu0 0
    %387 = vmatpush1.bf16.msra.mxu0 0
    %388 = vmatprep.subr.bf16.mxu0 0
    %389 = vmatpush1.bf16.msra.mxu0 0
    %390 = vmatprep.subr.bf16.mxu0 0
    %391 = vmatpush1.bf16.msra.mxu0 0
    %392 = vmatprep.subr.bf16.mxu0 0
    %393 = vmatpush1.bf16.msra.mxu0 0
    %394 = vmatprep.subr.bf16.mxu0 0
    %395 = vmatpush1.bf16.msra.mxu0 %v381
    %396 = vmatprep.subr.bf16.mxu0 0
    %397 = vmatpush1.bf16.msra.mxu0 %v380
    %398 = vmatprep.subr.bf16.mxu0 0
    %399 = vmatpush1.bf16.msra.mxu0 %v379
    %400 = vmatprep.subr.bf16.mxu0 0
    %401 = vmatpush1.bf16.msra.mxu0 %v378
    %402 = vmatprep.subr.bf16.mxu0 0
    %403 = vmatpush2.bf16.msra.mxu0 0
    %404 = vmatprep.subr.bf16.mxu0 0
    %405 = vmatpush2.bf16.msra.mxu0 0
    %406 = vmatprep.subr.bf16.mxu0 0
    %407 = vmatpush2.bf16.msra.mxu0 0
    %408 = vmatprep.subr.bf16.mxu0 0
    %409 = vmatpush2.bf16.msra.mxu0 0
    %410 = vmatprep.subr.bf16.mxu0 0
    %411 = vmatpush2.bf16.msra.mxu0 0
    %412 = vmatprep.subr.bf16.mxu0 0
    %413 = vmatpush2.bf16.msra.mxu0 0
    %414 = vmatprep.subr.bf16.mxu0 0
    %415 = vmatpush2.bf16.msra.mxu0 0
    %416 = vmatprep.subr.bf16.mxu0 0
    %417 = vmatpush2.bf16.msra.mxu0 0
    %418 = vmatprep.mubr.bf16.mxu0 0
    %419 = vmatmul.mubr.bf16.gmra.mxu0 %v234
    %v420 = vpop.f32.mrf.mxu0
    %v421 = vadd.f32 0.0, %v420
    %v422 = vpop.f32.mrf.mxu0
    %v423 = vpop.f32.mrf.mxu0
    %v424 = vadd.f32 0.0, %v423
    %v425 = vpop.f32.mrf.mxu0
    %426 = vmatprep.mubr.bf16.mxu0 0
    %427 = vmatmul.mubr.bf16.gmra.mxu0 %v237
    %v428 = vpop.f32.mrf.mxu0
    %v429 = vadd.f32 0.0, %v428
    %v430 = vpop.f32.mrf.mxu0
    %v431 = vpop.f32.mrf.mxu0
    %v432 = vadd.f32 0.0, %v431
    %v433 = vpop.f32.mrf.mxu0
    %434 = vmatprep.mubr.bf16.mxu0 0
    %435 = vmatmul.mubr.bf16.gmra.mxu0 %v240
    %v436 = vpop.f32.mrf.mxu0
    %v437 = vadd.f32 0.0, %v436
    %v438 = vpop.f32.mrf.mxu0
    %v439 = vpop.f32.mrf.mxu0
    %v440 = vadd.f32 0.0, %v439
    %v441 = vpop.f32.mrf.mxu0
    %442 = vmatprep.mubr.bf16.mxu0 0
    %443 = vmatmul.mubr.bf16.gmra.mxu0 %v243
    %v444 = vpop.f32.mrf.mxu0
    %v445 = vadd.f32 0.0, %v444
    %v446 = vpop.f32.mrf.mxu0
    %v447 = vpop.f32.mrf.mxu0
    %v448 = vadd.f32 0.0, %v447
    %v449 = vpop.f32.mrf.mxu0
    %450 = vmatprep.mubr.bf16.mxu0 0
    %451 = vmatmul.mubr.bf16.gmra.mxu0 %v246
    %v452 = vpop.f32.mrf.mxu0
    %v453 = vadd.f32 0.0, %v452
    %v454 = vpop.f32.mrf.mxu0
    %v455 = vpop.f32.mrf.mxu0
    %v456 = vadd.f32 0.0, %v455
    %v457 = vpop.f32.mrf.mxu0
    %458 = vmatprep.mubr.bf16.mxu0 0
    %459 = vmatmul.mubr.bf16.gmra.mxu0 %v249
    %v460 = vpop.f32.mrf.mxu0
    %v461 = vadd.f32 0.0, %v460
    %v462 = vpop.f32.mrf.mxu0
    %v463 = vpop.f32.mrf.mxu0
    %v464 = vadd.f32 0.0, %v463
    %v465 = vpop.f32.mrf.mxu0
    %466 = vmatprep.mubr.bf16.mxu0 0
    %467 = vmatmul.mubr.bf16.gmra.mxu0 %v252
    %v468 = vpop.f32.mrf.mxu0
    %v469 = vadd.f32 0.0, %v468
    %v470 = vpop.f32.mrf.mxu0
    %v471 = vpop.f32.mrf.mxu0
    %v472 = vadd.f32 0.0, %v471
    %v473 = vpop.f32.mrf.mxu0
    %474 = vmatprep.mubr.bf16.mxu0 0
    %475 = vmatmul.mubr.bf16.gmra.mxu0 %v255
    %v476 = vpop.f32.mrf.mxu0
    %v477 = vadd.f32 0.0, %v476
    %v478 = vpop.f32.mrf.mxu0
    %v479 = vpop.f32.mrf.mxu0
    %v480 = vadd.f32 0.0, %v479
    %v481 = vpop.f32.mrf.mxu0
    %482 = vdwg.mxu0
    %v483 = vld [vmem:[%s4] sm:$0xf]
    %v484 = vld [vmem:[%s4 + $0x4] sm:$0xf]
    %v485 = vld [vmem:[%s4 + $0x8] sm:$0xf]
    %v486 = vld [vmem:[%s4 + $0xc] sm:$0xf]
    %v487 = vld [vmem:[%s4 + $0x10] sm:$0xf]
    %v488 = vld [vmem:[%s4 + $0x14] sm:$0xf]
    %v489 = vld [vmem:[%s4 + $0x18] sm:$0xf]
    %v490 = vld [vmem:[%s4 + $0x1c] sm:$0xf]
    %v499 = vunpack.c.l.b16 %v483
    %v500 = vunpack.c.l.b16 %v484
    %v501 = vunpack.c.l.b16 %v485
    %v502 = vunpack.c.l.b16 %v486
    %v503 = vunpack.c.l.b16 %v487
    %v504 = vunpack.c.l.b16 %v488
    %v505 = vunpack.c.l.b16 %v489
    %v506 = vunpack.c.l.b16 %v490
    %v507 = vpack.c.b16 %v500, %v499
    %v508 = vpack.c.b16 %v502, %v501
    %v509 = vpack.c.b16 %v504, %v503
    %v510 = vpack.c.b16 %v506, %v505
    %515 = vmatprep.subr.bf16.mxu0 0
    %516 = vmatpush1.bf16.msra.mxu0 0
    %517 = vmatprep.subr.bf16.mxu0 0
    %518 = vmatpush1.bf16.msra.mxu0 0
    %519 = vmatprep.subr.bf16.mxu0 0
    %520 = vmatpush1.bf16.msra.mxu0 0
    %521 = vmatprep.subr.bf16.mxu0 0
    %522 = vmatpush1.bf16.msra.mxu0 0
    %523 = vmatprep.subr.bf16.mxu0 0
    %524 = vmatpush1.bf16.msra.mxu0 %v510
    %525 = vmatprep.subr.bf16.mxu0 0
    %526 = vmatpush1.bf16.msra.mxu0 %v509
    %527 = vmatprep.subr.bf16.mxu0 0
    %528 = vmatpush1.bf16.msra.mxu0 %v508
    %529 = vmatprep.subr.bf16.mxu0 0
    %530 = vmatpush1.bf16.msra.mxu0 %v507
    %531 = vmatprep.subr.bf16.mxu0 0
    %532 = vmatpush2.bf16.msra.mxu0 0
    %533 = vmatprep.subr.bf16.mxu0 0
    %534 = vmatpush2.bf16.msra.mxu0 0
    %535 = vmatprep.subr.bf16.mxu0 0
    %536 = vmatpush2.bf16.msra.mxu0 0
    %537 = vmatprep.subr.bf16.mxu0 0
    %538 = vmatpush2.bf16.msra.mxu0 0
    %539 = vmatprep.subr.bf16.mxu0 0
    %540 = vmatpush2.bf16.msra.mxu0 0
    %541 = vmatprep.subr.bf16.mxu0 0
    %542 = vmatpush2.bf16.msra.mxu0 0
    %543 = vmatprep.subr.bf16.mxu0 0
    %544 = vmatpush2.bf16.msra.mxu0 0
    %545 = vmatprep.subr.bf16.mxu0 0
    %546 = vmatpush2.bf16.msra.mxu0 0
    %547 = vmatprep.mubr.bf16.mxu0 0
    %548 = vmatmul.mubr.bf16.gmra.mxu0 %v234
    %v549 = vpop.f32.mrf.mxu0
    %v550 = vadd.f32 0.0, %v549
    %v551 = vpop.f32.mrf.mxu0
    %v552 = vpop.f32.mrf.mxu0
    %v553 = vadd.f32 0.0, %v552
    %v554 = vpop.f32.mrf.mxu0
    %555 = vmatprep.mubr.bf16.mxu0 0
    %556 = vmatmul.mubr.bf16.gmra.mxu0 %v237
    %v557 = vpop.f32.mrf.mxu0
    %v558 = vadd.f32 0.0, %v557
    %v559 = vpop.f32.mrf.mxu0
    %v560 = vpop.f32.mrf.mxu0
    %v561 = vadd.f32 0.0, %v560
    %v562 = vpop.f32.mrf.mxu0
    %563 = vmatprep.mubr.bf16.mxu0 0
    %564 = vmatmul.mubr.bf16.gmra.mxu0 %v240
    %v565 = vpop.f32.mrf.mxu0
    %v566 = vadd.f32 0.0, %v565
    %v567 = vpop.f32.mrf.mxu0
    %v568 = vpop.f32.mrf.mxu0
    %v569 = vadd.f32 0.0, %v568
    %v570 = vpop.f32.mrf.mxu0
    %571 = vmatprep.mubr.bf16.mxu0 0
    %572 = vmatmul.mubr.bf16.gmra.mxu0 %v243
    %v573 = vpop.f32.mrf.mxu0
    %v574 = vadd.f32 0.0, %v573
    %v575 = vpop.f32.mrf.mxu0
    %v576 = vpop.f32.mrf.mxu0
    %v577 = vadd.f32 0.0, %v576
    %v578 = vpop.f32.mrf.mxu0
    %579 = vmatprep.mubr.bf16.mxu0 0
    %580 = vmatmul.mubr.bf16.gmra.mxu0 %v246
    %v581 = vpop.f32.mrf.mxu0
    %v582 = vadd.f32 0.0, %v581
    %v583 = vpop.f32.mrf.mxu0
    %v584 = vpop.f32.mrf.mxu0
    %v585 = vadd.f32 0.0, %v584
    %v586 = vpop.f32.mrf.mxu0
    %587 = vmatprep.mubr.bf16.mxu0 0
    %588 = vmatmul.mubr.bf16.gmra.mxu0 %v249
    %v589 = vpop.f32.mrf.mxu0
    %v590 = vadd.f32 0.0, %v589
    %v591 = vpop.f32.mrf.mxu0
    %v592 = vpop.f32.mrf.mxu0
    %v593 = vadd.f32 0.0, %v592
    %v594 = vpop.f32.mrf.mxu0
    %595 = vmatprep.mubr.bf16.mxu0 0
    %596 = vmatmul.mubr.bf16.gmra.mxu0 %v252
    %v597 = vpop.f32.mrf.mxu0
    %v598 = vadd.f32 0.0, %v597
    %v599 = vpop.f32.mrf.mxu0
    %v600 = vpop.f32.mrf.mxu0
    %v601 = vadd.f32 0.0, %v600
    %v602 = vpop.f32.mrf.mxu0
    %603 = vmatprep.mubr.bf16.mxu0 0
    %604 = vmatmul.mubr.bf16.gmra.mxu0 %v255
    %v605 = vpop.f32.mrf.mxu0
    %v606 = vadd.f32 0.0, %v605
    %v607 = vpop.f32.mrf.mxu0
    %v608 = vpop.f32.mrf.mxu0
    %v609 = vadd.f32 0.0, %v608
    %v610 = vpop.f32.mrf.mxu0
    %611 = vdwg.mxu0
    %v612 = vpack.c.bf16 %v295, %v292
    %v613 = vpack.c.bf16 %v303, %v300
    %v614 = vpack.c.bf16 %v311, %v308
    %v615 = vpack.c.bf16 %v319, %v316
    %v616 = vpack.c.bf16 %v327, %v324
    %v617 = vpack.c.bf16 %v335, %v332
    %v618 = vpack.c.bf16 %v343, %v340
    %v619 = vpack.c.bf16 %v351, %v348
    %v620 = vpack.c.bf16 %v424, %v421
    %v621 = vpack.c.bf16 %v432, %v429
    %v622 = vpack.c.bf16 %v440, %v437
    %v623 = vpack.c.bf16 %v448, %v445
    %v624 = vpack.c.bf16 %v456, %v453
    %v625 = vpack.c.bf16 %v464, %v461
    %v626 = vpack.c.bf16 %v472, %v469
    %v627 = vpack.c.bf16 %v480, %v477
    %v628 = vpack.c.bf16 %v553, %v550
    %v629 = vpack.c.bf16 %v561, %v558
    %v630 = vpack.c.bf16 %v569, %v566
    %v631 = vpack.c.bf16 %v577, %v574
    %v632 = vpack.c.bf16 %v585, %v582
    %v633 = vpack.c.bf16 %v593, %v590
    %v634 = vpack.c.bf16 %v601, %v598
    %v635 = vpack.c.bf16 %v609, %v606
    %vm636 = vcmask 130048
    %v638 = vsel %vm636, %v612, 0
    %v641 = vsel %vm636, %v613, 0
    %v644 = vsel %vm636, %v614, 0
    %v647 = vsel %vm636, %v615, 0
    %v650 = vsel %vm636, %v620, 0
    %v653 = vsel %vm636, %v621, 0
    %v656 = vsel %vm636, %v622, 0
    %v659 = vsel %vm636, %v623, 0
    %661 = vmatprep.subr.bf16.mxu0 0
    %662 = vmatpush1.bf16.xpose.msra.mxu0 0
    %663 = vmatprep.subr.bf16.mxu0 0
    %664 = vmatpush1.bf16.xpose.msra.mxu0 0
    %665 = vmatprep.subr.bf16.mxu0 0
    %666 = vmatpush1.bf16.xpose.msra.mxu0 0
    %667 = vmatprep.subr.bf16.mxu0 0
    %668 = vmatpush1.bf16.xpose.msra.mxu0 0
    %669 = vmatprep.subr.bf16.mxu0 0
    %670 = vmatpush1.bf16.xpose.msra.mxu0 %v659
    %671 = vmatprep.subr.bf16.mxu0 0
    %672 = vmatpush1.bf16.xpose.msra.mxu0 %v656
    %673 = vmatprep.subr.bf16.mxu0 0
    %674 = vmatpush1.bf16.xpose.msra.mxu0 %v653
    %675 = vmatprep.subr.bf16.mxu0 0
    %676 = vmatpush1.bf16.xpose.msra.mxu0 %v650
    %677 = vmatprep.subr.bf16.mxu0 0
    %678 = vmatpush2.bf16.xpose.msra.mxu0 0
    %679 = vmatprep.subr.bf16.mxu0 0
    %680 = vmatpush2.bf16.xpose.msra.mxu0 0
    %681 = vmatprep.subr.bf16.mxu0 0
    %682 = vmatpush2.bf16.xpose.msra.mxu0 0
    %683 = vmatprep.subr.bf16.mxu0 0
    %684 = vmatpush2.bf16.xpose.msra.mxu0 0
    %685 = vmatprep.subr.bf16.mxu0 0
    %686 = vmatpush2.bf16.xpose.msra.mxu0 0
    %687 = vmatprep.subr.bf16.mxu0 0
    %688 = vmatpush2.bf16.xpose.msra.mxu0 0
    %689 = vmatprep.subr.bf16.mxu0 0
    %690 = vmatpush2.bf16.xpose.msra.mxu0 0
    %691 = vmatprep.subr.bf16.mxu0 0
    %692 = vmatpush2.bf16.xpose.msra.mxu0 0
    %693 = vmatprep.mubr.bf16.mxu0 0
    %694 = vmatmul.mubr.bf16.gmra.mxu0 %v638
    %v695 = vpop.f32.mrf.mxu0
    %v696 = vadd.f32 0.0, %v695
    %v697 = vpop.f32.mrf.mxu0
    %v698 = vpop.f32.mrf.mxu0
    %v699 = vadd.f32 0.0, %v698
    %v700 = vpop.f32.mrf.mxu0
    %701 = vmatprep.mubr.bf16.mxu0 0
    %702 = vmatmul.mubr.bf16.gmra.mxu0 %v641
    %v703 = vpop.f32.mrf.mxu0
    %v704 = vadd.f32 0.0, %v703
    %v705 = vpop.f32.mrf.mxu0
    %v706 = vpop.f32.mrf.mxu0
    %v707 = vadd.f32 0.0, %v706
    %v708 = vpop.f32.mrf.mxu0
    %709 = vmatprep.mubr.bf16.mxu0 0
    %710 = vmatmul.mubr.bf16.gmra.mxu0 %v644
    %v711 = vpop.f32.mrf.mxu0
    %v712 = vadd.f32 0.0, %v711
    %v713 = vpop.f32.mrf.mxu0
    %v714 = vpop.f32.mrf.mxu0
    %v715 = vadd.f32 0.0, %v714
    %v716 = vpop.f32.mrf.mxu0
    %717 = vmatprep.mubr.bf16.mxu0 0
    %718 = vmatmul.mubr.bf16.gmra.mxu0 %v647
    %v719 = vpop.f32.mrf.mxu0
    %v720 = vadd.f32 0.0, %v719
    %v721 = vpop.f32.mrf.mxu0
    %v722 = vpop.f32.mrf.mxu0
    %v723 = vadd.f32 0.0, %v722
    %v724 = vpop.f32.mrf.mxu0
    %725 = vdwg.mxu0
    %v727 = vsel %vm636, %v616, 0
    %v730 = vsel %vm636, %v617, 0
    %v733 = vsel %vm636, %v618, 0
    %v736 = vsel %vm636, %v619, 0
    %v739 = vsel %vm636, %v624, 0
    %v742 = vsel %vm636, %v625, 0
    %v745 = vsel %vm636, %v626, 0
    %v748 = vsel %vm636, %v627, 0
    %750 = vmatprep.subr.bf16.mxu0 0
    %751 = vmatpush1.bf16.xpose.msra.mxu0 0
    %752 = vmatprep.subr.bf16.mxu0 0
    %753 = vmatpush1.bf16.xpose.msra.mxu0 0
    %754 = vmatprep.subr.bf16.mxu0 0
    %755 = vmatpush1.bf16.xpose.msra.mxu0 0
    %756 = vmatprep.subr.bf16.mxu0 0
    %757 = vmatpush1.bf16.xpose.msra.mxu0 0
    %758 = vmatprep.subr.bf16.mxu0 0
    %759 = vmatpush1.bf16.xpose.msra.mxu0 %v748
    %760 = vmatprep.subr.bf16.mxu0 0
    %761 = vmatpush1.bf16.xpose.msra.mxu0 %v745
    %762 = vmatprep.subr.bf16.mxu0 0
    %763 = vmatpush1.bf16.xpose.msra.mxu0 %v742
    %764 = vmatprep.subr.bf16.mxu0 0
    %765 = vmatpush1.bf16.xpose.msra.mxu0 %v739
    %766 = vmatprep.subr.bf16.mxu0 0
    %767 = vmatpush2.bf16.xpose.msra.mxu0 0
    %768 = vmatprep.subr.bf16.mxu0 0
    %769 = vmatpush2.bf16.xpose.msra.mxu0 0
    %770 = vmatprep.subr.bf16.mxu0 0
    %771 = vmatpush2.bf16.xpose.msra.mxu0 0
    %772 = vmatprep.subr.bf16.mxu0 0
    %773 = vmatpush2.bf16.xpose.msra.mxu0 0
    %774 = vmatprep.subr.bf16.mxu0 0
    %775 = vmatpush2.bf16.xpose.msra.mxu0 0
    %776 = vmatprep.subr.bf16.mxu0 0
    %777 = vmatpush2.bf16.xpose.msra.mxu0 0
    %778 = vmatprep.subr.bf16.mxu0 0
    %779 = vmatpush2.bf16.xpose.msra.mxu0 0
    %780 = vmatprep.subr.bf16.mxu0 0
    %781 = vmatpush2.bf16.xpose.msra.mxu0 0
    %782 = vmatprep.mubr.bf16.mxu0 0
    %783 = vmatmul.mubr.bf16.gmra.mxu0 %v727
    %v784 = vpop.f32.mrf.mxu0
    %v785 = vadd.f32 0.0, %v784
    %v786 = vpop.f32.mrf.mxu0
    %v787 = vpop.f32.mrf.mxu0
    %v788 = vadd.f32 0.0, %v787
    %v789 = vpop.f32.mrf.mxu0
    %790 = vmatprep.mubr.bf16.mxu0 0
    %791 = vmatmul.mubr.bf16.gmra.mxu0 %v730
    %v792 = vpop.f32.mrf.mxu0
    %v793 = vadd.f32 0.0, %v792
    %v794 = vpop.f32.mrf.mxu0
    %v795 = vpop.f32.mrf.mxu0
    %v796 = vadd.f32 0.0, %v795
    %v797 = vpop.f32.mrf.mxu0
    %798 = vmatprep.mubr.bf16.mxu0 0
    %799 = vmatmul.mubr.bf16.gmra.mxu0 %v733
    %v800 = vpop.f32.mrf.mxu0
    %v801 = vadd.f32 0.0, %v800
    %v802 = vpop.f32.mrf.mxu0
    %v803 = vpop.f32.mrf.mxu0
    %v804 = vadd.f32 0.0, %v803
    %v805 = vpop.f32.mrf.mxu0
    %806 = vmatprep.mubr.bf16.mxu0 0
    %807 = vmatmul.mubr.bf16.gmra.mxu0 %v736
    %v808 = vpop.f32.mrf.mxu0
    %v809 = vadd.f32 0.0, %v808
    %v810 = vpop.f32.mrf.mxu0
    %v811 = vpop.f32.mrf.mxu0
    %v812 = vadd.f32 0.0, %v811
    %v813 = vpop.f32.mrf.mxu0
    %814 = vdwg.mxu0
    %v815 = vsel %vm232, %v696, -inf
    %816 = vmax.xlane.f32.xlu0 %v815
    %v817 = vpop.xlane.xlu0 %816
    %v818 = vsel %vm232, %v699, -inf
    %819 = vmax.xlane.f32.xlu0 %v818
    %v820 = vpop.xlane.xlu0 %819
    %v821 = vsel %vm232, %v704, -inf
    %822 = vmax.xlane.f32.xlu0 %v821
    %v823 = vpop.xlane.xlu0 %822
    %v824 = vsel %vm232, %v707, -inf
    %825 = vmax.xlane.f32.xlu0 %v824
    %v826 = vpop.xlane.xlu0 %825
    %v827 = vsel %vm232, %v712, -inf
    %828 = vmax.xlane.f32.xlu0 %v827
    %v829 = vpop.xlane.xlu0 %828
    %v830 = vsel %vm232, %v715, -inf
    %831 = vmax.xlane.f32.xlu0 %v830
    %v832 = vpop.xlane.xlu0 %831
    %v833 = vsel %vm232, %v720, -inf
    %834 = vmax.xlane.f32.xlu0 %v833
    %v835 = vpop.xlane.xlu0 %834
    %v836 = vsel %vm232, %v723, -inf
    %837 = vmax.xlane.f32.xlu0 %v836
    %v838 = vpop.xlane.xlu0 %837
    %v839 = vsel %vm232, %v785, -inf
    %840 = vmax.xlane.f32.xlu0 %v839
    %v841 = vpop.xlane.xlu0 %840
    %v842 = vsel %vm232, %v788, -inf
    %843 = vmax.xlane.f32.xlu0 %v842
    %v844 = vpop.xlane.xlu0 %843
    %v845 = vsel %vm232, %v793, -inf
    %846 = vmax.xlane.f32.xlu0 %v845
    %v847 = vpop.xlane.xlu0 %846
    %v848 = vsel %vm232, %v796, -inf
    %849 = vmax.xlane.f32.xlu0 %v848
    %v850 = vpop.xlane.xlu0 %849
    %v851 = vsel %vm232, %v801, -inf
    %852 = vmax.xlane.f32.xlu0 %v851
    %v853 = vpop.xlane.xlu0 %852
    %v854 = vsel %vm232, %v804, -inf
    %855 = vmax.xlane.f32.xlu0 %v854
    %v856 = vpop.xlane.xlu0 %855
    %v857 = vsel %vm232, %v809, -inf
    %858 = vmax.xlane.f32.xlu0 %v857
    %v859 = vpop.xlane.xlu0 %858
    %v860 = vsel %vm232, %v812, -inf
    %861 = vmax.xlane.f32.xlu0 %v860
    %v862 = vpop.xlane.xlu0 %861
    %v863 = vsub.f32 %v696, %v817
    %v864 = vsub.f32 %v699, %v820
    %v865 = vsub.f32 %v704, %v823
    %v866 = vsub.f32 %v707, %v826
    %v867 = vsub.f32 %v712, %v829
    %v868 = vsub.f32 %v715, %v832
    %v869 = vsub.f32 %v720, %v835
    %v870 = vsub.f32 %v723, %v838
    %v871 = vsub.f32 %v785, %v841
    %v872 = vsub.f32 %v788, %v844
    %v873 = vsub.f32 %v793, %v847
    %v874 = vsub.f32 %v796, %v850
    %v875 = vsub.f32 %v801, %v853
    %v876 = vsub.f32 %v804, %v856
    %v877 = vsub.f32 %v809, %v859
    %v878 = vsub.f32 %v812, %v862
    %v879 = vmul.f32 %v863, 1.442695
    %v880 = vpow.pop %v879
    %v881 = vmul.f32 %v864, 1.442695
    %v882 = vpow.pop %v881
    %v883 = vmul.f32 %v865, 1.442695
    %v884 = vpow.pop %v883
    %v885 = vmul.f32 %v866, 1.442695
    %v886 = vpow.pop %v885
    %v887 = vmul.f32 %v867, 1.442695
    %v888 = vpow.pop %v887
    %v889 = vmul.f32 %v868, 1.442695
    %v890 = vpow.pop %v889
    %v891 = vmul.f32 %v869, 1.442695
    %v892 = vpow.pop %v891
    %v893 = vmul.f32 %v870, 1.442695
    %v894 = vpow.pop %v893
    %v895 = vmul.f32 %v871, 1.442695
    %v896 = vpow.pop %v895
    %v897 = vmul.f32 %v872, 1.442695
    %v898 = vpow.pop %v897
    %v899 = vmul.f32 %v873, 1.442695
    %v900 = vpow.pop %v899
    %v901 = vmul.f32 %v874, 1.442695
    %v902 = vpow.pop %v901
    %v903 = vmul.f32 %v875, 1.442695
    %v904 = vpow.pop %v903
    %v905 = vmul.f32 %v876, 1.442695
    %v906 = vpow.pop %v905
    %v907 = vmul.f32 %v877, 1.442695
    %v908 = vpow.pop %v907
    %v909 = vmul.f32 %v878, 1.442695
    %v910 = vpow.pop %v909
    %v911 = vsel %vm232, %v880, 0.0
    %912 = vadd.xlane.f32.xlu0 %v911
    %v913 = vpop.xlane.xlu0 %912
    %v914 = vsel %vm232, %v882, 0.0
    %915 = vadd.xlane.f32.xlu0 %v914
    %v916 = vpop.xlane.xlu0 %915
    %v917 = vsel %vm232, %v884, 0.0
    %918 = vadd.xlane.f32.xlu0 %v917
    %v919 = vpop.xlane.xlu0 %918
    %v920 = vsel %vm232, %v886, 0.0
    %921 = vadd.xlane.f32.xlu0 %v920
    %v922 = vpop.xlane.xlu0 %921
    %v923 = vsel %vm232, %v888, 0.0
    %924 = vadd.xlane.f32.xlu0 %v923
    %v925 = vpop.xlane.xlu0 %924
    %v926 = vsel %vm232, %v890, 0.0
    %927 = vadd.xlane.f32.xlu0 %v926
    %v928 = vpop.xlane.xlu0 %927
    %v929 = vsel %vm232, %v892, 0.0
    %930 = vadd.xlane.f32.xlu0 %v929
    %v931 = vpop.xlane.xlu0 %930
    %v932 = vsel %vm232, %v894, 0.0
    %933 = vadd.xlane.f32.xlu0 %v932
    %v934 = vpop.xlane.xlu0 %933
    %v935 = vsel %vm232, %v896, 0.0
    %936 = vadd.xlane.f32.xlu0 %v935
    %v937 = vpop.xlane.xlu0 %936
    %v938 = vsel %vm232, %v898, 0.0
    %939 = vadd.xlane.f32.xlu0 %v938
    %v940 = vpop.xlane.xlu0 %939
    %v941 = vsel %vm232, %v900, 0.0
    %942 = vadd.xlane.f32.xlu0 %v941
    %v943 = vpop.xlane.xlu0 %942
    %v944 = vsel %vm232, %v902, 0.0
    %945 = vadd.xlane.f32.xlu0 %v944
    %v946 = vpop.xlane.xlu0 %945
    %v947 = vsel %vm232, %v904, 0.0
    %948 = vadd.xlane.f32.xlu0 %v947
    %v949 = vpop.xlane.xlu0 %948
    %v950 = vsel %vm232, %v906, 0.0
    %951 = vadd.xlane.f32.xlu0 %v950
    %v952 = vpop.xlane.xlu0 %951
    %v953 = vsel %vm232, %v908, 0.0
    %954 = vadd.xlane.f32.xlu0 %v953
    %v955 = vpop.xlane.xlu0 %954
    %v956 = vsel %vm232, %v910, 0.0
    %957 = vadd.xlane.f32.xlu0 %v956
    %v958 = vpop.xlane.xlu0 %957
    %v959 = vrcp.pop %v913
    %v960 = vrcp.pop %v916
    %v961 = vrcp.pop %v919
    %v962 = vrcp.pop %v922
    %v963 = vrcp.pop %v925
    %v964 = vrcp.pop %v928
    %v965 = vrcp.pop %v931
    %v966 = vrcp.pop %v934
    %v967 = vrcp.pop %v937
    %v968 = vrcp.pop %v940
    %v969 = vrcp.pop %v943
    %v970 = vrcp.pop %v946
    %v971 = vrcp.pop %v949
    %v972 = vrcp.pop %v952
    %v973 = vrcp.pop %v955
    %v974 = vrcp.pop %v958
    %v975 = vmul.f32 %v880, %v959
    %v976 = vmul.f32 %v882, %v960
    %v977 = vmul.f32 %v884, %v961
    %v978 = vmul.f32 %v886, %v962
    %v979 = vmul.f32 %v888, %v963
    %v980 = vmul.f32 %v890, %v964
    %v981 = vmul.f32 %v892, %v965
    %v982 = vmul.f32 %v894, %v966
    %v983 = vmul.f32 %v896, %v967
    %v984 = vmul.f32 %v898, %v968
    %v985 = vmul.f32 %v900, %v969
    %v986 = vmul.f32 %v902, %v970
    %v987 = vmul.f32 %v904, %v971
    %v988 = vmul.f32 %v906, %v972
    %v989 = vmul.f32 %v908, %v973
    %v990 = vmul.f32 %v910, %v974
    %v991 = vpack.c.bf16 %v976, %v975
    %v992 = vpack.c.bf16 %v978, %v977
    %v993 = vpack.c.bf16 %v980, %v979
    %v994 = vpack.c.bf16 %v982, %v981
    %v995 = vpack.c.bf16 %v984, %v983
    %v996 = vpack.c.bf16 %v986, %v985
    %v997 = vpack.c.bf16 %v988, %v987
    %v998 = vpack.c.bf16 %v990, %v989
    %v1000 = vsel %vm232, %v991, 0
    %v1003 = vsel %vm232, %v992, 0
    %v1006 = vsel %vm232, %v993, 0
    %v1009 = vsel %vm232, %v994, 0
    %1011 = vmatprep.subr.bf16.mxu0 0
    %1012 = vmatpush1.bf16.msra.mxu0 0
    %1013 = vmatprep.subr.bf16.mxu0 0
    %1014 = vmatpush1.bf16.msra.mxu0 0
    %1015 = vmatprep.subr.bf16.mxu0 0
    %1016 = vmatpush1.bf16.msra.mxu0 0
    %1017 = vmatprep.subr.bf16.mxu0 0
    %1018 = vmatpush1.bf16.msra.mxu0 0
    %1019 = vmatprep.subr.bf16.mxu0 0
    %1020 = vmatpush1.bf16.msra.mxu0 %v631
    %1021 = vmatprep.subr.bf16.mxu0 0
    %1022 = vmatpush1.bf16.msra.mxu0 %v630
    %1023 = vmatprep.subr.bf16.mxu0 0
    %1024 = vmatpush1.bf16.msra.mxu0 %v629
    %1025 = vmatprep.subr.bf16.mxu0 0
    %1026 = vmatpush1.bf16.msra.mxu0 %v628
    %1027 = vmatprep.subr.bf16.mxu0 0
    %1028 = vmatpush2.bf16.msra.mxu0 0
    %1029 = vmatprep.subr.bf16.mxu0 0
    %1030 = vmatpush2.bf16.msra.mxu0 0
    %1031 = vmatprep.subr.bf16.mxu0 0
    %1032 = vmatpush2.bf16.msra.mxu0 0
    %1033 = vmatprep.subr.bf16.mxu0 0
    %1034 = vmatpush2.bf16.msra.mxu0 0
    %1035 = vmatprep.subr.bf16.mxu0 0
    %1036 = vmatpush2.bf16.msra.mxu0 0
    %1037 = vmatprep.subr.bf16.mxu0 0
    %1038 = vmatpush2.bf16.msra.mxu0 0
    %1039 = vmatprep.subr.bf16.mxu0 0
    %1040 = vmatpush2.bf16.msra.mxu0 0
    %1041 = vmatprep.subr.bf16.mxu0 0
    %1042 = vmatpush2.bf16.msra.mxu0 0
    %1043 = vmatprep.mubr.bf16.mxu0 0
    %1044 = vmatmul.mubr.bf16.gmra.mxu0 %v1000
    %v1045 = vpop.f32.mrf.mxu0
    %v1046 = vadd.f32 0.0, %v1045
    %v1047 = vpop.f32.mrf.mxu0
    %v1048 = vpop.f32.mrf.mxu0
    %v1049 = vadd.f32 0.0, %v1048
    %v1050 = vpop.f32.mrf.mxu0
    %1051 = vmatprep.mubr.bf16.mxu0 0
    %1052 = vmatmul.mubr.bf16.gmra.mxu0 %v1003
    %v1053 = vpop.f32.mrf.mxu0
    %v1054 = vadd.f32 0.0, %v1053
    %v1055 = vpop.f32.mrf.mxu0
    %v1056 = vpop.f32.mrf.mxu0
    %v1057 = vadd.f32 0.0, %v1056
    %v1058 = vpop.f32.mrf.mxu0
    %1059 = vmatprep.mubr.bf16.mxu0 0
    %1060 = vmatmul.mubr.bf16.gmra.mxu0 %v1006
    %v1061 = vpop.f32.mrf.mxu0
    %v1062 = vadd.f32 0.0, %v1061
    %v1063 = vpop.f32.mrf.mxu0
    %v1064 = vpop.f32.mrf.mxu0
    %v1065 = vadd.f32 0.0, %v1064
    %v1066 = vpop.f32.mrf.mxu0
    %1067 = vmatprep.mubr.bf16.mxu0 0
    %1068 = vmatmul.mubr.bf16.gmra.mxu0 %v1009
    %v1069 = vpop.f32.mrf.mxu0
    %v1070 = vadd.f32 0.0, %v1069
    %v1071 = vpop.f32.mrf.mxu0
    %v1072 = vpop.f32.mrf.mxu0
    %v1073 = vadd.f32 0.0, %v1072
    %v1074 = vpop.f32.mrf.mxu0
    %1075 = vdwg.mxu0
    %v1077 = vsel %vm232, %v995, 0
    %v1080 = vsel %vm232, %v996, 0
    %v1083 = vsel %vm232, %v997, 0
    %v1086 = vsel %vm232, %v998, 0
    %1088 = vmatprep.subr.bf16.mxu0 0
    %1089 = vmatpush1.bf16.msra.mxu0 0
    %1090 = vmatprep.subr.bf16.mxu0 0
    %1091 = vmatpush1.bf16.msra.mxu0 0
    %1092 = vmatprep.subr.bf16.mxu0 0
    %1093 = vmatpush1.bf16.msra.mxu0 0
    %1094 = vmatprep.subr.bf16.mxu0 0
    %1095 = vmatpush1.bf16.msra.mxu0 0
    %1096 = vmatprep.subr.bf16.mxu0 0
    %1097 = vmatpush1.bf16.msra.mxu0 %v635
    %1098 = vmatprep.subr.bf16.mxu0 0
    %1099 = vmatpush1.bf16.msra.mxu0 %v634
    %1100 = vmatprep.subr.bf16.mxu0 0
    %1101 = vmatpush1.bf16.msra.mxu0 %v633
    %1102 = vmatprep.subr.bf16.mxu0 0
    %1103 = vmatpush1.bf16.msra.mxu0 %v632
    %1104 = vmatprep.subr.bf16.mxu0 0
    %1105 = vmatpush2.bf16.msra.mxu0 0
    %1106 = vmatprep.subr.bf16.mxu0 0
    %1107 = vmatpush2.bf16.msra.mxu0 0
    %1108 = vmatprep.subr.bf16.mxu0 0
    %1109 = vmatpush2.bf16.msra.mxu0 0
    %1110 = vmatprep.subr.bf16.mxu0 0
    %1111 = vmatpush2.bf16.msra.mxu0 0
    %1112 = vmatprep.subr.bf16.mxu0 0
    %1113 = vmatpush2.bf16.msra.mxu0 0
    %1114 = vmatprep.subr.bf16.mxu0 0
    %1115 = vmatpush2.bf16.msra.mxu0 0
    %1116 = vmatprep.subr.bf16.mxu0 0
    %1117 = vmatpush2.bf16.msra.mxu0 0
    %1118 = vmatprep.subr.bf16.mxu0 0
    %1119 = vmatpush2.bf16.msra.mxu0 0
    %1120 = vmatprep.mubr.bf16.mxu0 0
    %1121 = vmatmul.mubr.bf16.gmra.mxu0 %v1077
    %v1122 = vpop.f32.mrf.mxu0
    %v1123 = vadd.f32 0.0, %v1122
    %v1124 = vpop.f32.mrf.mxu0
    %v1125 = vpop.f32.mrf.mxu0
    %v1126 = vadd.f32 0.0, %v1125
    %v1127 = vpop.f32.mrf.mxu0
    %1128 = vmatprep.mubr.bf16.mxu0 0
    %1129 = vmatmul.mubr.bf16.gmra.mxu0 %v1080
    %v1130 = vpop.f32.mrf.mxu0
    %v1131 = vadd.f32 0.0, %v1130
    %v1132 = vpop.f32.mrf.mxu0
    %v1133 = vpop.f32.mrf.mxu0
    %v1134 = vadd.f32 0.0, %v1133
    %v1135 = vpop.f32.mrf.mxu0
    %1136 = vmatprep.mubr.bf16.mxu0 0
    %1137 = vmatmul.mubr.bf16.gmra.mxu0 %v1083
    %v1138 = vpop.f32.mrf.mxu0
    %v1139 = vadd.f32 0.0, %v1138
    %v1140 = vpop.f32.mrf.mxu0
    %v1141 = vpop.f32.mrf.mxu0
    %v1142 = vadd.f32 0.0, %v1141
    %v1143 = vpop.f32.mrf.mxu0
    %1144 = vmatprep.mubr.bf16.mxu0 0
    %1145 = vmatmul.mubr.bf16.gmra.mxu0 %v1086
    %v1146 = vpop.f32.mrf.mxu0
    %v1147 = vadd.f32 0.0, %v1146
    %v1148 = vpop.f32.mrf.mxu0
    %v1149 = vpop.f32.mrf.mxu0
    %v1150 = vadd.f32 0.0, %v1149
    %v1151 = vpop.f32.mrf.mxu0
    %1152 = vdwg.mxu0
    %v1153 = vpack.c.bf16 %v1049, %v1046
    %v1154 = vpack.c.bf16 %v1057, %v1054
    %v1155 = vpack.c.bf16 %v1065, %v1062
    %v1156 = vpack.c.bf16 %v1073, %v1070
    %v1157 = vpack.c.bf16 %v1126, %v1123
    %v1158 = vpack.c.bf16 %v1134, %v1131
    %v1159 = vpack.c.bf16 %v1142, %v1139
    %v1160 = vpack.c.bf16 %v1150, %v1147
    %v1161 = vld [vmem:[%s5] sm:$0xf]
    %v1162 = vld [vmem:[%s5 + $0x4] sm:$0xf]
    %s1163 = scalar_lea.vmem %s2, 32
    %v1164 = vld [vmem:[%s1163] sm:$0xf]
    %v1165 = vld [vmem:[%s1163 + $0x4] sm:$0xf]
    %v1166 = vld [vmem:[%s1163 + $0x8] sm:$0xf]
    %v1167 = vld [vmem:[%s1163 + $0xc] sm:$0xf]
    %v1168 = vld [vmem:[%s1163 + $0x10] sm:$0xf]
    %v1169 = vld [vmem:[%s1163 + $0x14] sm:$0xf]
    %v1170 = vld [vmem:[%s1163 + $0x18] sm:$0xf]
    %v1171 = vld [vmem:[%s1163 + $0x1c] sm:$0xf]
    %v1180 = vunpack.c.l.b16 %v1164
    %v1181 = vunpack.c.l.b16 %v1165
    %v1182 = vunpack.c.l.b16 %v1166
    %v1183 = vunpack.c.l.b16 %v1167
    %v1184 = vunpack.c.l.b16 %v1168
    %v1185 = vunpack.c.l.b16 %v1169
    %v1186 = vunpack.c.l.b16 %v1170
    %v1187 = vunpack.c.l.b16 %v1171
    %v1188 = vpack.c.b16 %v1181, %v1180
    %v1189 = vpack.c.b16 %v1183, %v1182
    %v1190 = vpack.c.b16 %v1185, %v1184
    %v1191 = vpack.c.b16 %v1187, %v1186
    %1196 = vmatprep.subr.bf16.mxu0 0
    %1197 = vmatpush1.bf16.msra.mxu0 0
    %1198 = vmatprep.subr.bf16.mxu0 0
    %1199 = vmatpush1.bf16.msra.mxu0 0
    %1200 = vmatprep.subr.bf16.mxu0 0
    %1201 = vmatpush1.bf16.msra.mxu0 0
    %1202 = vmatprep.subr.bf16.mxu0 0
    %1203 = vmatpush1.bf16.msra.mxu0 0
    %1204 = vmatprep.subr.bf16.mxu0 0
    %1205 = vmatpush1.bf16.msra.mxu0 %v1191
    %1206 = vmatprep.subr.bf16.mxu0 0
    %1207 = vmatpush1.bf16.msra.mxu0 %v1190
    %1208 = vmatprep.subr.bf16.mxu0 0
    %1209 = vmatpush1.bf16.msra.mxu0 %v1189
    %1210 = vmatprep.subr.bf16.mxu0 0
    %1211 = vmatpush1.bf16.msra.mxu0 %v1188
    %1212 = vmatprep.subr.bf16.mxu0 0
    %1213 = vmatpush2.bf16.msra.mxu0 0
    %1214 = vmatprep.subr.bf16.mxu0 0
    %1215 = vmatpush2.bf16.msra.mxu0 0
    %1216 = vmatprep.subr.bf16.mxu0 0
    %1217 = vmatpush2.bf16.msra.mxu0 0
    %1218 = vmatprep.subr.bf16.mxu0 0
    %1219 = vmatpush2.bf16.msra.mxu0 0
    %1220 = vmatprep.subr.bf16.mxu0 0
    %1221 = vmatpush2.bf16.msra.mxu0 0
    %1222 = vmatprep.subr.bf16.mxu0 0
    %1223 = vmatpush2.bf16.msra.mxu0 0
    %1224 = vmatprep.subr.bf16.mxu0 0
    %1225 = vmatpush2.bf16.msra.mxu0 0
    %1226 = vmatprep.subr.bf16.mxu0 0
    %1227 = vmatpush2.bf16.msra.mxu0 0
    %1228 = vmatprep.mubr.bf16.mxu0 0
    %1229 = vmatmul.mubr.bf16.gmra.mxu0 %v234
    %v1230 = vpop.f32.mrf.mxu0
    %v1231 = vadd.f32 0.0, %v1230
    %v1232 = vpop.f32.mrf.mxu0
    %v1233 = vpop.f32.mrf.mxu0
    %v1234 = vadd.f32 0.0, %v1233
    %v1235 = vpop.f32.mrf.mxu0
    %1236 = vmatprep.mubr.bf16.mxu0 0
    %1237 = vmatmul.mubr.bf16.gmra.mxu0 %v237
    %v1238 = vpop.f32.mrf.mxu0
    %v1239 = vadd.f32 0.0, %v1238
    %v1240 = vpop.f32.mrf.mxu0
    %v1241 = vpop.f32.mrf.mxu0
    %v1242 = vadd.f32 0.0, %v1241
    %v1243 = vpop.f32.mrf.mxu0
    %1244 = vmatprep.mubr.bf16.mxu0 0
    %1245 = vmatmul.mubr.bf16.gmra.mxu0 %v240
    %v1246 = vpop.f32.mrf.mxu0
    %v1247 = vadd.f32 0.0, %v1246
    %v1248 = vpop.f32.mrf.mxu0
    %v1249 = vpop.f32.mrf.mxu0
    %v1250 = vadd.f32 0.0, %v1249
    %v1251 = vpop.f32.mrf.mxu0
    %1252 = vmatprep.mubr.bf16.mxu0 0
    %1253 = vmatmul.mubr.bf16.gmra.mxu0 %v243
    %v1254 = vpop.f32.mrf.mxu0
    %v1255 = vadd.f32 0.0, %v1254
    %v1256 = vpop.f32.mrf.mxu0
    %v1257 = vpop.f32.mrf.mxu0
    %v1258 = vadd.f32 0.0, %v1257
    %v1259 = vpop.f32.mrf.mxu0
    %1260 = vmatprep.mubr.bf16.mxu0 0
    %1261 = vmatmul.mubr.bf16.gmra.mxu0 %v246
    %v1262 = vpop.f32.mrf.mxu0
    %v1263 = vadd.f32 0.0, %v1262
    %v1264 = vpop.f32.mrf.mxu0
    %v1265 = vpop.f32.mrf.mxu0
    %v1266 = vadd.f32 0.0, %v1265
    %v1267 = vpop.f32.mrf.mxu0
    %1268 = vmatprep.mubr.bf16.mxu0 0
    %1269 = vmatmul.mubr.bf16.gmra.mxu0 %v249
    %v1270 = vpop.f32.mrf.mxu0
    %v1271 = vadd.f32 0.0, %v1270
    %v1272 = vpop.f32.mrf.mxu0
    %v1273 = vpop.f32.mrf.mxu0
    %v1274 = vadd.f32 0.0, %v1273
    %v1275 = vpop.f32.mrf.mxu0
    %1276 = vmatprep.mubr.bf16.mxu0 0
    %1277 = vmatmul.mubr.bf16.gmra.mxu0 %v252
    %v1278 = vpop.f32.mrf.mxu0
    %v1279 = vadd.f32 0.0, %v1278
    %v1280 = vpop.f32.mrf.mxu0
    %v1281 = vpop.f32.mrf.mxu0
    %v1282 = vadd.f32 0.0, %v1281
    %v1283 = vpop.f32.mrf.mxu0
    %1284 = vmatprep.mubr.bf16.mxu0 0
    %1285 = vmatmul.mubr.bf16.gmra.mxu0 %v255
    %v1286 = vpop.f32.mrf.mxu0
    %v1287 = vadd.f32 0.0, %v1286
    %v1288 = vpop.f32.mrf.mxu0
    %v1289 = vpop.f32.mrf.mxu0
    %v1290 = vadd.f32 0.0, %v1289
    %v1291 = vpop.f32.mrf.mxu0
    %1292 = vdwg.mxu0
    %s1293 = scalar_lea.vmem %s3, 32
    %v1294 = vld [vmem:[%s1293] sm:$0xf]
    %v1295 = vld [vmem:[%s1293 + $0x4] sm:$0xf]
    %v1296 = vld [vmem:[%s1293 + $0x8] sm:$0xf]
    %v1297 = vld [vmem:[%s1293 + $0xc] sm:$0xf]
    %v1298 = vld [vmem:[%s1293 + $0x10] sm:$0xf]
    %v1299 = vld [vmem:[%s1293 + $0x14] sm:$0xf]
    %v1300 = vld [vmem:[%s1293 + $0x18] sm:$0xf]
    %v1301 = vld [vmem:[%s1293 + $0x1c] sm:$0xf]
    %v1310 = vunpack.c.l.b16 %v1294
    %v1311 = vunpack.c.l.b16 %v1295
    %v1312 = vunpack.c.l.b16 %v1296
    %v1313 = vunpack.c.l.b16 %v1297
    %v1314 = vunpack.c.l.b16 %v1298
    %v1315 = vunpack.c.l.b16 %v1299
    %v1316 = vunpack.c.l.b16 %v1300
    %v1317 = vunpack.c.l.b16 %v1301
    %v1318 = vpack.c.b16 %v1311, %v1310
    %v1319 = vpack.c.b16 %v1313, %v1312
    %v1320 = vpack.c.b16 %v1315, %v1314
    %v1321 = vpack.c.b16 %v1317, %v1316
    %1326 = vmatprep.subr.bf16.mxu0 0
    %1327 = vmatpush1.bf16.msra.mxu0 0
    %1328 = vmatprep.subr.bf16.mxu0 0
    %1329 = vmatpush1.bf16.msra.mxu0 0
    %1330 = vmatprep.subr.bf16.mxu0 0
    %1331 = vmatpush1.bf16.msra.mxu0 0
    %1332 = vmatprep.subr.bf16.mxu0 0
    %1333 = vmatpush1.bf16.msra.mxu0 0
    %1334 = vmatprep.subr.bf16.mxu0 0
    %1335 = vmatpush1.bf16.msra.mxu0 %v1321
    %1336 = vmatprep.subr.bf16.mxu0 0
    %1337 = vmatpush1.bf16.msra.mxu0 %v1320
    %1338 = vmatprep.subr.bf16.mxu0 0
    %1339 = vmatpush1.bf16.msra.mxu0 %v1319
    %1340 = vmatprep.subr.bf16.mxu0 0
    %1341 = vmatpush1.bf16.msra.mxu0 %v1318
    %1342 = vmatprep.subr.bf16.mxu0 0
    %1343 = vmatpush2.bf16.msra.mxu0 0
    %1344 = vmatprep.subr.bf16.mxu0 0
    %1345 = vmatpush2.bf16.msra.mxu0 0
    %1346 = vmatprep.subr.bf16.mxu0 0
    %1347 = vmatpush2.bf16.msra.mxu0 0
    %1348 = vmatprep.subr.bf16.mxu0 0
    %1349 = vmatpush2.bf16.msra.mxu0 0
    %1350 = vmatprep.subr.bf16.mxu0 0
    %1351 = vmatpush2.bf16.msra.mxu0 0
    %1352 = vmatprep.subr.bf16.mxu0 0
    %1353 = vmatpush2.bf16.msra.mxu0 0
    %1354 = vmatprep.subr.bf16.mxu0 0
    %1355 = vmatpush2.bf16.msra.mxu0 0
    %1356 = vmatprep.subr.bf16.mxu0 0
    %1357 = vmatpush2.bf16.msra.mxu0 0
    %1358 = vmatprep.mubr.bf16.mxu0 0
    %1359 = vmatmul.mubr.bf16.gmra.mxu0 %v234
    %v1360 = vpop.f32.mrf.mxu0
    %v1361 = vadd.f32 0.0, %v1360
    %v1362 = vpop.f32.mrf.mxu0
    %v1363 = vpop.f32.mrf.mxu0
    %v1364 = vadd.f32 0.0, %v1363
    %v1365 = vpop.f32.mrf.mxu0
    %1366 = vmatprep.mubr.bf16.mxu0 0
    %1367 = vmatmul.mubr.bf16.gmra.mxu0 %v237
    %v1368 = vpop.f32.mrf.mxu0
    %v1369 = vadd.f32 0.0, %v1368
    %v1370 = vpop.f32.mrf.mxu0
    %v1371 = vpop.f32.mrf.mxu0
    %v1372 = vadd.f32 0.0, %v1371
    %v1373 = vpop.f32.mrf.mxu0
    %1374 = vmatprep.mubr.bf16.mxu0 0
    %1375 = vmatmul.mubr.bf16.gmra.mxu0 %v240
    %v1376 = vpop.f32.mrf.mxu0
    %v1377 = vadd.f32 0.0, %v1376
    %v1378 = vpop.f32.mrf.mxu0
    %v1379 = vpop.f32.mrf.mxu0
    %v1380 = vadd.f32 0.0, %v1379
    %v1381 = vpop.f32.mrf.mxu0
    %1382 = vmatprep.mubr.bf16.mxu0 0
    %1383 = vmatmul.mubr.bf16.gmra.mxu0 %v243
    %v1384 = vpop.f32.mrf.mxu0
    %v1385 = vadd.f32 0.0, %v1384
    %v1386 = vpop.f32.mrf.mxu0
    %v1387 = vpop.f32.mrf.mxu0
    %v1388 = vadd.f32 0.0, %v1387
    %v1389 = vpop.f32.mrf.mxu0
    %1390 = vmatprep.mubr.bf16.mxu0 0
    %1391 = vmatmul.mubr.bf16.gmra.mxu0 %v246
    %v1392 = vpop.f32.mrf.mxu0
    %v1393 = vadd.f32 0.0, %v1392
    %v1394 = vpop.f32.mrf.mxu0
    %v1395 = vpop.f32.mrf.mxu0
    %v1396 = vadd.f32 0.0, %v1395
    %v1397 = vpop.f32.mrf.mxu0
    %1398 = vmatprep.mubr.bf16.mxu0 0
    %1399 = vmatmul.mubr.bf16.gmra.mxu0 %v249
    %v1400 = vpop.f32.mrf.mxu0
    %v1401 = vadd.f32 0.0, %v1400
    %v1402 = vpop.f32.mrf.mxu0
    %v1403 = vpop.f32.mrf.mxu0
    %v1404 = vadd.f32 0.0, %v1403
    %v1405 = vpop.f32.mrf.mxu0
    %1406 = vmatprep.mubr.bf16.mxu0 0
    %1407 = vmatmul.mubr.bf16.gmra.mxu0 %v252
    %v1408 = vpop.f32.mrf.mxu0
    %v1409 = vadd.f32 0.0, %v1408
    %v1410 = vpop.f32.mrf.mxu0
    %v1411 = vpop.f32.mrf.mxu0
    %v1412 = vadd.f32 0.0, %v1411
    %v1413 = vpop.f32.mrf.mxu0
    %1414 = vmatprep.mubr.bf16.mxu0 0
    %1415 = vmatmul.mubr.bf16.gmra.mxu0 %v255
    %v1416 = vpop.f32.mrf.mxu0
    %v1417 = vadd.f32 0.0, %v1416
    %v1418 = vpop.f32.mrf.mxu0
    %v1419 = vpop.f32.mrf.mxu0
    %v1420 = vadd.f32 0.0, %v1419
    %v1421 = vpop.f32.mrf.mxu0
    %1422 = vdwg.mxu0
    %s1423 = scalar_lea.vmem %s4, 32
    %v1424 = vld [vmem:[%s1423] sm:$0xf]
    %v1425 = vld [vmem:[%s1423 + $0x4] sm:$0xf]
    %v1426 = vld [vmem:[%s1423 + $0x8] sm:$0xf]
    %v1427 = vld [vmem:[%s1423 + $0xc] sm:$0xf]
    %v1428 = vld [vmem:[%s1423 + $0x10] sm:$0xf]
    %v1429 = vld [vmem:[%s1423 + $0x14] sm:$0xf]
    %v1430 = vld [vmem:[%s1423 + $0x18] sm:$0xf]
    %v1431 = vld [vmem:[%s1423 + $0x1c] sm:$0xf]
    %v1440 = vunpack.c.l.b16 %v1424
    %v1441 = vunpack.c.l.b16 %v1425
    %v1442 = vunpack.c.l.b16 %v1426
    %v1443 = vunpack.c.l.b16 %v1427
    %v1444 = vunpack.c.l.b16 %v1428
    %v1445 = vunpack.c.l.b16 %v1429
    %v1446 = vunpack.c.l.b16 %v1430
    %v1447 = vunpack.c.l.b16 %v1431
    %v1448 = vpack.c.b16 %v1441, %v1440
    %v1449 = vpack.c.b16 %v1443, %v1442
    %v1450 = vpack.c.b16 %v1445, %v1444
    %v1451 = vpack.c.b16 %v1447, %v1446
    %1456 = vmatprep.subr.bf16.mxu0 0
    %1457 = vmatpush1.bf16.msra.mxu0 0
    %1458 = vmatprep.subr.bf16.mxu0 0
    %1459 = vmatpush1.bf16.msra.mxu0 0
    %1460 = vmatprep.subr.bf16.mxu0 0
    %1461 = vmatpush1.bf16.msra.mxu0 0
    %1462 = vmatprep.subr.bf16.mxu0 0
    %1463 = vmatpush1.bf16.msra.mxu0 0
    %1464 = vmatprep.subr.bf16.mxu0 0
    %1465 = vmatpush1.bf16.msra.mxu0 %v1451
    %1466 = vmatprep.subr.bf16.mxu0 0
    %1467 = vmatpush1.bf16.msra.mxu0 %v1450
    %1468 = vmatprep.subr.bf16.mxu0 0
    %1469 = vmatpush1.bf16.msra.mxu0 %v1449
    %1470 = vmatprep.subr.bf16.mxu0 0
    %1471 = vmatpush1.bf16.msra.mxu0 %v1448
    %1472 = vmatprep.subr.bf16.mxu0 0
    %1473 = vmatpush2.bf16.msra.mxu0 0
    %1474 = vmatprep.subr.bf16.mxu0 0
    %1475 = vmatpush2.bf16.msra.mxu0 0
    %1476 = vmatprep.subr.bf16.mxu0 0
    %1477 = vmatpush2.bf16.msra.mxu0 0
    %1478 = vmatprep.subr.bf16.mxu0 0
    %1479 = vmatpush2.bf16.msra.mxu0 0
    %1480 = vmatprep.subr.bf16.mxu0 0
    %1481 = vmatpush2.bf16.msra.mxu0 0
    %1482 = vmatprep.subr.bf16.mxu0 0
    %1483 = vmatpush2.bf16.msra.mxu0 0
    %1484 = vmatprep.subr.bf16.mxu0 0
    %1485 = vmatpush2.bf16.msra.mxu0 0
    %1486 = vmatprep.subr.bf16.mxu0 0
    %1487 = vmatpush2.bf16.msra.mxu0 0
    %1488 = vmatprep.mubr.bf16.mxu0 0
    %1489 = vmatmul.mubr.bf16.gmra.mxu0 %v234
    %v1490 = vpop.f32.mrf.mxu0
    %v1491 = vadd.f32 0.0, %v1490
    %v1492 = vpop.f32.mrf.mxu0
    %v1493 = vpop.f32.mrf.mxu0
    %v1494 = vadd.f32 0.0, %v1493
    %v1495 = vpop.f32.mrf.mxu0
    %1496 = vmatprep.mubr.bf16.mxu0 0
    %1497 = vmatmul.mubr.bf16.gmra.mxu0 %v237
    %v1498 = vpop.f32.mrf.mxu0
    %v1499 = vadd.f32 0.0, %v1498
    %v1500 = vpop.f32.mrf.mxu0
    %v1501 = vpop.f32.mrf.mxu0
    %v1502 = vadd.f32 0.0, %v1501
    %v1503 = vpop.f32.mrf.mxu0
    %1504 = vmatprep.mubr.bf16.mxu0 0
    %1505 = vmatmul.mubr.bf16.gmra.mxu0 %v240
    %v1506 = vpop.f32.mrf.mxu0
    %v1507 = vadd.f32 0.0, %v1506
    %v1508 = vpop.f32.mrf.mxu0
    %v1509 = vpop.f32.mrf.mxu0
    %v1510 = vadd.f32 0.0, %v1509
    %v1511 = vpop.f32.mrf.mxu0
    %1512 = vmatprep.mubr.bf16.mxu0 0
    %1513 = vmatmul.mubr.bf16.gmra.mxu0 %v243
    %v1514 = vpop.f32.mrf.mxu0
    %v1515 = vadd.f32 0.0, %v1514
    %v1516 = vpop.f32.mrf.mxu0
    %v1517 = vpop.f32.mrf.mxu0
    %v1518 = vadd.f32 0.0, %v1517
    %v1519 = vpop.f32.mrf.mxu0
    %1520 = vmatprep.mubr.bf16.mxu0 0
    %1521 = vmatmul.mubr.bf16.gmra.mxu0 %v246
    %v1522 = vpop.f32.mrf.mxu0
    %v1523 = vadd.f32 0.0, %v1522
    %v1524 = vpop.f32.mrf.mxu0
    %v1525 = vpop.f32.mrf.mxu0
    %v1526 = vadd.f32 0.0, %v1525
    %v1527 = vpop.f32.mrf.mxu0
    %1528 = vmatprep.mubr.bf16.mxu0 0
    %1529 = vmatmul.mubr.bf16.gmra.mxu0 %v249
    %v1530 = vpop.f32.mrf.mxu0
    %v1531 = vadd.f32 0.0, %v1530
    %v1532 = vpop.f32.mrf.mxu0
    %v1533 = vpop.f32.mrf.mxu0
    %v1534 = vadd.f32 0.0, %v1533
    %v1535 = vpop.f32.mrf.mxu0
    %1536 = vmatprep.mubr.bf16.mxu0 0
    %1537 = vmatmul.mubr.bf16.gmra.mxu0 %v252
    %v1538 = vpop.f32.mrf.mxu0
    %v1539 = vadd.f32 0.0, %v1538
    %v1540 = vpop.f32.mrf.mxu0
    %v1541 = vpop.f32.mrf.mxu0
    %v1542 = vadd.f32 0.0, %v1541
    %v1543 = vpop.f32.mrf.mxu0
    %1544 = vmatprep.mubr.bf16.mxu0 0
    %1545 = vmatmul.mubr.bf16.gmra.mxu0 %v255
    %v1546 = vpop.f32.mrf.mxu0
    %v1547 = vadd.f32 0.0, %v1546
    %v1548 = vpop.f32.mrf.mxu0
    %v1549 = vpop.f32.mrf.mxu0
    %v1550 = vadd.f32 0.0, %v1549
    %v1551 = vpop.f32.mrf.mxu0
    %1552 = vdwg.mxu0
    %v1553 = vpack.c.bf16 %v1234, %v1231
    %v1554 = vpack.c.bf16 %v1242, %v1239
    %v1555 = vpack.c.bf16 %v1250, %v1247
    %v1556 = vpack.c.bf16 %v1258, %v1255
    %v1557 = vpack.c.bf16 %v1266, %v1263
    %v1558 = vpack.c.bf16 %v1274, %v1271
    %v1559 = vpack.c.bf16 %v1282, %v1279
    %v1560 = vpack.c.bf16 %v1290, %v1287
    %v1561 = vpack.c.bf16 %v1364, %v1361
    %v1562 = vpack.c.bf16 %v1372, %v1369
    %v1563 = vpack.c.bf16 %v1380, %v1377
    %v1564 = vpack.c.bf16 %v1388, %v1385
    %v1565 = vpack.c.bf16 %v1396, %v1393
    %v1566 = vpack.c.bf16 %v1404, %v1401
    %v1567 = vpack.c.bf16 %v1412, %v1409
    %v1568 = vpack.c.bf16 %v1420, %v1417
    %v1569 = vpack.c.bf16 %v1494, %v1491
    %v1570 = vpack.c.bf16 %v1502, %v1499
    %v1571 = vpack.c.bf16 %v1510, %v1507
    %v1572 = vpack.c.bf16 %v1518, %v1515
    %v1573 = vpack.c.bf16 %v1526, %v1523
    %v1574 = vpack.c.bf16 %v1534, %v1531
    %v1575 = vpack.c.bf16 %v1542, %v1539
    %v1576 = vpack.c.bf16 %v1550, %v1547
    %v1578 = vsel %vm636, %v1553, 0
    %v1581 = vsel %vm636, %v1554, 0
    %v1584 = vsel %vm636, %v1555, 0
    %v1587 = vsel %vm636, %v1556, 0
    %v1590 = vsel %vm636, %v1561, 0
    %v1593 = vsel %vm636, %v1562, 0
    %v1596 = vsel %vm636, %v1563, 0
    %v1599 = vsel %vm636, %v1564, 0
    %1601 = vmatprep.subr.bf16.mxu0 0
    %1602 = vmatpush1.bf16.xpose.msra.mxu0 0
    %1603 = vmatprep.subr.bf16.mxu0 0
    %1604 = vmatpush1.bf16.xpose.msra.mxu0 0
    %1605 = vmatprep.subr.bf16.mxu0 0
    %1606 = vmatpush1.bf16.xpose.msra.mxu0 0
    %1607 = vmatprep.subr.bf16.mxu0 0
    %1608 = vmatpush1.bf16.xpose.msra.mxu0 0
    %1609 = vmatprep.subr.bf16.mxu0 0
    %1610 = vmatpush1.bf16.xpose.msra.mxu0 %v1599
    %1611 = vmatprep.subr.bf16.mxu0 0
    %1612 = vmatpush1.bf16.xpose.msra.mxu0 %v1596
    %1613 = vmatprep.subr.bf16.mxu0 0
    %1614 = vmatpush1.bf16.xpose.msra.mxu0 %v1593
    %1615 = vmatprep.subr.bf16.mxu0 0
    %1616 = vmatpush1.bf16.xpose.msra.mxu0 %v1590
    %1617 = vmatprep.subr.bf16.mxu0 0
    %1618 = vmatpush2.bf16.xpose.msra.mxu0 0
    %1619 = vmatprep.subr.bf16.mxu0 0
    %1620 = vmatpush2.bf16.xpose.msra.mxu0 0
    %1621 = vmatprep.subr.bf16.mxu0 0
    %1622 = vmatpush2.bf16.xpose.msra.mxu0 0
    %1623 = vmatprep.subr.bf16.mxu0 0
    %1624 = vmatpush2.bf16.xpose.msra.mxu0 0
    %1625 = vmatprep.subr.bf16.mxu0 0
    %1626 = vmatpush2.bf16.xpose.msra.mxu0 0
    %1627 = vmatprep.subr.bf16.mxu0 0
    %1628 = vmatpush2.bf16.xpose.msra.mxu0 0
    %1629 = vmatprep.subr.bf16.mxu0 0
    %1630 = vmatpush2.bf16.xpose.msra.mxu0 0
    %1631 = vmatprep.subr.bf16.mxu0 0
    %1632 = vmatpush2.bf16.xpose.msra.mxu0 0
    %1633 = vmatprep.mubr.bf16.mxu0 0
    %1634 = vmatmul.mubr.bf16.gmra.mxu0 %v1578
    %v1635 = vpop.f32.mrf.mxu0
    %v1636 = vadd.f32 0.0, %v1635
    %v1637 = vpop.f32.mrf.mxu0
    %v1638 = vpop.f32.mrf.mxu0
    %v1639 = vadd.f32 0.0, %v1638
    %v1640 = vpop.f32.mrf.mxu0
    %1641 = vmatprep.mubr.bf16.mxu0 0
    %1642 = vmatmul.mubr.bf16.gmra.mxu0 %v1581
    %v1643 = vpop.f32.mrf.mxu0
    %v1644 = vadd.f32 0.0, %v1643
    %v1645 = vpop.f32.mrf.mxu0
    %v1646 = vpop.f32.mrf.mxu0
    %v1647 = vadd.f32 0.0, %v1646
    %v1648 = vpop.f32.mrf.mxu0
    %1649 = vmatprep.mubr.bf16.mxu0 0
    %1650 = vmatmul.mubr.bf16.gmra.mxu0 %v1584
    %v1651 = vpop.f32.mrf.mxu0
    %v1652 = vadd.f32 0.0, %v1651
    %v1653 = vpop.f32.mrf.mxu0
    %v1654 = vpop.f32.mrf.mxu0
    %v1655 = vadd.f32 0.0, %v1654
    %v1656 = vpop.f32.mrf.mxu0
    %1657 = vmatprep.mubr.bf16.mxu0 0
    %1658 = vmatmul.mubr.bf16.gmra.mxu0 %v1587
    %v1659 = vpop.f32.mrf.mxu0
    %v1660 = vadd.f32 0.0, %v1659
    %v1661 = vpop.f32.mrf.mxu0
    %v1662 = vpop.f32.mrf.mxu0
    %v1663 = vadd.f32 0.0, %v1662
    %v1664 = vpop.f32.mrf.mxu0
    %1665 = vdwg.mxu0
    %v1667 = vsel %vm636, %v1557, 0
    %v1670 = vsel %vm636, %v1558, 0
    %v1673 = vsel %vm636, %v1559, 0
    %v1676 = vsel %vm636, %v1560, 0
    %v1679 = vsel %vm636, %v1565, 0
    %v1682 = vsel %vm636, %v1566, 0
    %v1685 = vsel %vm636, %v1567, 0
    %v1688 = vsel %vm636, %v1568, 0
    %1690 = vmatprep.subr.bf16.mxu0 0
    %1691 = vmatpush1.bf16.xpose.msra.mxu0 0
    %1692 = vmatprep.subr.bf16.mxu0 0
    %1693 = vmatpush1.bf16.xpose.msra.mxu0 0
    %1694 = vmatprep.subr.bf16.mxu0 0
    %1695 = vmatpush1.bf16.xpose.msra.mxu0 0
    %1696 = vmatprep.subr.bf16.mxu0 0
    %1697 = vmatpush1.bf16.xpose.msra.mxu0 0
    %1698 = vmatprep.subr.bf16.mxu0 0
    %1699 = vmatpush1.bf16.xpose.msra.mxu0 %v1688
    %1700 = vmatprep.subr.bf16.mxu0 0
    %1701 = vmatpush1.bf16.xpose.msra.mxu0 %v1685
    %1702 = vmatprep.subr.bf16.mxu0 0
    %1703 = vmatpush1.bf16.xpose.msra.mxu0 %v1682
    %1704 = vmatprep.subr.bf16.mxu0 0
    %1705 = vmatpush1.bf16.xpose.msra.mxu0 %v1679
    %1706 = vmatprep.subr.bf16.mxu0 0
    %1707 = vmatpush2.bf16.xpose.msra.mxu0 0
    %1708 = vmatprep.subr.bf16.mxu0 0
    %1709 = vmatpush2.bf16.xpose.msra.mxu0 0
    %1710 = vmatprep.subr.bf16.mxu0 0
    %1711 = vmatpush2.bf16.xpose.msra.mxu0 0
    %1712 = vmatprep.subr.bf16.mxu0 0
    %1713 = vmatpush2.bf16.xpose.msra.mxu0 0
    %1714 = vmatprep.subr.bf16.mxu0 0
    %1715 = vmatpush2.bf16.xpose.msra.mxu0 0
    %1716 = vmatprep.subr.bf16.mxu0 0
    %1717 = vmatpush2.bf16.xpose.msra.mxu0 0
    %1718 = vmatprep.subr.bf16.mxu0 0
    %1719 = vmatpush2.bf16.xpose.msra.mxu0 0
    %1720 = vmatprep.subr.bf16.mxu0 0
    %1721 = vmatpush2.bf16.xpose.msra.mxu0 0
    %1722 = vmatprep.mubr.bf16.mxu0 0
    %1723 = vmatmul.mubr.bf16.gmra.mxu0 %v1667
    %v1724 = vpop.f32.mrf.mxu0
    %v1725 = vadd.f32 0.0, %v1724
    %v1726 = vpop.f32.mrf.mxu0
    %v1727 = vpop.f32.mrf.mxu0
    %v1728 = vadd.f32 0.0, %v1727
    %v1729 = vpop.f32.mrf.mxu0
    %1730 = vmatprep.mubr.bf16.mxu0 0
    %1731 = vmatmul.mubr.bf16.gmra.mxu0 %v1670
    %v1732 = vpop.f32.mrf.mxu0
    %v1733 = vadd.f32 0.0, %v1732
    %v1734 = vpop.f32.mrf.mxu0
    %v1735 = vpop.f32.mrf.mxu0
    %v1736 = vadd.f32 0.0, %v1735
    %v1737 = vpop.f32.mrf.mxu0
    %1738 = vmatprep.mubr.bf16.mxu0 0
    %1739 = vmatmul.mubr.bf16.gmra.mxu0 %v1673
    %v1740 = vpop.f32.mrf.mxu0
    %v1741 = vadd.f32 0.0, %v1740
    %v1742 = vpop.f32.mrf.mxu0
    %v1743 = vpop.f32.mrf.mxu0
    %v1744 = vadd.f32 0.0, %v1743
    %v1745 = vpop.f32.mrf.mxu0
    %1746 = vmatprep.mubr.bf16.mxu0 0
    %1747 = vmatmul.mubr.bf16.gmra.mxu0 %v1676
    %v1748 = vpop.f32.mrf.mxu0
    %v1749 = vadd.f32 0.0, %v1748
    %v1750 = vpop.f32.mrf.mxu0
    %v1751 = vpop.f32.mrf.mxu0
    %v1752 = vadd.f32 0.0, %v1751
    %v1753 = vpop.f32.mrf.mxu0
    %1754 = vdwg.mxu0
    %v1755 = vsel %vm232, %v1636, -inf
    %1756 = vmax.xlane.f32.xlu0 %v1755
    %v1757 = vpop.xlane.xlu0 %1756
    %v1758 = vsel %vm232, %v1639, -inf
    %1759 = vmax.xlane.f32.xlu0 %v1758
    %v1760 = vpop.xlane.xlu0 %1759
    %v1761 = vsel %vm232, %v1644, -inf
    %1762 = vmax.xlane.f32.xlu0 %v1761
    %v1763 = vpop.xlane.xlu0 %1762
    %v1764 = vsel %vm232, %v1647, -inf
    %1765 = vmax.xlane.f32.xlu0 %v1764
    %v1766 = vpop.xlane.xlu0 %1765
    %v1767 = vsel %vm232, %v1652, -inf
    %1768 = vmax.xlane.f32.xlu0 %v1767
    %v1769 = vpop.xlane.xlu0 %1768
    %v1770 = vsel %vm232, %v1655, -inf
    %1771 = vmax.xlane.f32.xlu0 %v1770
    %v1772 = vpop.xlane.xlu0 %1771
    %v1773 = vsel %vm232, %v1660, -inf
    %1774 = vmax.xlane.f32.xlu0 %v1773
    %v1775 = vpop.xlane.xlu0 %1774
    %v1776 = vsel %vm232, %v1663, -inf
    %1777 = vmax.xlane.f32.xlu0 %v1776
    %v1778 = vpop.xlane.xlu0 %1777
    %v1779 = vsel %vm232, %v1725, -inf
    %1780 = vmax.xlane.f32.xlu0 %v1779
    %v1781 = vpop.xlane.xlu0 %1780
    %v1782 = vsel %vm232, %v1728, -inf
    %1783 = vmax.xlane.f32.xlu0 %v1782
    %v1784 = vpop.xlane.xlu0 %1783
    %v1785 = vsel %vm232, %v1733, -inf
    %1786 = vmax.xlane.f32.xlu0 %v1785
    %v1787 = vpop.xlane.xlu0 %1786
    %v1788 = vsel %vm232, %v1736, -inf
    %1789 = vmax.xlane.f32.xlu0 %v1788
    %v1790 = vpop.xlane.xlu0 %1789
    %v1791 = vsel %vm232, %v1741, -inf
    %1792 = vmax.xlane.f32.xlu0 %v1791
    %v1793 = vpop.xlane.xlu0 %1792
    %v1794 = vsel %vm232, %v1744, -inf
    %1795 = vmax.xlane.f32.xlu0 %v1794
    %v1796 = vpop.xlane.xlu0 %1795
    %v1797 = vsel %vm232, %v1749, -inf
    %1798 = vmax.xlane.f32.xlu0 %v1797
    %v1799 = vpop.xlane.xlu0 %1798
    %v1800 = vsel %vm232, %v1752, -inf
    %1801 = vmax.xlane.f32.xlu0 %v1800
    %v1802 = vpop.xlane.xlu0 %1801
    %v1803 = vsub.f32 %v1636, %v1757
    %v1804 = vsub.f32 %v1639, %v1760
    %v1805 = vsub.f32 %v1644, %v1763
    %v1806 = vsub.f32 %v1647, %v1766
    %v1807 = vsub.f32 %v1652, %v1769
    %v1808 = vsub.f32 %v1655, %v1772
    %v1809 = vsub.f32 %v1660, %v1775
    %v1810 = vsub.f32 %v1663, %v1778
    %v1811 = vsub.f32 %v1725, %v1781
    %v1812 = vsub.f32 %v1728, %v1784
    %v1813 = vsub.f32 %v1733, %v1787
    %v1814 = vsub.f32 %v1736, %v1790
    %v1815 = vsub.f32 %v1741, %v1793
    %v1816 = vsub.f32 %v1744, %v1796
    %v1817 = vsub.f32 %v1749, %v1799
    %v1818 = vsub.f32 %v1752, %v1802
    %v1819 = vmul.f32 %v1803, 1.442695
    %v1820 = vpow.pop %v1819
    %v1821 = vmul.f32 %v1804, 1.442695
    %v1822 = vpow.pop %v1821
    %v1823 = vmul.f32 %v1805, 1.442695
    %v1824 = vpow.pop %v1823
    %v1825 = vmul.f32 %v1806, 1.442695
    %v1826 = vpow.pop %v1825
    %v1827 = vmul.f32 %v1807, 1.442695
    %v1828 = vpow.pop %v1827
    %v1829 = vmul.f32 %v1808, 1.442695
    %v1830 = vpow.pop %v1829
    %v1831 = vmul.f32 %v1809, 1.442695
    %v1832 = vpow.pop %v1831
    %v1833 = vmul.f32 %v1810, 1.442695
    %v1834 = vpow.pop %v1833
    %v1835 = vmul.f32 %v1811, 1.442695
    %v1836 = vpow.pop %v1835
    %v1837 = vmul.f32 %v1812, 1.442695
    %v1838 = vpow.pop %v1837
    %v1839 = vmul.f32 %v1813, 1.442695
    %v1840 = vpow.pop %v1839
    %v1841 = vmul.f32 %v1814, 1.442695
    %v1842 = vpow.pop %v1841
    %v1843 = vmul.f32 %v1815, 1.442695
    %v1844 = vpow.pop %v1843
    %v1845 = vmul.f32 %v1816, 1.442695
    %v1846 = vpow.pop %v1845
    %v1847 = vmul.f32 %v1817, 1.442695
    %v1848 = vpow.pop %v1847
    %v1849 = vmul.f32 %v1818, 1.442695
    %v1850 = vpow.pop %v1849
    %v1851 = vsel %vm232, %v1820, 0.0
    %1852 = vadd.xlane.f32.xlu0 %v1851
    %v1853 = vpop.xlane.xlu0 %1852
    %v1854 = vsel %vm232, %v1822, 0.0
    %1855 = vadd.xlane.f32.xlu0 %v1854
    %v1856 = vpop.xlane.xlu0 %1855
    %v1857 = vsel %vm232, %v1824, 0.0
    %1858 = vadd.xlane.f32.xlu0 %v1857
    %v1859 = vpop.xlane.xlu0 %1858
    %v1860 = vsel %vm232, %v1826, 0.0
    %1861 = vadd.xlane.f32.xlu0 %v1860
    %v1862 = vpop.xlane.xlu0 %1861
    %v1863 = vsel %vm232, %v1828, 0.0
    %1864 = vadd.xlane.f32.xlu0 %v1863
    %v1865 = vpop.xlane.xlu0 %1864
    %v1866 = vsel %vm232, %v1830, 0.0
    %1867 = vadd.xlane.f32.xlu0 %v1866
    %v1868 = vpop.xlane.xlu0 %1867
    %v1869 = vsel %vm232, %v1832, 0.0
    %1870 = vadd.xlane.f32.xlu0 %v1869
    %v1871 = vpop.xlane.xlu0 %1870
    %v1872 = vsel %vm232, %v1834, 0.0
    %1873 = vadd.xlane.f32.xlu0 %v1872
    %v1874 = vpop.xlane.xlu0 %1873
    %v1875 = vsel %vm232, %v1836, 0.0
    %1876 = vadd.xlane.f32.xlu0 %v1875
    %v1877 = vpop.xlane.xlu0 %1876
    %v1878 = vsel %vm232, %v1838, 0.0
    %1879 = vadd.xlane.f32.xlu0 %v1878
    %v1880 = vpop.xlane.xlu0 %1879
    %v1881 = vsel %vm232, %v1840, 0.0
    %1882 = vadd.xlane.f32.xlu0 %v1881
    %v1883 = vpop.xlane.xlu0 %1882
    %v1884 = vsel %vm232, %v1842, 0.0
    %1885 = vadd.xlane.f32.xlu0 %v1884
    %v1886 = vpop.xlane.xlu0 %1885
    %v1887 = vsel %vm232, %v1844, 0.0
    %1888 = vadd.xlane.f32.xlu0 %v1887
    %v1889 = vpop.xlane.xlu0 %1888
    %v1890 = vsel %vm232, %v1846, 0.0
    %1891 = vadd.xlane.f32.xlu0 %v1890
    %v1892 = vpop.xlane.xlu0 %1891
    %v1893 = vsel %vm232, %v1848, 0.0
    %1894 = vadd.xlane.f32.xlu0 %v1893
    %v1895 = vpop.xlane.xlu0 %1894
    %v1896 = vsel %vm232, %v1850, 0.0
    %1897 = vadd.xlane.f32.xlu0 %v1896
    %v1898 = vpop.xlane.xlu0 %1897
    %v1899 = vrcp.pop %v1853
    %v1900 = vrcp.pop %v1856
    %v1901 = vrcp.pop %v1859
    %v1902 = vrcp.pop %v1862
    %v1903 = vrcp.pop %v1865
    %v1904 = vrcp.pop %v1868
    %v1905 = vrcp.pop %v1871
    %v1906 = vrcp.pop %v1874
    %v1907 = vrcp.pop %v1877
    %v1908 = vrcp.pop %v1880
    %v1909 = vrcp.pop %v1883
    %v1910 = vrcp.pop %v1886
    %v1911 = vrcp.pop %v1889
    %v1912 = vrcp.pop %v1892
    %v1913 = vrcp.pop %v1895
    %v1914 = vrcp.pop %v1898
    %v1915 = vmul.f32 %v1820, %v1899
    %v1916 = vmul.f32 %v1822, %v1900
    %v1917 = vmul.f32 %v1824, %v1901
    %v1918 = vmul.f32 %v1826, %v1902
    %v1919 = vmul.f32 %v1828, %v1903
    %v1920 = vmul.f32 %v1830, %v1904
    %v1921 = vmul.f32 %v1832, %v1905
    %v1922 = vmul.f32 %v1834, %v1906
    %v1923 = vmul.f32 %v1836, %v1907
    %v1924 = vmul.f32 %v1838, %v1908
    %v1925 = vmul.f32 %v1840, %v1909
    %v1926 = vmul.f32 %v1842, %v1910
    %v1927 = vmul.f32 %v1844, %v1911
    %v1928 = vmul.f32 %v1846, %v1912
    %v1929 = vmul.f32 %v1848, %v1913
    %v1930 = vmul.f32 %v1850, %v1914
    %v1931 = vpack.c.bf16 %v1916, %v1915
    %v1932 = vpack.c.bf16 %v1918, %v1917
    %v1933 = vpack.c.bf16 %v1920, %v1919
    %v1934 = vpack.c.bf16 %v1922, %v1921
    %v1935 = vpack.c.bf16 %v1924, %v1923
    %v1936 = vpack.c.bf16 %v1926, %v1925
    %v1937 = vpack.c.bf16 %v1928, %v1927
    %v1938 = vpack.c.bf16 %v1930, %v1929
    %v1940 = vsel %vm232, %v1931, 0
    %v1943 = vsel %vm232, %v1932, 0
    %v1946 = vsel %vm232, %v1933, 0
    %v1949 = vsel %vm232, %v1934, 0
    %1951 = vmatprep.subr.bf16.mxu0 0
    %1952 = vmatpush1.bf16.msra.mxu0 0
    %1953 = vmatprep.subr.bf16.mxu0 0
    %1954 = vmatpush1.bf16.msra.mxu0 0
    %1955 = vmatprep.subr.bf16.mxu0 0
    %1956 = vmatpush1.bf16.msra.mxu0 0
    %1957 = vmatprep.subr.bf16.mxu0 0
    %1958 = vmatpush1.bf16.msra.mxu0 0
    %1959 = vmatprep.subr.bf16.mxu0 0
    %1960 = vmatpush1.bf16.msra.mxu0 %v1572
    %1961 = vmatprep.subr.bf16.mxu0 0
    %1962 = vmatpush1.bf16.msra.mxu0 %v1571
    %1963 = vmatprep.subr.bf16.mxu0 0
    %1964 = vmatpush1.bf16.msra.mxu0 %v1570
    %1965 = vmatprep.subr.bf16.mxu0 0
    %1966 = vmatpush1.bf16.msra.mxu0 %v1569
    %1967 = vmatprep.subr.bf16.mxu0 0
    %1968 = vmatpush2.bf16.msra.mxu0 0
    %1969 = vmatprep.subr.bf16.mxu0 0
    %1970 = vmatpush2.bf16.msra.mxu0 0
    %1971 = vmatprep.subr.bf16.mxu0 0
    %1972 = vmatpush2.bf16.msra.mxu0 0
    %1973 = vmatprep.subr.bf16.mxu0 0
    %1974 = vmatpush2.bf16.msra.mxu0 0
    %1975 = vmatprep.subr.bf16.mxu0 0
    %1976 = vmatpush2.bf16.msra.mxu0 0
    %1977 = vmatprep.subr.bf16.mxu0 0
    %1978 = vmatpush2.bf16.msra.mxu0 0
    %1979 = vmatprep.subr.bf16.mxu0 0
    %1980 = vmatpush2.bf16.msra.mxu0 0
    %1981 = vmatprep.subr.bf16.mxu0 0
    %1982 = vmatpush2.bf16.msra.mxu0 0
    %1983 = vmatprep.mubr.bf16.mxu0 0
    %1984 = vmatmul.mubr.bf16.gmra.mxu0 %v1940
    %v1985 = vpop.f32.mrf.mxu0
    %v1986 = vadd.f32 0.0, %v1985
    %v1987 = vpop.f32.mrf.mxu0
    %v1988 = vpop.f32.mrf.mxu0
    %v1989 = vadd.f32 0.0, %v1988
    %v1990 = vpop.f32.mrf.mxu0
    %1991 = vmatprep.mubr.bf16.mxu0 0
    %1992 = vmatmul.mubr.bf16.gmra.mxu0 %v1943
    %v1993 = vpop.f32.mrf.mxu0
    %v1994 = vadd.f32 0.0, %v1993
    %v1995 = vpop.f32.mrf.mxu0
    %v1996 = vpop.f32.mrf.mxu0
    %v1997 = vadd.f32 0.0, %v1996
    %v1998 = vpop.f32.mrf.mxu0
    %1999 = vmatprep.mubr.bf16.mxu0 0
    %2000 = vmatmul.mubr.bf16.gmra.mxu0 %v1946
    %v2001 = vpop.f32.mrf.mxu0
    %v2002 = vadd.f32 0.0, %v2001
    %v2003 = vpop.f32.mrf.mxu0
    %v2004 = vpop.f32.mrf.mxu0
    %v2005 = vadd.f32 0.0, %v2004
    %v2006 = vpop.f32.mrf.mxu0
    %2007 = vmatprep.mubr.bf16.mxu0 0
    %2008 = vmatmul.mubr.bf16.gmra.mxu0 %v1949
    %v2009 = vpop.f32.mrf.mxu0
    %v2010 = vadd.f32 0.0, %v2009
    %v2011 = vpop.f32.mrf.mxu0
    %v2012 = vpop.f32.mrf.mxu0
    %v2013 = vadd.f32 0.0, %v2012
    %v2014 = vpop.f32.mrf.mxu0
    %2015 = vdwg.mxu0
    %v2017 = vsel %vm232, %v1935, 0
    %v2020 = vsel %vm232, %v1936, 0
    %v2023 = vsel %vm232, %v1937, 0
    %v2026 = vsel %vm232, %v1938, 0
    %2028 = vmatprep.subr.bf16.mxu0 0
    %2029 = vmatpush1.bf16.msra.mxu0 0
    %2030 = vmatprep.subr.bf16.mxu0 0
    %2031 = vmatpush1.bf16.msra.mxu0 0
    %2032 = vmatprep.subr.bf16.mxu0 0
    %2033 = vmatpush1.bf16.msra.mxu0 0
    %2034 = vmatprep.subr.bf16.mxu0 0
    %2035 = vmatpush1.bf16.msra.mxu0 0
    %2036 = vmatprep.subr.bf16.mxu0 0
    %2037 = vmatpush1.bf16.msra.mxu0 %v1576
    %2038 = vmatprep.subr.bf16.mxu0 0
    %2039 = vmatpush1.bf16.msra.mxu0 %v1575
    %2040 = vmatprep.subr.bf16.mxu0 0
    %2041 = vmatpush1.bf16.msra.mxu0 %v1574
    %2042 = vmatprep.subr.bf16.mxu0 0
    %2043 = vmatpush1.bf16.msra.mxu0 %v1573
    %2044 = vmatprep.subr.bf16.mxu0 0
    %2045 = vmatpush2.bf16.msra.mxu0 0
    %2046 = vmatprep.subr.bf16.mxu0 0
    %2047 = vmatpush2.bf16.msra.mxu0 0
    %2048 = vmatprep.subr.bf16.mxu0 0
    %2049 = vmatpush2.bf16.msra.mxu0 0
    %2050 = vmatprep.subr.bf16.mxu0 0
    %2051 = vmatpush2.bf16.msra.mxu0 0
    %2052 = vmatprep.subr.bf16.mxu0 0
    %2053 = vmatpush2.bf16.msra.mxu0 0
    %2054 = vmatprep.subr.bf16.mxu0 0
    %2055 = vmatpush2.bf16.msra.mxu0 0
    %2056 = vmatprep.subr.bf16.mxu0 0
    %2057 = vmatpush2.bf16.msra.mxu0 0
    %2058 = vmatprep.subr.bf16.mxu0 0
    %2059 = vmatpush2.bf16.msra.mxu0 0
    %2060 = vmatprep.mubr.bf16.mxu0 0
    %2061 = vmatmul.mubr.bf16.gmra.mxu0 %v2017
    %v2062 = vpop.f32.mrf.mxu0
    %v2063 = vadd.f32 0.0, %v2062
    %v2064 = vpop.f32.mrf.mxu0
    %v2065 = vpop.f32.mrf.mxu0
    %v2066 = vadd.f32 0.0, %v2065
    %v2067 = vpop.f32.mrf.mxu0
    %2068 = vmatprep.mubr.bf16.mxu0 0
    %2069 = vmatmul.mubr.bf16.gmra.mxu0 %v2020
    %v2070 = vpop.f32.mrf.mxu0
    %v2071 = vadd.f32 0.0, %v2070
    %v2072 = vpop.f32.mrf.mxu0
    %v2073 = vpop.f32.mrf.mxu0
    %v2074 = vadd.f32 0.0, %v2073
    %v2075 = vpop.f32.mrf.mxu0
    %2076 = vmatprep.mubr.bf16.mxu0 0
    %2077 = vmatmul.mubr.bf16.gmra.mxu0 %v2023
    %v2078 = vpop.f32.mrf.mxu0
    %v2079 = vadd.f32 0.0, %v2078
    %v2080 = vpop.f32.mrf.mxu0
    %v2081 = vpop.f32.mrf.mxu0
    %v2082 = vadd.f32 0.0, %v2081
    %v2083 = vpop.f32.mrf.mxu0
    %2084 = vmatprep.mubr.bf16.mxu0 0
    %2085 = vmatmul.mubr.bf16.gmra.mxu0 %v2026
    %v2086 = vpop.f32.mrf.mxu0
    %v2087 = vadd.f32 0.0, %v2086
    %v2088 = vpop.f32.mrf.mxu0
    %v2089 = vpop.f32.mrf.mxu0
    %v2090 = vadd.f32 0.0, %v2089
    %v2091 = vpop.f32.mrf.mxu0
    %2092 = vdwg.mxu0
    %v2093 = vpack.c.bf16 %v1989, %v1986
    %v2094 = vpack.c.bf16 %v1997, %v1994
    %v2095 = vpack.c.bf16 %v2005, %v2002
    %v2096 = vpack.c.bf16 %v2013, %v2010
    %v2097 = vpack.c.bf16 %v2066, %v2063
    %v2098 = vpack.c.bf16 %v2074, %v2071
    %v2099 = vpack.c.bf16 %v2082, %v2079
    %v2100 = vpack.c.bf16 %v2090, %v2087
    %s2101 = scalar_lea.vmem %s5, 8
    %v2102 = vld [vmem:[%s2101] sm:$0xf]
    %v2103 = vld [vmem:[%s2101 + $0x4] sm:$0xf]
    %v2106 = vunpack.c.l.b16 %v2102
    %v2107 = vunpack.c.l.b16 %v2103
    %v2108 = vpack.c.b16 %v2107, %v2106
    %v2111 = vsel %vm636, %v2093, 0
    %v2114 = vsel %vm636, %v2094, 0
    %v2117 = vsel %vm636, %v2095, 0
    %v2120 = vsel %vm636, %v2096, 0
    %v2123 = vsel %vm636, %v2097, 0
    %v2126 = vsel %vm636, %v2098, 0
    %v2129 = vsel %vm636, %v2099, 0
    %v2132 = vsel %vm636, %v2100, 0
    %2134 = vmatprep.subr.bf16.mxu0 0
    %2135 = vmatpush1.bf16.msra.mxu0 0
    %2136 = vmatprep.subr.bf16.mxu0 0
    %2137 = vmatpush1.bf16.msra.mxu0 0
    %2138 = vmatprep.subr.bf16.mxu0 0
    %2139 = vmatpush1.bf16.msra.mxu0 0
    %2140 = vmatprep.subr.bf16.mxu0 0
    %2141 = vmatpush1.bf16.msra.mxu0 0
    %2142 = vmatprep.subr.bf16.mxu0 0
    %2143 = vmatpush1.bf16.msra.mxu0 0
    %2144 = vmatprep.subr.bf16.mxu0 0
    %2145 = vmatpush1.bf16.msra.mxu0 0
    %2146 = vmatprep.subr.bf16.mxu0 0
    %2147 = vmatpush1.bf16.msra.mxu0 0
    %2148 = vmatprep.subr.bf16.mxu0 0
    %2149 = vmatpush1.bf16.msra.mxu0 %v2108
    %2150 = vmatprep.subr.bf16.mxu0 0
    %2151 = vmatpush2.bf16.msra.mxu0 0
    %2152 = vmatprep.subr.bf16.mxu0 0
    %2153 = vmatpush2.bf16.msra.mxu0 0
    %2154 = vmatprep.subr.bf16.mxu0 0
    %2155 = vmatpush2.bf16.msra.mxu0 0
    %2156 = vmatprep.subr.bf16.mxu0 0
    %2157 = vmatpush2.bf16.msra.mxu0 0
    %2158 = vmatprep.subr.bf16.mxu0 0
    %2159 = vmatpush2.bf16.msra.mxu0 0
    %2160 = vmatprep.subr.bf16.mxu0 0
    %2161 = vmatpush2.bf16.msra.mxu0 0
    %2162 = vmatprep.subr.bf16.mxu0 0
    %2163 = vmatpush2.bf16.msra.mxu0 0
    %2164 = vmatprep.subr.bf16.mxu0 0
    %2165 = vmatpush2.bf16.msra.mxu0 0
    %2166 = vmatprep.mubr.bf16.mxu0 0
    %2167 = vmatmul.mubr.bf16.gmra.mxu0 %v2111
    %v2168 = vpop.f32.mrf.mxu0
    %v2169 = vadd.f32 0.0, %v2168
    %v2170 = vpop.f32.mrf.mxu0
    %v2171 = vpop.f32.mrf.mxu0
    %v2172 = vadd.f32 0.0, %v2171
    %v2173 = vpop.f32.mrf.mxu0
    %2174 = vmatprep.mubr.bf16.mxu0 0
    %2175 = vmatmul.mubr.bf16.gmra.mxu0 %v2114
    %v2176 = vpop.f32.mrf.mxu0
    %v2177 = vadd.f32 0.0, %v2176
    %v2178 = vpop.f32.mrf.mxu0
    %v2179 = vpop.f32.mrf.mxu0
    %v2180 = vadd.f32 0.0, %v2179
    %v2181 = vpop.f32.mrf.mxu0
    %2182 = vmatprep.mubr.bf16.mxu0 0
    %2183 = vmatmul.mubr.bf16.gmra.mxu0 %v2117
    %v2184 = vpop.f32.mrf.mxu0
    %v2185 = vadd.f32 0.0, %v2184
    %v2186 = vpop.f32.mrf.mxu0
    %v2187 = vpop.f32.mrf.mxu0
    %v2188 = vadd.f32 0.0, %v2187
    %v2189 = vpop.f32.mrf.mxu0
    %2190 = vmatprep.mubr.bf16.mxu0 0
    %2191 = vmatmul.mubr.bf16.gmra.mxu0 %v2120
    %v2192 = vpop.f32.mrf.mxu0
    %v2193 = vadd.f32 0.0, %v2192
    %v2194 = vpop.f32.mrf.mxu0
    %v2195 = vpop.f32.mrf.mxu0
    %v2196 = vadd.f32 0.0, %v2195
    %v2197 = vpop.f32.mrf.mxu0
    %2198 = vmatprep.mubr.bf16.mxu0 0
    %2199 = vmatmul.mubr.bf16.gmra.mxu0 %v2123
    %v2200 = vpop.f32.mrf.mxu0
    %v2201 = vadd.f32 0.0, %v2200
    %v2202 = vpop.f32.mrf.mxu0
    %v2203 = vpop.f32.mrf.mxu0
    %v2204 = vadd.f32 0.0, %v2203
    %v2205 = vpop.f32.mrf.mxu0
    %2206 = vmatprep.mubr.bf16.mxu0 0
    %2207 = vmatmul.mubr.bf16.gmra.mxu0 %v2126
    %v2208 = vpop.f32.mrf.mxu0
    %v2209 = vadd.f32 0.0, %v2208
    %v2210 = vpop.f32.mrf.mxu0
    %v2211 = vpop.f32.mrf.mxu0
    %v2212 = vadd.f32 0.0, %v2211
    %v2213 = vpop.f32.mrf.mxu0
    %2214 = vmatprep.mubr.bf16.mxu0 0
    %2215 = vmatmul.mubr.bf16.gmra.mxu0 %v2129
    %v2216 = vpop.f32.mrf.mxu0
    %v2217 = vadd.f32 0.0, %v2216
    %v2218 = vpop.f32.mrf.mxu0
    %v2219 = vpop.f32.mrf.mxu0
    %v2220 = vadd.f32 0.0, %v2219
    %v2221 = vpop.f32.mrf.mxu0
    %2222 = vmatprep.mubr.bf16.mxu0 0
    %2223 = vmatmul.mubr.bf16.gmra.mxu0 %v2132
    %v2224 = vpop.f32.mrf.mxu0
    %v2225 = vadd.f32 0.0, %v2224
    %v2226 = vpop.f32.mrf.mxu0
    %v2227 = vpop.f32.mrf.mxu0
    %v2228 = vadd.f32 0.0, %v2227
    %v2229 = vpop.f32.mrf.mxu0
    %2230 = vdwg.mxu0
    %v2233 = vunpack.c.l.b16 %v1161
    %v2234 = vunpack.c.l.b16 %v1162
    %v2235 = vpack.c.b16 %v2234, %v2233
    %v2238 = vsel %vm636, %v1153, 0
    %v2241 = vsel %vm636, %v1154, 0
    %v2244 = vsel %vm636, %v1155, 0
    %v2247 = vsel %vm636, %v1156, 0
    %v2250 = vsel %vm636, %v1157, 0
    %v2253 = vsel %vm636, %v1158, 0
    %v2256 = vsel %vm636, %v1159, 0
    %v2259 = vsel %vm636, %v1160, 0
    %2261 = vmatprep.subr.bf16.mxu0 0
    %2262 = vmatpush1.bf16.msra.mxu0 0
    %2263 = vmatprep.subr.bf16.mxu0 0
    %2264 = vmatpush1.bf16.msra.mxu0 0
    %2265 = vmatprep.subr.bf16.mxu0 0
    %2266 = vmatpush1.bf16.msra.mxu0 0
    %2267 = vmatprep.subr.bf16.mxu0 0
    %2268 = vmatpush1.bf16.msra.mxu0 0
    %2269 = vmatprep.subr.bf16.mxu0 0
    %2270 = vmatpush1.bf16.msra.mxu0 0
    %2271 = vmatprep.subr.bf16.mxu0 0
    %2272 = vmatpush1.bf16.msra.mxu0 0
    %2273 = vmatprep.subr.bf16.mxu0 0
    %2274 = vmatpush1.bf16.msra.mxu0 0
    %2275 = vmatprep.subr.bf16.mxu0 0
    %2276 = vmatpush1.bf16.msra.mxu0 %v2235
    %2277 = vmatprep.subr.bf16.mxu0 0
    %2278 = vmatpush2.bf16.msra.mxu0 0
    %2279 = vmatprep.subr.bf16.mxu0 0
    %2280 = vmatpush2.bf16.msra.mxu0 0
    %2281 = vmatprep.subr.bf16.mxu0 0
    %2282 = vmatpush2.bf16.msra.mxu0 0
    %2283 = vmatprep.subr.bf16.mxu0 0
    %2284 = vmatpush2.bf16.msra.mxu0 0
    %2285 = vmatprep.subr.bf16.mxu0 0
    %2286 = vmatpush2.bf16.msra.mxu0 0
    %2287 = vmatprep.subr.bf16.mxu0 0
    %2288 = vmatpush2.bf16.msra.mxu0 0
    %2289 = vmatprep.subr.bf16.mxu0 0
    %2290 = vmatpush2.bf16.msra.mxu0 0
    %2291 = vmatprep.subr.bf16.mxu0 0
    %2292 = vmatpush2.bf16.msra.mxu0 0
    %2293 = vmatprep.mubr.bf16.mxu0 0
    %2294 = vmatmul.mubr.bf16.gmra.mxu0 %v2238
    %v2295 = vpop.f32.mrf.mxu0
    %v2296 = vadd.f32 %v2169, %v2295
    %v2297 = vpop.f32.mrf.mxu0
    %v2298 = vpop.f32.mrf.mxu0
    %v2299 = vadd.f32 %v2172, %v2298
    %v2300 = vpop.f32.mrf.mxu0
    %2301 = vmatprep.mubr.bf16.mxu0 0
    %2302 = vmatmul.mubr.bf16.gmra.mxu0 %v2241
    %v2303 = vpop.f32.mrf.mxu0
    %v2304 = vadd.f32 %v2177, %v2303
    %v2305 = vpop.f32.mrf.mxu0
    %v2306 = vpop.f32.mrf.mxu0
    %v2307 = vadd.f32 %v2180, %v2306
    %v2308 = vpop.f32.mrf.mxu0
    %2309 = vmatprep.mubr.bf16.mxu0 0
    %2310 = vmatmul.mubr.bf16.gmra.mxu0 %v2244
    %v2311 = vpop.f32.mrf.mxu0
    %v2312 = vadd.f32 %v2185, %v2311
    %v2313 = vpop.f32.mrf.mxu0
    %v2314 = vpop.f32.mrf.mxu0
    %v2315 = vadd.f32 %v2188, %v2314
    %v2316 = vpop.f32.mrf.mxu0
    %2317 = vmatprep.mubr.bf16.mxu0 0
    %2318 = vmatmul.mubr.bf16.gmra.mxu0 %v2247
    %v2319 = vpop.f32.mrf.mxu0
    %v2320 = vadd.f32 %v2193, %v2319
    %v2321 = vpop.f32.mrf.mxu0
    %v2322 = vpop.f32.mrf.mxu0
    %v2323 = vadd.f32 %v2196, %v2322
    %v2324 = vpop.f32.mrf.mxu0
    %2325 = vmatprep.mubr.bf16.mxu0 0
    %2326 = vmatmul.mubr.bf16.gmra.mxu0 %v2250
    %v2327 = vpop.f32.mrf.mxu0
    %v2328 = vadd.f32 %v2201, %v2327
    %v2329 = vpop.f32.mrf.mxu0
    %v2330 = vpop.f32.mrf.mxu0
    %v2331 = vadd.f32 %v2204, %v2330
    %v2332 = vpop.f32.mrf.mxu0
    %2333 = vmatprep.mubr.bf16.mxu0 0
    %2334 = vmatmul.mubr.bf16.gmra.mxu0 %v2253
    %v2335 = vpop.f32.mrf.mxu0
    %v2336 = vadd.f32 %v2209, %v2335
    %v2337 = vpop.f32.mrf.mxu0
    %v2338 = vpop.f32.mrf.mxu0
    %v2339 = vadd.f32 %v2212, %v2338
    %v2340 = vpop.f32.mrf.mxu0
    %2341 = vmatprep.mubr.bf16.mxu0 0
    %2342 = vmatmul.mubr.bf16.gmra.mxu0 %v2256
    %v2343 = vpop.f32.mrf.mxu0
    %v2344 = vadd.f32 %v2217, %v2343
    %v2345 = vpop.f32.mrf.mxu0
    %v2346 = vpop.f32.mrf.mxu0
    %v2347 = vadd.f32 %v2220, %v2346
    %v2348 = vpop.f32.mrf.mxu0
    %2349 = vmatprep.mubr.bf16.mxu0 0
    %2350 = vmatmul.mubr.bf16.gmra.mxu0 %v2259
    %v2351 = vpop.f32.mrf.mxu0
    %v2352 = vadd.f32 %v2225, %v2351
    %v2353 = vpop.f32.mrf.mxu0
    %v2354 = vpop.f32.mrf.mxu0
    %v2355 = vadd.f32 %v2228, %v2354
    %v2356 = vpop.f32.mrf.mxu0
    %2357 = vdwg.mxu0
    %s2358 = scalar_lea.vmem %s2, 64
    %v2359 = vld [vmem:[%s2358] sm:$0xf]
    %v2360 = vld [vmem:[%s2358 + $0x4] sm:$0xf]
    %v2361 = vld [vmem:[%s2358 + $0x8] sm:$0xf]
    %v2362 = vld [vmem:[%s2358 + $0xc] sm:$0xf]
    %v2363 = vld [vmem:[%s2358 + $0x10] sm:$0xf]
    %v2364 = vld [vmem:[%s2358 + $0x14] sm:$0xf]
    %v2365 = vld [vmem:[%s2358 + $0x18] sm:$0xf]
    %v2366 = vld [vmem:[%s2358 + $0x1c] sm:$0xf]
    %v2375 = vunpack.c.l.b16 %v2359
    %v2376 = vunpack.c.l.b16 %v2360
    %v2377 = vunpack.c.l.b16 %v2361
    %v2378 = vunpack.c.l.b16 %v2362
    %v2379 = vunpack.c.l.b16 %v2363
    %v2380 = vunpack.c.l.b16 %v2364
    %v2381 = vunpack.c.l.b16 %v2365
    %v2382 = vunpack.c.l.b16 %v2366
    %v2383 = vpack.c.b16 %v2376, %v2375
    %v2384 = vpack.c.b16 %v2378, %v2377
    %v2385 = vpack.c.b16 %v2380, %v2379
    %v2386 = vpack.c.b16 %v2382, %v2381
    %2391 = vmatprep.subr.bf16.mxu0 0
    %2392 = vmatpush1.bf16.msra.mxu0 0
    %2393 = vmatprep.subr.bf16.mxu0 0
    %2394 = vmatpush1.bf16.msra.mxu0 0
    %2395 = vmatprep.subr.bf16.mxu0 0
    %2396 = vmatpush1.bf16.msra.mxu0 0
    %2397 = vmatprep.subr.bf16.mxu0 0
    %2398 = vmatpush1.bf16.msra.mxu0 0
    %2399 = vmatprep.subr.bf16.mxu0 0
    %2400 = vmatpush1.bf16.msra.mxu0 %v2386
    %2401 = vmatprep.subr.bf16.mxu0 0
    %2402 = vmatpush1.bf16.msra.mxu0 %v2385
    %2403 = vmatprep.subr.bf16.mxu0 0
    %2404 = vmatpush1.bf16.msra.mxu0 %v2384
    %2405 = vmatprep.subr.bf16.mxu0 0
    %2406 = vmatpush1.bf16.msra.mxu0 %v2383
    %2407 = vmatprep.subr.bf16.mxu0 0
    %2408 = vmatpush2.bf16.msra.mxu0 0
    %2409 = vmatprep.subr.bf16.mxu0 0
    %2410 = vmatpush2.bf16.msra.mxu0 0
    %2411 = vmatprep.subr.bf16.mxu0 0
    %2412 = vmatpush2.bf16.msra.mxu0 0
    %2413 = vmatprep.subr.bf16.mxu0 0
    %2414 = vmatpush2.bf16.msra.mxu0 0
    %2415 = vmatprep.subr.bf16.mxu0 0
    %2416 = vmatpush2.bf16.msra.mxu0 0
    %2417 = vmatprep.subr.bf16.mxu0 0
    %2418 = vmatpush2.bf16.msra.mxu0 0
    %2419 = vmatprep.subr.bf16.mxu0 0
    %2420 = vmatpush2.bf16.msra.mxu0 0
    %2421 = vmatprep.subr.bf16.mxu0 0
    %2422 = vmatpush2.bf16.msra.mxu0 0
    %2423 = vmatprep.mubr.bf16.mxu0 0
    %2424 = vmatmul.mubr.bf16.gmra.mxu0 %v234
    %v2425 = vpop.f32.mrf.mxu0
    %v2426 = vadd.f32 0.0, %v2425
    %v2427 = vpop.f32.mrf.mxu0
    %v2428 = vpop.f32.mrf.mxu0
    %v2429 = vadd.f32 0.0, %v2428
    %v2430 = vpop.f32.mrf.mxu0
    %2431 = vmatprep.mubr.bf16.mxu0 0
    %2432 = vmatmul.mubr.bf16.gmra.mxu0 %v237
    %v2433 = vpop.f32.mrf.mxu0
    %v2434 = vadd.f32 0.0, %v2433
    %v2435 = vpop.f32.mrf.mxu0
    %v2436 = vpop.f32.mrf.mxu0
    %v2437 = vadd.f32 0.0, %v2436
    %v2438 = vpop.f32.mrf.mxu0
    %2439 = vmatprep.mubr.bf16.mxu0 0
    %2440 = vmatmul.mubr.bf16.gmra.mxu0 %v240
    %v2441 = vpop.f32.mrf.mxu0
    %v2442 = vadd.f32 0.0, %v2441
    %v2443 = vpop.f32.mrf.mxu0
    %v2444 = vpop.f32.mrf.mxu0
    %v2445 = vadd.f32 0.0, %v2444
    %v2446 = vpop.f32.mrf.mxu0
    %2447 = vmatprep.mubr.bf16.mxu0 0
    %2448 = vmatmul.mubr.bf16.gmra.mxu0 %v243
    %v2449 = vpop.f32.mrf.mxu0
    %v2450 = vadd.f32 0.0, %v2449
    %v2451 = vpop.f32.mrf.mxu0
    %v2452 = vpop.f32.mrf.mxu0
    %v2453 = vadd.f32 0.0, %v2452
    %v2454 = vpop.f32.mrf.mxu0
    %2455 = vmatprep.mubr.bf16.mxu0 0
    %2456 = vmatmul.mubr.bf16.gmra.mxu0 %v246
    %v2457 = vpop.f32.mrf.mxu0
    %v2458 = vadd.f32 0.0, %v2457
    %v2459 = vpop.f32.mrf.mxu0
    %v2460 = vpop.f32.mrf.mxu0
    %v2461 = vadd.f32 0.0, %v2460
    %v2462 = vpop.f32.mrf.mxu0
    %2463 = vmatprep.mubr.bf16.mxu0 0
    %2464 = vmatmul.mubr.bf16.gmra.mxu0 %v249
    %v2465 = vpop.f32.mrf.mxu0
    %v2466 = vadd.f32 0.0, %v2465
    %v2467 = vpop.f32.mrf.mxu0
    %v2468 = vpop.f32.mrf.mxu0
    %v2469 = vadd.f32 0.0, %v2468
    %v2470 = vpop.f32.mrf.mxu0
    %2471 = vmatprep.mubr.bf16.mxu0 0
    %2472 = vmatmul.mubr.bf16.gmra.mxu0 %v252
    %v2473 = vpop.f32.mrf.mxu0
    %v2474 = vadd.f32 0.0, %v2473
    %v2475 = vpop.f32.mrf.mxu0
    %v2476 = vpop.f32.mrf.mxu0
    %v2477 = vadd.f32 0.0, %v2476
    %v2478 = vpop.f32.mrf.mxu0
    %2479 = vmatprep.mubr.bf16.mxu0 0
    %2480 = vmatmul.mubr.bf16.gmra.mxu0 %v255
    %v2481 = vpop.f32.mrf.mxu0
    %v2482 = vadd.f32 0.0, %v2481
    %v2483 = vpop.f32.mrf.mxu0
    %v2484 = vpop.f32.mrf.mxu0
    %v2485 = vadd.f32 0.0, %v2484
    %v2486 = vpop.f32.mrf.mxu0
    %2487 = vdwg.mxu0
    %s2488 = scalar_lea.vmem %s3, 64
    %v2489 = vld [vmem:[%s2488] sm:$0xf]
    %v2490 = vld [vmem:[%s2488 + $0x4] sm:$0xf]
    %v2491 = vld [vmem:[%s2488 + $0x8] sm:$0xf]
    %v2492 = vld [vmem:[%s2488 + $0xc] sm:$0xf]
    %v2493 = vld [vmem:[%s2488 + $0x10] sm:$0xf]
    %v2494 = vld [vmem:[%s2488 + $0x14] sm:$0xf]
    %v2495 = vld [vmem:[%s2488 + $0x18] sm:$0xf]
    %v2496 = vld [vmem:[%s2488 + $0x1c] sm:$0xf]
    %v2505 = vunpack.c.l.b16 %v2489
    %v2506 = vunpack.c.l.b16 %v2490
    %v2507 = vunpack.c.l.b16 %v2491
    %v2508 = vunpack.c.l.b16 %v2492
    %v2509 = vunpack.c.l.b16 %v2493
    %v2510 = vunpack.c.l.b16 %v2494
    %v2511 = vunpack.c.l.b16 %v2495
    %v2512 = vunpack.c.l.b16 %v2496
    %v2513 = vpack.c.b16 %v2506, %v2505
    %v2514 = vpack.c.b16 %v2508, %v2507
    %v2515 = vpack.c.b16 %v2510, %v2509
    %v2516 = vpack.c.b16 %v2512, %v2511
    %2521 = vmatprep.subr.bf16.mxu0 0
    %2522 = vmatpush1.bf16.msra.mxu0 0
    %2523 = vmatprep.subr.bf16.mxu0 0
    %2524 = vmatpush1.bf16.msra.mxu0 0
    %2525 = vmatprep.subr.bf16.mxu0 0
    %2526 = vmatpush1.bf16.msra.mxu0 0
    %2527 = vmatprep.subr.bf16.mxu0 0
    %2528 = vmatpush1.bf16.msra.mxu0 0
    %2529 = vmatprep.subr.bf16.mxu0 0
    %2530 = vmatpush1.bf16.msra.mxu0 %v2516
    %2531 = vmatprep.subr.bf16.mxu0 0
    %2532 = vmatpush1.bf16.msra.mxu0 %v2515
    %2533 = vmatprep.subr.bf16.mxu0 0
    %2534 = vmatpush1.bf16.msra.mxu0 %v2514
    %2535 = vmatprep.subr.bf16.mxu0 0
    %2536 = vmatpush1.bf16.msra.mxu0 %v2513
    %2537 = vmatprep.subr.bf16.mxu0 0
    %2538 = vmatpush2.bf16.msra.mxu0 0
    %2539 = vmatprep.subr.bf16.mxu0 0
    %2540 = vmatpush2.bf16.msra.mxu0 0
    %2541 = vmatprep.subr.bf16.mxu0 0
    %2542 = vmatpush2.bf16.msra.mxu0 0
    %2543 = vmatprep.subr.bf16.mxu0 0
    %2544 = vmatpush2.bf16.msra.mxu0 0
    %2545 = vmatprep.subr.bf16.mxu0 0
    %2546 = vmatpush2.bf16.msra.mxu0 0
    %2547 = vmatprep.subr.bf16.mxu0 0
    %2548 = vmatpush2.bf16.msra.mxu0 0
    %2549 = vmatprep.subr.bf16.mxu0 0
    %2550 = vmatpush2.bf16.msra.mxu0 0
    %2551 = vmatprep.subr.bf16.mxu0 0
    %2552 = vmatpush2.bf16.msra.mxu0 0
    %2553 = vmatprep.mubr.bf16.mxu0 0
    %2554 = vmatmul.mubr.bf16.gmra.mxu0 %v234
    %v2555 = vpop.f32.mrf.mxu0
    %v2556 = vadd.f32 0.0, %v2555
    %v2557 = vpop.f32.mrf.mxu0
    %v2558 = vpop.f32.mrf.mxu0
    %v2559 = vadd.f32 0.0, %v2558
    %v2560 = vpop.f32.mrf.mxu0
    %2561 = vmatprep.mubr.bf16.mxu0 0
    %2562 = vmatmul.mubr.bf16.gmra.mxu0 %v237
    %v2563 = vpop.f32.mrf.mxu0
    %v2564 = vadd.f32 0.0, %v2563
    %v2565 = vpop.f32.mrf.mxu0
    %v2566 = vpop.f32.mrf.mxu0
    %v2567 = vadd.f32 0.0, %v2566
    %v2568 = vpop.f32.mrf.mxu0
    %2569 = vmatprep.mubr.bf16.mxu0 0
    %2570 = vmatmul.mubr.bf16.gmra.mxu0 %v240
    %v2571 = vpop.f32.mrf.mxu0
    %v2572 = vadd.f32 0.0, %v2571
    %v2573 = vpop.f32.mrf.mxu0
    %v2574 = vpop.f32.mrf.mxu0
    %v2575 = vadd.f32 0.0, %v2574
    %v2576 = vpop.f32.mrf.mxu0
    %2577 = vmatprep.mubr.bf16.mxu0 0
    %2578 = vmatmul.mubr.bf16.gmra.mxu0 %v243
    %v2579 = vpop.f32.mrf.mxu0
    %v2580 = vadd.f32 0.0, %v2579
    %v2581 = vpop.f32.mrf.mxu0
    %v2582 = vpop.f32.mrf.mxu0
    %v2583 = vadd.f32 0.0, %v2582
    %v2584 = vpop.f32.mrf.mxu0
    %2585 = vmatprep.mubr.bf16.mxu0 0
    %2586 = vmatmul.mubr.bf16.gmra.mxu0 %v246
    %v2587 = vpop.f32.mrf.mxu0
    %v2588 = vadd.f32 0.0, %v2587
    %v2589 = vpop.f32.mrf.mxu0
    %v2590 = vpop.f32.mrf.mxu0
    %v2591 = vadd.f32 0.0, %v2590
    %v2592 = vpop.f32.mrf.mxu0
    %2593 = vmatprep.mubr.bf16.mxu0 0
    %2594 = vmatmul.mubr.bf16.gmra.mxu0 %v249
    %v2595 = vpop.f32.mrf.mxu0
    %v2596 = vadd.f32 0.0, %v2595
    %v2597 = vpop.f32.mrf.mxu0
    %v2598 = vpop.f32.mrf.mxu0
    %v2599 = vadd.f32 0.0, %v2598
    %v2600 = vpop.f32.mrf.mxu0
    %2601 = vmatprep.mubr.bf16.mxu0 0
    %2602 = vmatmul.mubr.bf16.gmra.mxu0 %v252
    %v2603 = vpop.f32.mrf.mxu0
    %v2604 = vadd.f32 0.0, %v2603
    %v2605 = vpop.f32.mrf.mxu0
    %v2606 = vpop.f32.mrf.mxu0
    %v2607 = vadd.f32 0.0, %v2606
    %v2608 = vpop.f32.mrf.mxu0
    %2609 = vmatprep.mubr.bf16.mxu0 0
    %2610 = vmatmul.mubr.bf16.gmra.mxu0 %v255
    %v2611 = vpop.f32.mrf.mxu0
    %v2612 = vadd.f32 0.0, %v2611
    %v2613 = vpop.f32.mrf.mxu0
    %v2614 = vpop.f32.mrf.mxu0
    %v2615 = vadd.f32 0.0, %v2614
    %v2616 = vpop.f32.mrf.mxu0
    %2617 = vdwg.mxu0
    %s2618 = scalar_lea.vmem %s4, 64
    %v2619 = vld [vmem:[%s2618] sm:$0xf]
    %v2620 = vld [vmem:[%s2618 + $0x4] sm:$0xf]
    %v2621 = vld [vmem:[%s2618 + $0x8] sm:$0xf]
    %v2622 = vld [vmem:[%s2618 + $0xc] sm:$0xf]
    %v2623 = vld [vmem:[%s2618 + $0x10] sm:$0xf]
    %v2624 = vld [vmem:[%s2618 + $0x14] sm:$0xf]
    %v2625 = vld [vmem:[%s2618 + $0x18] sm:$0xf]
    %v2626 = vld [vmem:[%s2618 + $0x1c] sm:$0xf]
    %v2635 = vunpack.c.l.b16 %v2619
    %v2636 = vunpack.c.l.b16 %v2620
    %v2637 = vunpack.c.l.b16 %v2621
    %v2638 = vunpack.c.l.b16 %v2622
    %v2639 = vunpack.c.l.b16 %v2623
    %v2640 = vunpack.c.l.b16 %v2624
    %v2641 = vunpack.c.l.b16 %v2625
    %v2642 = vunpack.c.l.b16 %v2626
    %v2643 = vpack.c.b16 %v2636, %v2635
    %v2644 = vpack.c.b16 %v2638, %v2637
    %v2645 = vpack.c.b16 %v2640, %v2639
    %v2646 = vpack.c.b16 %v2642, %v2641
    %2651 = vmatprep.subr.bf16.mxu0 0
    %2652 = vmatpush1.bf16.msra.mxu0 0
    %2653 = vmatprep.subr.bf16.mxu0 0
    %2654 = vmatpush1.bf16.msra.mxu0 0
    %2655 = vmatprep.subr.bf16.mxu0 0
    %2656 = vmatpush1.bf16.msra.mxu0 0
    %2657 = vmatprep.subr.bf16.mxu0 0
    %2658 = vmatpush1.bf16.msra.mxu0 0
    %2659 = vmatprep.subr.bf16.mxu0 0
    %2660 = vmatpush1.bf16.msra.mxu0 %v2646
    %2661 = vmatprep.subr.bf16.mxu0 0
    %2662 = vmatpush1.bf16.msra.mxu0 %v2645
    %2663 = vmatprep.subr.bf16.mxu0 0
    %2664 = vmatpush1.bf16.msra.mxu0 %v2644
    %2665 = vmatprep.subr.bf16.mxu0 0
    %2666 = vmatpush1.bf16.msra.mxu0 %v2643
    %2667 = vmatprep.subr.bf16.mxu0 0
    %2668 = vmatpush2.bf16.msra.mxu0 0
    %2669 = vmatprep.subr.bf16.mxu0 0
    %2670 = vmatpush2.bf16.msra.mxu0 0
    %2671 = vmatprep.subr.bf16.mxu0 0
    %2672 = vmatpush2.bf16.msra.mxu0 0
    %2673 = vmatprep.subr.bf16.mxu0 0
    %2674 = vmatpush2.bf16.msra.mxu0 0
    %2675 = vmatprep.subr.bf16.mxu0 0
    %2676 = vmatpush2.bf16.msra.mxu0 0
    %2677 = vmatprep.subr.bf16.mxu0 0
    %2678 = vmatpush2.bf16.msra.mxu0 0
    %2679 = vmatprep.subr.bf16.mxu0 0
    %2680 = vmatpush2.bf16.msra.mxu0 0
    %2681 = vmatprep.subr.bf16.mxu0 0
    %2682 = vmatpush2.bf16.msra.mxu0 0
    %2683 = vmatprep.mubr.bf16.mxu0 0
    %2684 = vmatmul.mubr.bf16.gmra.mxu0 %v234
    %v2685 = vpop.f32.mrf.mxu0
    %v2686 = vadd.f32 0.0, %v2685
    %v2687 = vpop.f32.mrf.mxu0
    %v2688 = vpop.f32.mrf.mxu0
    %v2689 = vadd.f32 0.0, %v2688
    %v2690 = vpop.f32.mrf.mxu0
    %2691 = vmatprep.mubr.bf16.mxu0 0
    %2692 = vmatmul.mubr.bf16.gmra.mxu0 %v237
    %v2693 = vpop.f32.mrf.mxu0
    %v2694 = vadd.f32 0.0, %v2693
    %v2695 = vpop.f32.mrf.mxu0
    %v2696 = vpop.f32.mrf.mxu0
    %v2697 = vadd.f32 0.0, %v2696
    %v2698 = vpop.f32.mrf.mxu0
    %2699 = vmatprep.mubr.bf16.mxu0 0
    %2700 = vmatmul.mubr.bf16.gmra.mxu0 %v240
    %v2701 = vpop.f32.mrf.mxu0
    %v2702 = vadd.f32 0.0, %v2701
    %v2703 = vpop.f32.mrf.mxu0
    %v2704 = vpop.f32.mrf.mxu0
    %v2705 = vadd.f32 0.0, %v2704
    %v2706 = vpop.f32.mrf.mxu0
    %2707 = vmatprep.mubr.bf16.mxu0 0
    %2708 = vmatmul.mubr.bf16.gmra.mxu0 %v243
    %v2709 = vpop.f32.mrf.mxu0
    %v2710 = vadd.f32 0.0, %v2709
    %v2711 = vpop.f32.mrf.mxu0
    %v2712 = vpop.f32.mrf.mxu0
    %v2713 = vadd.f32 0.0, %v2712
    %v2714 = vpop.f32.mrf.mxu0
    %2715 = vmatprep.mubr.bf16.mxu0 0
    %2716 = vmatmul.mubr.bf16.gmra.mxu0 %v246
    %v2717 = vpop.f32.mrf.mxu0
    %v2718 = vadd.f32 0.0, %v2717
    %v2719 = vpop.f32.mrf.mxu0
    %v2720 = vpop.f32.mrf.mxu0
    %v2721 = vadd.f32 0.0, %v2720
    %v2722 = vpop.f32.mrf.mxu0
    %2723 = vmatprep.mubr.bf16.mxu0 0
    %2724 = vmatmul.mubr.bf16.gmra.mxu0 %v249
    %v2725 = vpop.f32.mrf.mxu0
    %v2726 = vadd.f32 0.0, %v2725
    %v2727 = vpop.f32.mrf.mxu0
    %v2728 = vpop.f32.mrf.mxu0
    %v2729 = vadd.f32 0.0, %v2728
    %v2730 = vpop.f32.mrf.mxu0
    %2731 = vmatprep.mubr.bf16.mxu0 0
    %2732 = vmatmul.mubr.bf16.gmra.mxu0 %v252
    %v2733 = vpop.f32.mrf.mxu0
    %v2734 = vadd.f32 0.0, %v2733
    %v2735 = vpop.f32.mrf.mxu0
    %v2736 = vpop.f32.mrf.mxu0
    %v2737 = vadd.f32 0.0, %v2736
    %v2738 = vpop.f32.mrf.mxu0
    %2739 = vmatprep.mubr.bf16.mxu0 0
    %2740 = vmatmul.mubr.bf16.gmra.mxu0 %v255
    %v2741 = vpop.f32.mrf.mxu0
    %v2742 = vadd.f32 0.0, %v2741
    %v2743 = vpop.f32.mrf.mxu0
    %v2744 = vpop.f32.mrf.mxu0
    %v2745 = vadd.f32 0.0, %v2744
    %v2746 = vpop.f32.mrf.mxu0
    %2747 = vdwg.mxu0
    %v2748 = vpack.c.bf16 %v2429, %v2426
    %v2749 = vpack.c.bf16 %v2437, %v2434
    %v2750 = vpack.c.bf16 %v2445, %v2442
    %v2751 = vpack.c.bf16 %v2453, %v2450
    %v2752 = vpack.c.bf16 %v2461, %v2458
    %v2753 = vpack.c.bf16 %v2469, %v2466
    %v2754 = vpack.c.bf16 %v2477, %v2474
    %v2755 = vpack.c.bf16 %v2485, %v2482
    %v2756 = vpack.c.bf16 %v2559, %v2556
    %v2757 = vpack.c.bf16 %v2567, %v2564
    %v2758 = vpack.c.bf16 %v2575, %v2572
    %v2759 = vpack.c.bf16 %v2583, %v2580
    %v2760 = vpack.c.bf16 %v2591, %v2588
    %v2761 = vpack.c.bf16 %v2599, %v2596
    %v2762 = vpack.c.bf16 %v2607, %v2604
    %v2763 = vpack.c.bf16 %v2615, %v2612
    %v2764 = vpack.c.bf16 %v2689, %v2686
    %v2765 = vpack.c.bf16 %v2697, %v2694
    %v2766 = vpack.c.bf16 %v2705, %v2702
    %v2767 = vpack.c.bf16 %v2713, %v2710
    %v2768 = vpack.c.bf16 %v2721, %v2718
    %v2769 = vpack.c.bf16 %v2729, %v2726
    %v2770 = vpack.c.bf16 %v2737, %v2734
    %v2771 = vpack.c.bf16 %v2745, %v2742
    %v2773 = vsel %vm636, %v2748, 0
    %v2776 = vsel %vm636, %v2749, 0
    %v2779 = vsel %vm636, %v2750, 0
    %v2782 = vsel %vm636, %v2751, 0
    %v2785 = vsel %vm636, %v2756, 0
    %v2788 = vsel %vm636, %v2757, 0
    %v2791 = vsel %vm636, %v2758, 0
    %v2794 = vsel %vm636, %v2759, 0
    %2796 = vmatprep.subr.bf16.mxu0 0
    %2797 = vmatpush1.bf16.xpose.msra.mxu0 0
    %2798 = vmatprep.subr.bf16.mxu0 0
    %2799 = vmatpush1.bf16.xpose.msra.mxu0 0
    %2800 = vmatprep.subr.bf16.mxu0 0
    %2801 = vmatpush1.bf16.xpose.msra.mxu0 0
    %2802 = vmatprep.subr.bf16.mxu0 0
    %2803 = vmatpush1.bf16.xpose.msra.mxu0 0
    %2804 = vmatprep.subr.bf16.mxu0 0
    %2805 = vmatpush1.bf16.xpose.msra.mxu0 %v2794
    %2806 = vmatprep.subr.bf16.mxu0 0
    %2807 = vmatpush1.bf16.xpose.msra.mxu0 %v2791
    %2808 = vmatprep.subr.bf16.mxu0 0
    %2809 = vmatpush1.bf16.xpose.msra.mxu0 %v2788
    %2810 = vmatprep.subr.bf16.mxu0 0
    %2811 = vmatpush1.bf16.xpose.msra.mxu0 %v2785
    %2812 = vmatprep.subr.bf16.mxu0 0
    %2813 = vmatpush2.bf16.xpose.msra.mxu0 0
    %2814 = vmatprep.subr.bf16.mxu0 0
    %2815 = vmatpush2.bf16.xpose.msra.mxu0 0
    %2816 = vmatprep.subr.bf16.mxu0 0
    %2817 = vmatpush2.bf16.xpose.msra.mxu0 0
    %2818 = vmatprep.subr.bf16.mxu0 0
    %2819 = vmatpush2.bf16.xpose.msra.mxu0 0
    %2820 = vmatprep.subr.bf16.mxu0 0
    %2821 = vmatpush2.bf16.xpose.msra.mxu0 0
    %2822 = vmatprep.subr.bf16.mxu0 0
    %2823 = vmatpush2.bf16.xpose.msra.mxu0 0
    %2824 = vmatprep.subr.bf16.mxu0 0
    %2825 = vmatpush2.bf16.xpose.msra.mxu0 0
    %2826 = vmatprep.subr.bf16.mxu0 0
    %2827 = vmatpush2.bf16.xpose.msra.mxu0 0
    %2828 = vmatprep.mubr.bf16.mxu0 0
    %2829 = vmatmul.mubr.bf16.gmra.mxu0 %v2773
    %v2830 = vpop.f32.mrf.mxu0
    %v2831 = vadd.f32 0.0, %v2830
    %v2832 = vpop.f32.mrf.mxu0
    %v2833 = vpop.f32.mrf.mxu0
    %v2834 = vadd.f32 0.0, %v2833
    %v2835 = vpop.f32.mrf.mxu0
    %2836 = vmatprep.mubr.bf16.mxu0 0
    %2837 = vmatmul.mubr.bf16.gmra.mxu0 %v2776
    %v2838 = vpop.f32.mrf.mxu0
    %v2839 = vadd.f32 0.0, %v2838
    %v2840 = vpop.f32.mrf.mxu0
    %v2841 = vpop.f32.mrf.mxu0
    %v2842 = vadd.f32 0.0, %v2841
    %v2843 = vpop.f32.mrf.mxu0
    %2844 = vmatprep.mubr.bf16.mxu0 0
    %2845 = vmatmul.mubr.bf16.gmra.mxu0 %v2779
    %v2846 = vpop.f32.mrf.mxu0
    %v2847 = vadd.f32 0.0, %v2846
    %v2848 = vpop.f32.mrf.mxu0
    %v2849 = vpop.f32.mrf.mxu0
    %v2850 = vadd.f32 0.0, %v2849
    %v2851 = vpop.f32.mrf.mxu0
    %2852 = vmatprep.mubr.bf16.mxu0 0
    %2853 = vmatmul.mubr.bf16.gmra.mxu0 %v2782
    %v2854 = vpop.f32.mrf.mxu0
    %v2855 = vadd.f32 0.0, %v2854
    %v2856 = vpop.f32.mrf.mxu0
    %v2857 = vpop.f32.mrf.mxu0
    %v2858 = vadd.f32 0.0, %v2857
    %v2859 = vpop.f32.mrf.mxu0
    %2860 = vdwg.mxu0
    %v2862 = vsel %vm636, %v2752, 0
    %v2865 = vsel %vm636, %v2753, 0
    %v2868 = vsel %vm636, %v2754, 0
    %v2871 = vsel %vm636, %v2755, 0
    %v2874 = vsel %vm636, %v2760, 0
    %v2877 = vsel %vm636, %v2761, 0
    %v2880 = vsel %vm636, %v2762, 0
    %v2883 = vsel %vm636, %v2763, 0
    %2885 = vmatprep.subr.bf16.mxu0 0
    %2886 = vmatpush1.bf16.xpose.msra.mxu0 0
    %2887 = vmatprep.subr.bf16.mxu0 0
    %2888 = vmatpush1.bf16.xpose.msra.mxu0 0
    %2889 = vmatprep.subr.bf16.mxu0 0
    %2890 = vmatpush1.bf16.xpose.msra.mxu0 0
    %2891 = vmatprep.subr.bf16.mxu0 0
    %2892 = vmatpush1.bf16.xpose.msra.mxu0 0
    %2893 = vmatprep.subr.bf16.mxu0 0
    %2894 = vmatpush1.bf16.xpose.msra.mxu0 %v2883
    %2895 = vmatprep.subr.bf16.mxu0 0
    %2896 = vmatpush1.bf16.xpose.msra.mxu0 %v2880
    %2897 = vmatprep.subr.bf16.mxu0 0
    %2898 = vmatpush1.bf16.xpose.msra.mxu0 %v2877
    %2899 = vmatprep.subr.bf16.mxu0 0
    %2900 = vmatpush1.bf16.xpose.msra.mxu0 %v2874
    %2901 = vmatprep.subr.bf16.mxu0 0
    %2902 = vmatpush2.bf16.xpose.msra.mxu0 0
    %2903 = vmatprep.subr.bf16.mxu0 0
    %2904 = vmatpush2.bf16.xpose.msra.mxu0 0
    %2905 = vmatprep.subr.bf16.mxu0 0
    %2906 = vmatpush2.bf16.xpose.msra.mxu0 0
    %2907 = vmatprep.subr.bf16.mxu0 0
    %2908 = vmatpush2.bf16.xpose.msra.mxu0 0
    %2909 = vmatprep.subr.bf16.mxu0 0
    %2910 = vmatpush2.bf16.xpose.msra.mxu0 0
    %2911 = vmatprep.subr.bf16.mxu0 0
    %2912 = vmatpush2.bf16.xpose.msra.mxu0 0
    %2913 = vmatprep.subr.bf16.mxu0 0
    %2914 = vmatpush2.bf16.xpose.msra.mxu0 0
    %2915 = vmatprep.subr.bf16.mxu0 0
    %2916 = vmatpush2.bf16.xpose.msra.mxu0 0
    %2917 = vmatprep.mubr.bf16.mxu0 0
    %2918 = vmatmul.mubr.bf16.gmra.mxu0 %v2862
    %v2919 = vpop.f32.mrf.mxu0
    %v2920 = vadd.f32 0.0, %v2919
    %v2921 = vpop.f32.mrf.mxu0
    %v2922 = vpop.f32.mrf.mxu0
    %v2923 = vadd.f32 0.0, %v2922
    %v2924 = vpop.f32.mrf.mxu0
    %2925 = vmatprep.mubr.bf16.mxu0 0
    %2926 = vmatmul.mubr.bf16.gmra.mxu0 %v2865
    %v2927 = vpop.f32.mrf.mxu0
    %v2928 = vadd.f32 0.0, %v2927
    %v2929 = vpop.f32.mrf.mxu0
    %v2930 = vpop.f32.mrf.mxu0
    %v2931 = vadd.f32 0.0, %v2930
    %v2932 = vpop.f32.mrf.mxu0
    %2933 = vmatprep.mubr.bf16.mxu0 0
    %2934 = vmatmul.mubr.bf16.gmra.mxu0 %v2868
    %v2935 = vpop.f32.mrf.mxu0
    %v2936 = vadd.f32 0.0, %v2935
    %v2937 = vpop.f32.mrf.mxu0
    %v2938 = vpop.f32.mrf.mxu0
    %v2939 = vadd.f32 0.0, %v2938
    %v2940 = vpop.f32.mrf.mxu0
    %2941 = vmatprep.mubr.bf16.mxu0 0
    %2942 = vmatmul.mubr.bf16.gmra.mxu0 %v2871
    %v2943 = vpop.f32.mrf.mxu0
    %v2944 = vadd.f32 0.0, %v2943
    %v2945 = vpop.f32.mrf.mxu0
    %v2946 = vpop.f32.mrf.mxu0
    %v2947 = vadd.f32 0.0, %v2946
    %v2948 = vpop.f32.mrf.mxu0
    %2949 = vdwg.mxu0
    %v2950 = vsel %vm232, %v2831, -inf
    %2951 = vmax.xlane.f32.xlu0 %v2950
    %v2952 = vpop.xlane.xlu0 %2951
    %v2953 = vsel %vm232, %v2834, -inf
    %2954 = vmax.xlane.f32.xlu0 %v2953
    %v2955 = vpop.xlane.xlu0 %2954
    %v2956 = vsel %vm232, %v2839, -inf
    %2957 = vmax.xlane.f32.xlu0 %v2956
    %v2958 = vpop.xlane.xlu0 %2957
    %v2959 = vsel %vm232, %v2842, -inf
    %2960 = vmax.xlane.f32.xlu0 %v2959
    %v2961 = vpop.xlane.xlu0 %2960
    %v2962 = vsel %vm232, %v2847, -inf
    %2963 = vmax.xlane.f32.xlu0 %v2962
    %v2964 = vpop.xlane.xlu0 %2963
    %v2965 = vsel %vm232, %v2850, -inf
    %2966 = vmax.xlane.f32.xlu0 %v2965
    %v2967 = vpop.xlane.xlu0 %2966
    %v2968 = vsel %vm232, %v2855, -inf
    %2969 = vmax.xlane.f32.xlu0 %v2968
    %v2970 = vpop.xlane.xlu0 %2969
    %v2971 = vsel %vm232, %v2858, -inf
    %2972 = vmax.xlane.f32.xlu0 %v2971
    %v2973 = vpop.xlane.xlu0 %2972
    %v2974 = vsel %vm232, %v2920, -inf
    %2975 = vmax.xlane.f32.xlu0 %v2974
    %v2976 = vpop.xlane.xlu0 %2975
    %v2977 = vsel %vm232, %v2923, -inf
    %2978 = vmax.xlane.f32.xlu0 %v2977
    %v2979 = vpop.xlane.xlu0 %2978
    %v2980 = vsel %vm232, %v2928, -inf
    %2981 = vmax.xlane.f32.xlu0 %v2980
    %v2982 = vpop.xlane.xlu0 %2981
    %v2983 = vsel %vm232, %v2931, -inf
    %2984 = vmax.xlane.f32.xlu0 %v2983
    %v2985 = vpop.xlane.xlu0 %2984
    %v2986 = vsel %vm232, %v2936, -inf
    %2987 = vmax.xlane.f32.xlu0 %v2986
    %v2988 = vpop.xlane.xlu0 %2987
    %v2989 = vsel %vm232, %v2939, -inf
    %2990 = vmax.xlane.f32.xlu0 %v2989
    %v2991 = vpop.xlane.xlu0 %2990
    %v2992 = vsel %vm232, %v2944, -inf
    %2993 = vmax.xlane.f32.xlu0 %v2992
    %v2994 = vpop.xlane.xlu0 %2993
    %v2995 = vsel %vm232, %v2947, -inf
    %2996 = vmax.xlane.f32.xlu0 %v2995
    %v2997 = vpop.xlane.xlu0 %2996
    %v2998 = vsub.f32 %v2831, %v2952
    %v2999 = vsub.f32 %v2834, %v2955
    %v3000 = vsub.f32 %v2839, %v2958
    %v3001 = vsub.f32 %v2842, %v2961
    %v3002 = vsub.f32 %v2847, %v2964
    %v3003 = vsub.f32 %v2850, %v2967
    %v3004 = vsub.f32 %v2855, %v2970
    %v3005 = vsub.f32 %v2858, %v2973
    %v3006 = vsub.f32 %v2920, %v2976
    %v3007 = vsub.f32 %v2923, %v2979
    %v3008 = vsub.f32 %v2928, %v2982
    %v3009 = vsub.f32 %v2931, %v2985
    %v3010 = vsub.f32 %v2936, %v2988
    %v3011 = vsub.f32 %v2939, %v2991
    %v3012 = vsub.f32 %v2944, %v2994
    %v3013 = vsub.f32 %v2947, %v2997
    %v3014 = vmul.f32 %v2998, 1.442695
    %v3015 = vpow.pop %v3014
    %v3016 = vmul.f32 %v2999, 1.442695
    %v3017 = vpow.pop %v3016
    %v3018 = vmul.f32 %v3000, 1.442695
    %v3019 = vpow.pop %v3018
    %v3020 = vmul.f32 %v3001, 1.442695
    %v3021 = vpow.pop %v3020
    %v3022 = vmul.f32 %v3002, 1.442695
    %v3023 = vpow.pop %v3022
    %v3024 = vmul.f32 %v3003, 1.442695
    %v3025 = vpow.pop %v3024
    %v3026 = vmul.f32 %v3004, 1.442695
    %v3027 = vpow.pop %v3026
    %v3028 = vmul.f32 %v3005, 1.442695
    %v3029 = vpow.pop %v3028
    %v3030 = vmul.f32 %v3006, 1.442695
    %v3031 = vpow.pop %v3030
    %v3032 = vmul.f32 %v3007, 1.442695
    %v3033 = vpow.pop %v3032
    %v3034 = vmul.f32 %v3008, 1.442695
    %v3035 = vpow.pop %v3034
    %v3036 = vmul.f32 %v3009, 1.442695
    %v3037 = vpow.pop %v3036
    %v3038 = vmul.f32 %v3010, 1.442695
    %v3039 = vpow.pop %v3038
    %v3040 = vmul.f32 %v3011, 1.442695
    %v3041 = vpow.pop %v3040
    %v3042 = vmul.f32 %v3012, 1.442695
    %v3043 = vpow.pop %v3042
    %v3044 = vmul.f32 %v3013, 1.442695
    %v3045 = vpow.pop %v3044
    %v3046 = vsel %vm232, %v3015, 0.0
    %3047 = vadd.xlane.f32.xlu0 %v3046
    %v3048 = vpop.xlane.xlu0 %3047
    %v3049 = vsel %vm232, %v3017, 0.0
    %3050 = vadd.xlane.f32.xlu0 %v3049
    %v3051 = vpop.xlane.xlu0 %3050
    %v3052 = vsel %vm232, %v3019, 0.0
    %3053 = vadd.xlane.f32.xlu0 %v3052
    %v3054 = vpop.xlane.xlu0 %3053
    %v3055 = vsel %vm232, %v3021, 0.0
    %3056 = vadd.xlane.f32.xlu0 %v3055
    %v3057 = vpop.xlane.xlu0 %3056
    %v3058 = vsel %vm232, %v3023, 0.0
    %3059 = vadd.xlane.f32.xlu0 %v3058
    %v3060 = vpop.xlane.xlu0 %3059
    %v3061 = vsel %vm232, %v3025, 0.0
    %3062 = vadd.xlane.f32.xlu0 %v3061
    %v3063 = vpop.xlane.xlu0 %3062
    %v3064 = vsel %vm232, %v3027, 0.0
    %3065 = vadd.xlane.f32.xlu0 %v3064
    %v3066 = vpop.xlane.xlu0 %3065
    %v3067 = vsel %vm232, %v3029, 0.0
    %3068 = vadd.xlane.f32.xlu0 %v3067
    %v3069 = vpop.xlane.xlu0 %3068
    %v3070 = vsel %vm232, %v3031, 0.0
    %3071 = vadd.xlane.f32.xlu0 %v3070
    %v3072 = vpop.xlane.xlu0 %3071
    %v3073 = vsel %vm232, %v3033, 0.0
    %3074 = vadd.xlane.f32.xlu0 %v3073
    %v3075 = vpop.xlane.xlu0 %3074
    %v3076 = vsel %vm232, %v3035, 0.0
    %3077 = vadd.xlane.f32.xlu0 %v3076
    %v3078 = vpop.xlane.xlu0 %3077
    %v3079 = vsel %vm232, %v3037, 0.0
    %3080 = vadd.xlane.f32.xlu0 %v3079
    %v3081 = vpop.xlane.xlu0 %3080
    %v3082 = vsel %vm232, %v3039, 0.0
    %3083 = vadd.xlane.f32.xlu0 %v3082
    %v3084 = vpop.xlane.xlu0 %3083
    %v3085 = vsel %vm232, %v3041, 0.0
    %3086 = vadd.xlane.f32.xlu0 %v3085
    %v3087 = vpop.xlane.xlu0 %3086
    %v3088 = vsel %vm232, %v3043, 0.0
    %3089 = vadd.xlane.f32.xlu0 %v3088
    %v3090 = vpop.xlane.xlu0 %3089
    %v3091 = vsel %vm232, %v3045, 0.0
    %3092 = vadd.xlane.f32.xlu0 %v3091
    %v3093 = vpop.xlane.xlu0 %3092
    %v3094 = vrcp.pop %v3048
    %v3095 = vrcp.pop %v3051
    %v3096 = vrcp.pop %v3054
    %v3097 = vrcp.pop %v3057
    %v3098 = vrcp.pop %v3060
    %v3099 = vrcp.pop %v3063
    %v3100 = vrcp.pop %v3066
    %v3101 = vrcp.pop %v3069
    %v3102 = vrcp.pop %v3072
    %v3103 = vrcp.pop %v3075
    %v3104 = vrcp.pop %v3078
    %v3105 = vrcp.pop %v3081
    %v3106 = vrcp.pop %v3084
    %v3107 = vrcp.pop %v3087
    %v3108 = vrcp.pop %v3090
    %v3109 = vrcp.pop %v3093
    %v3110 = vmul.f32 %v3015, %v3094
    %v3111 = vmul.f32 %v3017, %v3095
    %v3112 = vmul.f32 %v3019, %v3096
    %v3113 = vmul.f32 %v3021, %v3097
    %v3114 = vmul.f32 %v3023, %v3098
    %v3115 = vmul.f32 %v3025, %v3099
    %v3116 = vmul.f32 %v3027, %v3100
    %v3117 = vmul.f32 %v3029, %v3101
    %v3118 = vmul.f32 %v3031, %v3102
    %v3119 = vmul.f32 %v3033, %v3103
    %v3120 = vmul.f32 %v3035, %v3104
    %v3121 = vmul.f32 %v3037, %v3105
    %v3122 = vmul.f32 %v3039, %v3106
    %v3123 = vmul.f32 %v3041, %v3107
    %v3124 = vmul.f32 %v3043, %v3108
    %v3125 = vmul.f32 %v3045, %v3109
    %v3126 = vpack.c.bf16 %v3111, %v3110
    %v3127 = vpack.c.bf16 %v3113, %v3112
    %v3128 = vpack.c.bf16 %v3115, %v3114
    %v3129 = vpack.c.bf16 %v3117, %v3116
    %v3130 = vpack.c.bf16 %v3119, %v3118
    %v3131 = vpack.c.bf16 %v3121, %v3120
    %v3132 = vpack.c.bf16 %v3123, %v3122
    %v3133 = vpack.c.bf16 %v3125, %v3124
    %v3135 = vsel %vm232, %v3126, 0
    %v3138 = vsel %vm232, %v3127, 0
    %v3141 = vsel %vm232, %v3128, 0
    %v3144 = vsel %vm232, %v3129, 0
    %3146 = vmatprep.subr.bf16.mxu0 0
    %3147 = vmatpush1.bf16.msra.mxu0 0
    %3148 = vmatprep.subr.bf16.mxu0 0
    %3149 = vmatpush1.bf16.msra.mxu0 0
    %3150 = vmatprep.subr.bf16.mxu0 0
    %3151 = vmatpush1.bf16.msra.mxu0 0
    %3152 = vmatprep.subr.bf16.mxu0 0
    %3153 = vmatpush1.bf16.msra.mxu0 0
    %3154 = vmatprep.subr.bf16.mxu0 0
    %3155 = vmatpush1.bf16.msra.mxu0 %v2767
    %3156 = vmatprep.subr.bf16.mxu0 0
    %3157 = vmatpush1.bf16.msra.mxu0 %v2766
    %3158 = vmatprep.subr.bf16.mxu0 0
    %3159 = vmatpush1.bf16.msra.mxu0 %v2765
    %3160 = vmatprep.subr.bf16.mxu0 0
    %3161 = vmatpush1.bf16.msra.mxu0 %v2764
    %3162 = vmatprep.subr.bf16.mxu0 0
    %3163 = vmatpush2.bf16.msra.mxu0 0
    %3164 = vmatprep.subr.bf16.mxu0 0
    %3165 = vmatpush2.bf16.msra.mxu0 0
    %3166 = vmatprep.subr.bf16.mxu0 0
    %3167 = vmatpush2.bf16.msra.mxu0 0
    %3168 = vmatprep.subr.bf16.mxu0 0
    %3169 = vmatpush2.bf16.msra.mxu0 0
    %3170 = vmatprep.subr.bf16.mxu0 0
    %3171 = vmatpush2.bf16.msra.mxu0 0
    %3172 = vmatprep.subr.bf16.mxu0 0
    %3173 = vmatpush2.bf16.msra.mxu0 0
    %3174 = vmatprep.subr.bf16.mxu0 0
    %3175 = vmatpush2.bf16.msra.mxu0 0
    %3176 = vmatprep.subr.bf16.mxu0 0
    %3177 = vmatpush2.bf16.msra.mxu0 0
    %3178 = vmatprep.mubr.bf16.mxu0 0
    %3179 = vmatmul.mubr.bf16.gmra.mxu0 %v3135
    %v3180 = vpop.f32.mrf.mxu0
    %v3181 = vadd.f32 0.0, %v3180
    %v3182 = vpop.f32.mrf.mxu0
    %v3183 = vpop.f32.mrf.mxu0
    %v3184 = vadd.f32 0.0, %v3183
    %v3185 = vpop.f32.mrf.mxu0
    %3186 = vmatprep.mubr.bf16.mxu0 0
    %3187 = vmatmul.mubr.bf16.gmra.mxu0 %v3138
    %v3188 = vpop.f32.mrf.mxu0
    %v3189 = vadd.f32 0.0, %v3188
    %v3190 = vpop.f32.mrf.mxu0
    %v3191 = vpop.f32.mrf.mxu0
    %v3192 = vadd.f32 0.0, %v3191
    %v3193 = vpop.f32.mrf.mxu0
    %3194 = vmatprep.mubr.bf16.mxu0 0
    %3195 = vmatmul.mubr.bf16.gmra.mxu0 %v3141
    %v3196 = vpop.f32.mrf.mxu0
    %v3197 = vadd.f32 0.0, %v3196
    %v3198 = vpop.f32.mrf.mxu0
    %v3199 = vpop.f32.mrf.mxu0
    %v3200 = vadd.f32 0.0, %v3199
    %v3201 = vpop.f32.mrf.mxu0
    %3202 = vmatprep.mubr.bf16.mxu0 0
    %3203 = vmatmul.mubr.bf16.gmra.mxu0 %v3144
    %v3204 = vpop.f32.mrf.mxu0
    %v3205 = vadd.f32 0.0, %v3204
    %v3206 = vpop.f32.mrf.mxu0
    %v3207 = vpop.f32.mrf.mxu0
    %v3208 = vadd.f32 0.0, %v3207
    %v3209 = vpop.f32.mrf.mxu0
    %3210 = vdwg.mxu0
    %v3212 = vsel %vm232, %v3130, 0
    %v3215 = vsel %vm232, %v3131, 0
    %v3218 = vsel %vm232, %v3132, 0
    %v3221 = vsel %vm232, %v3133, 0
    %3223 = vmatprep.subr.bf16.mxu0 0
    %3224 = vmatpush1.bf16.msra.mxu0 0
    %3225 = vmatprep.subr.bf16.mxu0 0
    %3226 = vmatpush1.bf16.msra.mxu0 0
    %3227 = vmatprep.subr.bf16.mxu0 0
    %3228 = vmatpush1.bf16.msra.mxu0 0
    %3229 = vmatprep.subr.bf16.mxu0 0
    %3230 = vmatpush1.bf16.msra.mxu0 0
    %3231 = vmatprep.subr.bf16.mxu0 0
    %3232 = vmatpush1.bf16.msra.mxu0 %v2771
    %3233 = vmatprep.subr.bf16.mxu0 0
    %3234 = vmatpush1.bf16.msra.mxu0 %v2770
    %3235 = vmatprep.subr.bf16.mxu0 0
    %3236 = vmatpush1.bf16.msra.mxu0 %v2769
    %3237 = vmatprep.subr.bf16.mxu0 0
    %3238 = vmatpush1.bf16.msra.mxu0 %v2768
    %3239 = vmatprep.subr.bf16.mxu0 0
    %3240 = vmatpush2.bf16.msra.mxu0 0
    %3241 = vmatprep.subr.bf16.mxu0 0
    %3242 = vmatpush2.bf16.msra.mxu0 0
    %3243 = vmatprep.subr.bf16.mxu0 0
    %3244 = vmatpush2.bf16.msra.mxu0 0
    %3245 = vmatprep.subr.bf16.mxu0 0
    %3246 = vmatpush2.bf16.msra.mxu0 0
    %3247 = vmatprep.subr.bf16.mxu0 0
    %3248 = vmatpush2.bf16.msra.mxu0 0
    %3249 = vmatprep.subr.bf16.mxu0 0
    %3250 = vmatpush2.bf16.msra.mxu0 0
    %3251 = vmatprep.subr.bf16.mxu0 0
    %3252 = vmatpush2.bf16.msra.mxu0 0
    %3253 = vmatprep.subr.bf16.mxu0 0
    %3254 = vmatpush2.bf16.msra.mxu0 0
    %3255 = vmatprep.mubr.bf16.mxu0 0
    %3256 = vmatmul.mubr.bf16.gmra.mxu0 %v3212
    %v3257 = vpop.f32.mrf.mxu0
    %v3258 = vadd.f32 0.0, %v3257
    %v3259 = vpop.f32.mrf.mxu0
    %v3260 = vpop.f32.mrf.mxu0
    %v3261 = vadd.f32 0.0, %v3260
    %v3262 = vpop.f32.mrf.mxu0
    %3263 = vmatprep.mubr.bf16.mxu0 0
    %3264 = vmatmul.mubr.bf16.gmra.mxu0 %v3215
    %v3265 = vpop.f32.mrf.mxu0
    %v3266 = vadd.f32 0.0, %v3265
    %v3267 = vpop.f32.mrf.mxu0
    %v3268 = vpop.f32.mrf.mxu0
    %v3269 = vadd.f32 0.0, %v3268
    %v3270 = vpop.f32.mrf.mxu0
    %3271 = vmatprep.mubr.bf16.mxu0 0
    %3272 = vmatmul.mubr.bf16.gmra.mxu0 %v3218
    %v3273 = vpop.f32.mrf.mxu0
    %v3274 = vadd.f32 0.0, %v3273
    %v3275 = vpop.f32.mrf.mxu0
    %v3276 = vpop.f32.mrf.mxu0
    %v3277 = vadd.f32 0.0, %v3276
    %v3278 = vpop.f32.mrf.mxu0
    %3279 = vmatprep.mubr.bf16.mxu0 0
    %3280 = vmatmul.mubr.bf16.gmra.mxu0 %v3221
    %v3281 = vpop.f32.mrf.mxu0
    %v3282 = vadd.f32 0.0, %v3281
    %v3283 = vpop.f32.mrf.mxu0
    %v3284 = vpop.f32.mrf.mxu0
    %v3285 = vadd.f32 0.0, %v3284
    %v3286 = vpop.f32.mrf.mxu0
    %3287 = vdwg.mxu0
    %v3288 = vpack.c.bf16 %v3184, %v3181
    %v3289 = vpack.c.bf16 %v3192, %v3189
    %v3290 = vpack.c.bf16 %v3200, %v3197
    %v3291 = vpack.c.bf16 %v3208, %v3205
    %v3292 = vpack.c.bf16 %v3261, %v3258
    %v3293 = vpack.c.bf16 %v3269, %v3266
    %v3294 = vpack.c.bf16 %v3277, %v3274
    %v3295 = vpack.c.bf16 %v3285, %v3282
    %s3296 = scalar_lea.vmem %s5, 16
    %v3297 = vld [vmem:[%s3296] sm:$0xf]
    %v3298 = vld [vmem:[%s3296 + $0x4] sm:$0xf]
    %v3301 = vunpack.c.l.b16 %v3297
    %v3302 = vunpack.c.l.b16 %v3298
    %v3303 = vpack.c.b16 %v3302, %v3301
    %v3306 = vsel %vm636, %v3288, 0
    %v3309 = vsel %vm636, %v3289, 0
    %v3312 = vsel %vm636, %v3290, 0
    %v3315 = vsel %vm636, %v3291, 0
    %v3318 = vsel %vm636, %v3292, 0
    %v3321 = vsel %vm636, %v3293, 0
    %v3324 = vsel %vm636, %v3294, 0
    %v3327 = vsel %vm636, %v3295, 0
    %3329 = vmatprep.subr.bf16.mxu0 0
    %3330 = vmatpush1.bf16.msra.mxu0 0
    %3331 = vmatprep.subr.bf16.mxu0 0
    %3332 = vmatpush1.bf16.msra.mxu0 0
    %3333 = vmatprep.subr.bf16.mxu0 0
    %3334 = vmatpush1.bf16.msra.mxu0 0
    %3335 = vmatprep.subr.bf16.mxu0 0
    %3336 = vmatpush1.bf16.msra.mxu0 0
    %3337 = vmatprep.subr.bf16.mxu0 0
    %3338 = vmatpush1.bf16.msra.mxu0 0
    %3339 = vmatprep.subr.bf16.mxu0 0
    %3340 = vmatpush1.bf16.msra.mxu0 0
    %3341 = vmatprep.subr.bf16.mxu0 0
    %3342 = vmatpush1.bf16.msra.mxu0 0
    %3343 = vmatprep.subr.bf16.mxu0 0
    %3344 = vmatpush1.bf16.msra.mxu0 %v3303
    %3345 = vmatprep.subr.bf16.mxu0 0
    %3346 = vmatpush2.bf16.msra.mxu0 0
    %3347 = vmatprep.subr.bf16.mxu0 0
    %3348 = vmatpush2.bf16.msra.mxu0 0
    %3349 = vmatprep.subr.bf16.mxu0 0
    %3350 = vmatpush2.bf16.msra.mxu0 0
    %3351 = vmatprep.subr.bf16.mxu0 0
    %3352 = vmatpush2.bf16.msra.mxu0 0
    %3353 = vmatprep.subr.bf16.mxu0 0
    %3354 = vmatpush2.bf16.msra.mxu0 0
    %3355 = vmatprep.subr.bf16.mxu0 0
    %3356 = vmatpush2.bf16.msra.mxu0 0
    %3357 = vmatprep.subr.bf16.mxu0 0
    %3358 = vmatpush2.bf16.msra.mxu0 0
    %3359 = vmatprep.subr.bf16.mxu0 0
    %3360 = vmatpush2.bf16.msra.mxu0 0
    %3361 = vmatprep.mubr.bf16.mxu0 0
    %3362 = vmatmul.mubr.bf16.gmra.mxu0 %v3306
    %v3363 = vpop.f32.mrf.mxu0
    %v3364 = vadd.f32 0.0, %v3363
    %v3365 = vpop.f32.mrf.mxu0
    %v3366 = vpop.f32.mrf.mxu0
    %v3367 = vadd.f32 0.0, %v3366
    %v3368 = vpop.f32.mrf.mxu0
    %3369 = vmatprep.mubr.bf16.mxu0 0
    %3370 = vmatmul.mubr.bf16.gmra.mxu0 %v3309
    %v3371 = vpop.f32.mrf.mxu0
    %v3372 = vadd.f32 0.0, %v3371
    %v3373 = vpop.f32.mrf.mxu0
    %v3374 = vpop.f32.mrf.mxu0
    %v3375 = vadd.f32 0.0, %v3374
    %v3376 = vpop.f32.mrf.mxu0
    %3377 = vmatprep.mubr.bf16.mxu0 0
    %3378 = vmatmul.mubr.bf16.gmra.mxu0 %v3312
    %v3379 = vpop.f32.mrf.mxu0
    %v3380 = vadd.f32 0.0, %v3379
    %v3381 = vpop.f32.mrf.mxu0
    %v3382 = vpop.f32.mrf.mxu0
    %v3383 = vadd.f32 0.0, %v3382
    %v3384 = vpop.f32.mrf.mxu0
    %3385 = vmatprep.mubr.bf16.mxu0 0
    %3386 = vmatmul.mubr.bf16.gmra.mxu0 %v3315
    %v3387 = vpop.f32.mrf.mxu0
    %v3388 = vadd.f32 0.0, %v3387
    %v3389 = vpop.f32.mrf.mxu0
    %v3390 = vpop.f32.mrf.mxu0
    %v3391 = vadd.f32 0.0, %v3390
    %v3392 = vpop.f32.mrf.mxu0
    %3393 = vmatprep.mubr.bf16.mxu0 0
    %3394 = vmatmul.mubr.bf16.gmra.mxu0 %v3318
    %v3395 = vpop.f32.mrf.mxu0
    %v3396 = vadd.f32 0.0, %v3395
    %v3397 = vpop.f32.mrf.mxu0
    %v3398 = vpop.f32.mrf.mxu0
    %v3399 = vadd.f32 0.0, %v3398
    %v3400 = vpop.f32.mrf.mxu0
    %3401 = vmatprep.mubr.bf16.mxu0 0
    %3402 = vmatmul.mubr.bf16.gmra.mxu0 %v3321
    %v3403 = vpop.f32.mrf.mxu0
    %v3404 = vadd.f32 0.0, %v3403
    %v3405 = vpop.f32.mrf.mxu0
    %v3406 = vpop.f32.mrf.mxu0
    %v3407 = vadd.f32 0.0, %v3406
    %v3408 = vpop.f32.mrf.mxu0
    %3409 = vmatprep.mubr.bf16.mxu0 0
    %3410 = vmatmul.mubr.bf16.gmra.mxu0 %v3324
    %v3411 = vpop.f32.mrf.mxu0
    %v3412 = vadd.f32 0.0, %v3411
    %v3413 = vpop.f32.mrf.mxu0
    %v3414 = vpop.f32.mrf.mxu0
    %v3415 = vadd.f32 0.0, %v3414
    %v3416 = vpop.f32.mrf.mxu0
    %3417 = vmatprep.mubr.bf16.mxu0 0
    %3418 = vmatmul.mubr.bf16.gmra.mxu0 %v3327
    %v3419 = vpop.f32.mrf.mxu0
    %v3420 = vadd.f32 0.0, %v3419
    %v3421 = vpop.f32.mrf.mxu0
    %v3422 = vpop.f32.mrf.mxu0
    %v3423 = vadd.f32 0.0, %v3422
    %v3424 = vpop.f32.mrf.mxu0
    %3425 = vdwg.mxu0
    %v3426 = vadd.f32 %v2296, %v3364
    %v3427 = vadd.f32 %v2299, %v3367
    %v3428 = vadd.f32 %v2304, %v3372
    %v3429 = vadd.f32 %v2307, %v3375
    %v3430 = vadd.f32 %v2312, %v3380
    %v3431 = vadd.f32 %v2315, %v3383
    %v3432 = vadd.f32 %v2320, %v3388
    %v3433 = vadd.f32 %v2323, %v3391
    %v3434 = vadd.f32 %v2328, %v3396
    %v3435 = vadd.f32 %v2331, %v3399
    %v3436 = vadd.f32 %v2336, %v3404
    %v3437 = vadd.f32 %v2339, %v3407
    %v3438 = vadd.f32 %v2344, %v3412
    %v3439 = vadd.f32 %v2347, %v3415
    %v3440 = vadd.f32 %v2352, %v3420
    %v3441 = vadd.f32 %v2355, %v3423
    %s3442 = scalar_lea.vmem %s2, 96
    %v3443 = vld [vmem:[%s3442] sm:$0xf]
    %v3444 = vld [vmem:[%s3442 + $0x4] sm:$0xf]
    %v3445 = vld [vmem:[%s3442 + $0x8] sm:$0xf]
    %v3446 = vld [vmem:[%s3442 + $0xc] sm:$0xf]
    %v3447 = vld [vmem:[%s3442 + $0x10] sm:$0xf]
    %v3448 = vld [vmem:[%s3442 + $0x14] sm:$0xf]
    %v3449 = vld [vmem:[%s3442 + $0x18] sm:$0xf]
    %v3450 = vld [vmem:[%s3442 + $0x1c] sm:$0xf]
    %v3459 = vunpack.c.l.b16 %v3443
    %v3460 = vunpack.c.l.b16 %v3444
    %v3461 = vunpack.c.l.b16 %v3445
    %v3462 = vunpack.c.l.b16 %v3446
    %v3463 = vunpack.c.l.b16 %v3447
    %v3464 = vunpack.c.l.b16 %v3448
    %v3465 = vunpack.c.l.b16 %v3449
    %v3466 = vunpack.c.l.b16 %v3450
    %v3467 = vpack.c.b16 %v3460, %v3459
    %v3468 = vpack.c.b16 %v3462, %v3461
    %v3469 = vpack.c.b16 %v3464, %v3463
    %v3470 = vpack.c.b16 %v3466, %v3465
    %3475 = vmatprep.subr.bf16.mxu0 0
    %3476 = vmatpush1.bf16.msra.mxu0 0
    %3477 = vmatprep.subr.bf16.mxu0 0
    %3478 = vmatpush1.bf16.msra.mxu0 0
    %3479 = vmatprep.subr.bf16.mxu0 0
    %3480 = vmatpush1.bf16.msra.mxu0 0
    %3481 = vmatprep.subr.bf16.mxu0 0
    %3482 = vmatpush1.bf16.msra.mxu0 0
    %3483 = vmatprep.subr.bf16.mxu0 0
    %3484 = vmatpush1.bf16.msra.mxu0 %v3470
    %3485 = vmatprep.subr.bf16.mxu0 0
    %3486 = vmatpush1.bf16.msra.mxu0 %v3469
    %3487 = vmatprep.subr.bf16.mxu0 0
    %3488 = vmatpush1.bf16.msra.mxu0 %v3468
    %3489 = vmatprep.subr.bf16.mxu0 0
    %3490 = vmatpush1.bf16.msra.mxu0 %v3467
    %3491 = vmatprep.subr.bf16.mxu0 0
    %3492 = vmatpush2.bf16.msra.mxu0 0
    %3493 = vmatprep.subr.bf16.mxu0 0
    %3494 = vmatpush2.bf16.msra.mxu0 0
    %3495 = vmatprep.subr.bf16.mxu0 0
    %3496 = vmatpush2.bf16.msra.mxu0 0
    %3497 = vmatprep.subr.bf16.mxu0 0
    %3498 = vmatpush2.bf16.msra.mxu0 0
    %3499 = vmatprep.subr.bf16.mxu0 0
    %3500 = vmatpush2.bf16.msra.mxu0 0
    %3501 = vmatprep.subr.bf16.mxu0 0
    %3502 = vmatpush2.bf16.msra.mxu0 0
    %3503 = vmatprep.subr.bf16.mxu0 0
    %3504 = vmatpush2.bf16.msra.mxu0 0
    %3505 = vmatprep.subr.bf16.mxu0 0
    %3506 = vmatpush2.bf16.msra.mxu0 0
    %3507 = vmatprep.mubr.bf16.mxu0 0
    %3508 = vmatmul.mubr.bf16.gmra.mxu0 %v234
    %v3509 = vpop.f32.mrf.mxu0
    %v3510 = vadd.f32 0.0, %v3509
    %v3511 = vpop.f32.mrf.mxu0
    %v3512 = vpop.f32.mrf.mxu0
    %v3513 = vadd.f32 0.0, %v3512
    %v3514 = vpop.f32.mrf.mxu0
    %3515 = vmatprep.mubr.bf16.mxu0 0
    %3516 = vmatmul.mubr.bf16.gmra.mxu0 %v237
    %v3517 = vpop.f32.mrf.mxu0
    %v3518 = vadd.f32 0.0, %v3517
    %v3519 = vpop.f32.mrf.mxu0
    %v3520 = vpop.f32.mrf.mxu0
    %v3521 = vadd.f32 0.0, %v3520
    %v3522 = vpop.f32.mrf.mxu0
    %3523 = vmatprep.mubr.bf16.mxu0 0
    %3524 = vmatmul.mubr.bf16.gmra.mxu0 %v240
    %v3525 = vpop.f32.mrf.mxu0
    %v3526 = vadd.f32 0.0, %v3525
    %v3527 = vpop.f32.mrf.mxu0
    %v3528 = vpop.f32.mrf.mxu0
    %v3529 = vadd.f32 0.0, %v3528
    %v3530 = vpop.f32.mrf.mxu0
    %3531 = vmatprep.mubr.bf16.mxu0 0
    %3532 = vmatmul.mubr.bf16.gmra.mxu0 %v243
    %v3533 = vpop.f32.mrf.mxu0
    %v3534 = vadd.f32 0.0, %v3533
    %v3535 = vpop.f32.mrf.mxu0
    %v3536 = vpop.f32.mrf.mxu0
    %v3537 = vadd.f32 0.0, %v3536
    %v3538 = vpop.f32.mrf.mxu0
    %3539 = vmatprep.mubr.bf16.mxu0 0
    %3540 = vmatmul.mubr.bf16.gmra.mxu0 %v246
    %v3541 = vpop.f32.mrf.mxu0
    %v3542 = vadd.f32 0.0, %v3541
    %v3543 = vpop.f32.mrf.mxu0
    %v3544 = vpop.f32.mrf.mxu0
    %v3545 = vadd.f32 0.0, %v3544
    %v3546 = vpop.f32.mrf.mxu0
    %3547 = vmatprep.mubr.bf16.mxu0 0
    %3548 = vmatmul.mubr.bf16.gmra.mxu0 %v249
    %v3549 = vpop.f32.mrf.mxu0
    %v3550 = vadd.f32 0.0, %v3549
    %v3551 = vpop.f32.mrf.mxu0
    %v3552 = vpop.f32.mrf.mxu0
    %v3553 = vadd.f32 0.0, %v3552
    %v3554 = vpop.f32.mrf.mxu0
    %3555 = vmatprep.mubr.bf16.mxu0 0
    %3556 = vmatmul.mubr.bf16.gmra.mxu0 %v252
    %v3557 = vpop.f32.mrf.mxu0
    %v3558 = vadd.f32 0.0, %v3557
    %v3559 = vpop.f32.mrf.mxu0
    %v3560 = vpop.f32.mrf.mxu0
    %v3561 = vadd.f32 0.0, %v3560
    %v3562 = vpop.f32.mrf.mxu0
    %3563 = vmatprep.mubr.bf16.mxu0 0
    %3564 = vmatmul.mubr.bf16.gmra.mxu0 %v255
    %v3565 = vpop.f32.mrf.mxu0
    %v3566 = vadd.f32 0.0, %v3565
    %v3567 = vpop.f32.mrf.mxu0
    %v3568 = vpop.f32.mrf.mxu0
    %v3569 = vadd.f32 0.0, %v3568
    %v3570 = vpop.f32.mrf.mxu0
    %3571 = vdwg.mxu0
    %s3572 = scalar_lea.vmem %s3, 96
    %v3573 = vld [vmem:[%s3572] sm:$0xf]
    %v3574 = vld [vmem:[%s3572 + $0x4] sm:$0xf]
    %v3575 = vld [vmem:[%s3572 + $0x8] sm:$0xf]
    %v3576 = vld [vmem:[%s3572 + $0xc] sm:$0xf]
    %v3577 = vld [vmem:[%s3572 + $0x10] sm:$0xf]
    %v3578 = vld [vmem:[%s3572 + $0x14] sm:$0xf]
    %v3579 = vld [vmem:[%s3572 + $0x18] sm:$0xf]
    %v3580 = vld [vmem:[%s3572 + $0x1c] sm:$0xf]
    %v3589 = vunpack.c.l.b16 %v3573
    %v3590 = vunpack.c.l.b16 %v3574
    %v3591 = vunpack.c.l.b16 %v3575
    %v3592 = vunpack.c.l.b16 %v3576
    %v3593 = vunpack.c.l.b16 %v3577
    %v3594 = vunpack.c.l.b16 %v3578
    %v3595 = vunpack.c.l.b16 %v3579
    %v3596 = vunpack.c.l.b16 %v3580
    %v3597 = vpack.c.b16 %v3590, %v3589
    %v3598 = vpack.c.b16 %v3592, %v3591
    %v3599 = vpack.c.b16 %v3594, %v3593
    %v3600 = vpack.c.b16 %v3596, %v3595
    %3605 = vmatprep.subr.bf16.mxu0 0
    %3606 = vmatpush1.bf16.msra.mxu0 0
    %3607 = vmatprep.subr.bf16.mxu0 0
    %3608 = vmatpush1.bf16.msra.mxu0 0
    %3609 = vmatprep.subr.bf16.mxu0 0
    %3610 = vmatpush1.bf16.msra.mxu0 0
    %3611 = vmatprep.subr.bf16.mxu0 0
    %3612 = vmatpush1.bf16.msra.mxu0 0
    %3613 = vmatprep.subr.bf16.mxu0 0
    %3614 = vmatpush1.bf16.msra.mxu0 %v3600
    %3615 = vmatprep.subr.bf16.mxu0 0
    %3616 = vmatpush1.bf16.msra.mxu0 %v3599
    %3617 = vmatprep.subr.bf16.mxu0 0
    %3618 = vmatpush1.bf16.msra.mxu0 %v3598
    %3619 = vmatprep.subr.bf16.mxu0 0
    %3620 = vmatpush1.bf16.msra.mxu0 %v3597
    %3621 = vmatprep.subr.bf16.mxu0 0
    %3622 = vmatpush2.bf16.msra.mxu0 0
    %3623 = vmatprep.subr.bf16.mxu0 0
    %3624 = vmatpush2.bf16.msra.mxu0 0
    %3625 = vmatprep.subr.bf16.mxu0 0
    %3626 = vmatpush2.bf16.msra.mxu0 0
    %3627 = vmatprep.subr.bf16.mxu0 0
    %3628 = vmatpush2.bf16.msra.mxu0 0
    %3629 = vmatprep.subr.bf16.mxu0 0
    %3630 = vmatpush2.bf16.msra.mxu0 0
    %3631 = vmatprep.subr.bf16.mxu0 0
    %3632 = vmatpush2.bf16.msra.mxu0 0
    %3633 = vmatprep.subr.bf16.mxu0 0
    %3634 = vmatpush2.bf16.msra.mxu0 0
    %3635 = vmatprep.subr.bf16.mxu0 0
    %3636 = vmatpush2.bf16.msra.mxu0 0
    %3637 = vmatprep.mubr.bf16.mxu0 0
    %3638 = vmatmul.mubr.bf16.gmra.mxu0 %v234
    %v3639 = vpop.f32.mrf.mxu0
    %v3640 = vadd.f32 0.0, %v3639
    %v3641 = vpop.f32.mrf.mxu0
    %v3642 = vpop.f32.mrf.mxu0
    %v3643 = vadd.f32 0.0, %v3642
    %v3644 = vpop.f32.mrf.mxu0
    %3645 = vmatprep.mubr.bf16.mxu0 0
    %3646 = vmatmul.mubr.bf16.gmra.mxu0 %v237
    %v3647 = vpop.f32.mrf.mxu0
    %v3648 = vadd.f32 0.0, %v3647
    %v3649 = vpop.f32.mrf.mxu0
    %v3650 = vpop.f32.mrf.mxu0
    %v3651 = vadd.f32 0.0, %v3650
    %v3652 = vpop.f32.mrf.mxu0
    %3653 = vmatprep.mubr.bf16.mxu0 0
    %3654 = vmatmul.mubr.bf16.gmra.mxu0 %v240
    %v3655 = vpop.f32.mrf.mxu0
    %v3656 = vadd.f32 0.0, %v3655
    %v3657 = vpop.f32.mrf.mxu0
    %v3658 = vpop.f32.mrf.mxu0
    %v3659 = vadd.f32 0.0, %v3658
    %v3660 = vpop.f32.mrf.mxu0
    %3661 = vmatprep.mubr.bf16.mxu0 0
    %3662 = vmatmul.mubr.bf16.gmra.mxu0 %v243
    %v3663 = vpop.f32.mrf.mxu0
    %v3664 = vadd.f32 0.0, %v3663
    %v3665 = vpop.f32.mrf.mxu0
    %v3666 = vpop.f32.mrf.mxu0
    %v3667 = vadd.f32 0.0, %v3666
    %v3668 = vpop.f32.mrf.mxu0
    %3669 = vmatprep.mubr.bf16.mxu0 0
    %3670 = vmatmul.mubr.bf16.gmra.mxu0 %v246
    %v3671 = vpop.f32.mrf.mxu0
    %v3672 = vadd.f32 0.0, %v3671
    %v3673 = vpop.f32.mrf.mxu0
    %v3674 = vpop.f32.mrf.mxu0
    %v3675 = vadd.f32 0.0, %v3674
    %v3676 = vpop.f32.mrf.mxu0
    %3677 = vmatprep.mubr.bf16.mxu0 0
    %3678 = vmatmul.mubr.bf16.gmra.mxu0 %v249
    %v3679 = vpop.f32.mrf.mxu0
    %v3680 = vadd.f32 0.0, %v3679
    %v3681 = vpop.f32.mrf.mxu0
    %v3682 = vpop.f32.mrf.mxu0
    %v3683 = vadd.f32 0.0, %v3682
    %v3684 = vpop.f32.mrf.mxu0
    %3685 = vmatprep.mubr.bf16.mxu0 0
    %3686 = vmatmul.mubr.bf16.gmra.mxu0 %v252
    %v3687 = vpop.f32.mrf.mxu0
    %v3688 = vadd.f32 0.0, %v3687
    %v3689 = vpop.f32.mrf.mxu0
    %v3690 = vpop.f32.mrf.mxu0
    %v3691 = vadd.f32 0.0, %v3690
    %v3692 = vpop.f32.mrf.mxu0
    %3693 = vmatprep.mubr.bf16.mxu0 0
    %3694 = vmatmul.mubr.bf16.gmra.mxu0 %v255
    %v3695 = vpop.f32.mrf.mxu0
    %v3696 = vadd.f32 0.0, %v3695
    %v3697 = vpop.f32.mrf.mxu0
    %v3698 = vpop.f32.mrf.mxu0
    %v3699 = vadd.f32 0.0, %v3698
    %v3700 = vpop.f32.mrf.mxu0
    %3701 = vdwg.mxu0
    %s3702 = scalar_lea.vmem %s4, 96
    %v3703 = vld [vmem:[%s3702] sm:$0xf]
    %v3704 = vld [vmem:[%s3702 + $0x4] sm:$0xf]
    %v3705 = vld [vmem:[%s3702 + $0x8] sm:$0xf]
    %v3706 = vld [vmem:[%s3702 + $0xc] sm:$0xf]
    %v3707 = vld [vmem:[%s3702 + $0x10] sm:$0xf]
    %v3708 = vld [vmem:[%s3702 + $0x14] sm:$0xf]
    %v3709 = vld [vmem:[%s3702 + $0x18] sm:$0xf]
    %v3710 = vld [vmem:[%s3702 + $0x1c] sm:$0xf]
    %v3719 = vunpack.c.l.b16 %v3703
    %v3720 = vunpack.c.l.b16 %v3704
    %v3721 = vunpack.c.l.b16 %v3705
    %v3722 = vunpack.c.l.b16 %v3706
    %v3723 = vunpack.c.l.b16 %v3707
    %v3724 = vunpack.c.l.b16 %v3708
    %v3725 = vunpack.c.l.b16 %v3709
    %v3726 = vunpack.c.l.b16 %v3710
    %v3727 = vpack.c.b16 %v3720, %v3719
    %v3728 = vpack.c.b16 %v3722, %v3721
    %v3729 = vpack.c.b16 %v3724, %v3723
    %v3730 = vpack.c.b16 %v3726, %v3725
    %3735 = vmatprep.subr.bf16.mxu0 0
    %3736 = vmatpush1.bf16.msra.mxu0 0
    %3737 = vmatprep.subr.bf16.mxu0 0
    %3738 = vmatpush1.bf16.msra.mxu0 0
    %3739 = vmatprep.subr.bf16.mxu0 0
    %3740 = vmatpush1.bf16.msra.mxu0 0
    %3741 = vmatprep.subr.bf16.mxu0 0
    %3742 = vmatpush1.bf16.msra.mxu0 0
    %3743 = vmatprep.subr.bf16.mxu0 0
    %3744 = vmatpush1.bf16.msra.mxu0 %v3730
    %3745 = vmatprep.subr.bf16.mxu0 0
    %3746 = vmatpush1.bf16.msra.mxu0 %v3729
    %3747 = vmatprep.subr.bf16.mxu0 0
    %3748 = vmatpush1.bf16.msra.mxu0 %v3728
    %3749 = vmatprep.subr.bf16.mxu0 0
    %3750 = vmatpush1.bf16.msra.mxu0 %v3727
    %3751 = vmatprep.subr.bf16.mxu0 0
    %3752 = vmatpush2.bf16.msra.mxu0 0
    %3753 = vmatprep.subr.bf16.mxu0 0
    %3754 = vmatpush2.bf16.msra.mxu0 0
    %3755 = vmatprep.subr.bf16.mxu0 0
    %3756 = vmatpush2.bf16.msra.mxu0 0
    %3757 = vmatprep.subr.bf16.mxu0 0
    %3758 = vmatpush2.bf16.msra.mxu0 0
    %3759 = vmatprep.subr.bf16.mxu0 0
    %3760 = vmatpush2.bf16.msra.mxu0 0
    %3761 = vmatprep.subr.bf16.mxu0 0
    %3762 = vmatpush2.bf16.msra.mxu0 0
    %3763 = vmatprep.subr.bf16.mxu0 0
    %3764 = vmatpush2.bf16.msra.mxu0 0
    %3765 = vmatprep.subr.bf16.mxu0 0
    %3766 = vmatpush2.bf16.msra.mxu0 0
    %3767 = vmatprep.mubr.bf16.mxu0 0
    %3768 = vmatmul.mubr.bf16.gmra.mxu0 %v234
    %v3769 = vpop.f32.mrf.mxu0
    %v3770 = vadd.f32 0.0, %v3769
    %v3771 = vpop.f32.mrf.mxu0
    %v3772 = vpop.f32.mrf.mxu0
    %v3773 = vadd.f32 0.0, %v3772
    %v3774 = vpop.f32.mrf.mxu0
    %3775 = vmatprep.mubr.bf16.mxu0 0
    %3776 = vmatmul.mubr.bf16.gmra.mxu0 %v237
    %v3777 = vpop.f32.mrf.mxu0
    %v3778 = vadd.f32 0.0, %v3777
    %v3779 = vpop.f32.mrf.mxu0
    %v3780 = vpop.f32.mrf.mxu0
    %v3781 = vadd.f32 0.0, %v3780
    %v3782 = vpop.f32.mrf.mxu0
    %3783 = vmatprep.mubr.bf16.mxu0 0
    %3784 = vmatmul.mubr.bf16.gmra.mxu0 %v240
    %v3785 = vpop.f32.mrf.mxu0
    %v3786 = vadd.f32 0.0, %v3785
    %v3787 = vpop.f32.mrf.mxu0
    %v3788 = vpop.f32.mrf.mxu0
    %v3789 = vadd.f32 0.0, %v3788
    %v3790 = vpop.f32.mrf.mxu0
    %3791 = vmatprep.mubr.bf16.mxu0 0
    %3792 = vmatmul.mubr.bf16.gmra.mxu0 %v243
    %v3793 = vpop.f32.mrf.mxu0
    %v3794 = vadd.f32 0.0, %v3793
    %v3795 = vpop.f32.mrf.mxu0
    %v3796 = vpop.f32.mrf.mxu0
    %v3797 = vadd.f32 0.0, %v3796
    %v3798 = vpop.f32.mrf.mxu0
    %3799 = vmatprep.mubr.bf16.mxu0 0
    %3800 = vmatmul.mubr.bf16.gmra.mxu0 %v246
    %v3801 = vpop.f32.mrf.mxu0
    %v3802 = vadd.f32 0.0, %v3801
    %v3803 = vpop.f32.mrf.mxu0
    %v3804 = vpop.f32.mrf.mxu0
    %v3805 = vadd.f32 0.0, %v3804
    %v3806 = vpop.f32.mrf.mxu0
    %3807 = vmatprep.mubr.bf16.mxu0 0
    %3808 = vmatmul.mubr.bf16.gmra.mxu0 %v249
    %v3809 = vpop.f32.mrf.mxu0
    %v3810 = vadd.f32 0.0, %v3809
    %v3811 = vpop.f32.mrf.mxu0
    %v3812 = vpop.f32.mrf.mxu0
    %v3813 = vadd.f32 0.0, %v3812
    %v3814 = vpop.f32.mrf.mxu0
    %3815 = vmatprep.mubr.bf16.mxu0 0
    %3816 = vmatmul.mubr.bf16.gmra.mxu0 %v252
    %v3817 = vpop.f32.mrf.mxu0
    %v3818 = vadd.f32 0.0, %v3817
    %v3819 = vpop.f32.mrf.mxu0
    %v3820 = vpop.f32.mrf.mxu0
    %v3821 = vadd.f32 0.0, %v3820
    %v3822 = vpop.f32.mrf.mxu0
    %3823 = vmatprep.mubr.bf16.mxu0 0
    %3824 = vmatmul.mubr.bf16.gmra.mxu0 %v255
    %v3825 = vpop.f32.mrf.mxu0
    %v3826 = vadd.f32 0.0, %v3825
    %v3827 = vpop.f32.mrf.mxu0
    %v3828 = vpop.f32.mrf.mxu0
    %v3829 = vadd.f32 0.0, %v3828
    %v3830 = vpop.f32.mrf.mxu0
    %3831 = vdwg.mxu0
    %v3832 = vpack.c.bf16 %v3513, %v3510
    %v3833 = vpack.c.bf16 %v3521, %v3518
    %v3834 = vpack.c.bf16 %v3529, %v3526
    %v3835 = vpack.c.bf16 %v3537, %v3534
    %v3836 = vpack.c.bf16 %v3545, %v3542
    %v3837 = vpack.c.bf16 %v3553, %v3550
    %v3838 = vpack.c.bf16 %v3561, %v3558
    %v3839 = vpack.c.bf16 %v3569, %v3566
    %v3840 = vpack.c.bf16 %v3643, %v3640
    %v3841 = vpack.c.bf16 %v3651, %v3648
    %v3842 = vpack.c.bf16 %v3659, %v3656
    %v3843 = vpack.c.bf16 %v3667, %v3664
    %v3844 = vpack.c.bf16 %v3675, %v3672
    %v3845 = vpack.c.bf16 %v3683, %v3680
    %v3846 = vpack.c.bf16 %v3691, %v3688
    %v3847 = vpack.c.bf16 %v3699, %v3696
    %v3848 = vpack.c.bf16 %v3773, %v3770
    %v3849 = vpack.c.bf16 %v3781, %v3778
    %v3850 = vpack.c.bf16 %v3789, %v3786
    %v3851 = vpack.c.bf16 %v3797, %v3794
    %v3852 = vpack.c.bf16 %v3805, %v3802
    %v3853 = vpack.c.bf16 %v3813, %v3810
    %v3854 = vpack.c.bf16 %v3821, %v3818
    %v3855 = vpack.c.bf16 %v3829, %v3826
    %v3857 = vsel %vm636, %v3832, 0
    %v3860 = vsel %vm636, %v3833, 0
    %v3863 = vsel %vm636, %v3834, 0
    %v3866 = vsel %vm636, %v3835, 0
    %v3869 = vsel %vm636, %v3840, 0
    %v3872 = vsel %vm636, %v3841, 0
    %v3875 = vsel %vm636, %v3842, 0
    %v3878 = vsel %vm636, %v3843, 0
    %3880 = vmatprep.subr.bf16.mxu0 0
    %3881 = vmatpush1.bf16.xpose.msra.mxu0 0
    %3882 = vmatprep.subr.bf16.mxu0 0
    %3883 = vmatpush1.bf16.xpose.msra.mxu0 0
    %3884 = vmatprep.subr.bf16.mxu0 0
    %3885 = vmatpush1.bf16.xpose.msra.mxu0 0
    %3886 = vmatprep.subr.bf16.mxu0 0
    %3887 = vmatpush1.bf16.xpose.msra.mxu0 0
    %3888 = vmatprep.subr.bf16.mxu0 0
    %3889 = vmatpush1.bf16.xpose.msra.mxu0 %v3878
    %3890 = vmatprep.subr.bf16.mxu0 0
    %3891 = vmatpush1.bf16.xpose.msra.mxu0 %v3875
    %3892 = vmatprep.subr.bf16.mxu0 0
    %3893 = vmatpush1.bf16.xpose.msra.mxu0 %v3872
    %3894 = vmatprep.subr.bf16.mxu0 0
    %3895 = vmatpush1.bf16.xpose.msra.mxu0 %v3869
    %3896 = vmatprep.subr.bf16.mxu0 0
    %3897 = vmatpush2.bf16.xpose.msra.mxu0 0
    %3898 = vmatprep.subr.bf16.mxu0 0
    %3899 = vmatpush2.bf16.xpose.msra.mxu0 0
    %3900 = vmatprep.subr.bf16.mxu0 0
    %3901 = vmatpush2.bf16.xpose.msra.mxu0 0
    %3902 = vmatprep.subr.bf16.mxu0 0
    %3903 = vmatpush2.bf16.xpose.msra.mxu0 0
    %3904 = vmatprep.subr.bf16.mxu0 0
    %3905 = vmatpush2.bf16.xpose.msra.mxu0 0
    %3906 = vmatprep.subr.bf16.mxu0 0
    %3907 = vmatpush2.bf16.xpose.msra.mxu0 0
    %3908 = vmatprep.subr.bf16.mxu0 0
    %3909 = vmatpush2.bf16.xpose.msra.mxu0 0
    %3910 = vmatprep.subr.bf16.mxu0 0
    %3911 = vmatpush2.bf16.xpose.msra.mxu0 0
    %3912 = vmatprep.mubr.bf16.mxu0 0
    %3913 = vmatmul.mubr.bf16.gmra.mxu0 %v3857
    %v3914 = vpop.f32.mrf.mxu0
    %v3915 = vadd.f32 0.0, %v3914
    %v3916 = vpop.f32.mrf.mxu0
    %v3917 = vpop.f32.mrf.mxu0
    %v3918 = vadd.f32 0.0, %v3917
    %v3919 = vpop.f32.mrf.mxu0
    %3920 = vmatprep.mubr.bf16.mxu0 0
    %3921 = vmatmul.mubr.bf16.gmra.mxu0 %v3860
    %v3922 = vpop.f32.mrf.mxu0
    %v3923 = vadd.f32 0.0, %v3922
    %v3924 = vpop.f32.mrf.mxu0
    %v3925 = vpop.f32.mrf.mxu0
    %v3926 = vadd.f32 0.0, %v3925
    %v3927 = vpop.f32.mrf.mxu0
    %3928 = vmatprep.mubr.bf16.mxu0 0
    %3929 = vmatmul.mubr.bf16.gmra.mxu0 %v3863
    %v3930 = vpop.f32.mrf.mxu0
    %v3931 = vadd.f32 0.0, %v3930
    %v3932 = vpop.f32.mrf.mxu0
    %v3933 = vpop.f32.mrf.mxu0
    %v3934 = vadd.f32 0.0, %v3933
    %v3935 = vpop.f32.mrf.mxu0
    %3936 = vmatprep.mubr.bf16.mxu0 0
    %3937 = vmatmul.mubr.bf16.gmra.mxu0 %v3866
    %v3938 = vpop.f32.mrf.mxu0
    %v3939 = vadd.f32 0.0, %v3938
    %v3940 = vpop.f32.mrf.mxu0
    %v3941 = vpop.f32.mrf.mxu0
    %v3942 = vadd.f32 0.0, %v3941
    %v3943 = vpop.f32.mrf.mxu0
    %3944 = vdwg.mxu0
    %v3946 = vsel %vm636, %v3836, 0
    %v3949 = vsel %vm636, %v3837, 0
    %v3952 = vsel %vm636, %v3838, 0
    %v3955 = vsel %vm636, %v3839, 0
    %v3958 = vsel %vm636, %v3844, 0
    %v3961 = vsel %vm636, %v3845, 0
    %v3964 = vsel %vm636, %v3846, 0
    %v3967 = vsel %vm636, %v3847, 0
    %3969 = vmatprep.subr.bf16.mxu0 0
    %3970 = vmatpush1.bf16.xpose.msra.mxu0 0
    %3971 = vmatprep.subr.bf16.mxu0 0
    %3972 = vmatpush1.bf16.xpose.msra.mxu0 0
    %3973 = vmatprep.subr.bf16.mxu0 0
    %3974 = vmatpush1.bf16.xpose.msra.mxu0 0
    %3975 = vmatprep.subr.bf16.mxu0 0
    %3976 = vmatpush1.bf16.xpose.msra.mxu0 0
    %3977 = vmatprep.subr.bf16.mxu0 0
    %3978 = vmatpush1.bf16.xpose.msra.mxu0 %v3967
    %3979 = vmatprep.subr.bf16.mxu0 0
    %3980 = vmatpush1.bf16.xpose.msra.mxu0 %v3964
    %3981 = vmatprep.subr.bf16.mxu0 0
    %3982 = vmatpush1.bf16.xpose.msra.mxu0 %v3961
    %3983 = vmatprep.subr.bf16.mxu0 0
    %3984 = vmatpush1.bf16.xpose.msra.mxu0 %v3958
    %3985 = vmatprep.subr.bf16.mxu0 0
    %3986 = vmatpush2.bf16.xpose.msra.mxu0 0
    %3987 = vmatprep.subr.bf16.mxu0 0
    %3988 = vmatpush2.bf16.xpose.msra.mxu0 0
    %3989 = vmatprep.subr.bf16.mxu0 0
    %3990 = vmatpush2.bf16.xpose.msra.mxu0 0
    %3991 = vmatprep.subr.bf16.mxu0 0
    %3992 = vmatpush2.bf16.xpose.msra.mxu0 0
    %3993 = vmatprep.subr.bf16.mxu0 0
    %3994 = vmatpush2.bf16.xpose.msra.mxu0 0
    %3995 = vmatprep.subr.bf16.mxu0 0
    %3996 = vmatpush2.bf16.xpose.msra.mxu0 0
    %3997 = vmatprep.subr.bf16.mxu0 0
    %3998 = vmatpush2.bf16.xpose.msra.mxu0 0
    %3999 = vmatprep.subr.bf16.mxu0 0
    %4000 = vmatpush2.bf16.xpose.msra.mxu0 0
    %4001 = vmatprep.mubr.bf16.mxu0 0
    %4002 = vmatmul.mubr.bf16.gmra.mxu0 %v3946
    %v4003 = vpop.f32.mrf.mxu0
    %v4004 = vadd.f32 0.0, %v4003
    %v4005 = vpop.f32.mrf.mxu0
    %v4006 = vpop.f32.mrf.mxu0
    %v4007 = vadd.f32 0.0, %v4006
    %v4008 = vpop.f32.mrf.mxu0
    %4009 = vmatprep.mubr.bf16.mxu0 0
    %4010 = vmatmul.mubr.bf16.gmra.mxu0 %v3949
    %v4011 = vpop.f32.mrf.mxu0
    %v4012 = vadd.f32 0.0, %v4011
    %v4013 = vpop.f32.mrf.mxu0
    %v4014 = vpop.f32.mrf.mxu0
    %v4015 = vadd.f32 0.0, %v4014
    %v4016 = vpop.f32.mrf.mxu0
    %4017 = vmatprep.mubr.bf16.mxu0 0
    %4018 = vmatmul.mubr.bf16.gmra.mxu0 %v3952
    %v4019 = vpop.f32.mrf.mxu0
    %v4020 = vadd.f32 0.0, %v4019
    %v4021 = vpop.f32.mrf.mxu0
    %v4022 = vpop.f32.mrf.mxu0
    %v4023 = vadd.f32 0.0, %v4022
    %v4024 = vpop.f32.mrf.mxu0
    %4025 = vmatprep.mubr.bf16.mxu0 0
    %4026 = vmatmul.mubr.bf16.gmra.mxu0 %v3955
    %v4027 = vpop.f32.mrf.mxu0
    %v4028 = vadd.f32 0.0, %v4027
    %v4029 = vpop.f32.mrf.mxu0
    %v4030 = vpop.f32.mrf.mxu0
    %v4031 = vadd.f32 0.0, %v4030
    %v4032 = vpop.f32.mrf.mxu0
    %4033 = vdwg.mxu0
    %v4034 = vsel %vm232, %v3915, -inf
    %4035 = vmax.xlane.f32.xlu0 %v4034
    %v4036 = vpop.xlane.xlu0 %4035
    %v4037 = vsel %vm232, %v3918, -inf
    %4038 = vmax.xlane.f32.xlu0 %v4037
    %v4039 = vpop.xlane.xlu0 %4038
    %v4040 = vsel %vm232, %v3923, -inf
    %4041 = vmax.xlane.f32.xlu0 %v4040
    %v4042 = vpop.xlane.xlu0 %4041
    %v4043 = vsel %vm232, %v3926, -inf
    %4044 = vmax.xlane.f32.xlu0 %v4043
    %v4045 = vpop.xlane.xlu0 %4044
    %v4046 = vsel %vm232, %v3931, -inf
    %4047 = vmax.xlane.f32.xlu0 %v4046
    %v4048 = vpop.xlane.xlu0 %4047
    %v4049 = vsel %vm232, %v3934, -inf
    %4050 = vmax.xlane.f32.xlu0 %v4049
    %v4051 = vpop.xlane.xlu0 %4050
    %v4052 = vsel %vm232, %v3939, -inf
    %4053 = vmax.xlane.f32.xlu0 %v4052
    %v4054 = vpop.xlane.xlu0 %4053
    %v4055 = vsel %vm232, %v3942, -inf
    %4056 = vmax.xlane.f32.xlu0 %v4055
    %v4057 = vpop.xlane.xlu0 %4056
    %v4058 = vsel %vm232, %v4004, -inf
    %4059 = vmax.xlane.f32.xlu0 %v4058
    %v4060 = vpop.xlane.xlu0 %4059
    %v4061 = vsel %vm232, %v4007, -inf
    %4062 = vmax.xlane.f32.xlu0 %v4061
    %v4063 = vpop.xlane.xlu0 %4062
    %v4064 = vsel %vm232, %v4012, -inf
    %4065 = vmax.xlane.f32.xlu0 %v4064
    %v4066 = vpop.xlane.xlu0 %4065
    %v4067 = vsel %vm232, %v4015, -inf
    %4068 = vmax.xlane.f32.xlu0 %v4067
    %v4069 = vpop.xlane.xlu0 %4068
    %v4070 = vsel %vm232, %v4020, -inf
    %4071 = vmax.xlane.f32.xlu0 %v4070
    %v4072 = vpop.xlane.xlu0 %4071
    %v4073 = vsel %vm232, %v4023, -inf
    %4074 = vmax.xlane.f32.xlu0 %v4073
    %v4075 = vpop.xlane.xlu0 %4074
    %v4076 = vsel %vm232, %v4028, -inf
    %4077 = vmax.xlane.f32.xlu0 %v4076
    %v4078 = vpop.xlane.xlu0 %4077
    %v4079 = vsel %vm232, %v4031, -inf
    %4080 = vmax.xlane.f32.xlu0 %v4079
    %v4081 = vpop.xlane.xlu0 %4080
    %v4082 = vsub.f32 %v3915, %v4036
    %v4083 = vsub.f32 %v3918, %v4039
    %v4084 = vsub.f32 %v3923, %v4042
    %v4085 = vsub.f32 %v3926, %v4045
    %v4086 = vsub.f32 %v3931, %v4048
    %v4087 = vsub.f32 %v3934, %v4051
    %v4088 = vsub.f32 %v3939, %v4054
    %v4089 = vsub.f32 %v3942, %v4057
    %v4090 = vsub.f32 %v4004, %v4060
    %v4091 = vsub.f32 %v4007, %v4063
    %v4092 = vsub.f32 %v4012, %v4066
    %v4093 = vsub.f32 %v4015, %v4069
    %v4094 = vsub.f32 %v4020, %v4072
    %v4095 = vsub.f32 %v4023, %v4075
    %v4096 = vsub.f32 %v4028, %v4078
    %v4097 = vsub.f32 %v4031, %v4081
    %v4098 = vmul.f32 %v4082, 1.442695
    %v4099 = vpow.pop %v4098
    %v4100 = vmul.f32 %v4083, 1.442695
    %v4101 = vpow.pop %v4100
    %v4102 = vmul.f32 %v4084, 1.442695
    %v4103 = vpow.pop %v4102
    %v4104 = vmul.f32 %v4085, 1.442695
    %v4105 = vpow.pop %v4104
    %v4106 = vmul.f32 %v4086, 1.442695
    %v4107 = vpow.pop %v4106
    %v4108 = vmul.f32 %v4087, 1.442695
    %v4109 = vpow.pop %v4108
    %v4110 = vmul.f32 %v4088, 1.442695
    %v4111 = vpow.pop %v4110
    %v4112 = vmul.f32 %v4089, 1.442695
    %v4113 = vpow.pop %v4112
    %v4114 = vmul.f32 %v4090, 1.442695
    %v4115 = vpow.pop %v4114
    %v4116 = vmul.f32 %v4091, 1.442695
    %v4117 = vpow.pop %v4116
    %v4118 = vmul.f32 %v4092, 1.442695
    %v4119 = vpow.pop %v4118
    %v4120 = vmul.f32 %v4093, 1.442695
    %v4121 = vpow.pop %v4120
    %v4122 = vmul.f32 %v4094, 1.442695
    %v4123 = vpow.pop %v4122
    %v4124 = vmul.f32 %v4095, 1.442695
    %v4125 = vpow.pop %v4124
    %v4126 = vmul.f32 %v4096, 1.442695
    %v4127 = vpow.pop %v4126
    %v4128 = vmul.f32 %v4097, 1.442695
    %v4129 = vpow.pop %v4128
    %v4130 = vsel %vm232, %v4099, 0.0
    %4131 = vadd.xlane.f32.xlu0 %v4130
    %v4132 = vpop.xlane.xlu0 %4131
    %v4133 = vsel %vm232, %v4101, 0.0
    %4134 = vadd.xlane.f32.xlu0 %v4133
    %v4135 = vpop.xlane.xlu0 %4134
    %v4136 = vsel %vm232, %v4103, 0.0
    %4137 = vadd.xlane.f32.xlu0 %v4136
    %v4138 = vpop.xlane.xlu0 %4137
    %v4139 = vsel %vm232, %v4105, 0.0
    %4140 = vadd.xlane.f32.xlu0 %v4139
    %v4141 = vpop.xlane.xlu0 %4140
    %v4142 = vsel %vm232, %v4107, 0.0
    %4143 = vadd.xlane.f32.xlu0 %v4142
    %v4144 = vpop.xlane.xlu0 %4143
    %v4145 = vsel %vm232, %v4109, 0.0
    %4146 = vadd.xlane.f32.xlu0 %v4145
    %v4147 = vpop.xlane.xlu0 %4146
    %v4148 = vsel %vm232, %v4111, 0.0
    %4149 = vadd.xlane.f32.xlu0 %v4148
    %v4150 = vpop.xlane.xlu0 %4149
    %v4151 = vsel %vm232, %v4113, 0.0
    %4152 = vadd.xlane.f32.xlu0 %v4151
    %v4153 = vpop.xlane.xlu0 %4152
    %v4154 = vsel %vm232, %v4115, 0.0
    %4155 = vadd.xlane.f32.xlu0 %v4154
    %v4156 = vpop.xlane.xlu0 %4155
    %v4157 = vsel %vm232, %v4117, 0.0
    %4158 = vadd.xlane.f32.xlu0 %v4157
    %v4159 = vpop.xlane.xlu0 %4158
    %v4160 = vsel %vm232, %v4119, 0.0
    %4161 = vadd.xlane.f32.xlu0 %v4160
    %v4162 = vpop.xlane.xlu0 %4161
    %v4163 = vsel %vm232, %v4121, 0.0
    %4164 = vadd.xlane.f32.xlu0 %v4163
    %v4165 = vpop.xlane.xlu0 %4164
    %v4166 = vsel %vm232, %v4123, 0.0
    %4167 = vadd.xlane.f32.xlu0 %v4166
    %v4168 = vpop.xlane.xlu0 %4167
    %v4169 = vsel %vm232, %v4125, 0.0
    %4170 = vadd.xlane.f32.xlu0 %v4169
    %v4171 = vpop.xlane.xlu0 %4170
    %v4172 = vsel %vm232, %v4127, 0.0
    %4173 = vadd.xlane.f32.xlu0 %v4172
    %v4174 = vpop.xlane.xlu0 %4173
    %v4175 = vsel %vm232, %v4129, 0.0
    %4176 = vadd.xlane.f32.xlu0 %v4175
    %v4177 = vpop.xlane.xlu0 %4176
    %v4178 = vrcp.pop %v4132
    %v4179 = vrcp.pop %v4135
    %v4180 = vrcp.pop %v4138
    %v4181 = vrcp.pop %v4141
    %v4182 = vrcp.pop %v4144
    %v4183 = vrcp.pop %v4147
    %v4184 = vrcp.pop %v4150
    %v4185 = vrcp.pop %v4153
    %v4186 = vrcp.pop %v4156
    %v4187 = vrcp.pop %v4159
    %v4188 = vrcp.pop %v4162
    %v4189 = vrcp.pop %v4165
    %v4190 = vrcp.pop %v4168
    %v4191 = vrcp.pop %v4171
    %v4192 = vrcp.pop %v4174
    %v4193 = vrcp.pop %v4177
    %v4194 = vmul.f32 %v4099, %v4178
    %v4195 = vmul.f32 %v4101, %v4179
    %v4196 = vmul.f32 %v4103, %v4180
    %v4197 = vmul.f32 %v4105, %v4181
    %v4198 = vmul.f32 %v4107, %v4182
    %v4199 = vmul.f32 %v4109, %v4183
    %v4200 = vmul.f32 %v4111, %v4184
    %v4201 = vmul.f32 %v4113, %v4185
    %v4202 = vmul.f32 %v4115, %v4186
    %v4203 = vmul.f32 %v4117, %v4187
    %v4204 = vmul.f32 %v4119, %v4188
    %v4205 = vmul.f32 %v4121, %v4189
    %v4206 = vmul.f32 %v4123, %v4190
    %v4207 = vmul.f32 %v4125, %v4191
    %v4208 = vmul.f32 %v4127, %v4192
    %v4209 = vmul.f32 %v4129, %v4193
    %v4210 = vpack.c.bf16 %v4195, %v4194
    %v4211 = vpack.c.bf16 %v4197, %v4196
    %v4212 = vpack.c.bf16 %v4199, %v4198
    %v4213 = vpack.c.bf16 %v4201, %v4200
    %v4214 = vpack.c.bf16 %v4203, %v4202
    %v4215 = vpack.c.bf16 %v4205, %v4204
    %v4216 = vpack.c.bf16 %v4207, %v4206
    %v4217 = vpack.c.bf16 %v4209, %v4208
    %v4219 = vsel %vm232, %v4210, 0
    %v4222 = vsel %vm232, %v4211, 0
    %v4225 = vsel %vm232, %v4212, 0
    %v4228 = vsel %vm232, %v4213, 0
    %4230 = vmatprep.subr.bf16.mxu0 0
    %4231 = vmatpush1.bf16.msra.mxu0 0
    %4232 = vmatprep.subr.bf16.mxu0 0
    %4233 = vmatpush1.bf16.msra.mxu0 0
    %4234 = vmatprep.subr.bf16.mxu0 0
    %4235 = vmatpush1.bf16.msra.mxu0 0
    %4236 = vmatprep.subr.bf16.mxu0 0
    %4237 = vmatpush1.bf16.msra.mxu0 0
    %4238 = vmatprep.subr.bf16.mxu0 0
    %4239 = vmatpush1.bf16.msra.mxu0 %v3851
    %4240 = vmatprep.subr.bf16.mxu0 0
    %4241 = vmatpush1.bf16.msra.mxu0 %v3850
    %4242 = vmatprep.subr.bf16.mxu0 0
    %4243 = vmatpush1.bf16.msra.mxu0 %v3849
    %4244 = vmatprep.subr.bf16.mxu0 0
    %4245 = vmatpush1.bf16.msra.mxu0 %v3848
    %4246 = vmatprep.subr.bf16.mxu0 0
    %4247 = vmatpush2.bf16.msra.mxu0 0
    %4248 = vmatprep.subr.bf16.mxu0 0
    %4249 = vmatpush2.bf16.msra.mxu0 0
    %4250 = vmatprep.subr.bf16.mxu0 0
    %4251 = vmatpush2.bf16.msra.mxu0 0
    %4252 = vmatprep.subr.bf16.mxu0 0
    %4253 = vmatpush2.bf16.msra.mxu0 0
    %4254 = vmatprep.subr.bf16.mxu0 0
    %4255 = vmatpush2.bf16.msra.mxu0 0
    %4256 = vmatprep.subr.bf16.mxu0 0
    %4257 = vmatpush2.bf16.msra.mxu0 0
    %4258 = vmatprep.subr.bf16.mxu0 0
    %4259 = vmatpush2.bf16.msra.mxu0 0
    %4260 = vmatprep.subr.bf16.mxu0 0
    %4261 = vmatpush2.bf16.msra.mxu0 0
    %4262 = vmatprep.mubr.bf16.mxu0 0
    %4263 = vmatmul.mubr.bf16.gmra.mxu0 %v4219
    %v4264 = vpop.f32.mrf.mxu0
    %v4265 = vadd.f32 0.0, %v4264
    %v4266 = vpop.f32.mrf.mxu0
    %v4267 = vpop.f32.mrf.mxu0
    %v4268 = vadd.f32 0.0, %v4267
    %v4269 = vpop.f32.mrf.mxu0
    %4270 = vmatprep.mubr.bf16.mxu0 0
    %4271 = vmatmul.mubr.bf16.gmra.mxu0 %v4222
    %v4272 = vpop.f32.mrf.mxu0
    %v4273 = vadd.f32 0.0, %v4272
    %v4274 = vpop.f32.mrf.mxu0
    %v4275 = vpop.f32.mrf.mxu0
    %v4276 = vadd.f32 0.0, %v4275
    %v4277 = vpop.f32.mrf.mxu0
    %4278 = vmatprep.mubr.bf16.mxu0 0
    %4279 = vmatmul.mubr.bf16.gmra.mxu0 %v4225
    %v4280 = vpop.f32.mrf.mxu0
    %v4281 = vadd.f32 0.0, %v4280
    %v4282 = vpop.f32.mrf.mxu0
    %v4283 = vpop.f32.mrf.mxu0
    %v4284 = vadd.f32 0.0, %v4283
    %v4285 = vpop.f32.mrf.mxu0
    %4286 = vmatprep.mubr.bf16.mxu0 0
    %4287 = vmatmul.mubr.bf16.gmra.mxu0 %v4228
    %v4288 = vpop.f32.mrf.mxu0
    %v4289 = vadd.f32 0.0, %v4288
    %v4290 = vpop.f32.mrf.mxu0
    %v4291 = vpop.f32.mrf.mxu0
    %v4292 = vadd.f32 0.0, %v4291
    %v4293 = vpop.f32.mrf.mxu0
    %4294 = vdwg.mxu0
    %v4296 = vsel %vm232, %v4214, 0
    %v4299 = vsel %vm232, %v4215, 0
    %v4302 = vsel %vm232, %v4216, 0
    %v4305 = vsel %vm232, %v4217, 0
    %4307 = vmatprep.subr.bf16.mxu0 0
    %4308 = vmatpush1.bf16.msra.mxu0 0
    %4309 = vmatprep.subr.bf16.mxu0 0
    %4310 = vmatpush1.bf16.msra.mxu0 0
    %4311 = vmatprep.subr.bf16.mxu0 0
    %4312 = vmatpush1.bf16.msra.mxu0 0
    %4313 = vmatprep.subr.bf16.mxu0 0
    %4314 = vmatpush1.bf16.msra.mxu0 0
    %4315 = vmatprep.subr.bf16.mxu0 0
    %4316 = vmatpush1.bf16.msra.mxu0 %v3855
    %4317 = vmatprep.subr.bf16.mxu0 0
    %4318 = vmatpush1.bf16.msra.mxu0 %v3854
    %4319 = vmatprep.subr.bf16.mxu0 0
    %4320 = vmatpush1.bf16.msra.mxu0 %v3853
    %4321 = vmatprep.subr.bf16.mxu0 0
    %4322 = vmatpush1.bf16.msra.mxu0 %v3852
    %4323 = vmatprep.subr.bf16.mxu0 0
    %4324 = vmatpush2.bf16.msra.mxu0 0
    %4325 = vmatprep.subr.bf16.mxu0 0
    %4326 = vmatpush2.bf16.msra.mxu0 0
    %4327 = vmatprep.subr.bf16.mxu0 0
    %4328 = vmatpush2.bf16.msra.mxu0 0
    %4329 = vmatprep.subr.bf16.mxu0 0
    %4330 = vmatpush2.bf16.msra.mxu0 0
    %4331 = vmatprep.subr.bf16.mxu0 0
    %4332 = vmatpush2.bf16.msra.mxu0 0
    %4333 = vmatprep.subr.bf16.mxu0 0
    %4334 = vmatpush2.bf16.msra.mxu0 0
    %4335 = vmatprep.subr.bf16.mxu0 0
    %4336 = vmatpush2.bf16.msra.mxu0 0
    %4337 = vmatprep.subr.bf16.mxu0 0
    %4338 = vmatpush2.bf16.msra.mxu0 0
    %4339 = vmatprep.mubr.bf16.mxu0 0
    %4340 = vmatmul.mubr.bf16.gmra.mxu0 %v4296
    %v4341 = vpop.f32.mrf.mxu0
    %v4342 = vadd.f32 0.0, %v4341
    %v4343 = vpop.f32.mrf.mxu0
    %v4344 = vpop.f32.mrf.mxu0
    %v4345 = vadd.f32 0.0, %v4344
    %v4346 = vpop.f32.mrf.mxu0
    %4347 = vmatprep.mubr.bf16.mxu0 0
    %4348 = vmatmul.mubr.bf16.gmra.mxu0 %v4299
    %v4349 = vpop.f32.mrf.mxu0
    %v4350 = vadd.f32 0.0, %v4349
    %v4351 = vpop.f32.mrf.mxu0
    %v4352 = vpop.f32.mrf.mxu0
    %v4353 = vadd.f32 0.0, %v4352
    %v4354 = vpop.f32.mrf.mxu0
    %4355 = vmatprep.mubr.bf16.mxu0 0
    %4356 = vmatmul.mubr.bf16.gmra.mxu0 %v4302
    %v4357 = vpop.f32.mrf.mxu0
    %v4358 = vadd.f32 0.0, %v4357
    %v4359 = vpop.f32.mrf.mxu0
    %v4360 = vpop.f32.mrf.mxu0
    %v4361 = vadd.f32 0.0, %v4360
    %v4362 = vpop.f32.mrf.mxu0
    %4363 = vmatprep.mubr.bf16.mxu0 0
    %4364 = vmatmul.mubr.bf16.gmra.mxu0 %v4305
    %v4365 = vpop.f32.mrf.mxu0
    %v4366 = vadd.f32 0.0, %v4365
    %v4367 = vpop.f32.mrf.mxu0
    %v4368 = vpop.f32.mrf.mxu0
    %v4369 = vadd.f32 0.0, %v4368
    %v4370 = vpop.f32.mrf.mxu0
    %4371 = vdwg.mxu0
    %v4372 = vpack.c.bf16 %v4268, %v4265
    %v4373 = vpack.c.bf16 %v4276, %v4273
    %v4374 = vpack.c.bf16 %v4284, %v4281
    %v4375 = vpack.c.bf16 %v4292, %v4289
    %v4376 = vpack.c.bf16 %v4345, %v4342
    %v4377 = vpack.c.bf16 %v4353, %v4350
    %v4378 = vpack.c.bf16 %v4361, %v4358
    %v4379 = vpack.c.bf16 %v4369, %v4366
    %s4380 = scalar_lea.vmem %s5, 24
    %v4381 = vld [vmem:[%s4380] sm:$0xf]
    %v4382 = vld [vmem:[%s4380 + $0x4] sm:$0xf]
    %v4385 = vunpack.c.l.b16 %v4381
    %v4386 = vunpack.c.l.b16 %v4382
    %v4387 = vpack.c.b16 %v4386, %v4385
    %v4390 = vsel %vm636, %v4372, 0
    %v4393 = vsel %vm636, %v4373, 0
    %v4396 = vsel %vm636, %v4374, 0
    %v4399 = vsel %vm636, %v4375, 0
    %v4402 = vsel %vm636, %v4376, 0
    %v4405 = vsel %vm636, %v4377, 0
    %v4408 = vsel %vm636, %v4378, 0
    %v4411 = vsel %vm636, %v4379, 0
    %4413 = vmatprep.subr.bf16.mxu0 0
    %4414 = vmatpush1.bf16.msra.mxu0 0
    %4415 = vmatprep.subr.bf16.mxu0 0
    %4416 = vmatpush1.bf16.msra.mxu0 0
    %4417 = vmatprep.subr.bf16.mxu0 0
    %4418 = vmatpush1.bf16.msra.mxu0 0
    %4419 = vmatprep.subr.bf16.mxu0 0
    %4420 = vmatpush1.bf16.msra.mxu0 0
    %4421 = vmatprep.subr.bf16.mxu0 0
    %4422 = vmatpush1.bf16.msra.mxu0 0
    %4423 = vmatprep.subr.bf16.mxu0 0
    %4424 = vmatpush1.bf16.msra.mxu0 0
    %4425 = vmatprep.subr.bf16.mxu0 0
    %4426 = vmatpush1.bf16.msra.mxu0 0
    %4427 = vmatprep.subr.bf16.mxu0 0
    %4428 = vmatpush1.bf16.msra.mxu0 %v4387
    %4429 = vmatprep.subr.bf16.mxu0 0
    %4430 = vmatpush2.bf16.msra.mxu0 0
    %4431 = vmatprep.subr.bf16.mxu0 0
    %4432 = vmatpush2.bf16.msra.mxu0 0
    %4433 = vmatprep.subr.bf16.mxu0 0
    %4434 = vmatpush2.bf16.msra.mxu0 0
    %4435 = vmatprep.subr.bf16.mxu0 0
    %4436 = vmatpush2.bf16.msra.mxu0 0
    %4437 = vmatprep.subr.bf16.mxu0 0
    %4438 = vmatpush2.bf16.msra.mxu0 0
    %4439 = vmatprep.subr.bf16.mxu0 0
    %4440 = vmatpush2.bf16.msra.mxu0 0
    %4441 = vmatprep.subr.bf16.mxu0 0
    %4442 = vmatpush2.bf16.msra.mxu0 0
    %4443 = vmatprep.subr.bf16.mxu0 0
    %4444 = vmatpush2.bf16.msra.mxu0 0
    %4445 = vmatprep.mubr.bf16.mxu0 0
    %4446 = vmatmul.mubr.bf16.gmra.mxu0 %v4390
    %v4447 = vpop.f32.mrf.mxu0
    %v4448 = vadd.f32 0.0, %v4447
    %v4449 = vpop.f32.mrf.mxu0
    %v4450 = vpop.f32.mrf.mxu0
    %v4451 = vadd.f32 0.0, %v4450
    %v4452 = vpop.f32.mrf.mxu0
    %4453 = vmatprep.mubr.bf16.mxu0 0
    %4454 = vmatmul.mubr.bf16.gmra.mxu0 %v4393
    %v4455 = vpop.f32.mrf.mxu0
    %v4456 = vadd.f32 0.0, %v4455
    %v4457 = vpop.f32.mrf.mxu0
    %v4458 = vpop.f32.mrf.mxu0
    %v4459 = vadd.f32 0.0, %v4458
    %v4460 = vpop.f32.mrf.mxu0
    %4461 = vmatprep.mubr.bf16.mxu0 0
    %4462 = vmatmul.mubr.bf16.gmra.mxu0 %v4396
    %v4463 = vpop.f32.mrf.mxu0
    %v4464 = vadd.f32 0.0, %v4463
    %v4465 = vpop.f32.mrf.mxu0
    %v4466 = vpop.f32.mrf.mxu0
    %v4467 = vadd.f32 0.0, %v4466
    %v4468 = vpop.f32.mrf.mxu0
    %4469 = vmatprep.mubr.bf16.mxu0 0
    %4470 = vmatmul.mubr.bf16.gmra.mxu0 %v4399
    %v4471 = vpop.f32.mrf.mxu0
    %v4472 = vadd.f32 0.0, %v4471
    %v4473 = vpop.f32.mrf.mxu0
    %v4474 = vpop.f32.mrf.mxu0
    %v4475 = vadd.f32 0.0, %v4474
    %v4476 = vpop.f32.mrf.mxu0
    %4477 = vmatprep.mubr.bf16.mxu0 0
    %4478 = vmatmul.mubr.bf16.gmra.mxu0 %v4402
    %v4479 = vpop.f32.mrf.mxu0
    %v4480 = vadd.f32 0.0, %v4479
    %v4481 = vpop.f32.mrf.mxu0
    %v4482 = vpop.f32.mrf.mxu0
    %v4483 = vadd.f32 0.0, %v4482
    %v4484 = vpop.f32.mrf.mxu0
    %4485 = vmatprep.mubr.bf16.mxu0 0
    %4486 = vmatmul.mubr.bf16.gmra.mxu0 %v4405
    %v4487 = vpop.f32.mrf.mxu0
    %v4488 = vadd.f32 0.0, %v4487
    %v4489 = vpop.f32.mrf.mxu0
    %v4490 = vpop.f32.mrf.mxu0
    %v4491 = vadd.f32 0.0, %v4490
    %v4492 = vpop.f32.mrf.mxu0
    %4493 = vmatprep.mubr.bf16.mxu0 0
    %4494 = vmatmul.mubr.bf16.gmra.mxu0 %v4408
    %v4495 = vpop.f32.mrf.mxu0
    %v4496 = vadd.f32 0.0, %v4495
    %v4497 = vpop.f32.mrf.mxu0
    %v4498 = vpop.f32.mrf.mxu0
    %v4499 = vadd.f32 0.0, %v4498
    %v4500 = vpop.f32.mrf.mxu0
    %4501 = vmatprep.mubr.bf16.mxu0 0
    %4502 = vmatmul.mubr.bf16.gmra.mxu0 %v4411
    %v4503 = vpop.f32.mrf.mxu0
    %v4504 = vadd.f32 0.0, %v4503
    %v4505 = vpop.f32.mrf.mxu0
    %v4506 = vpop.f32.mrf.mxu0
    %v4507 = vadd.f32 0.0, %v4506
    %v4508 = vpop.f32.mrf.mxu0
    %4509 = vdwg.mxu0
    %v4510 = vadd.f32 %v3426, %v4448
    %v4511 = vadd.f32 %v3427, %v4451
    %v4512 = vadd.f32 %v3428, %v4456
    %v4513 = vadd.f32 %v3429, %v4459
    %v4514 = vadd.f32 %v3430, %v4464
    %v4515 = vadd.f32 %v3431, %v4467
    %v4516 = vadd.f32 %v3432, %v4472
    %v4517 = vadd.f32 %v3433, %v4475
    %v4518 = vadd.f32 %v3434, %v4480
    %v4519 = vadd.f32 %v3435, %v4483
    %v4520 = vadd.f32 %v3436, %v4488
    %v4521 = vadd.f32 %v3437, %v4491
    %v4522 = vadd.f32 %v3438, %v4496
    %v4523 = vadd.f32 %v3439, %v4499
    %v4524 = vadd.f32 %v3440, %v4504
    %v4525 = vadd.f32 %v3441, %v4507
    %v4526 = vld [vmem:[%s6] sm:$0x1]
    %v4528 = vlaneseq
    %v4529 = vshrl.u32 %v4528, 7
    %v4530 = vsub.s32 0, %v4529
    %v4531 = vrot.slane %v4526, %v4530
    %v4533 = vadd.f32 %v4510, %v4531
    %v4534 = vadd.f32 %v4511, %v4531
    %v4535 = vadd.f32 %v4512, %v4531
    %v4536 = vadd.f32 %v4513, %v4531
    %v4537 = vadd.f32 %v4514, %v4531
    %v4538 = vadd.f32 %v4515, %v4531
    %v4539 = vadd.f32 %v4516, %v4531
    %v4540 = vadd.f32 %v4517, %v4531
    %v4541 = vadd.f32 %v4518, %v4531
    %v4542 = vadd.f32 %v4519, %v4531
    %v4543 = vadd.f32 %v4520, %v4531
    %v4544 = vadd.f32 %v4521, %v4531
    %v4545 = vadd.f32 %v4522, %v4531
    %v4546 = vadd.f32 %v4523, %v4531
    %v4547 = vadd.f32 %v4524, %v4531
    %v4548 = vadd.f32 %v4525, %v4531
    %v4549 = vadd.f32 %v176, %v4533
    %v4550 = vadd.f32 %v177, %v4534
    %v4551 = vadd.f32 %v178, %v4535
    %v4552 = vadd.f32 %v179, %v4536
    %v4553 = vadd.f32 %v180, %v4537
    %v4554 = vadd.f32 %v181, %v4538
    %v4555 = vadd.f32 %v182, %v4539
    %v4556 = vadd.f32 %v183, %v4540
    %v4557 = vadd.f32 %v184, %v4541
    %v4558 = vadd.f32 %v185, %v4542
    %v4559 = vadd.f32 %v186, %v4543
    %v4560 = vadd.f32 %v187, %v4544
    %v4561 = vadd.f32 %v188, %v4545
    %v4562 = vadd.f32 %v189, %v4546
    %v4563 = vadd.f32 %v190, %v4547
    %v4564 = vadd.f32 %v191, %v4548
    %v4565 = vsel %vm232, %v4549, 0.0
    %4566 = vadd.xlane.f32.xlu0 %v4565
    %v4567 = vpop.xlane.xlu0 %4566
    %v4568 = vsel %vm232, %v4550, 0.0
    %4569 = vadd.xlane.f32.xlu0 %v4568
    %v4570 = vpop.xlane.xlu0 %4569
    %v4571 = vsel %vm232, %v4551, 0.0
    %4572 = vadd.xlane.f32.xlu0 %v4571
    %v4573 = vpop.xlane.xlu0 %4572
    %v4574 = vsel %vm232, %v4552, 0.0
    %4575 = vadd.xlane.f32.xlu0 %v4574
    %v4576 = vpop.xlane.xlu0 %4575
    %v4577 = vsel %vm232, %v4553, 0.0
    %4578 = vadd.xlane.f32.xlu0 %v4577
    %v4579 = vpop.xlane.xlu0 %4578
    %v4580 = vsel %vm232, %v4554, 0.0
    %4581 = vadd.xlane.f32.xlu0 %v4580
    %v4582 = vpop.xlane.xlu0 %4581
    %v4583 = vsel %vm232, %v4555, 0.0
    %4584 = vadd.xlane.f32.xlu0 %v4583
    %v4585 = vpop.xlane.xlu0 %4584
    %v4586 = vsel %vm232, %v4556, 0.0
    %4587 = vadd.xlane.f32.xlu0 %v4586
    %v4588 = vpop.xlane.xlu0 %4587
    %v4589 = vsel %vm232, %v4557, 0.0
    %4590 = vadd.xlane.f32.xlu0 %v4589
    %v4591 = vpop.xlane.xlu0 %4590
    %v4592 = vsel %vm232, %v4558, 0.0
    %4593 = vadd.xlane.f32.xlu0 %v4592
    %v4594 = vpop.xlane.xlu0 %4593
    %v4595 = vsel %vm232, %v4559, 0.0
    %4596 = vadd.xlane.f32.xlu0 %v4595
    %v4597 = vpop.xlane.xlu0 %4596
    %v4598 = vsel %vm232, %v4560, 0.0
    %4599 = vadd.xlane.f32.xlu0 %v4598
    %v4600 = vpop.xlane.xlu0 %4599
    %v4601 = vsel %vm232, %v4561, 0.0
    %4602 = vadd.xlane.f32.xlu0 %v4601
    %v4603 = vpop.xlane.xlu0 %4602
    %v4604 = vsel %vm232, %v4562, 0.0
    %4605 = vadd.xlane.f32.xlu0 %v4604
    %v4606 = vpop.xlane.xlu0 %4605
    %v4607 = vsel %vm232, %v4563, 0.0
    %4608 = vadd.xlane.f32.xlu0 %v4607
    %v4609 = vpop.xlane.xlu0 %4608
    %v4610 = vsel %vm232, %v4564, 0.0
    %4611 = vadd.xlane.f32.xlu0 %v4610
    %v4612 = vpop.xlane.xlu0 %4611
    %v4613 = vrcp.pop 64.0
    %v4614 = vmul.f32 %v4567, %v4613
    %v4615 = vmul.f32 %v4570, %v4613
    %v4616 = vmul.f32 %v4573, %v4613
    %v4617 = vmul.f32 %v4576, %v4613
    %v4618 = vmul.f32 %v4579, %v4613
    %v4619 = vmul.f32 %v4582, %v4613
    %v4620 = vmul.f32 %v4585, %v4613
    %v4621 = vmul.f32 %v4588, %v4613
    %v4622 = vmul.f32 %v4591, %v4613
    %v4623 = vmul.f32 %v4594, %v4613
    %v4624 = vmul.f32 %v4597, %v4613
    %v4625 = vmul.f32 %v4600, %v4613
    %v4626 = vmul.f32 %v4603, %v4613
    %v4627 = vmul.f32 %v4606, %v4613
    %v4628 = vmul.f32 %v4609, %v4613
    %v4629 = vmul.f32 %v4612, %v4613
    %v4630 = vsub.f32 %v4549, %v4614
    %v4631 = vsub.f32 %v4550, %v4615
    %v4632 = vsub.f32 %v4551, %v4616
    %v4633 = vsub.f32 %v4552, %v4617
    %v4634 = vsub.f32 %v4553, %v4618
    %v4635 = vsub.f32 %v4554, %v4619
    %v4636 = vsub.f32 %v4555, %v4620
    %v4637 = vsub.f32 %v4556, %v4621
    %v4638 = vsub.f32 %v4557, %v4622
    %v4639 = vsub.f32 %v4558, %v4623
    %v4640 = vsub.f32 %v4559, %v4624
    %v4641 = vsub.f32 %v4560, %v4625
    %v4642 = vsub.f32 %v4561, %v4626
    %v4643 = vsub.f32 %v4562, %v4627
    %v4644 = vsub.f32 %v4563, %v4628
    %v4645 = vsub.f32 %v4564, %v4629
    %v4646 = vmul.f32 %v4630, %v4630
    %v4647 = vmul.f32 %v4631, %v4631
    %v4648 = vmul.f32 %v4632, %v4632
    %v4649 = vmul.f32 %v4633, %v4633
    %v4650 = vmul.f32 %v4634, %v4634
    %v4651 = vmul.f32 %v4635, %v4635
    %v4652 = vmul.f32 %v4636, %v4636
    %v4653 = vmul.f32 %v4637, %v4637
    %v4654 = vmul.f32 %v4638, %v4638
    %v4655 = vmul.f32 %v4639, %v4639
    %v4656 = vmul.f32 %v4640, %v4640
    %v4657 = vmul.f32 %v4641, %v4641
    %v4658 = vmul.f32 %v4642, %v4642
    %v4659 = vmul.f32 %v4643, %v4643
    %v4660 = vmul.f32 %v4644, %v4644
    %v4661 = vmul.f32 %v4645, %v4645
    %v4662 = vsel %vm232, %v4646, 0.0
    %4663 = vadd.xlane.f32.xlu0 %v4662
    %v4664 = vpop.xlane.xlu0 %4663
    %v4665 = vsel %vm232, %v4647, 0.0
    %4666 = vadd.xlane.f32.xlu0 %v4665
    %v4667 = vpop.xlane.xlu0 %4666
    %v4668 = vsel %vm232, %v4648, 0.0
    %4669 = vadd.xlane.f32.xlu0 %v4668
    %v4670 = vpop.xlane.xlu0 %4669
    %v4671 = vsel %vm232, %v4649, 0.0
    %4672 = vadd.xlane.f32.xlu0 %v4671
    %v4673 = vpop.xlane.xlu0 %4672
    %v4674 = vsel %vm232, %v4650, 0.0
    %4675 = vadd.xlane.f32.xlu0 %v4674
    %v4676 = vpop.xlane.xlu0 %4675
    %v4677 = vsel %vm232, %v4651, 0.0
    %4678 = vadd.xlane.f32.xlu0 %v4677
    %v4679 = vpop.xlane.xlu0 %4678
    %v4680 = vsel %vm232, %v4652, 0.0
    %4681 = vadd.xlane.f32.xlu0 %v4680
    %v4682 = vpop.xlane.xlu0 %4681
    %v4683 = vsel %vm232, %v4653, 0.0
    %4684 = vadd.xlane.f32.xlu0 %v4683
    %v4685 = vpop.xlane.xlu0 %4684
    %v4686 = vsel %vm232, %v4654, 0.0
    %4687 = vadd.xlane.f32.xlu0 %v4686
    %v4688 = vpop.xlane.xlu0 %4687
    %v4689 = vsel %vm232, %v4655, 0.0
    %4690 = vadd.xlane.f32.xlu0 %v4689
    %v4691 = vpop.xlane.xlu0 %4690
    %v4692 = vsel %vm232, %v4656, 0.0
    %4693 = vadd.xlane.f32.xlu0 %v4692
    %v4694 = vpop.xlane.xlu0 %4693
    %v4695 = vsel %vm232, %v4657, 0.0
    %4696 = vadd.xlane.f32.xlu0 %v4695
    %v4697 = vpop.xlane.xlu0 %4696
    %v4698 = vsel %vm232, %v4658, 0.0
    %4699 = vadd.xlane.f32.xlu0 %v4698
    %v4700 = vpop.xlane.xlu0 %4699
    %v4701 = vsel %vm232, %v4659, 0.0
    %4702 = vadd.xlane.f32.xlu0 %v4701
    %v4703 = vpop.xlane.xlu0 %4702
    %v4704 = vsel %vm232, %v4660, 0.0
    %4705 = vadd.xlane.f32.xlu0 %v4704
    %v4706 = vpop.xlane.xlu0 %4705
    %v4707 = vsel %vm232, %v4661, 0.0
    %4708 = vadd.xlane.f32.xlu0 %v4707
    %v4709 = vpop.xlane.xlu0 %4708
    %v4710 = vmul.f32 %v4664, %v4613
    %v4711 = vmul.f32 %v4667, %v4613
    %v4712 = vmul.f32 %v4670, %v4613
    %v4713 = vmul.f32 %v4673, %v4613
    %v4714 = vmul.f32 %v4676, %v4613
    %v4715 = vmul.f32 %v4679, %v4613
    %v4716 = vmul.f32 %v4682, %v4613
    %v4717 = vmul.f32 %v4685, %v4613
    %v4718 = vmul.f32 %v4688, %v4613
    %v4719 = vmul.f32 %v4691, %v4613
    %v4720 = vmul.f32 %v4694, %v4613
    %v4721 = vmul.f32 %v4697, %v4613
    %v4722 = vmul.f32 %v4700, %v4613
    %v4723 = vmul.f32 %v4703, %v4613
    %v4724 = vmul.f32 %v4706, %v4613
    %v4725 = vmul.f32 %v4709, %v4613
    %v4726 = vadd.f32 %v4710, 1e-06
    %v4727 = vadd.f32 %v4711, 1e-06
    %v4728 = vadd.f32 %v4712, 1e-06
    %v4729 = vadd.f32 %v4713, 1e-06
    %v4730 = vadd.f32 %v4714, 1e-06
    %v4731 = vadd.f32 %v4715, 1e-06
    %v4732 = vadd.f32 %v4716, 1e-06
    %v4733 = vadd.f32 %v4717, 1e-06
    %v4734 = vadd.f32 %v4718, 1e-06
    %v4735 = vadd.f32 %v4719, 1e-06
    %v4736 = vadd.f32 %v4720, 1e-06
    %v4737 = vadd.f32 %v4721, 1e-06
    %v4738 = vadd.f32 %v4722, 1e-06
    %v4739 = vadd.f32 %v4723, 1e-06
    %v4740 = vadd.f32 %v4724, 1e-06
    %v4741 = vadd.f32 %v4725, 1e-06
    %v4742 = vrsqrt.pop %v4726
    %v4743 = vrsqrt.pop %v4727
    %v4744 = vrsqrt.pop %v4728
    %v4745 = vrsqrt.pop %v4729
    %v4746 = vrsqrt.pop %v4730
    %v4747 = vrsqrt.pop %v4731
    %v4748 = vrsqrt.pop %v4732
    %v4749 = vrsqrt.pop %v4733
    %v4750 = vrsqrt.pop %v4734
    %v4751 = vrsqrt.pop %v4735
    %v4752 = vrsqrt.pop %v4736
    %v4753 = vrsqrt.pop %v4737
    %v4754 = vrsqrt.pop %v4738
    %v4755 = vrsqrt.pop %v4739
    %v4756 = vrsqrt.pop %v4740
    %v4757 = vrsqrt.pop %v4741
    %v4758 = vmul.f32 %v4630, %v4742
    %v4759 = vmul.f32 %v4631, %v4743
    %v4760 = vmul.f32 %v4632, %v4744
    %v4761 = vmul.f32 %v4633, %v4745
    %v4762 = vmul.f32 %v4634, %v4746
    %v4763 = vmul.f32 %v4635, %v4747
    %v4764 = vmul.f32 %v4636, %v4748
    %v4765 = vmul.f32 %v4637, %v4749
    %v4766 = vmul.f32 %v4638, %v4750
    %v4767 = vmul.f32 %v4639, %v4751
    %v4768 = vmul.f32 %v4640, %v4752
    %v4769 = vmul.f32 %v4641, %v4753
    %v4770 = vmul.f32 %v4642, %v4754
    %v4771 = vmul.f32 %v4643, %v4755
    %v4772 = vmul.f32 %v4644, %v4756
    %v4773 = vmul.f32 %v4645, %v4757
    %v4774 = vld [vmem:[%s7] sm:$0x1]
    %v4776 = vlaneseq
    %v4777 = vshrl.u32 %v4776, 7
    %v4778 = vsub.s32 0, %v4777
    %v4779 = vrot.slane %v4774, %v4778
    %v4781 = vmul.f32 %v4758, %v4779
    %v4782 = vmul.f32 %v4759, %v4779
    %v4783 = vmul.f32 %v4760, %v4779
    %v4784 = vmul.f32 %v4761, %v4779
    %v4785 = vmul.f32 %v4762, %v4779
    %v4786 = vmul.f32 %v4763, %v4779
    %v4787 = vmul.f32 %v4764, %v4779
    %v4788 = vmul.f32 %v4765, %v4779
    %v4789 = vmul.f32 %v4766, %v4779
    %v4790 = vmul.f32 %v4767, %v4779
    %v4791 = vmul.f32 %v4768, %v4779
    %v4792 = vmul.f32 %v4769, %v4779
    %v4793 = vmul.f32 %v4770, %v4779
    %v4794 = vmul.f32 %v4771, %v4779
    %v4795 = vmul.f32 %v4772, %v4779
    %v4796 = vmul.f32 %v4773, %v4779
    %v4797 = vld [vmem:[%s8] sm:$0x1]
    %v4799 = vlaneseq
    %v4800 = vshrl.u32 %v4799, 7
    %v4801 = vsub.s32 0, %v4800
    %v4802 = vrot.slane %v4797, %v4801
    %v4804 = vadd.f32 %v4781, %v4802
    %v4805 = vadd.f32 %v4782, %v4802
    %v4806 = vadd.f32 %v4783, %v4802
    %v4807 = vadd.f32 %v4784, %v4802
    %v4808 = vadd.f32 %v4785, %v4802
    %v4809 = vadd.f32 %v4786, %v4802
    %v4810 = vadd.f32 %v4787, %v4802
    %v4811 = vadd.f32 %v4788, %v4802
    %v4812 = vadd.f32 %v4789, %v4802
    %v4813 = vadd.f32 %v4790, %v4802
    %v4814 = vadd.f32 %v4791, %v4802
    %v4815 = vadd.f32 %v4792, %v4802
    %v4816 = vadd.f32 %v4793, %v4802
    %v4817 = vadd.f32 %v4794, %v4802
    %v4818 = vadd.f32 %v4795, %v4802
    %v4819 = vadd.f32 %v4796, %v4802
    %v4820 = vpack.c.bf16 %v4805, %v4804
    %v4821 = vpack.c.bf16 %v4807, %v4806
    %v4822 = vpack.c.bf16 %v4809, %v4808
    %v4823 = vpack.c.bf16 %v4811, %v4810
    %v4824 = vpack.c.bf16 %v4813, %v4812
    %v4825 = vpack.c.bf16 %v4815, %v4814
    %v4826 = vpack.c.bf16 %v4817, %v4816
    %v4827 = vpack.c.bf16 %v4819, %v4818
    %v4828 = vld [vmem:[%s9] sm:$0xff]
    %v4829 = vld [vmem:[%s9 + $0x8] sm:$0xff]
    %v4830 = vld [vmem:[%s9 + $0x10] sm:$0xff]
    %v4831 = vld [vmem:[%s9 + $0x18] sm:$0xff]
    %v4832 = vld [vmem:[%s9 + $0x20] sm:$0xff]
    %v4833 = vld [vmem:[%s9 + $0x28] sm:$0xff]
    %v4834 = vld [vmem:[%s9 + $0x30] sm:$0xff]
    %v4835 = vld [vmem:[%s9 + $0x38] sm:$0xff]
    %v4844 = vunpack.c.l.b16 %v4828
    %v4845 = vunpack.c.h.b16 %v4828
    %v4846 = vunpack.c.l.b16 %v4829
    %v4847 = vunpack.c.h.b16 %v4829
    %v4848 = vunpack.c.l.b16 %v4830
    %v4849 = vunpack.c.h.b16 %v4830
    %v4850 = vunpack.c.l.b16 %v4831
    %v4851 = vunpack.c.h.b16 %v4831
    %v4852 = vunpack.c.l.b16 %v4832
    %v4853 = vunpack.c.h.b16 %v4832
    %v4854 = vunpack.c.l.b16 %v4833
    %v4855 = vunpack.c.h.b16 %v4833
    %v4856 = vunpack.c.l.b16 %v4834
    %v4857 = vunpack.c.h.b16 %v4834
    %v4858 = vunpack.c.l.b16 %v4835
    %v4859 = vunpack.c.h.b16 %v4835
    %v4860 = vpack.c.b16 %v4846, %v4844
    %v4861 = vpack.c.b16 %v4847, %v4845
    %v4862 = vpack.c.b16 %v4850, %v4848
    %v4863 = vpack.c.b16 %v4851, %v4849
    %v4864 = vpack.c.b16 %v4854, %v4852
    %v4865 = vpack.c.b16 %v4855, %v4853
    %v4866 = vpack.c.b16 %v4858, %v4856
    %v4867 = vpack.c.b16 %v4859, %v4857
    %v4877 = vsel %vm232, %v4820, 0
    %v4880 = vsel %vm232, %v4821, 0
    %v4883 = vsel %vm232, %v4822, 0
    %v4886 = vsel %vm232, %v4823, 0
    %v4889 = vsel %vm232, %v4824, 0
    %v4892 = vsel %vm232, %v4825, 0
    %v4895 = vsel %vm232, %v4826, 0
    %v4898 = vsel %vm232, %v4827, 0
    %4900 = vmatprep.subr.bf16.mxu0 0
    %4901 = vmatpush1.bf16.msra.mxu0 0
    %4902 = vmatprep.subr.bf16.mxu0 0
    %4903 = vmatpush1.bf16.msra.mxu0 0
    %4904 = vmatprep.subr.bf16.mxu0 0
    %4905 = vmatpush1.bf16.msra.mxu0 0
    %4906 = vmatprep.subr.bf16.mxu0 0
    %4907 = vmatpush1.bf16.msra.mxu0 0
    %4908 = vmatprep.subr.bf16.mxu0 %v4867
    %4909 = vmatpush1.bf16.msra.mxu0 %v4866
    %4910 = vmatprep.subr.bf16.mxu0 %v4865
    %4911 = vmatpush1.bf16.msra.mxu0 %v4864
    %4912 = vmatprep.subr.bf16.mxu0 %v4863
    %4913 = vmatpush1.bf16.msra.mxu0 %v4862
    %4914 = vmatprep.subr.bf16.mxu0 %v4861
    %4915 = vmatpush1.bf16.msra.mxu0 %v4860
    %4916 = vmatprep.subr.bf16.mxu0 0
    %4917 = vmatpush2.bf16.msra.mxu0 0
    %4918 = vmatprep.subr.bf16.mxu0 0
    %4919 = vmatpush2.bf16.msra.mxu0 0
    %4920 = vmatprep.subr.bf16.mxu0 0
    %4921 = vmatpush2.bf16.msra.mxu0 0
    %4922 = vmatprep.subr.bf16.mxu0 0
    %4923 = vmatpush2.bf16.msra.mxu0 0
    %4924 = vmatprep.subr.bf16.mxu0 0
    %4925 = vmatpush2.bf16.msra.mxu0 0
    %4926 = vmatprep.subr.bf16.mxu0 0
    %4927 = vmatpush2.bf16.msra.mxu0 0
    %4928 = vmatprep.subr.bf16.mxu0 0
    %4929 = vmatpush2.bf16.msra.mxu0 0
    %4930 = vmatprep.subr.bf16.mxu0 0
    %4931 = vmatpush2.bf16.msra.mxu0 0
    %4932 = vmatprep.mubr.bf16.mxu0 0
    %4933 = vmatmul.mubr.bf16.gmra.mxu0 %v4877
    %v4934 = vpop.f32.mrf.mxu0
    %v4935 = vadd.f32 0.0, %v4934
    %v4936 = vpop.f32.mrf.mxu0
    %v4937 = vadd.f32 0.0, %v4936
    %v4938 = vpop.f32.mrf.mxu0
    %v4939 = vadd.f32 0.0, %v4938
    %v4940 = vpop.f32.mrf.mxu0
    %v4941 = vadd.f32 0.0, %v4940
    %4942 = vmatprep.mubr.bf16.mxu0 0
    %4943 = vmatmul.mubr.bf16.gmra.mxu0 %v4880
    %v4944 = vpop.f32.mrf.mxu0
    %v4945 = vadd.f32 0.0, %v4944
    %v4946 = vpop.f32.mrf.mxu0
    %v4947 = vadd.f32 0.0, %v4946
    %v4948 = vpop.f32.mrf.mxu0
    %v4949 = vadd.f32 0.0, %v4948
    %v4950 = vpop.f32.mrf.mxu0
    %v4951 = vadd.f32 0.0, %v4950
    %4952 = vmatprep.mubr.bf16.mxu0 0
    %4953 = vmatmul.mubr.bf16.gmra.mxu0 %v4883
    %v4954 = vpop.f32.mrf.mxu0
    %v4955 = vadd.f32 0.0, %v4954
    %v4956 = vpop.f32.mrf.mxu0
    %v4957 = vadd.f32 0.0, %v4956
    %v4958 = vpop.f32.mrf.mxu0
    %v4959 = vadd.f32 0.0, %v4958
    %v4960 = vpop.f32.mrf.mxu0
    %v4961 = vadd.f32 0.0, %v4960
    %4962 = vmatprep.mubr.bf16.mxu0 0
    %4963 = vmatmul.mubr.bf16.gmra.mxu0 %v4886
    %v4964 = vpop.f32.mrf.mxu0
    %v4965 = vadd.f32 0.0, %v4964
    %v4966 = vpop.f32.mrf.mxu0
    %v4967 = vadd.f32 0.0, %v4966
    %v4968 = vpop.f32.mrf.mxu0
    %v4969 = vadd.f32 0.0, %v4968
    %v4970 = vpop.f32.mrf.mxu0
    %v4971 = vadd.f32 0.0, %v4970
    %4972 = vmatprep.mubr.bf16.mxu0 0
    %4973 = vmatmul.mubr.bf16.gmra.mxu0 %v4889
    %v4974 = vpop.f32.mrf.mxu0
    %v4975 = vadd.f32 0.0, %v4974
    %v4976 = vpop.f32.mrf.mxu0
    %v4977 = vadd.f32 0.0, %v4976
    %v4978 = vpop.f32.mrf.mxu0
    %v4979 = vadd.f32 0.0, %v4978
    %v4980 = vpop.f32.mrf.mxu0
    %v4981 = vadd.f32 0.0, %v4980
    %4982 = vmatprep.mubr.bf16.mxu0 0
    %4983 = vmatmul.mubr.bf16.gmra.mxu0 %v4892
    %v4984 = vpop.f32.mrf.mxu0
    %v4985 = vadd.f32 0.0, %v4984
    %v4986 = vpop.f32.mrf.mxu0
    %v4987 = vadd.f32 0.0, %v4986
    %v4988 = vpop.f32.mrf.mxu0
    %v4989 = vadd.f32 0.0, %v4988
    %v4990 = vpop.f32.mrf.mxu0
    %v4991 = vadd.f32 0.0, %v4990
    %4992 = vmatprep.mubr.bf16.mxu0 0
    %4993 = vmatmul.mubr.bf16.gmra.mxu0 %v4895
    %v4994 = vpop.f32.mrf.mxu0
    %v4995 = vadd.f32 0.0, %v4994
    %v4996 = vpop.f32.mrf.mxu0
    %v4997 = vadd.f32 0.0, %v4996
    %v4998 = vpop.f32.mrf.mxu0
    %v4999 = vadd.f32 0.0, %v4998
    %v5000 = vpop.f32.mrf.mxu0
    %v5001 = vadd.f32 0.0, %v5000
    %5002 = vmatprep.mubr.bf16.mxu0 0
    %5003 = vmatmul.mubr.bf16.gmra.mxu0 %v4898
    %v5004 = vpop.f32.mrf.mxu0
    %v5005 = vadd.f32 0.0, %v5004
    %v5006 = vpop.f32.mrf.mxu0
    %v5007 = vadd.f32 0.0, %v5006
    %v5008 = vpop.f32.mrf.mxu0
    %v5009 = vadd.f32 0.0, %v5008
    %v5010 = vpop.f32.mrf.mxu0
    %v5011 = vadd.f32 0.0, %v5010
    %5012 = vdwg.mxu0
    %v5013 = vpack.c.bf16 %v4939, %v4935
    %v5014 = vpack.c.bf16 %v4941, %v4937
    %v5015 = vpack.c.bf16 %v4949, %v4945
    %v5016 = vpack.c.bf16 %v4951, %v4947
    %v5017 = vpack.c.bf16 %v4959, %v4955
    %v5018 = vpack.c.bf16 %v4961, %v4957
    %v5019 = vpack.c.bf16 %v4969, %v4965
    %v5020 = vpack.c.bf16 %v4971, %v4967
    %v5021 = vpack.c.bf16 %v4979, %v4975
    %v5022 = vpack.c.bf16 %v4981, %v4977
    %v5023 = vpack.c.bf16 %v4989, %v4985
    %v5024 = vpack.c.bf16 %v4991, %v4987
    %v5025 = vpack.c.bf16 %v4999, %v4995
    %v5026 = vpack.c.bf16 %v5001, %v4997
    %v5027 = vpack.c.bf16 %v5009, %v5005
    %v5028 = vpack.c.bf16 %v5011, %v5007
    %v5029 = vld [vmem:[%s10] sm:$0xf]
    %v5030 = vld [vmem:[%s10 + $0x4] sm:$0xf]
    %v5031 = vld [vmem:[%s10 + $0x8] sm:$0xf]
    %v5032 = vld [vmem:[%s10 + $0xc] sm:$0xf]
    %v5033 = vld [vmem:[%s10 + $0x10] sm:$0xf]
    %v5034 = vld [vmem:[%s10 + $0x14] sm:$0xf]
    %v5035 = vld [vmem:[%s10 + $0x18] sm:$0xf]
    %v5036 = vld [vmem:[%s10 + $0x1c] sm:$0xf]
    %v5037 = vld [vmem:[%s10 + $0x20] sm:$0xf]
    %v5038 = vld [vmem:[%s10 + $0x24] sm:$0xf]
    %v5039 = vld [vmem:[%s10 + $0x28] sm:$0xf]
    %v5040 = vld [vmem:[%s10 + $0x2c] sm:$0xf]
    %v5041 = vld [vmem:[%s10 + $0x30] sm:$0xf]
    %v5042 = vld [vmem:[%s10 + $0x34] sm:$0xf]
    %v5043 = vld [vmem:[%s10 + $0x38] sm:$0xf]
    %v5044 = vld [vmem:[%s10 + $0x3c] sm:$0xf]
    %v5045 = vld [vmem:[%s10 + $0x40] sm:$0xf]
    %v5046 = vld [vmem:[%s10 + $0x44] sm:$0xf]
    %v5047 = vld [vmem:[%s10 + $0x48] sm:$0xf]
    %v5048 = vld [vmem:[%s10 + $0x4c] sm:$0xf]
    %v5049 = vld [vmem:[%s10 + $0x50] sm:$0xf]
    %v5050 = vld [vmem:[%s10 + $0x54] sm:$0xf]
    %v5051 = vld [vmem:[%s10 + $0x58] sm:$0xf]
    %v5052 = vld [vmem:[%s10 + $0x5c] sm:$0xf]
    %v5053 = vld [vmem:[%s10 + $0x60] sm:$0xf]
    %v5054 = vld [vmem:[%s10 + $0x64] sm:$0xf]
    %v5055 = vld [vmem:[%s10 + $0x68] sm:$0xf]
    %v5056 = vld [vmem:[%s10 + $0x6c] sm:$0xf]
    %v5057 = vld [vmem:[%s10 + $0x70] sm:$0xf]
    %v5058 = vld [vmem:[%s10 + $0x74] sm:$0xf]
    %v5059 = vld [vmem:[%s10 + $0x78] sm:$0xf]
    %v5060 = vld [vmem:[%s10 + $0x7c] sm:$0xf]
    %v5093 = vunpack.c.l.b16 %v5029
    %v5094 = vunpack.c.l.b16 %v5030
    %v5095 = vunpack.c.l.b16 %v5031
    %v5096 = vunpack.c.l.b16 %v5032
    %v5097 = vunpack.c.l.b16 %v5033
    %v5098 = vunpack.c.l.b16 %v5034
    %v5099 = vunpack.c.l.b16 %v5035
    %v5100 = vunpack.c.l.b16 %v5036
    %v5101 = vunpack.c.l.b16 %v5037
    %v5102 = vunpack.c.l.b16 %v5038
    %v5103 = vunpack.c.l.b16 %v5039
    %v5104 = vunpack.c.l.b16 %v5040
    %v5105 = vunpack.c.l.b16 %v5041
    %v5106 = vunpack.c.l.b16 %v5042
    %v5107 = vunpack.c.l.b16 %v5043
    %v5108 = vunpack.c.l.b16 %v5044
    %v5109 = vunpack.c.l.b16 %v5045
    %v5110 = vunpack.c.l.b16 %v5046
    %v5111 = vunpack.c.l.b16 %v5047
    %v5112 = vunpack.c.l.b16 %v5048
    %v5113 = vunpack.c.l.b16 %v5049
    %v5114 = vunpack.c.l.b16 %v5050
    %v5115 = vunpack.c.l.b16 %v5051
    %v5116 = vunpack.c.l.b16 %v5052
    %v5117 = vunpack.c.l.b16 %v5053
    %v5118 = vunpack.c.l.b16 %v5054
    %v5119 = vunpack.c.l.b16 %v5055
    %v5120 = vunpack.c.l.b16 %v5056
    %v5121 = vunpack.c.l.b16 %v5057
    %v5122 = vunpack.c.l.b16 %v5058
    %v5123 = vunpack.c.l.b16 %v5059
    %v5124 = vunpack.c.l.b16 %v5060
    %v5125 = vpack.c.b16 %v5094, %v5093
    %v5126 = vpack.c.b16 %v5096, %v5095
    %v5127 = vpack.c.b16 %v5098, %v5097
    %v5128 = vpack.c.b16 %v5100, %v5099
    %v5129 = vpack.c.b16 %v5102, %v5101
    %v5130 = vpack.c.b16 %v5104, %v5103
    %v5131 = vpack.c.b16 %v5106, %v5105
    %v5132 = vpack.c.b16 %v5108, %v5107
    %v5133 = vpack.c.b16 %v5110, %v5109
    %v5134 = vpack.c.b16 %v5112, %v5111
    %v5135 = vpack.c.b16 %v5114, %v5113
    %v5136 = vpack.c.b16 %v5116, %v5115
    %v5137 = vpack.c.b16 %v5118, %v5117
    %v5138 = vpack.c.b16 %v5120, %v5119
    %v5139 = vpack.c.b16 %v5122, %v5121
    %v5140 = vpack.c.b16 %v5124, %v5123
    %5157 = vmatprep.subr.bf16.mxu0 0
    %5158 = vmatpush1.bf16.msra.mxu0 %v5132
    %5159 = vmatprep.subr.bf16.mxu0 0
    %5160 = vmatpush1.bf16.msra.mxu0 %v5131
    %5161 = vmatprep.subr.bf16.mxu0 0
    %5162 = vmatpush1.bf16.msra.mxu0 %v5130
    %5163 = vmatprep.subr.bf16.mxu0 0
    %5164 = vmatpush1.bf16.msra.mxu0 %v5129
    %5165 = vmatprep.subr.bf16.mxu0 0
    %5166 = vmatpush1.bf16.msra.mxu0 %v5128
    %5167 = vmatprep.subr.bf16.mxu0 0
    %5168 = vmatpush1.bf16.msra.mxu0 %v5127
    %5169 = vmatprep.subr.bf16.mxu0 0
    %5170 = vmatpush1.bf16.msra.mxu0 %v5126
    %5171 = vmatprep.subr.bf16.mxu0 0
    %5172 = vmatpush1.bf16.msra.mxu0 %v5125
    %5173 = vmatprep.subr.bf16.mxu0 0
    %5174 = vmatpush2.bf16.msra.mxu0 %v5140
    %5175 = vmatprep.subr.bf16.mxu0 0
    %5176 = vmatpush2.bf16.msra.mxu0 %v5139
    %5177 = vmatprep.subr.bf16.mxu0 0
    %5178 = vmatpush2.bf16.msra.mxu0 %v5138
    %5179 = vmatprep.subr.bf16.mxu0 0
    %5180 = vmatpush2.bf16.msra.mxu0 %v5137
    %5181 = vmatprep.subr.bf16.mxu0 0
    %5182 = vmatpush2.bf16.msra.mxu0 %v5136
    %5183 = vmatprep.subr.bf16.mxu0 0
    %5184 = vmatpush2.bf16.msra.mxu0 %v5135
    %5185 = vmatprep.subr.bf16.mxu0 0
    %5186 = vmatpush2.bf16.msra.mxu0 %v5134
    %5187 = vmatprep.subr.bf16.mxu0 0
    %5188 = vmatpush2.bf16.msra.mxu0 %v5133
    %5189 = vmatprep.mubr.bf16.mxu0 %v5014
    %5190 = vmatmul.mubr.bf16.gmra.mxu0 %v5013
    %v5191 = vpop.f32.mrf.mxu0
    %v5192 = vadd.f32 0.0, %v5191
    %v5193 = vpop.f32.mrf.mxu0
    %v5194 = vpop.f32.mrf.mxu0
    %v5195 = vadd.f32 0.0, %v5194
    %v5196 = vpop.f32.mrf.mxu0
    %5197 = vmatprep.mubr.bf16.mxu0 %v5016
    %5198 = vmatmul.mubr.bf16.gmra.mxu0 %v5015
    %v5199 = vpop.f32.mrf.mxu0
    %v5200 = vadd.f32 0.0, %v5199
    %v5201 = vpop.f32.mrf.mxu0
    %v5202 = vpop.f32.mrf.mxu0
    %v5203 = vadd.f32 0.0, %v5202
    %v5204 = vpop.f32.mrf.mxu0
    %5205 = vmatprep.mubr.bf16.mxu0 %v5018
    %5206 = vmatmul.mubr.bf16.gmra.mxu0 %v5017
    %v5207 = vpop.f32.mrf.mxu0
    %v5208 = vadd.f32 0.0, %v5207
    %v5209 = vpop.f32.mrf.mxu0
    %v5210 = vpop.f32.mrf.mxu0
    %v5211 = vadd.f32 0.0, %v5210
    %v5212 = vpop.f32.mrf.mxu0
    %5213 = vmatprep.mubr.bf16.mxu0 %v5020
    %5214 = vmatmul.mubr.bf16.gmra.mxu0 %v5019
    %v5215 = vpop.f32.mrf.mxu0
    %v5216 = vadd.f32 0.0, %v5215
    %v5217 = vpop.f32.mrf.mxu0
    %v5218 = vpop.f32.mrf.mxu0
    %v5219 = vadd.f32 0.0, %v5218
    %v5220 = vpop.f32.mrf.mxu0
    %5221 = vmatprep.mubr.bf16.mxu0 %v5022
    %5222 = vmatmul.mubr.bf16.gmra.mxu0 %v5021
    %v5223 = vpop.f32.mrf.mxu0
    %v5224 = vadd.f32 0.0, %v5223
    %v5225 = vpop.f32.mrf.mxu0
    %v5226 = vpop.f32.mrf.mxu0
    %v5227 = vadd.f32 0.0, %v5226
    %v5228 = vpop.f32.mrf.mxu0
    %5229 = vmatprep.mubr.bf16.mxu0 %v5024
    %5230 = vmatmul.mubr.bf16.gmra.mxu0 %v5023
    %v5231 = vpop.f32.mrf.mxu0
    %v5232 = vadd.f32 0.0, %v5231
    %v5233 = vpop.f32.mrf.mxu0
    %v5234 = vpop.f32.mrf.mxu0
    %v5235 = vadd.f32 0.0, %v5234
    %v5236 = vpop.f32.mrf.mxu0
    %5237 = vmatprep.mubr.bf16.mxu0 %v5026
    %5238 = vmatmul.mubr.bf16.gmra.mxu0 %v5025
    %v5239 = vpop.f32.mrf.mxu0
    %v5240 = vadd.f32 0.0, %v5239
    %v5241 = vpop.f32.mrf.mxu0
    %v5242 = vpop.f32.mrf.mxu0
    %v5243 = vadd.f32 0.0, %v5242
    %v5244 = vpop.f32.mrf.mxu0
    %5245 = vmatprep.mubr.bf16.mxu0 %v5028
    %5246 = vmatmul.mubr.bf16.gmra.mxu0 %v5027
    %v5247 = vpop.f32.mrf.mxu0
    %v5248 = vadd.f32 0.0, %v5247
    %v5249 = vpop.f32.mrf.mxu0
    %v5250 = vpop.f32.mrf.mxu0
    %v5251 = vadd.f32 0.0, %v5250
    %v5252 = vpop.f32.mrf.mxu0
    %5253 = vdwg.mxu0
    %v5254 = vadd.f32 %v4804, %v5192
    %v5255 = vadd.f32 %v4805, %v5195
    %v5256 = vadd.f32 %v4806, %v5200
    %v5257 = vadd.f32 %v4807, %v5203
    %v5258 = vadd.f32 %v4808, %v5208
    %v5259 = vadd.f32 %v4809, %v5211
    %v5260 = vadd.f32 %v4810, %v5216
    %v5261 = vadd.f32 %v4811, %v5219
    %v5262 = vadd.f32 %v4812, %v5224
    %v5263 = vadd.f32 %v4813, %v5227
    %v5264 = vadd.f32 %v4814, %v5232
    %v5265 = vadd.f32 %v4815, %v5235
    %v5266 = vadd.f32 %v4816, %v5240
    %v5267 = vadd.f32 %v4817, %v5243
    %v5268 = vadd.f32 %v4818, %v5248
    %v5269 = vadd.f32 %v4819, %v5251
    %v5270 = vsel %vm232, %v5254, 0.0
    %5271 = vadd.xlane.f32.xlu0 %v5270
    %v5272 = vpop.xlane.xlu0 %5271
    %v5273 = vsel %vm232, %v5255, 0.0
    %5274 = vadd.xlane.f32.xlu0 %v5273
    %v5275 = vpop.xlane.xlu0 %5274
    %v5276 = vsel %vm232, %v5256, 0.0
    %5277 = vadd.xlane.f32.xlu0 %v5276
    %v5278 = vpop.xlane.xlu0 %5277
    %v5279 = vsel %vm232, %v5257, 0.0
    %5280 = vadd.xlane.f32.xlu0 %v5279
    %v5281 = vpop.xlane.xlu0 %5280
    %v5282 = vsel %vm232, %v5258, 0.0
    %5283 = vadd.xlane.f32.xlu0 %v5282
    %v5284 = vpop.xlane.xlu0 %5283
    %v5285 = vsel %vm232, %v5259, 0.0
    %5286 = vadd.xlane.f32.xlu0 %v5285
    %v5287 = vpop.xlane.xlu0 %5286
    %v5288 = vsel %vm232, %v5260, 0.0
    %5289 = vadd.xlane.f32.xlu0 %v5288
    %v5290 = vpop.xlane.xlu0 %5289
    %v5291 = vsel %vm232, %v5261, 0.0
    %5292 = vadd.xlane.f32.xlu0 %v5291
    %v5293 = vpop.xlane.xlu0 %5292
    %v5294 = vsel %vm232, %v5262, 0.0
    %5295 = vadd.xlane.f32.xlu0 %v5294
    %v5296 = vpop.xlane.xlu0 %5295
    %v5297 = vsel %vm232, %v5263, 0.0
    %5298 = vadd.xlane.f32.xlu0 %v5297
    %v5299 = vpop.xlane.xlu0 %5298
    %v5300 = vsel %vm232, %v5264, 0.0
    %5301 = vadd.xlane.f32.xlu0 %v5300
    %v5302 = vpop.xlane.xlu0 %5301
    %v5303 = vsel %vm232, %v5265, 0.0
    %5304 = vadd.xlane.f32.xlu0 %v5303
    %v5305 = vpop.xlane.xlu0 %5304
    %v5306 = vsel %vm232, %v5266, 0.0
    %5307 = vadd.xlane.f32.xlu0 %v5306
    %v5308 = vpop.xlane.xlu0 %5307
    %v5309 = vsel %vm232, %v5267, 0.0
    %5310 = vadd.xlane.f32.xlu0 %v5309
    %v5311 = vpop.xlane.xlu0 %5310
    %v5312 = vsel %vm232, %v5268, 0.0
    %5313 = vadd.xlane.f32.xlu0 %v5312
    %v5314 = vpop.xlane.xlu0 %5313
    %v5315 = vsel %vm232, %v5269, 0.0
    %5316 = vadd.xlane.f32.xlu0 %v5315
    %v5317 = vpop.xlane.xlu0 %5316
    %v5318 = vmul.f32 %v5272, %v4613
    %v5319 = vmul.f32 %v5275, %v4613
    %v5320 = vmul.f32 %v5278, %v4613
    %v5321 = vmul.f32 %v5281, %v4613
    %v5322 = vmul.f32 %v5284, %v4613
    %v5323 = vmul.f32 %v5287, %v4613
    %v5324 = vmul.f32 %v5290, %v4613
    %v5325 = vmul.f32 %v5293, %v4613
    %v5326 = vmul.f32 %v5296, %v4613
    %v5327 = vmul.f32 %v5299, %v4613
    %v5328 = vmul.f32 %v5302, %v4613
    %v5329 = vmul.f32 %v5305, %v4613
    %v5330 = vmul.f32 %v5308, %v4613
    %v5331 = vmul.f32 %v5311, %v4613
    %v5332 = vmul.f32 %v5314, %v4613
    %v5333 = vmul.f32 %v5317, %v4613
    %v5334 = vsub.f32 %v5254, %v5318
    %v5335 = vsub.f32 %v5255, %v5319
    %v5336 = vsub.f32 %v5256, %v5320
    %v5337 = vsub.f32 %v5257, %v5321
    %v5338 = vsub.f32 %v5258, %v5322
    %v5339 = vsub.f32 %v5259, %v5323
    %v5340 = vsub.f32 %v5260, %v5324
    %v5341 = vsub.f32 %v5261, %v5325
    %v5342 = vsub.f32 %v5262, %v5326
    %v5343 = vsub.f32 %v5263, %v5327
    %v5344 = vsub.f32 %v5264, %v5328
    %v5345 = vsub.f32 %v5265, %v5329
    %v5346 = vsub.f32 %v5266, %v5330
    %v5347 = vsub.f32 %v5267, %v5331
    %v5348 = vsub.f32 %v5268, %v5332
    %v5349 = vsub.f32 %v5269, %v5333
    %v5350 = vmul.f32 %v5334, %v5334
    %v5351 = vmul.f32 %v5335, %v5335
    %v5352 = vmul.f32 %v5336, %v5336
    %v5353 = vmul.f32 %v5337, %v5337
    %v5354 = vmul.f32 %v5338, %v5338
    %v5355 = vmul.f32 %v5339, %v5339
    %v5356 = vmul.f32 %v5340, %v5340
    %v5357 = vmul.f32 %v5341, %v5341
    %v5358 = vmul.f32 %v5342, %v5342
    %v5359 = vmul.f32 %v5343, %v5343
    %v5360 = vmul.f32 %v5344, %v5344
    %v5361 = vmul.f32 %v5345, %v5345
    %v5362 = vmul.f32 %v5346, %v5346
    %v5363 = vmul.f32 %v5347, %v5347
    %v5364 = vmul.f32 %v5348, %v5348
    %v5365 = vmul.f32 %v5349, %v5349
    %v5366 = vsel %vm232, %v5350, 0.0
    %5367 = vadd.xlane.f32.xlu0 %v5366
    %v5368 = vpop.xlane.xlu0 %5367
    %v5369 = vsel %vm232, %v5351, 0.0
    %5370 = vadd.xlane.f32.xlu0 %v5369
    %v5371 = vpop.xlane.xlu0 %5370
    %v5372 = vsel %vm232, %v5352, 0.0
    %5373 = vadd.xlane.f32.xlu0 %v5372
    %v5374 = vpop.xlane.xlu0 %5373
    %v5375 = vsel %vm232, %v5353, 0.0
    %5376 = vadd.xlane.f32.xlu0 %v5375
    %v5377 = vpop.xlane.xlu0 %5376
    %v5378 = vsel %vm232, %v5354, 0.0
    %5379 = vadd.xlane.f32.xlu0 %v5378
    %v5380 = vpop.xlane.xlu0 %5379
    %v5381 = vsel %vm232, %v5355, 0.0
    %5382 = vadd.xlane.f32.xlu0 %v5381
    %v5383 = vpop.xlane.xlu0 %5382
    %v5384 = vsel %vm232, %v5356, 0.0
    %5385 = vadd.xlane.f32.xlu0 %v5384
    %v5386 = vpop.xlane.xlu0 %5385
    %v5387 = vsel %vm232, %v5357, 0.0
    %5388 = vadd.xlane.f32.xlu0 %v5387
    %v5389 = vpop.xlane.xlu0 %5388
    %v5390 = vsel %vm232, %v5358, 0.0
    %5391 = vadd.xlane.f32.xlu0 %v5390
    %v5392 = vpop.xlane.xlu0 %5391
    %v5393 = vsel %vm232, %v5359, 0.0
    %5394 = vadd.xlane.f32.xlu0 %v5393
    %v5395 = vpop.xlane.xlu0 %5394
    %v5396 = vsel %vm232, %v5360, 0.0
    %5397 = vadd.xlane.f32.xlu0 %v5396
    %v5398 = vpop.xlane.xlu0 %5397
    %v5399 = vsel %vm232, %v5361, 0.0
    %5400 = vadd.xlane.f32.xlu0 %v5399
    %v5401 = vpop.xlane.xlu0 %5400
    %v5402 = vsel %vm232, %v5362, 0.0
    %5403 = vadd.xlane.f32.xlu0 %v5402
    %v5404 = vpop.xlane.xlu0 %5403
    %v5405 = vsel %vm232, %v5363, 0.0
    %5406 = vadd.xlane.f32.xlu0 %v5405
    %v5407 = vpop.xlane.xlu0 %5406
    %v5408 = vsel %vm232, %v5364, 0.0
    %5409 = vadd.xlane.f32.xlu0 %v5408
    %v5410 = vpop.xlane.xlu0 %5409
    %v5411 = vsel %vm232, %v5365, 0.0
    %5412 = vadd.xlane.f32.xlu0 %v5411
    %v5413 = vpop.xlane.xlu0 %5412
    %v5414 = vmul.f32 %v5368, %v4613
    %v5415 = vmul.f32 %v5371, %v4613
    %v5416 = vmul.f32 %v5374, %v4613
    %v5417 = vmul.f32 %v5377, %v4613
    %v5418 = vmul.f32 %v5380, %v4613
    %v5419 = vmul.f32 %v5383, %v4613
    %v5420 = vmul.f32 %v5386, %v4613
    %v5421 = vmul.f32 %v5389, %v4613
    %v5422 = vmul.f32 %v5392, %v4613
    %v5423 = vmul.f32 %v5395, %v4613
    %v5424 = vmul.f32 %v5398, %v4613
    %v5425 = vmul.f32 %v5401, %v4613
    %v5426 = vmul.f32 %v5404, %v4613
    %v5427 = vmul.f32 %v5407, %v4613
    %v5428 = vmul.f32 %v5410, %v4613
    %v5429 = vmul.f32 %v5413, %v4613
    %v5430 = vadd.f32 %v5414, 1e-06
    %v5431 = vadd.f32 %v5415, 1e-06
    %v5432 = vadd.f32 %v5416, 1e-06
    %v5433 = vadd.f32 %v5417, 1e-06
    %v5434 = vadd.f32 %v5418, 1e-06
    %v5435 = vadd.f32 %v5419, 1e-06
    %v5436 = vadd.f32 %v5420, 1e-06
    %v5437 = vadd.f32 %v5421, 1e-06
    %v5438 = vadd.f32 %v5422, 1e-06
    %v5439 = vadd.f32 %v5423, 1e-06
    %v5440 = vadd.f32 %v5424, 1e-06
    %v5441 = vadd.f32 %v5425, 1e-06
    %v5442 = vadd.f32 %v5426, 1e-06
    %v5443 = vadd.f32 %v5427, 1e-06
    %v5444 = vadd.f32 %v5428, 1e-06
    %v5445 = vadd.f32 %v5429, 1e-06
    %v5446 = vrsqrt.pop %v5430
    %v5447 = vrsqrt.pop %v5431
    %v5448 = vrsqrt.pop %v5432
    %v5449 = vrsqrt.pop %v5433
    %v5450 = vrsqrt.pop %v5434
    %v5451 = vrsqrt.pop %v5435
    %v5452 = vrsqrt.pop %v5436
    %v5453 = vrsqrt.pop %v5437
    %v5454 = vrsqrt.pop %v5438
    %v5455 = vrsqrt.pop %v5439
    %v5456 = vrsqrt.pop %v5440
    %v5457 = vrsqrt.pop %v5441
    %v5458 = vrsqrt.pop %v5442
    %v5459 = vrsqrt.pop %v5443
    %v5460 = vrsqrt.pop %v5444
    %v5461 = vrsqrt.pop %v5445
    %v5462 = vmul.f32 %v5334, %v5446
    %v5463 = vmul.f32 %v5335, %v5447
    %v5464 = vmul.f32 %v5336, %v5448
    %v5465 = vmul.f32 %v5337, %v5449
    %v5466 = vmul.f32 %v5338, %v5450
    %v5467 = vmul.f32 %v5339, %v5451
    %v5468 = vmul.f32 %v5340, %v5452
    %v5469 = vmul.f32 %v5341, %v5453
    %v5470 = vmul.f32 %v5342, %v5454
    %v5471 = vmul.f32 %v5343, %v5455
    %v5472 = vmul.f32 %v5344, %v5456
    %v5473 = vmul.f32 %v5345, %v5457
    %v5474 = vmul.f32 %v5346, %v5458
    %v5475 = vmul.f32 %v5347, %v5459
    %v5476 = vmul.f32 %v5348, %v5460
    %v5477 = vmul.f32 %v5349, %v5461
    %v5478 = vld [vmem:[%s11] sm:$0x1]
    %v5480 = vlaneseq
    %v5481 = vshrl.u32 %v5480, 7
    %v5482 = vsub.s32 0, %v5481
    %v5483 = vrot.slane %v5478, %v5482
    %v5485 = vmul.f32 %v5462, %v5483
    %v5486 = vmul.f32 %v5463, %v5483
    %v5487 = vmul.f32 %v5464, %v5483
    %v5488 = vmul.f32 %v5465, %v5483
    %v5489 = vmul.f32 %v5466, %v5483
    %v5490 = vmul.f32 %v5467, %v5483
    %v5491 = vmul.f32 %v5468, %v5483
    %v5492 = vmul.f32 %v5469, %v5483
    %v5493 = vmul.f32 %v5470, %v5483
    %v5494 = vmul.f32 %v5471, %v5483
    %v5495 = vmul.f32 %v5472, %v5483
    %v5496 = vmul.f32 %v5473, %v5483
    %v5497 = vmul.f32 %v5474, %v5483
    %v5498 = vmul.f32 %v5475, %v5483
    %v5499 = vmul.f32 %v5476, %v5483
    %v5500 = vmul.f32 %v5477, %v5483
    %v5501 = vld [vmem:[%s12] sm:$0x1]
    %v5503 = vlaneseq
    %v5504 = vshrl.u32 %v5503, 7
    %v5505 = vsub.s32 0, %v5504
    %v5506 = vrot.slane %v5501, %v5505
    %v5508 = vadd.f32 %v5485, %v5506
    %v5509 = vadd.f32 %v5486, %v5506
    %v5510 = vadd.f32 %v5487, %v5506
    %v5511 = vadd.f32 %v5488, %v5506
    %v5512 = vadd.f32 %v5489, %v5506
    %v5513 = vadd.f32 %v5490, %v5506
    %v5514 = vadd.f32 %v5491, %v5506
    %v5515 = vadd.f32 %v5492, %v5506
    %v5516 = vadd.f32 %v5493, %v5506
    %v5517 = vadd.f32 %v5494, %v5506
    %v5518 = vadd.f32 %v5495, %v5506
    %v5519 = vadd.f32 %v5496, %v5506
    %v5520 = vadd.f32 %v5497, %v5506
    %v5521 = vadd.f32 %v5498, %v5506
    %v5522 = vadd.f32 %v5499, %v5506
    %v5523 = vadd.f32 %v5500, %v5506
    %v5524 = vsel %vm232, %v5508, 0.0
    %v5525 = vsel %vm232, %v5509, 0.0
    %v5526 = vadd.f32 %v5524, %v5525
    %v5527 = vsel %vm232, %v5510, 0.0
    %v5528 = vadd.f32 %v5526, %v5527
    %v5529 = vsel %vm232, %v5511, 0.0
    %v5530 = vadd.f32 %v5528, %v5529
    %v5531 = vsel %vm232, %v5512, 0.0
    %v5532 = vadd.f32 %v5530, %v5531
    %v5533 = vsel %vm232, %v5513, 0.0
    %v5534 = vadd.f32 %v5532, %v5533
    %v5535 = vsel %vm232, %v5514, 0.0
    %v5536 = vadd.f32 %v5534, %v5535
    %v5537 = vsel %vm232, %v5515, 0.0
    %v5538 = vadd.f32 %v5536, %v5537
    %v5539 = vrot.slane %v5538, 4
    %v5540 = vadd.f32 %v5538, %v5539
    %v5541 = vrot.slane %v5540, 2
    %v5542 = vadd.f32 %v5540, %v5541
    %v5543 = vrot.slane %v5542, 1
    %v5544 = vadd.f32 %v5542, %v5543
    %v5545 = vmul.f32 %v5544, %v4613
    %v5546 = vsel %vm232, %v5516, 0.0
    %v5547 = vsel %vm232, %v5517, 0.0
    %v5548 = vadd.f32 %v5546, %v5547
    %v5549 = vsel %vm232, %v5518, 0.0
    %v5550 = vadd.f32 %v5548, %v5549
    %v5551 = vsel %vm232, %v5519, 0.0
    %v5552 = vadd.f32 %v5550, %v5551
    %v5553 = vsel %vm232, %v5520, 0.0
    %v5554 = vadd.f32 %v5552, %v5553
    %v5555 = vsel %vm232, %v5521, 0.0
    %v5556 = vadd.f32 %v5554, %v5555
    %v5557 = vsel %vm232, %v5522, 0.0
    %v5558 = vadd.f32 %v5556, %v5557
    %v5559 = vsel %vm232, %v5523, 0.0
    %v5560 = vadd.f32 %v5558, %v5559
    %v5561 = vrot.slane %v5560, 4
    %v5562 = vadd.f32 %v5560, %v5561
    %v5563 = vrot.slane %v5562, 2
    %v5564 = vadd.f32 %v5562, %v5563
    %v5565 = vrot.slane %v5564, 1
    %v5566 = vadd.f32 %v5564, %v5565
    %v5567 = vmul.f32 %v5566, %v4613
    %vm5568 = vcmask 1040384
    %v5569 = vsel %vm5568, %v5545, %v5567
    %v5570 = vpack.c.bf16 %v5569, %v5569
    %v5571 = vld [vmem:[%s13] sm:$0xff]
    %v5572 = vld [vmem:[%s13 + $0x8] sm:$0xff]
    %v5573 = vld [vmem:[%s13 + $0x10] sm:$0xff]
    %v5574 = vld [vmem:[%s13 + $0x18] sm:$0xff]
    %v5575 = vld [vmem:[%s13 + $0x20] sm:$0xff]
    %v5576 = vld [vmem:[%s13 + $0x28] sm:$0xff]
    %v5577 = vld [vmem:[%s13 + $0x30] sm:$0xff]
    %v5578 = vld [vmem:[%s13 + $0x38] sm:$0xff]
    %v5579 = vld [vmem:[%s13 + $0x40] sm:$0xff]
    %v5580 = vld [vmem:[%s13 + $0x48] sm:$0xff]
    %v5581 = vld [vmem:[%s13 + $0x50] sm:$0xff]
    %v5582 = vld [vmem:[%s13 + $0x58] sm:$0xff]
    %v5583 = vld [vmem:[%s13 + $0x60] sm:$0xff]
    %v5584 = vld [vmem:[%s13 + $0x68] sm:$0xff]
    %v5585 = vld [vmem:[%s13 + $0x70] sm:$0xff]
    %v5586 = vld [vmem:[%s13 + $0x78] sm:$0xff]
    %v5587 = vld [vmem:[%s14] sm:$0xf]
    %v5589 = vlaneseq
    %v5590 = vshrl.u32 %v5589, 7
    %v5591 = vsub.s32 0, %v5590
    %v5592 = vrot.slane %v5587, %v5591
    %v5593 = vlaneseq
    %v5594 = vshrl.u32 %v5593, 7
    %v5595 = vsub.s32 1, %v5594
    %v5596 = vrot.slane %v5587, %v5595
    %v5597 = vlaneseq
    %v5598 = vshrl.u32 %v5597, 7
    %v5599 = vsub.s32 2, %v5598
    %v5600 = vrot.slane %v5587, %v5599
    %v5601 = vlaneseq
    %v5602 = vshrl.u32 %v5601, 7
    %v5603 = vsub.s32 3, %v5602
    %v5604 = vrot.slane %v5587, %v5603
    %v5625 = vunpack.c.l.b16 %v5571
    %v5626 = vunpack.c.h.b16 %v5571
    %v5627 = vunpack.c.l.b16 %v5572
    %v5628 = vunpack.c.h.b16 %v5572
    %v5629 = vunpack.c.l.b16 %v5573
    %v5630 = vunpack.c.h.b16 %v5573
    %v5631 = vunpack.c.l.b16 %v5574
    %v5632 = vunpack.c.h.b16 %v5574
    %v5633 = vunpack.c.l.b16 %v5575
    %v5634 = vunpack.c.h.b16 %v5575
    %v5635 = vunpack.c.l.b16 %v5576
    %v5636 = vunpack.c.h.b16 %v5576
    %v5637 = vunpack.c.l.b16 %v5577
    %v5638 = vunpack.c.h.b16 %v5577
    %v5639 = vunpack.c.l.b16 %v5578
    %v5640 = vunpack.c.h.b16 %v5578
    %v5641 = vunpack.c.l.b16 %v5579
    %v5642 = vunpack.c.h.b16 %v5579
    %v5643 = vunpack.c.l.b16 %v5580
    %v5644 = vunpack.c.h.b16 %v5580
    %v5645 = vunpack.c.l.b16 %v5581
    %v5646 = vunpack.c.h.b16 %v5581
    %v5647 = vunpack.c.l.b16 %v5582
    %v5648 = vunpack.c.h.b16 %v5582
    %v5649 = vunpack.c.l.b16 %v5583
    %v5650 = vunpack.c.h.b16 %v5583
    %v5651 = vunpack.c.l.b16 %v5584
    %v5652 = vunpack.c.h.b16 %v5584
    %v5653 = vunpack.c.l.b16 %v5585
    %v5654 = vunpack.c.h.b16 %v5585
    %v5655 = vunpack.c.l.b16 %v5586
    %v5656 = vunpack.c.h.b16 %v5586
    %v5657 = vpack.c.b16 %v5629, %v5625
    %v5658 = vpack.c.b16 %v5630, %v5626
    %v5659 = vpack.c.b16 %v5631, %v5627
    %v5660 = vpack.c.b16 %v5632, %v5628
    %v5661 = vpack.c.b16 %v5637, %v5633
    %v5662 = vpack.c.b16 %v5638, %v5634
    %v5663 = vpack.c.b16 %v5639, %v5635
    %v5664 = vpack.c.b16 %v5640, %v5636
    %v5665 = vpack.c.b16 %v5645, %v5641
    %v5666 = vpack.c.b16 %v5646, %v5642
    %v5667 = vpack.c.b16 %v5647, %v5643
    %v5668 = vpack.c.b16 %v5648, %v5644
    %v5669 = vpack.c.b16 %v5653, %v5649
    %v5670 = vpack.c.b16 %v5654, %v5650
    %v5671 = vpack.c.b16 %v5655, %v5651
    %v5672 = vpack.c.b16 %v5656, %v5652
    %v5690 = vsel %vm232, %v5570, 0
    %5692 = vmatprep.subr.bf16.mxu0 0
    %5693 = vmatpush1.bf16.msra.mxu0 0
    %5694 = vmatprep.subr.bf16.mxu0 0
    %5695 = vmatpush1.bf16.msra.mxu0 0
    %5696 = vmatprep.subr.bf16.mxu0 0
    %5697 = vmatpush1.bf16.msra.mxu0 0
    %5698 = vmatprep.subr.bf16.mxu0 0
    %5699 = vmatpush1.bf16.msra.mxu0 0
    %5700 = vmatprep.subr.bf16.mxu0 %v5670
    %5701 = vmatpush1.bf16.msra.mxu0 %v5669
    %5702 = vmatprep.subr.bf16.mxu0 %v5666
    %5703 = vmatpush1.bf16.msra.mxu0 %v5665
    %5704 = vmatprep.subr.bf16.mxu0 %v5662
    %5705 = vmatpush1.bf16.msra.mxu0 %v5661
    %5706 = vmatprep.subr.bf16.mxu0 %v5658
    %5707 = vmatpush1.bf16.msra.mxu0 %v5657
    %5708 = vmatprep.subr.bf16.mxu0 0
    %5709 = vmatpush2.bf16.msra.mxu0 0
    %5710 = vmatprep.subr.bf16.mxu0 0
    %5711 = vmatpush2.bf16.msra.mxu0 0
    %5712 = vmatprep.subr.bf16.mxu0 0
    %5713 = vmatpush2.bf16.msra.mxu0 0
    %5714 = vmatprep.subr.bf16.mxu0 0
    %5715 = vmatpush2.bf16.msra.mxu0 0
    %5716 = vmatprep.subr.bf16.mxu0 0
    %5717 = vmatpush2.bf16.msra.mxu0 0
    %5718 = vmatprep.subr.bf16.mxu0 0
    %5719 = vmatpush2.bf16.msra.mxu0 0
    %5720 = vmatprep.subr.bf16.mxu0 0
    %5721 = vmatpush2.bf16.msra.mxu0 0
    %5722 = vmatprep.subr.bf16.mxu0 0
    %5723 = vmatpush2.bf16.msra.mxu0 0
    %5724 = vmatprep.mubr.bf16.mxu0 0
    %5725 = vmatmul.mubr.bf16.gmra.mxu0 %v5690
    %v5726 = vpop.f32.mrf.mxu0
    %v5727 = vadd.f32 %v5592, %v5726
    %v5728 = vpop.f32.mrf.mxu0
    %v5729 = vadd.f32 %v5596, %v5728
    %v5730 = vpop.f32.mrf.mxu0
    %v5731 = vpop.f32.mrf.mxu0
    %5732 = vdwg.mxu0
    %5733 = vmatprep.subr.bf16.mxu0 0
    %5734 = vmatpush1.bf16.msra.mxu0 0
    %5735 = vmatprep.subr.bf16.mxu0 0
    %5736 = vmatpush1.bf16.msra.mxu0 0
    %5737 = vmatprep.subr.bf16.mxu0 0
    %5738 = vmatpush1.bf16.msra.mxu0 0
    %5739 = vmatprep.subr.bf16.mxu0 0
    %5740 = vmatpush1.bf16.msra.mxu0 0
    %5741 = vmatprep.subr.bf16.mxu0 %v5672
    %5742 = vmatpush1.bf16.msra.mxu0 %v5671
    %5743 = vmatprep.subr.bf16.mxu0 %v5668
    %5744 = vmatpush1.bf16.msra.mxu0 %v5667
    %5745 = vmatprep.subr.bf16.mxu0 %v5664
    %5746 = vmatpush1.bf16.msra.mxu0 %v5663
    %5747 = vmatprep.subr.bf16.mxu0 %v5660
    %5748 = vmatpush1.bf16.msra.mxu0 %v5659
    %5749 = vmatprep.subr.bf16.mxu0 0
    %5750 = vmatpush2.bf16.msra.mxu0 0
    %5751 = vmatprep.subr.bf16.mxu0 0
    %5752 = vmatpush2.bf16.msra.mxu0 0
    %5753 = vmatprep.subr.bf16.mxu0 0
    %5754 = vmatpush2.bf16.msra.mxu0 0
    %5755 = vmatprep.subr.bf16.mxu0 0
    %5756 = vmatpush2.bf16.msra.mxu0 0
    %5757 = vmatprep.subr.bf16.mxu0 0
    %5758 = vmatpush2.bf16.msra.mxu0 0
    %5759 = vmatprep.subr.bf16.mxu0 0
    %5760 = vmatpush2.bf16.msra.mxu0 0
    %5761 = vmatprep.subr.bf16.mxu0 0
    %5762 = vmatpush2.bf16.msra.mxu0 0
    %5763 = vmatprep.subr.bf16.mxu0 0
    %5764 = vmatpush2.bf16.msra.mxu0 0
    %5765 = vmatprep.mubr.bf16.mxu0 0
    %5766 = vmatmul.mubr.bf16.gmra.mxu0 %v5690
    %v5767 = vpop.f32.mrf.mxu0
    %v5768 = vadd.f32 %v5600, %v5767
    %v5769 = vpop.f32.mrf.mxu0
    %v5770 = vadd.f32 %v5604, %v5769
    %v5771 = vpop.f32.mrf.mxu0
    %v5772 = vpop.f32.mrf.mxu0
    %5773 = vdwg.mxu0
    %v5774 = vmax.f32 %v5727, 0.0
    %v5775 = vmax.f32 %v5729, 0.0
    %v5776 = vmax.f32 %v5768, 0.0
    %v5777 = vmax.f32 %v5770, 0.0
    %v5778 = vmin.f32 %v5774, 6.0
    %v5779 = vmin.f32 %v5775, 6.0
    %v5780 = vmin.f32 %v5776, 6.0
    %v5781 = vmin.f32 %v5777, 6.0
    %v5782 = vpack.c.bf16 %v5778, %v5778
    %v5783 = vpack.c.bf16 %v5779, %v5779
    %v5784 = vpack.c.bf16 %v5780, %v5780
    %v5785 = vpack.c.bf16 %v5781, %v5781
    %v5786 = vld [vmem:[%s15] sm:$0xff]
    %v5787 = vld [vmem:[%s15 + $0x8] sm:$0xff]
    %v5788 = vld [vmem:[%s15 + $0x10] sm:$0xff]
    %v5789 = vld [vmem:[%s15 + $0x18] sm:$0xff]
    %v5790 = vld [vmem:[%s15 + $0x20] sm:$0xff]
    %v5791 = vld [vmem:[%s15 + $0x28] sm:$0xff]
    %v5792 = vld [vmem:[%s15 + $0x30] sm:$0xff]
    %v5793 = vld [vmem:[%s15 + $0x38] sm:$0xff]
    %v5794 = vld [vmem:[%s15 + $0x40] sm:$0xff]
    %v5795 = vld [vmem:[%s15 + $0x48] sm:$0xff]
    %v5796 = vld [vmem:[%s15 + $0x50] sm:$0xff]
    %v5797 = vld [vmem:[%s15 + $0x58] sm:$0xff]
    %v5798 = vld [vmem:[%s15 + $0x60] sm:$0xff]
    %v5799 = vld [vmem:[%s15 + $0x68] sm:$0xff]
    %v5800 = vld [vmem:[%s15 + $0x70] sm:$0xff]
    %v5801 = vld [vmem:[%s15 + $0x78] sm:$0xff]
    %v5802 = vld [vmem:[%s15 + $0x80] sm:$0xff]
    %v5803 = vld [vmem:[%s15 + $0x88] sm:$0xff]
    %v5804 = vld [vmem:[%s15 + $0x90] sm:$0xff]
    %v5805 = vld [vmem:[%s15 + $0x98] sm:$0xff]
    %v5806 = vld [vmem:[%s15 + $0xa0] sm:$0xff]
    %v5807 = vld [vmem:[%s15 + $0xa8] sm:$0xff]
    %v5808 = vld [vmem:[%s15 + $0xb0] sm:$0xff]
    %v5809 = vld [vmem:[%s15 + $0xb8] sm:$0xff]
    %v5810 = vld [vmem:[%s15 + $0xc0] sm:$0xff]
    %v5811 = vld [vmem:[%s15 + $0xc8] sm:$0xff]
    %v5812 = vld [vmem:[%s15 + $0xd0] sm:$0xff]
    %v5813 = vld [vmem:[%s15 + $0xd8] sm:$0xff]
    %v5814 = vld [vmem:[%s15 + $0xe0] sm:$0xff]
    %v5815 = vld [vmem:[%s15 + $0xe8] sm:$0xff]
    %v5816 = vld [vmem:[%s15 + $0xf0] sm:$0xff]
    %v5817 = vld [vmem:[%s15 + $0xf8] sm:$0xff]
    %v5818 = vld [vmem:[%s15 + $0x100] sm:$0xff]
    %v5819 = vld [vmem:[%s15 + $0x108] sm:$0xff]
    %v5820 = vld [vmem:[%s15 + $0x110] sm:$0xff]
    %v5821 = vld [vmem:[%s15 + $0x118] sm:$0xff]
    %v5822 = vld [vmem:[%s15 + $0x120] sm:$0xff]
    %v5823 = vld [vmem:[%s15 + $0x128] sm:$0xff]
    %v5824 = vld [vmem:[%s15 + $0x130] sm:$0xff]
    %v5825 = vld [vmem:[%s15 + $0x138] sm:$0xff]
    %v5826 = vld [vmem:[%s15 + $0x140] sm:$0xff]
    %v5827 = vld [vmem:[%s15 + $0x148] sm:$0xff]
    %v5828 = vld [vmem:[%s15 + $0x150] sm:$0xff]
    %v5829 = vld [vmem:[%s15 + $0x158] sm:$0xff]
    %v5830 = vld [vmem:[%s15 + $0x160] sm:$0xff]
    %v5831 = vld [vmem:[%s15 + $0x168] sm:$0xff]
    %v5832 = vld [vmem:[%s15 + $0x170] sm:$0xff]
    %v5833 = vld [vmem:[%s15 + $0x178] sm:$0xff]
    %v5834 = vld [vmem:[%s15 + $0x180] sm:$0xff]
    %v5835 = vld [vmem:[%s15 + $0x188] sm:$0xff]
    %v5836 = vld [vmem:[%s15 + $0x190] sm:$0xff]
    %v5837 = vld [vmem:[%s15 + $0x198] sm:$0xff]
    %v5838 = vld [vmem:[%s15 + $0x1a0] sm:$0xff]
    %v5839 = vld [vmem:[%s15 + $0x1a8] sm:$0xff]
    %v5840 = vld [vmem:[%s15 + $0x1b0] sm:$0xff]
    %v5841 = vld [vmem:[%s15 + $0x1b8] sm:$0xff]
    %v5842 = vld [vmem:[%s15 + $0x1c0] sm:$0xff]
    %v5843 = vld [vmem:[%s15 + $0x1c8] sm:$0xff]
    %v5844 = vld [vmem:[%s15 + $0x1d0] sm:$0xff]
    %v5845 = vld [vmem:[%s15 + $0x1d8] sm:$0xff]
    %v5846 = vld [vmem:[%s15 + $0x1e0] sm:$0xff]
    %v5847 = vld [vmem:[%s15 + $0x1e8] sm:$0xff]
    %v5848 = vld [vmem:[%s15 + $0x1f0] sm:$0xff]
    %v5849 = vld [vmem:[%s15 + $0x1f8] sm:$0xff]
    %v5850 = vld [vmem:[%s16] sm:$0x3]
    %v5852 = vlaneseq
    %v5853 = vshrl.u32 %v5852, 7
    %v5854 = vsub.s32 0, %v5853
    %v5855 = vrot.slane %v5850, %v5854
    %v5856 = vlaneseq
    %v5857 = vshrl.u32 %v5856, 7
    %v5858 = vsub.s32 1, %v5857
    %v5859 = vrot.slane %v5850, %v5858
    %v5926 = vunpack.c.l.b16 %v5786
    %v5927 = vunpack.c.h.b16 %v5786
    %v5928 = vunpack.c.l.b16 %v5787
    %v5929 = vunpack.c.h.b16 %v5787
    %v5930 = vunpack.c.l.b16 %v5788
    %v5931 = vunpack.c.h.b16 %v5788
    %v5932 = vunpack.c.l.b16 %v5789
    %v5933 = vunpack.c.h.b16 %v5789
    %v5934 = vunpack.c.l.b16 %v5790
    %v5935 = vunpack.c.h.b16 %v5790
    %v5936 = vunpack.c.l.b16 %v5791
    %v5937 = vunpack.c.h.b16 %v5791
    %v5938 = vunpack.c.l.b16 %v5792
    %v5939 = vunpack.c.h.b16 %v5792
    %v5940 = vunpack.c.l.b16 %v5793
    %v5941 = vunpack.c.h.b16 %v5793
    %v5942 = vunpack.c.l.b16 %v5794
    %v5943 = vunpack.c.h.b16 %v5794
    %v5944 = vunpack.c.l.b16 %v5795
    %v5945 = vunpack.c.h.b16 %v5795
    %v5946 = vunpack.c.l.b16 %v5796
    %v5947 = vunpack.c.h.b16 %v5796
    %v5948 = vunpack.c.l.b16 %v5797
    %v5949 = vunpack.c.h.b16 %v5797
    %v5950 = vunpack.c.l.b16 %v5798
    %v5951 = vunpack.c.h.b16 %v5798
    %v5952 = vunpack.c.l.b16 %v5799
    %v5953 = vunpack.c.h.b16 %v5799
    %v5954 = vunpack.c.l.b16 %v5800
    %v5955 = vunpack.c.h.b16 %v5800
    %v5956 = vunpack.c.l.b16 %v5801
    %v5957 = vunpack.c.h.b16 %v5801
    %v5958 = vunpack.c.l.b16 %v5802
    %v5959 = vunpack.c.h.b16 %v5802
    %v5960 = vunpack.c.l.b16 %v5803
    %v5961 = vunpack.c.h.b16 %v5803
    %v5962 = vunpack.c.l.b16 %v5804
    %v5963 = vunpack.c.h.b16 %v5804
    %v5964 = vunpack.c.l.b16 %v5805
    %v5965 = vunpack.c.h.b16 %v5805
    %v5966 = vunpack.c.l.b16 %v5806
    %v5967 = vunpack.c.h.b16 %v5806
    %v5968 = vunpack.c.l.b16 %v5807
    %v5969 = vunpack.c.h.b16 %v5807
    %v5970 = vunpack.c.l.b16 %v5808
    %v5971 = vunpack.c.h.b16 %v5808
    %v5972 = vunpack.c.l.b16 %v5809
    %v5973 = vunpack.c.h.b16 %v5809
    %v5974 = vunpack.c.l.b16 %v5810
    %v5975 = vunpack.c.h.b16 %v5810
    %v5976 = vunpack.c.l.b16 %v5811
    %v5977 = vunpack.c.h.b16 %v5811
    %v5978 = vunpack.c.l.b16 %v5812
    %v5979 = vunpack.c.h.b16 %v5812
    %v5980 = vunpack.c.l.b16 %v5813
    %v5981 = vunpack.c.h.b16 %v5813
    %v5982 = vunpack.c.l.b16 %v5814
    %v5983 = vunpack.c.h.b16 %v5814
    %v5984 = vunpack.c.l.b16 %v5815
    %v5985 = vunpack.c.h.b16 %v5815
    %v5986 = vunpack.c.l.b16 %v5816
    %v5987 = vunpack.c.h.b16 %v5816
    %v5988 = vunpack.c.l.b16 %v5817
    %v5989 = vunpack.c.h.b16 %v5817
    %v5990 = vunpack.c.l.b16 %v5818
    %v5991 = vunpack.c.h.b16 %v5818
    %v5992 = vunpack.c.l.b16 %v5819
    %v5993 = vunpack.c.h.b16 %v5819
    %v5994 = vunpack.c.l.b16 %v5820
    %v5995 = vunpack.c.h.b16 %v5820
    %v5996 = vunpack.c.l.b16 %v5821
    %v5997 = vunpack.c.h.b16 %v5821
    %v5998 = vunpack.c.l.b16 %v5822
    %v5999 = vunpack.c.h.b16 %v5822
    %v6000 = vunpack.c.l.b16 %v5823
    %v6001 = vunpack.c.h.b16 %v5823
    %v6002 = vunpack.c.l.b16 %v5824
    %v6003 = vunpack.c.h.b16 %v5824
    %v6004 = vunpack.c.l.b16 %v5825
    %v6005 = vunpack.c.h.b16 %v5825
    %v6006 = vunpack.c.l.b16 %v5826
    %v6007 = vunpack.c.h.b16 %v5826
    %v6008 = vunpack.c.l.b16 %v5827
    %v6009 = vunpack.c.h.b16 %v5827
    %v6010 = vunpack.c.l.b16 %v5828
    %v6011 = vunpack.c.h.b16 %v5828
    %v6012 = vunpack.c.l.b16 %v5829
    %v6013 = vunpack.c.h.b16 %v5829
    %v6014 = vunpack.c.l.b16 %v5830
    %v6015 = vunpack.c.h.b16 %v5830
    %v6016 = vunpack.c.l.b16 %v5831
    %v6017 = vunpack.c.h.b16 %v5831
    %v6018 = vunpack.c.l.b16 %v5832
    %v6019 = vunpack.c.h.b16 %v5832
    %v6020 = vunpack.c.l.b16 %v5833
    %v6021 = vunpack.c.h.b16 %v5833
    %v6022 = vunpack.c.l.b16 %v5834
    %v6023 = vunpack.c.h.b16 %v5834
    %v6024 = vunpack.c.l.b16 %v5835
    %v6025 = vunpack.c.h.b16 %v5835
    %v6026 = vunpack.c.l.b16 %v5836
    %v6027 = vunpack.c.h.b16 %v5836
    %v6028 = vunpack.c.l.b16 %v5837
    %v6029 = vunpack.c.h.b16 %v5837
    %v6030 = vunpack.c.l.b16 %v5838
    %v6031 = vunpack.c.h.b16 %v5838
    %v6032 = vunpack.c.l.b16 %v5839
    %v6033 = vunpack.c.h.b16 %v5839
    %v6034 = vunpack.c.l.b16 %v5840
    %v6035 = vunpack.c.h.b16 %v5840
    %v6036 = vunpack.c.l.b16 %v5841
    %v6037 = vunpack.c.h.b16 %v5841
    %v6038 = vunpack.c.l.b16 %v5842
    %v6039 = vunpack.c.h.b16 %v5842
    %v6040 = vunpack.c.l.b16 %v5843
    %v6041 = vunpack.c.h.b16 %v5843
    %v6042 = vunpack.c.l.b16 %v5844
    %v6043 = vunpack.c.h.b16 %v5844
    %v6044 = vunpack.c.l.b16 %v5845
    %v6045 = vunpack.c.h.b16 %v5845
    %v6046 = vunpack.c.l.b16 %v5846
    %v6047 = vunpack.c.h.b16 %v5846
    %v6048 = vunpack.c.l.b16 %v5847
    %v6049 = vunpack.c.h.b16 %v5847
    %v6050 = vunpack.c.l.b16 %v5848
    %v6051 = vunpack.c.h.b16 %v5848
    %v6052 = vunpack.c.l.b16 %v5849
    %v6053 = vunpack.c.h.b16 %v5849
    %v6054 = vpack.c.b16 %v5928, %v5926
    %v6055 = vpack.c.b16 %v5929, %v5927
    %v6056 = vpack.c.b16 %v5932, %v5930
    %v6057 = vpack.c.b16 %v5933, %v5931
    %v6058 = vpack.c.b16 %v5936, %v5934
    %v6059 = vpack.c.b16 %v5937, %v5935
    %v6060 = vpack.c.b16 %v5940, %v5938
    %v6061 = vpack.c.b16 %v5941, %v5939
    %v6062 = vpack.c.b16 %v5944, %v5942
    %v6063 = vpack.c.b16 %v5945, %v5943
    %v6064 = vpack.c.b16 %v5948, %v5946
    %v6065 = vpack.c.b16 %v5949, %v5947
    %v6066 = vpack.c.b16 %v5952, %v5950
    %v6067 = vpack.c.b16 %v5953, %v5951
    %v6068 = vpack.c.b16 %v5956, %v5954
    %v6069 = vpack.c.b16 %v5957, %v5955
    %v6070 = vpack.c.b16 %v5960, %v5958
    %v6071 = vpack.c.b16 %v5961, %v5959
    %v6072 = vpack.c.b16 %v5964, %v5962
    %v6073 = vpack.c.b16 %v5965, %v5963
    %v6074 = vpack.c.b16 %v5968, %v5966
    %v6075 = vpack.c.b16 %v5969, %v5967
    %v6076 = vpack.c.b16 %v5972, %v5970
    %v6077 = vpack.c.b16 %v5973, %v5971
    %v6078 = vpack.c.b16 %v5976, %v5974
    %v6079 = vpack.c.b16 %v5977, %v5975
    %v6080 = vpack.c.b16 %v5980, %v5978
    %v6081 = vpack.c.b16 %v5981, %v5979
    %v6082 = vpack.c.b16 %v5984, %v5982
    %v6083 = vpack.c.b16 %v5985, %v5983
    %v6084 = vpack.c.b16 %v5988, %v5986
    %v6085 = vpack.c.b16 %v5989, %v5987
    %v6086 = vpack.c.b16 %v5992, %v5990
    %v6087 = vpack.c.b16 %v5993, %v5991
    %v6088 = vpack.c.b16 %v5996, %v5994
    %v6089 = vpack.c.b16 %v5997, %v5995
    %v6090 = vpack.c.b16 %v6000, %v5998
    %v6091 = vpack.c.b16 %v6001, %v5999
    %v6092 = vpack.c.b16 %v6004, %v6002
    %v6093 = vpack.c.b16 %v6005, %v6003
    %v6094 = vpack.c.b16 %v6008, %v6006
    %v6095 = vpack.c.b16 %v6009, %v6007
    %v6096 = vpack.c.b16 %v6012, %v6010
    %v6097 = vpack.c.b16 %v6013, %v6011
    %v6098 = vpack.c.b16 %v6016, %v6014
    %v6099 = vpack.c.b16 %v6017, %v6015
    %v6100 = vpack.c.b16 %v6020, %v6018
    %v6101 = vpack.c.b16 %v6021, %v6019
    %v6102 = vpack.c.b16 %v6024, %v6022
    %v6103 = vpack.c.b16 %v6025, %v6023
    %v6104 = vpack.c.b16 %v6028, %v6026
    %v6105 = vpack.c.b16 %v6029, %v6027
    %v6106 = vpack.c.b16 %v6032, %v6030
    %v6107 = vpack.c.b16 %v6033, %v6031
    %v6108 = vpack.c.b16 %v6036, %v6034
    %v6109 = vpack.c.b16 %v6037, %v6035
    %v6110 = vpack.c.b16 %v6040, %v6038
    %v6111 = vpack.c.b16 %v6041, %v6039
    %v6112 = vpack.c.b16 %v6044, %v6042
    %v6113 = vpack.c.b16 %v6045, %v6043
    %v6114 = vpack.c.b16 %v6048, %v6046
    %v6115 = vpack.c.b16 %v6049, %v6047
    %v6116 = vpack.c.b16 %v6052, %v6050
    %v6117 = vpack.c.b16 %v6053, %v6051
    %6182 = vmatprep.subr.bf16.mxu0 %v6069
    %6183 = vmatpush1.bf16.msra.mxu0 %v6068
    %6184 = vmatprep.subr.bf16.mxu0 %v6067
    %6185 = vmatpush1.bf16.msra.mxu0 %v6066
    %6186 = vmatprep.subr.bf16.mxu0 %v6065
    %6187 = vmatpush1.bf16.msra.mxu0 %v6064
    %6188 = vmatprep.subr.bf16.mxu0 %v6063
    %6189 = vmatpush1.bf16.msra.mxu0 %v6062
    %6190 = vmatprep.subr.bf16.mxu0 %v6061
    %6191 = vmatpush1.bf16.msra.mxu0 %v6060
    %6192 = vmatprep.subr.bf16.mxu0 %v6059
    %6193 = vmatpush1.bf16.msra.mxu0 %v6058
    %6194 = vmatprep.subr.bf16.mxu0 %v6057
    %6195 = vmatpush1.bf16.msra.mxu0 %v6056
    %6196 = vmatprep.subr.bf16.mxu0 %v6055
    %6197 = vmatpush1.bf16.msra.mxu0 %v6054
    %6198 = vmatprep.subr.bf16.mxu0 %v6085
    %6199 = vmatpush2.bf16.msra.mxu0 %v6084
    %6200 = vmatprep.subr.bf16.mxu0 %v6083
    %6201 = vmatpush2.bf16.msra.mxu0 %v6082
    %6202 = vmatprep.subr.bf16.mxu0 %v6081
    %6203 = vmatpush2.bf16.msra.mxu0 %v6080
    %6204 = vmatprep.subr.bf16.mxu0 %v6079
    %6205 = vmatpush2.bf16.msra.mxu0 %v6078
    %6206 = vmatprep.subr.bf16.mxu0 %v6077
    %6207 = vmatpush2.bf16.msra.mxu0 %v6076
    %6208 = vmatprep.subr.bf16.mxu0 %v6075
    %6209 = vmatpush2.bf16.msra.mxu0 %v6074
    %6210 = vmatprep.subr.bf16.mxu0 %v6073
    %6211 = vmatpush2.bf16.msra.mxu0 %v6072
    %6212 = vmatprep.subr.bf16.mxu0 %v6071
    %6213 = vmatpush2.bf16.msra.mxu0 %v6070
    %6214 = vmatprep.mubr.bf16.mxu0 %v5783
    %6215 = vmatmul.mubr.bf16.gmra.mxu0 %v5782
    %v6216 = vpop.f32.mrf.mxu0
    %v6217 = vadd.f32 %v5855, %v6216
    %v6218 = vpop.f32.mrf.mxu0
    %v6219 = vadd.f32 %v5859, %v6218
    %v6220 = vpop.f32.mrf.mxu0
    %v6221 = vpop.f32.mrf.mxu0
    %6222 = vdwg.mxu0
    %6223 = vmatprep.subr.bf16.mxu0 %v6101
    %6224 = vmatpush1.bf16.msra.mxu0 %v6100
    %6225 = vmatprep.subr.bf16.mxu0 %v6099
    %6226 = vmatpush1.bf16.msra.mxu0 %v6098
    %6227 = vmatprep.subr.bf16.mxu0 %v6097
    %6228 = vmatpush1.bf16.msra.mxu0 %v6096
    %6229 = vmatprep.subr.bf16.mxu0 %v6095
    %6230 = vmatpush1.bf16.msra.mxu0 %v6094
    %6231 = vmatprep.subr.bf16.mxu0 %v6093
    %6232 = vmatpush1.bf16.msra.mxu0 %v6092
    %6233 = vmatprep.subr.bf16.mxu0 %v6091
    %6234 = vmatpush1.bf16.msra.mxu0 %v6090
    %6235 = vmatprep.subr.bf16.mxu0 %v6089
    %6236 = vmatpush1.bf16.msra.mxu0 %v6088
    %6237 = vmatprep.subr.bf16.mxu0 %v6087
    %6238 = vmatpush1.bf16.msra.mxu0 %v6086
    %6239 = vmatprep.subr.bf16.mxu0 %v6117
    %6240 = vmatpush2.bf16.msra.mxu0 %v6116
    %6241 = vmatprep.subr.bf16.mxu0 %v6115
    %6242 = vmatpush2.bf16.msra.mxu0 %v6114
    %6243 = vmatprep.subr.bf16.mxu0 %v6113
    %6244 = vmatpush2.bf16.msra.mxu0 %v6112
    %6245 = vmatprep.subr.bf16.mxu0 %v6111
    %6246 = vmatpush2.bf16.msra.mxu0 %v6110
    %6247 = vmatprep.subr.bf16.mxu0 %v6109
    %6248 = vmatpush2.bf16.msra.mxu0 %v6108
    %6249 = vmatprep.subr.bf16.mxu0 %v6107
    %6250 = vmatpush2.bf16.msra.mxu0 %v6106
    %6251 = vmatprep.subr.bf16.mxu0 %v6105
    %6252 = vmatpush2.bf16.msra.mxu0 %v6104
    %6253 = vmatprep.subr.bf16.mxu0 %v6103
    %6254 = vmatpush2.bf16.msra.mxu0 %v6102
    %6255 = vmatprep.mubr.bf16.mxu0 %v5785
    %6256 = vmatmul.mubr.bf16.gmra.mxu0 %v5784
    %v6257 = vpop.f32.mrf.mxu0
    %v6258 = vadd.f32 %v6217, %v6257
    %v6259 = vpop.f32.mrf.mxu0
    %v6260 = vadd.f32 %v6219, %v6259
    %v6261 = vpop.f32.mrf.mxu0
    %v6262 = vpop.f32.mrf.mxu0
    %6263 = vdwg.mxu0
    %v6264 = vmax.f32 %v6258, 0.0
    %v6265 = vmax.f32 %v6260, 0.0
    %v6266 = vmin.f32 %v6264, 6.0
    %v6267 = vmin.f32 %v6265, 6.0
    %v6268 = vpack.c.bf16 %v6266, %v6266
    %v6269 = vpack.c.bf16 %v6267, %v6267
    %v6270 = vld [vmem:[%s17] sm:$0xf]
    %v6271 = vld [vmem:[%s17 + $0x4] sm:$0xf]
    %v6272 = vld [vmem:[%s17 + $0x8] sm:$0xf]
    %v6273 = vld [vmem:[%s17 + $0xc] sm:$0xf]
    %v6274 = vld [vmem:[%s17 + $0x10] sm:$0xf]
    %v6275 = vld [vmem:[%s17 + $0x14] sm:$0xf]
    %v6276 = vld [vmem:[%s17 + $0x18] sm:$0xf]
    %v6277 = vld [vmem:[%s17 + $0x1c] sm:$0xf]
    %v6278 = vld [vmem:[%s17 + $0x20] sm:$0xf]
    %v6279 = vld [vmem:[%s17 + $0x24] sm:$0xf]
    %v6280 = vld [vmem:[%s17 + $0x28] sm:$0xf]
    %v6281 = vld [vmem:[%s17 + $0x2c] sm:$0xf]
    %v6282 = vld [vmem:[%s17 + $0x30] sm:$0xf]
    %v6283 = vld [vmem:[%s17 + $0x34] sm:$0xf]
    %v6284 = vld [vmem:[%s17 + $0x38] sm:$0xf]
    %v6285 = vld [vmem:[%s17 + $0x3c] sm:$0xf]
    %v6286 = vld [vmem:[%s17 + $0x40] sm:$0xf]
    %v6287 = vld [vmem:[%s17 + $0x44] sm:$0xf]
    %v6288 = vld [vmem:[%s17 + $0x48] sm:$0xf]
    %v6289 = vld [vmem:[%s17 + $0x4c] sm:$0xf]
    %v6290 = vld [vmem:[%s17 + $0x50] sm:$0xf]
    %v6291 = vld [vmem:[%s17 + $0x54] sm:$0xf]
    %v6292 = vld [vmem:[%s17 + $0x58] sm:$0xf]
    %v6293 = vld [vmem:[%s17 + $0x5c] sm:$0xf]
    %v6294 = vld [vmem:[%s17 + $0x60] sm:$0xf]
    %v6295 = vld [vmem:[%s17 + $0x64] sm:$0xf]
    %v6296 = vld [vmem:[%s17 + $0x68] sm:$0xf]
    %v6297 = vld [vmem:[%s17 + $0x6c] sm:$0xf]
    %v6298 = vld [vmem:[%s17 + $0x70] sm:$0xf]
    %v6299 = vld [vmem:[%s17 + $0x74] sm:$0xf]
    %v6300 = vld [vmem:[%s17 + $0x78] sm:$0xf]
    %v6301 = vld [vmem:[%s17 + $0x7c] sm:$0xf]
    %v6302 = vld [vmem:[%s18] sm:$0x1]
    %v6304 = vlaneseq
    %v6305 = vshrl.u32 %v6304, 7
    %v6306 = vsub.s32 0, %v6305
    %v6307 = vrot.slane %v6302, %v6306
    %v6341 = vunpack.c.l.b16 %v6270
    %v6342 = vunpack.c.l.b16 %v6271
    %v6343 = vunpack.c.l.b16 %v6272
    %v6344 = vunpack.c.l.b16 %v6273
    %v6345 = vunpack.c.l.b16 %v6274
    %v6346 = vunpack.c.l.b16 %v6275
    %v6347 = vunpack.c.l.b16 %v6276
    %v6348 = vunpack.c.l.b16 %v6277
    %v6349 = vunpack.c.l.b16 %v6278
    %v6350 = vunpack.c.l.b16 %v6279
    %v6351 = vunpack.c.l.b16 %v6280
    %v6352 = vunpack.c.l.b16 %v6281
    %v6353 = vunpack.c.l.b16 %v6282
    %v6354 = vunpack.c.l.b16 %v6283
    %v6355 = vunpack.c.l.b16 %v6284
    %v6356 = vunpack.c.l.b16 %v6285
    %v6357 = vunpack.c.l.b16 %v6286
    %v6358 = vunpack.c.l.b16 %v6287
    %v6359 = vunpack.c.l.b16 %v6288
    %v6360 = vunpack.c.l.b16 %v6289
    %v6361 = vunpack.c.l.b16 %v6290
    %v6362 = vunpack.c.l.b16 %v6291
    %v6363 = vunpack.c.l.b16 %v6292
    %v6364 = vunpack.c.l.b16 %v6293
    %v6365 = vunpack.c.l.b16 %v6294
    %v6366 = vunpack.c.l.b16 %v6295
    %v6367 = vunpack.c.l.b16 %v6296
    %v6368 = vunpack.c.l.b16 %v6297
    %v6369 = vunpack.c.l.b16 %v6298
    %v6370 = vunpack.c.l.b16 %v6299
    %v6371 = vunpack.c.l.b16 %v6300
    %v6372 = vunpack.c.l.b16 %v6301
    %v6373 = vpack.c.b16 %v6342, %v6341
    %v6374 = vpack.c.b16 %v6344, %v6343
    %v6375 = vpack.c.b16 %v6346, %v6345
    %v6376 = vpack.c.b16 %v6348, %v6347
    %v6377 = vpack.c.b16 %v6350, %v6349
    %v6378 = vpack.c.b16 %v6352, %v6351
    %v6379 = vpack.c.b16 %v6354, %v6353
    %v6380 = vpack.c.b16 %v6356, %v6355
    %v6381 = vpack.c.b16 %v6358, %v6357
    %v6382 = vpack.c.b16 %v6360, %v6359
    %v6383 = vpack.c.b16 %v6362, %v6361
    %v6384 = vpack.c.b16 %v6364, %v6363
    %v6385 = vpack.c.b16 %v6366, %v6365
    %v6386 = vpack.c.b16 %v6368, %v6367
    %v6387 = vpack.c.b16 %v6370, %v6369
    %v6388 = vpack.c.b16 %v6372, %v6371
    %6405 = vmatprep.subr.bf16.mxu0 0
    %6406 = vmatpush1.bf16.msra.mxu0 %v6380
    %6407 = vmatprep.subr.bf16.mxu0 0
    %6408 = vmatpush1.bf16.msra.mxu0 %v6379
    %6409 = vmatprep.subr.bf16.mxu0 0
    %6410 = vmatpush1.bf16.msra.mxu0 %v6378
    %6411 = vmatprep.subr.bf16.mxu0 0
    %6412 = vmatpush1.bf16.msra.mxu0 %v6377
    %6413 = vmatprep.subr.bf16.mxu0 0
    %6414 = vmatpush1.bf16.msra.mxu0 %v6376
    %6415 = vmatprep.subr.bf16.mxu0 0
    %6416 = vmatpush1.bf16.msra.mxu0 %v6375
    %6417 = vmatprep.subr.bf16.mxu0 0
    %6418 = vmatpush1.bf16.msra.mxu0 %v6374
    %6419 = vmatprep.subr.bf16.mxu0 0
    %6420 = vmatpush1.bf16.msra.mxu0 %v6373
    %6421 = vmatprep.subr.bf16.mxu0 0
    %6422 = vmatpush2.bf16.msra.mxu0 %v6388
    %6423 = vmatprep.subr.bf16.mxu0 0
    %6424 = vmatpush2.bf16.msra.mxu0 %v6387
    %6425 = vmatprep.subr.bf16.mxu0 0
    %6426 = vmatpush2.bf16.msra.mxu0 %v6386
    %6427 = vmatprep.subr.bf16.mxu0 0
    %6428 = vmatpush2.bf16.msra.mxu0 %v6385
    %6429 = vmatprep.subr.bf16.mxu0 0
    %6430 = vmatpush2.bf16.msra.mxu0 %v6384
    %6431 = vmatprep.subr.bf16.mxu0 0
    %6432 = vmatpush2.bf16.msra.mxu0 %v6383
    %6433 = vmatprep.subr.bf16.mxu0 0
    %6434 = vmatpush2.bf16.msra.mxu0 %v6382
    %6435 = vmatprep.subr.bf16.mxu0 0
    %6436 = vmatpush2.bf16.msra.mxu0 %v6381
    %6437 = vmatprep.mubr.bf16.mxu0 %v6269
    %6438 = vmatmul.mubr.bf16.gmra.mxu0 %v6268
    %v6439 = vpop.f32.mrf.mxu0
    %v6440 = vadd.f32 %v6307, %v6439
    %v6441 = vpop.f32.mrf.mxu0
    %v6442 = vpop.f32.mrf.mxu0
    %v6443 = vpop.f32.mrf.mxu0
    %6444 = vdwg.mxu0
    %v6445 = vxor.u32 %v6440, 2147483648
    %v6446 = vmul.f32 %v6445, 1.442695
    %v6447 = vpow.pop %v6446
    %v6448 = vadd.f32 %v6447, 1.0
    %v6449 = vrcp.pop %v6448
    %v6450 = vmul.f32 1.0, %v6449
    %6451 = vst [vmem:[#allocation2] sm:$0x3] %v6450
    // Predicated region
    $region78: #{cnn_feature_transformer_2d.3} parent=1 // pred_check
      _
    $region79: #{cnn_feature_transformer_2d.3} parent=1 // pred_check_branch
      %6453 = sbr.rel (0) target = $region81
    $region80: #{cnn_feature_transformer_2d.3} parent=1 // pred_region
      %s6455 = ssub.s32 32, 32
      %6456 = vsyncadd [#allocation3], %s6455
      %s6458 = sshll.u32 [#allocation2], 4
      %s6459 = int_to_ptr.vmem [resolvable:$true] %s6458
      %6461 = dma.vmem_to_hbm [thread:$0]  %s6459, 32, %s19, [#allocation3]
    $region81: #{cnn_feature_transformer_2d.3} parent=1 // pred_fallthru
      _
    // Predicated region
    $region82: #{cnn_feature_transformer_2d.3} parent=1 // pred_check
      _
    $region83: #{cnn_feature_transformer_2d.3} parent=1 // pred_check_branch
      %6463 = sbr.rel (0) target = $region85
    $region84: #{cnn_feature_transformer_2d.3} parent=1 // pred_region
      %6464 = dma.done [#allocation3], 32
    $region85: #{cnn_feature_transformer_2d.3} parent=1 // pred_fallthru
      _
    %6465 = vsyncpa [#allocation3], 1

</llo_original>
